<compile_context>
chip_gen: v6e
topology: v6e:2x2x1
jax: 0.10.0
libtpu: 0.0.40
codegen_flags: <defaults>
</compile_context>

<pallas_src>
import functools

import jax
import jax.numpy as jnp
from jax.experimental import pallas as pl
from jax.experimental.pallas import tpu as pltpu


def _mask_b_taps(ks):
    """Statically non-zero (ky, kx) taps of the PixelCNN 'B' mask (center=True)."""
    c = ks // 2
    return tuple((ky, kx) for ky in range(ks) for kx in range(ks)
                 if ky < c or (ky == c and kx <= c))


def _sum_all(a):
    """(N,1,H,W) -> (1,1,1,1).  Staged: lane reduction first, then the rest."""
    s = jnp.sum(a, axis=3, keepdims=True)
    return jnp.sum(s, axis=(0, 1, 2), keepdims=True)


# ----------------------------------------------------------------------------
# Fused kernel: (masked conv -> BN -> ReLU) x2 + residual, everything in VMEM.
# ----------------------------------------------------------------------------
def _resblk_kernel(x_ref, w1_ref, g1_ref, be1_ref, w2_ref, g2_ref, be2_ref,
                   out_ref, xpad_ref, hpad_ref, *, taps, ks, C, H, W, eps):
    N = x_ref.shape[0]
    C2 = 2 * C
    p = ks // 2
    inv_cnt = 1.0 / float(N * H * W)

    xv = x_ref[...]                                   # (N, C, H, W), reused for residual

    # ---- stage x into a zero-padded VMEM scratch (padding done in-kernel) ----
    xpad_ref[...] = jnp.zeros_like(xpad_ref)
    xpad_ref[:, :, p:p + H, p:p + W] = xv

    def conv(src_ref, cin, cout, w_ref):
        """Masked conv over the non-zero taps only, as VPU broadcast-FMAs.
        Returns per-output-channel (N,1,H,W) f32 accumulators (init from the
        first tap — no zero-fill pass)."""
        acc = [None] * cout
        for t, (ky, kx) in enumerate(taps):
            for ci in range(cin):
                patch = src_ref[:, ci:ci + 1, ky:ky + H, kx:kx + W]   # (N,1,H,W)
                base = (t * cin + ci) * cout
                for co in range(cout):
                    contrib = patch * w_ref[base + co]                # scalar from SMEM
                    acc[co] = contrib if acc[co] is None else acc[co] + contrib
        return acc

    def bn_relu(a, gamma, beta):
        """Training-mode BatchNorm2d (one-pass biased stats) + ReLU, one channel.
        The conv bias is omitted: it cancels exactly under training-mode BN."""
        mean = _sum_all(a) * inv_cnt
        ex2 = _sum_all(a * a) * inv_cnt
        var = jnp.maximum(ex2 - mean * mean, 0.0)
        scale = gamma * jax.lax.rsqrt(var + eps)
        shift = beta - mean * scale
        return jnp.maximum(a * scale + shift, 0.0)

    # ---- block 1: masked conv (C -> 2C) + BN + ReLU; h stays in VMEM ---------
    acc1 = conv(xpad_ref, C, C2, w1_ref)
    hpad_ref[...] = jnp.zeros_like(hpad_ref)
    for co in range(C2):
        h = bn_relu(acc1[co], g1_ref[co], be1_ref[co])
        hpad_ref[:, co:co + 1, p:p + H, p:p + W] = h

    # ---- block 2: masked conv (2C -> C) + BN + ReLU + residual ---------------
    acc2 = conv(hpad_ref, C2, C, w2_ref)
    for co in range(C):
        y = bn_relu(acc2[co], g2_ref[co], be2_ref[co])
        out_ref[:, co:co + 1, :, :] = (y + xv[:, co:co + 1, :, :]).astype(out_ref.dtype)


# ----------------------------------------------------------------------------
# Wrapper: packs the non-zero-tap weights and launches the single fused call.
# ----------------------------------------------------------------------------
def resblk_forward(x_nchw, params, ks):
    """ResBlk forward.  x_nchw: (N, C, H, W) float32 (PyTorch layout in & out)."""
    N, C, H, W = x_nchw.shape
    p = ks // 2
    taps = _mask_b_taps(ks)

    # Pack only the non-zero-mask taps, flattened as [(tap, cin, cout)] -> SMEM.
    def pack(w_hwio):
        return jnp.stack([w_hwio[ky, kx] for (ky, kx) in taps]).reshape(-1)

    w1f = pack(params['w1'])            # (T * C  * 2C,)
    w2f = pack(params['w2'])            # (T * 2C * C,)

    kernel = functools.partial(_resblk_kernel, taps=taps, ks=ks, C=C, H=H, W=W,
                               eps=1e-5)
    vmem = pl.BlockSpec(memory_space=pltpu.MemorySpace.VMEM)
    smem = pl.BlockSpec(memory_space=pltpu.MemorySpace.SMEM)

    return pl.pallas_call(
        kernel,
        out_shape=jax.ShapeDtypeStruct((N, C, H, W), x_nchw.dtype),
        in_specs=[vmem, smem, smem, smem, smem, smem, smem],
        out_specs=vmem,
        scratch_shapes=[
            pltpu.VMEM((N, C, H + 2 * p, W + 2 * p), jnp.float32),      # padded x
            pltpu.VMEM((N, 2 * C, H + 2 * p, W + 2 * p), jnp.float32),  # padded h
        ],
    )(x_nchw, w1f, params['g1'], params['be1'], w2f, params['g2'], params['be2'])


# ----------------------------------------------------------------------------
# Parameters (deterministic, synthetic).
# ----------------------------------------------------------------------------
def _pixelcnn_mask(ks, cin, cout, center=True):
    """PixelCNN mask in HWIO layout.  center=True -> mask 'B'."""
    yc, xc = ks // 2, ks // 2
    m = jnp.zeros((ks, ks), jnp.float32)
    m = m.at[:yc, :].set(1.0)
    m = m.at[yc, :xc + (1 if center else 0)].set(1.0)
    return m[:, :, None, None] * jnp.ones((ks, ks, cin, cout), jnp.float32)


def init_resblk_params(key, ch, ks):
    k1, k2, k3, k4 = jax.random.split(key, 4)
    s1 = 1.0 / float(ks * ks * ch) ** 0.5
    s2 = 1.0 / float(ks * ks * 2 * ch) ** 0.5
    w1 = jax.random.normal(k1, (ks, ks, ch, 2 * ch), jnp.float32) * s1
    b1 = jax.random.normal(k2, (2 * ch,), jnp.float32) * s1
    w2 = jax.random.normal(k3, (ks, ks, 2 * ch, ch), jnp.float32) * s2
    b2 = jax.random.normal(k4, (ch,), jnp.float32) * s2
    # MaskedConv2d: the mask zeroes the "future" taps (applied once to weights).
    w1 = w1 * _pixelcnn_mask(ks, ch, 2 * ch, center=True)
    w2 = w2 * _pixelcnn_mask(ks, 2 * ch, ch, center=True)
    return dict(
        w1=w1, b1=b1, g1=jnp.ones((2 * ch,), jnp.float32),
        be1=jnp.zeros((2 * ch,), jnp.float32),
        w2=w2, b2=b2, g2=jnp.ones((ch,), jnp.float32),
        be2=jnp.zeros((ch,), jnp.float32),
    )


# ----------------------------------------------------------------------------
# Pure-JAX reference (includes the conv bias, two-pass BN) for correctness.
# ----------------------------------------------------------------------------
def _ref_block(x, w, b, g, be, ks, eps=1e-5):
    p = ks // 2
    y = jax.lax.conv_general_dilated(
        x, w, (1, 1), ((p, p), (p, p)),
        dimension_numbers=('NCHW', 'HWIO', 'NCHW')) + b.reshape(1, -1, 1, 1)
    mean = y.mean(axis=(0, 2, 3), keepdims=True)
    var = ((y - mean) ** 2).mean(axis=(0, 2, 3), keepdims=True)
    y = (y - mean) * jax.lax.rsqrt(var + eps) * g.reshape(1, -1, 1, 1) \
        + be.reshape(1, -1, 1, 1)
    return jnp.maximum(y, 0.0)


if __name__ == "__main__":
    key = jax.random.PRNGKey(0)
    ch, ks = 4, 3
    N, H, W = 2, 16, 16

    pkey, xkey = jax.random.split(key)
    params = init_resblk_params(pkey, ch, ks)
    x = jax.random.normal(xkey, (N, ch, H, W), jnp.float32)

    out = jax.block_until_ready(resblk_forward(x, params, ks))
    assert out.shape == x.shape and out.dtype == x.dtype

    # Reference check (pure JAX, NCHW, bias included, two-pass BN stats).
    h = _ref_block(x, params['w1'], params['b1'], params['g1'], params['be1'], ks)
    ref = x + _ref_block(h, params['w2'], params['b2'], params['g2'], params['be2'], ks)
    assert jnp.allclose(out, ref, atol=1e-3, rtol=1e-3), \
        float(jnp.max(jnp.abs(out - ref)))

    print("KERNEL_OK")
</pallas_src>

<mosaic_0001>
module attributes {stable_mosaic.version = 11 : i64} {
  func.func @_resblk_kernel(%arg0: memref<2x4x16x16xf32, #tpu.memory_space<vmem>>, %arg1: memref<160xf32, #tpu.memory_space<smem>>, %arg2: memref<8xf32, #tpu.memory_space<smem>>, %arg3: memref<8xf32, #tpu.memory_space<smem>>, %arg4: memref<160xf32, #tpu.memory_space<smem>>, %arg5: memref<4xf32, #tpu.memory_space<smem>>, %arg6: memref<4xf32, #tpu.memory_space<smem>>, %arg7: memref<2x4x16x16xf32, #tpu.memory_space<vmem>>, %arg8: memref<2x4x18x18xf32, #tpu.memory_space<vmem>>, %arg9: memref<2x8x18x18xf32, #tpu.memory_space<vmem>>) attributes {dimension_semantics = [], scalar_prefetch = 0 : i64, scratch_operands = 2 : i64, tpu.core_type = #tpu.core_type<tc>} {
    %c0 = arith.constant 0 : index
    %c0_0 = arith.constant 0 : index
    %c0_1 = arith.constant 0 : index
    %c0_2 = arith.constant 0 : index
    %0 = vector.load %arg0[%c0, %c0_0, %c0_1, %c0_2] : memref<2x4x16x16xf32, #tpu.memory_space<vmem>>, vector<2x4x16x16xf32>
    %cst = arith.constant 0.000000e+00 : f32
    %1 = vector.broadcast %cst : f32 to vector<2x4x18x18xf32>
    %c0_3 = arith.constant 0 : index
    %c0_4 = arith.constant 0 : index
    %c0_5 = arith.constant 0 : index
    %c0_6 = arith.constant 0 : index
    %2 = vector.load %arg8[%c0_3, %c0_4, %c0_5, %c0_6] : memref<2x4x18x18xf32, #tpu.memory_space<vmem>>, vector<2x4x18x18xf32>
    tpu.vector_store %arg8[%c0_3, %c0_4, %c0_5, %c0_6], %1 {strides = array<i32>} : memref<2x4x18x18xf32, #tpu.memory_space<vmem>>, vector<2x4x18x18xf32>,
    %c0_7 = arith.constant 0 : index
    %c0_8 = arith.constant 0 : index
    %c1 = arith.constant 1 : index
    %c1_9 = arith.constant 1 : index
    %3 = vector.load %arg8[%c0_7, %c0_8, %c1, %c1_9] : memref<2x4x18x18xf32, #tpu.memory_space<vmem>>, vector<2x4x16x16xf32>
    tpu.vector_store %arg8[%c0_7, %c0_8, %c1, %c1_9], %0 {strides = array<i32>} : memref<2x4x18x18xf32, #tpu.memory_space<vmem>>, vector<2x4x16x16xf32>,
    %c0_10 = arith.constant 0 : index
    %c0_11 = arith.constant 0 : index
    %c0_12 = arith.constant 0 : index
    %c0_13 = arith.constant 0 : index
    %4 = vector.load %arg8[%c0_10, %c0_11, %c0_12, %c0_13] : memref<2x4x18x18xf32, #tpu.memory_space<vmem>>, vector<2x1x16x16xf32>
    %c0_14 = arith.constant 0 : index
    %5 = memref.load %arg1[%c0_14] : memref<160xf32, #tpu.memory_space<smem>>
    %6 = vector.broadcast %5 : f32 to vector<2x1x16x16xf32>
    %7 = arith.mulf %4, %6 : vector<2x1x16x16xf32>
    %c1_15 = arith.constant 1 : index
    %8 = memref.load %arg1[%c1_15] : memref<160xf32, #tpu.memory_space<smem>>
    %9 = vector.broadcast %8 : f32 to vector<2x1x16x16xf32>
    %10 = arith.mulf %4, %9 : vector<2x1x16x16xf32>
    %c2 = arith.constant 2 : index
    %11 = memref.load %arg1[%c2] : memref<160xf32, #tpu.memory_space<smem>>
    %12 = vector.broadcast %11 : f32 to vector<2x1x16x16xf32>
    %13 = arith.mulf %4, %12 : vector<2x1x16x16xf32>
    %c3 = arith.constant 3 : index
    %14 = memref.load %arg1[%c3] : memref<160xf32, #tpu.memory_space<smem>>
    %15 = vector.broadcast %14 : f32 to vector<2x1x16x16xf32>
    %16 = arith.mulf %4, %15 : vector<2x1x16x16xf32>
    %c4 = arith.constant 4 : index
    %17 = memref.load %arg1[%c4] : memref<160xf32, #tpu.memory_space<smem>>
    %18 = vector.broadcast %17 : f32 to vector<2x1x16x16xf32>
    %19 = arith.mulf %4, %18 : vector<2x1x16x16xf32>
    %c5 = arith.constant 5 : index
    %20 = memref.load %arg1[%c5] : memref<160xf32, #tpu.memory_space<smem>>
    %21 = vector.broadcast %20 : f32 to vector<2x1x16x16xf32>
    %22 = arith.mulf %4, %21 : vector<2x1x16x16xf32>
    %c6 = arith.constant 6 : index
    %23 = memref.load %arg1[%c6] : memref<160xf32, #tpu.memory_space<smem>>
    %24 = vector.broadcast %23 : f32 to vector<2x1x16x16xf32>
    %25 = arith.mulf %4, %24 : vector<2x1x16x16xf32>
    %c7 = arith.constant 7 : index
    %26 = memref.load %arg1[%c7] : memref<160xf32, #tpu.memory_space<smem>>
    %27 = vector.broadcast %26 : f32 to vector<2x1x16x16xf32>
    %28 = arith.mulf %4, %27 : vector<2x1x16x16xf32>
    %c0_16 = arith.constant 0 : index
    %c1_17 = arith.constant 1 : index
    %c0_18 = arith.constant 0 : index
    %c0_19 = arith.constant 0 : index
    %29 = vector.load %arg8[%c0_16, %c1_17, %c0_18, %c0_19] : memref<2x4x18x18xf32, #tpu.memory_space<vmem>>, vector<2x1x16x16xf32>
    %c8 = arith.constant 8 : index
    %30 = memref.load %arg1[%c8] : memref<160xf32, #tpu.memory_space<smem>>
    %31 = vector.broadcast %30 : f32 to vector<2x1x16x16xf32>
    %32 = arith.mulf %29, %31 : vector<2x1x16x16xf32>
    %33 = arith.addf %7, %32 : vector<2x1x16x16xf32>
    %c9 = arith.constant 9 : index
    %34 = memref.load %arg1[%c9] : memref<160xf32, #tpu.memory_space<smem>>
    %35 = vector.broadcast %34 : f32 to vector<2x1x16x16xf32>
    %36 = arith.mulf %29, %35 : vector<2x1x16x16xf32>
    %37 = arith.addf %10, %36 : vector<2x1x16x16xf32>
    %c10 = arith.constant 10 : index
    %38 = memref.load %arg1[%c10] : memref<160xf32, #tpu.memory_space<smem>>
    %39 = vector.broadcast %38 : f32 to vector<2x1x16x16xf32>
    %40 = arith.mulf %29, %39 : vector<2x1x16x16xf32>
    %41 = arith.addf %13, %40 : vector<2x1x16x16xf32>
    %c11 = arith.constant 11 : index
    %42 = memref.load %arg1[%c11] : memref<160xf32, #tpu.memory_space<smem>>
    %43 = vector.broadcast %42 : f32 to vector<2x1x16x16xf32>
    %44 = arith.mulf %29, %43 : vector<2x1x16x16xf32>
    %45 = arith.addf %16, %44 : vector<2x1x16x16xf32>
    %c12 = arith.constant 12 : index
    %46 = memref.load %arg1[%c12] : memref<160xf32, #tpu.memory_space<smem>>
    %47 = vector.broadcast %46 : f32 to vector<2x1x16x16xf32>
    %48 = arith.mulf %29, %47 : vector<2x1x16x16xf32>
    %49 = arith.addf %19, %48 : vector<2x1x16x16xf32>
    %c13 = arith.constant 13 : index
    %50 = memref.load %arg1[%c13] : memref<160xf32, #tpu.memory_space<smem>>
    %51 = vector.broadcast %50 : f32 to vector<2x1x16x16xf32>
    %52 = arith.mulf %29, %51 : vector<2x1x16x16xf32>
    %53 = arith.addf %22, %52 : vector<2x1x16x16xf32>
    %c14 = arith.constant 14 : index
    %54 = memref.load %arg1[%c14] : memref<160xf32, #tpu.memory_space<smem>>
    %55 = vector.broadcast %54 : f32 to vector<2x1x16x16xf32>
    %56 = arith.mulf %29, %55 : vector<2x1x16x16xf32>
    %57 = arith.addf %25, %56 : vector<2x1x16x16xf32>
    %c15 = arith.constant 15 : index
    %58 = memref.load %arg1[%c15] : memref<160xf32, #tpu.memory_space<smem>>
    %59 = vector.broadcast %58 : f32 to vector<2x1x16x16xf32>
    %60 = arith.mulf %29, %59 : vector<2x1x16x16xf32>
    %61 = arith.addf %28, %60 : vector<2x1x16x16xf32>
    %c0_20 = arith.constant 0 : index
    %c2_21 = arith.constant 2 : index
    %c0_22 = arith.constant 0 : index
    %c0_23 = arith.constant 0 : index
    %62 = vector.load %arg8[%c0_20, %c2_21, %c0_22, %c0_23] : memref<2x4x18x18xf32, #tpu.memory_space<vmem>>, vector<2x1x16x16xf32>
    %c16 = arith.constant 16 : index
    %63 = memref.load %arg1[%c16] : memref<160xf32, #tpu.memory_space<smem>>
    %64 = vector.broadcast %63 : f32 to vector<2x1x16x16xf32>
    %65 = arith.mulf %62, %64 : vector<2x1x16x16xf32>
    %66 = arith.addf %33, %65 : vector<2x1x16x16xf32>
    %c17 = arith.constant 17 : index
    %67 = memref.load %arg1[%c17] : memref<160xf32, #tpu.memory_space<smem>>
    %68 = vector.broadcast %67 : f32 to vector<2x1x16x16xf32>
    %69 = arith.mulf %62, %68 : vector<2x1x16x16xf32>
    %70 = arith.addf %37, %69 : vector<2x1x16x16xf32>
    %c18 = arith.constant 18 : index
    %71 = memref.load %arg1[%c18] : memref<160xf32, #tpu.memory_space<smem>>
    %72 = vector.broadcast %71 : f32 to vector<2x1x16x16xf32>
    %73 = arith.mulf %62, %72 : vector<2x1x16x16xf32>
    %74 = arith.addf %41, %73 : vector<2x1x16x16xf32>
    %c19 = arith.constant 19 : index
    %75 = memref.load %arg1[%c19] : memref<160xf32, #tpu.memory_space<smem>>
    %76 = vector.broadcast %75 : f32 to vector<2x1x16x16xf32>
    %77 = arith.mulf %62, %76 : vector<2x1x16x16xf32>
    %78 = arith.addf %45, %77 : vector<2x1x16x16xf32>
    %c20 = arith.constant 20 : index
    %79 = memref.load %arg1[%c20] : memref<160xf32, #tpu.memory_space<smem>>
    %80 = vector.broadcast %79 : f32 to vector<2x1x16x16xf32>
    %81 = arith.mulf %62, %80 : vector<2x1x16x16xf32>
    %82 = arith.addf %49, %81 : vector<2x1x16x16xf32>
    %c21 = arith.constant 21 : index
    %83 = memref.load %arg1[%c21] : memref<160xf32, #tpu.memory_space<smem>>
    %84 = vector.broadcast %83 : f32 to vector<2x1x16x16xf32>
    %85 = arith.mulf %62, %84 : vector<2x1x16x16xf32>
    %86 = arith.addf %53, %85 : vector<2x1x16x16xf32>
    %c22 = arith.constant 22 : index
    %87 = memref.load %arg1[%c22] : memref<160xf32, #tpu.memory_space<smem>>
    %88 = vector.broadcast %87 : f32 to vector<2x1x16x16xf32>
    %89 = arith.mulf %62, %88 : vector<2x1x16x16xf32>
    %90 = arith.addf %57, %89 : vector<2x1x16x16xf32>
    %c23 = arith.constant 23 : index
    %91 = memref.load %arg1[%c23] : memref<160xf32, #tpu.memory_space<smem>>
    %92 = vector.broadcast %91 : f32 to vector<2x1x16x16xf32>
    %93 = arith.mulf %62, %92 : vector<2x1x16x16xf32>
    %94 = arith.addf %61, %93 : vector<2x1x16x16xf32>
    %c0_24 = arith.constant 0 : index
    %c3_25 = arith.constant 3 : index
    %c0_26 = arith.constant 0 : index
    %c0_27 = arith.constant 0 : index
    %95 = vector.load %arg8[%c0_24, %c3_25, %c0_26, %c0_27] : memref<2x4x18x18xf32, #tpu.memory_space<vmem>>, vector<2x1x16x16xf32>
    %c24 = arith.constant 24 : index
    %96 = memref.load %arg1[%c24] : memref<160xf32, #tpu.memory_space<smem>>
    %97 = vector.broadcast %96 : f32 to vector<2x1x16x16xf32>
    %98 = arith.mulf %95, %97 : vector<2x1x16x16xf32>
    %99 = arith.addf %66, %98 : vector<2x1x16x16xf32>
    %c25 = arith.constant 25 : index
    %100 = memref.load %arg1[%c25] : memref<160xf32, #tpu.memory_space<smem>>
    %101 = vector.broadcast %100 : f32 to vector<2x1x16x16xf32>
    %102 = arith.mulf %95, %101 : vector<2x1x16x16xf32>
    %103 = arith.addf %70, %102 : vector<2x1x16x16xf32>
    %c26 = arith.constant 26 : index
    %104 = memref.load %arg1[%c26] : memref<160xf32, #tpu.memory_space<smem>>
    %105 = vector.broadcast %104 : f32 to vector<2x1x16x16xf32>
    %106 = arith.mulf %95, %105 : vector<2x1x16x16xf32>
    %107 = arith.addf %74, %106 : vector<2x1x16x16xf32>
    %c27 = arith.constant 27 : index
    %108 = memref.load %arg1[%c27] : memref<160xf32, #tpu.memory_space<smem>>
    %109 = vector.broadcast %108 : f32 to vector<2x1x16x16xf32>
    %110 = arith.mulf %95, %109 : vector<2x1x16x16xf32>
    %111 = arith.addf %78, %110 : vector<2x1x16x16xf32>
    %c28 = arith.constant 28 : index
    %112 = memref.load %arg1[%c28] : memref<160xf32, #tpu.memory_space<smem>>
    %113 = vector.broadcast %112 : f32 to vector<2x1x16x16xf32>
    %114 = arith.mulf %95, %113 : vector<2x1x16x16xf32>
    %115 = arith.addf %82, %114 : vector<2x1x16x16xf32>
    %c29 = arith.constant 29 : index
    %116 = memref.load %arg1[%c29] : memref<160xf32, #tpu.memory_space<smem>>
    %117 = vector.broadcast %116 : f32 to vector<2x1x16x16xf32>
    %118 = arith.mulf %95, %117 : vector<2x1x16x16xf32>
    %119 = arith.addf %86, %118 : vector<2x1x16x16xf32>
    %c30 = arith.constant 30 : index
    %120 = memref.load %arg1[%c30] : memref<160xf32, #tpu.memory_space<smem>>
    %121 = vector.broadcast %120 : f32 to vector<2x1x16x16xf32>
    %122 = arith.mulf %95, %121 : vector<2x1x16x16xf32>
    %123 = arith.addf %90, %122 : vector<2x1x16x16xf32>
    %c31 = arith.constant 31 : index
    %124 = memref.load %arg1[%c31] : memref<160xf32, #tpu.memory_space<smem>>
    %125 = vector.broadcast %124 : f32 to vector<2x1x16x16xf32>
    %126 = arith.mulf %95, %125 : vector<2x1x16x16xf32>
    %127 = arith.addf %94, %126 : vector<2x1x16x16xf32>
    %c0_28 = arith.constant 0 : index
    %c0_29 = arith.constant 0 : index
    %c0_30 = arith.constant 0 : index
    %c1_31 = arith.constant 1 : index
    %128 = vector.load %arg8[%c0_28, %c0_29, %c0_30, %c1_31] : memref<2x4x18x18xf32, #tpu.memory_space<vmem>>, vector<2x1x16x16xf32>
    %c32 = arith.constant 32 : index
    %129 = memref.load %arg1[%c32] : memref<160xf32, #tpu.memory_space<smem>>
    %130 = vector.broadcast %129 : f32 to vector<2x1x16x16xf32>
    %131 = arith.mulf %128, %130 : vector<2x1x16x16xf32>
    %132 = arith.addf %99, %131 : vector<2x1x16x16xf32>
    %c33 = arith.constant 33 : index
    %133 = memref.load %arg1[%c33] : memref<160xf32, #tpu.memory_space<smem>>
    %134 = vector.broadcast %133 : f32 to vector<2x1x16x16xf32>
    %135 = arith.mulf %128, %134 : vector<2x1x16x16xf32>
    %136 = arith.addf %103, %135 : vector<2x1x16x16xf32>
    %c34 = arith.constant 34 : index
    %137 = memref.load %arg1[%c34] : memref<160xf32, #tpu.memory_space<smem>>
    %138 = vector.broadcast %137 : f32 to vector<2x1x16x16xf32>
    %139 = arith.mulf %128, %138 : vector<2x1x16x16xf32>
    %140 = arith.addf %107, %139 : vector<2x1x16x16xf32>
    %c35 = arith.constant 35 : index
    %141 = memref.load %arg1[%c35] : memref<160xf32, #tpu.memory_space<smem>>
    %142 = vector.broadcast %141 : f32 to vector<2x1x16x16xf32>
    %143 = arith.mulf %128, %142 : vector<2x1x16x16xf32>
    %144 = arith.addf %111, %143 : vector<2x1x16x16xf32>
    %c36 = arith.constant 36 : index
    %145 = memref.load %arg1[%c36] : memref<160xf32, #tpu.memory_space<smem>>
    %146 = vector.broadcast %145 : f32 to vector<2x1x16x16xf32>
    %147 = arith.mulf %128, %146 : vector<2x1x16x16xf32>
    %148 = arith.addf %115, %147 : vector<2x1x16x16xf32>
    %c37 = arith.constant 37 : index
    %149 = memref.load %arg1[%c37] : memref<160xf32, #tpu.memory_space<smem>>
    %150 = vector.broadcast %149 : f32 to vector<2x1x16x16xf32>
    %151 = arith.mulf %128, %150 : vector<2x1x16x16xf32>
    %152 = arith.addf %119, %151 : vector<2x1x16x16xf32>
    %c38 = arith.constant 38 : index
    %153 = memref.load %arg1[%c38] : memref<160xf32, #tpu.memory_space<smem>>
    %154 = vector.broadcast %153 : f32 to vector<2x1x16x16xf32>
    %155 = arith.mulf %128, %154 : vector<2x1x16x16xf32>
    %156 = arith.addf %123, %155 : vector<2x1x16x16xf32>
    %c39 = arith.constant 39 : index
    %157 = memref.load %arg1[%c39] : memref<160xf32, #tpu.memory_space<smem>>
    %158 = vector.broadcast %157 : f32 to vector<2x1x16x16xf32>
    %159 = arith.mulf %128, %158 : vector<2x1x16x16xf32>
    %160 = arith.addf %127, %159 : vector<2x1x16x16xf32>
    %c0_32 = arith.constant 0 : index
    %c1_33 = arith.constant 1 : index
    %c0_34 = arith.constant 0 : index
    %c1_35 = arith.constant 1 : index
    %161 = vector.load %arg8[%c0_32, %c1_33, %c0_34, %c1_35] : memref<2x4x18x18xf32, #tpu.memory_space<vmem>>, vector<2x1x16x16xf32>
    %c40 = arith.constant 40 : index
    %162 = memref.load %arg1[%c40] : memref<160xf32, #tpu.memory_space<smem>>
    %163 = vector.broadcast %162 : f32 to vector<2x1x16x16xf32>
    %164 = arith.mulf %161, %163 : vector<2x1x16x16xf32>
    %165 = arith.addf %132, %164 : vector<2x1x16x16xf32>
    %c41 = arith.constant 41 : index
    %166 = memref.load %arg1[%c41] : memref<160xf32, #tpu.memory_space<smem>>
    %167 = vector.broadcast %166 : f32 to vector<2x1x16x16xf32>
    %168 = arith.mulf %161, %167 : vector<2x1x16x16xf32>
    %169 = arith.addf %136, %168 : vector<2x1x16x16xf32>
    %c42 = arith.constant 42 : index
    %170 = memref.load %arg1[%c42] : memref<160xf32, #tpu.memory_space<smem>>
    %171 = vector.broadcast %170 : f32 to vector<2x1x16x16xf32>
    %172 = arith.mulf %161, %171 : vector<2x1x16x16xf32>
    %173 = arith.addf %140, %172 : vector<2x1x16x16xf32>
    %c43 = arith.constant 43 : index
    %174 = memref.load %arg1[%c43] : memref<160xf32, #tpu.memory_space<smem>>
    %175 = vector.broadcast %174 : f32 to vector<2x1x16x16xf32>
    %176 = arith.mulf %161, %175 : vector<2x1x16x16xf32>
    %177 = arith.addf %144, %176 : vector<2x1x16x16xf32>
    %c44 = arith.constant 44 : index
    %178 = memref.load %arg1[%c44] : memref<160xf32, #tpu.memory_space<smem>>
    %179 = vector.broadcast %178 : f32 to vector<2x1x16x16xf32>
    %180 = arith.mulf %161, %179 : vector<2x1x16x16xf32>
    %181 = arith.addf %148, %180 : vector<2x1x16x16xf32>
    %c45 = arith.constant 45 : index
    %182 = memref.load %arg1[%c45] : memref<160xf32, #tpu.memory_space<smem>>
    %183 = vector.broadcast %182 : f32 to vector<2x1x16x16xf32>
    %184 = arith.mulf %161, %183 : vector<2x1x16x16xf32>
    %185 = arith.addf %152, %184 : vector<2x1x16x16xf32>
    %c46 = arith.constant 46 : index
    %186 = memref.load %arg1[%c46] : memref<160xf32, #tpu.memory_space<smem>>
    %187 = vector.broadcast %186 : f32 to vector<2x1x16x16xf32>
    %188 = arith.mulf %161, %187 : vector<2x1x16x16xf32>
    %189 = arith.addf %156, %188 : vector<2x1x16x16xf32>
    %c47 = arith.constant 47 : index
    %190 = memref.load %arg1[%c47] : memref<160xf32, #tpu.memory_space<smem>>
    %191 = vector.broadcast %190 : f32 to vector<2x1x16x16xf32>
    %192 = arith.mulf %161, %191 : vector<2x1x16x16xf32>
    %193 = arith.addf %160, %192 : vector<2x1x16x16xf32>
    %c0_36 = arith.constant 0 : index
    %c2_37 = arith.constant 2 : index
    %c0_38 = arith.constant 0 : index
    %c1_39 = arith.constant 1 : index
    %194 = vector.load %arg8[%c0_36, %c2_37, %c0_38, %c1_39] : memref<2x4x18x18xf32, #tpu.memory_space<vmem>>, vector<2x1x16x16xf32>
    %c48 = arith.constant 48 : index
    %195 = memref.load %arg1[%c48] : memref<160xf32, #tpu.memory_space<smem>>
    %196 = vector.broadcast %195 : f32 to vector<2x1x16x16xf32>
    %197 = arith.mulf %194, %196 : vector<2x1x16x16xf32>
    %198 = arith.addf %165, %197 : vector<2x1x16x16xf32>
    %c49 = arith.constant 49 : index
    %199 = memref.load %arg1[%c49] : memref<160xf32, #tpu.memory_space<smem>>
    %200 = vector.broadcast %199 : f32 to vector<2x1x16x16xf32>
    %201 = arith.mulf %194, %200 : vector<2x1x16x16xf32>
    %202 = arith.addf %169, %201 : vector<2x1x16x16xf32>
    %c50 = arith.constant 50 : index
    %203 = memref.load %arg1[%c50] : memref<160xf32, #tpu.memory_space<smem>>
    %204 = vector.broadcast %203 : f32 to vector<2x1x16x16xf32>
    %205 = arith.mulf %194, %204 : vector<2x1x16x16xf32>
    %206 = arith.addf %173, %205 : vector<2x1x16x16xf32>
    %c51 = arith.constant 51 : index
    %207 = memref.load %arg1[%c51] : memref<160xf32, #tpu.memory_space<smem>>
    %208 = vector.broadcast %207 : f32 to vector<2x1x16x16xf32>
    %209 = arith.mulf %194, %208 : vector<2x1x16x16xf32>
    %210 = arith.addf %177, %209 : vector<2x1x16x16xf32>
    %c52 = arith.constant 52 : index
    %211 = memref.load %arg1[%c52] : memref<160xf32, #tpu.memory_space<smem>>
    %212 = vector.broadcast %211 : f32 to vector<2x1x16x16xf32>
    %213 = arith.mulf %194, %212 : vector<2x1x16x16xf32>
    %214 = arith.addf %181, %213 : vector<2x1x16x16xf32>
    %c53 = arith.constant 53 : index
    %215 = memref.load %arg1[%c53] : memref<160xf32, #tpu.memory_space<smem>>
    %216 = vector.broadcast %215 : f32 to vector<2x1x16x16xf32>
    %217 = arith.mulf %194, %216 : vector<2x1x16x16xf32>
    %218 = arith.addf %185, %217 : vector<2x1x16x16xf32>
    %c54 = arith.constant 54 : index
    %219 = memref.load %arg1[%c54] : memref<160xf32, #tpu.memory_space<smem>>
    %220 = vector.broadcast %219 : f32 to vector<2x1x16x16xf32>
    %221 = arith.mulf %194, %220 : vector<2x1x16x16xf32>
    %222 = arith.addf %189, %221 : vector<2x1x16x16xf32>
    %c55 = arith.constant 55 : index
    %223 = memref.load %arg1[%c55] : memref<160xf32, #tpu.memory_space<smem>>
    %224 = vector.broadcast %223 : f32 to vector<2x1x16x16xf32>
    %225 = arith.mulf %194, %224 : vector<2x1x16x16xf32>
    %226 = arith.addf %193, %225 : vector<2x1x16x16xf32>
    %c0_40 = arith.constant 0 : index
    %c3_41 = arith.constant 3 : index
    %c0_42 = arith.constant 0 : index
    %c1_43 = arith.constant 1 : index
    %227 = vector.load %arg8[%c0_40, %c3_41, %c0_42, %c1_43] : memref<2x4x18x18xf32, #tpu.memory_space<vmem>>, vector<2x1x16x16xf32>
    %c56 = arith.constant 56 : index
    %228 = memref.load %arg1[%c56] : memref<160xf32, #tpu.memory_space<smem>>
    %229 = vector.broadcast %228 : f32 to vector<2x1x16x16xf32>
    %230 = arith.mulf %227, %229 : vector<2x1x16x16xf32>
    %231 = arith.addf %198, %230 : vector<2x1x16x16xf32>
    %c57 = arith.constant 57 : index
    %232 = memref.load %arg1[%c57] : memref<160xf32, #tpu.memory_space<smem>>
    %233 = vector.broadcast %232 : f32 to vector<2x1x16x16xf32>
    %234 = arith.mulf %227, %233 : vector<2x1x16x16xf32>
    %235 = arith.addf %202, %234 : vector<2x1x16x16xf32>
    %c58 = arith.constant 58 : index
    %236 = memref.load %arg1[%c58] : memref<160xf32, #tpu.memory_space<smem>>
    %237 = vector.broadcast %236 : f32 to vector<2x1x16x16xf32>
    %238 = arith.mulf %227, %237 : vector<2x1x16x16xf32>
    %239 = arith.addf %206, %238 : vector<2x1x16x16xf32>
    %c59 = arith.constant 59 : index
    %240 = memref.load %arg1[%c59] : memref<160xf32, #tpu.memory_space<smem>>
    %241 = vector.broadcast %240 : f32 to vector<2x1x16x16xf32>
    %242 = arith.mulf %227, %241 : vector<2x1x16x16xf32>
    %243 = arith.addf %210, %242 : vector<2x1x16x16xf32>
    %c60 = arith.constant 60 : index
    %244 = memref.load %arg1[%c60] : memref<160xf32, #tpu.memory_space<smem>>
    %245 = vector.broadcast %244 : f32 to vector<2x1x16x16xf32>
    %246 = arith.mulf %227, %245 : vector<2x1x16x16xf32>
    %247 = arith.addf %214, %246 : vector<2x1x16x16xf32>
    %c61 = arith.constant 61 : index
    %248 = memref.load %arg1[%c61] : memref<160xf32, #tpu.memory_space<smem>>
    %249 = vector.broadcast %248 : f32 to vector<2x1x16x16xf32>
    %250 = arith.mulf %227, %249 : vector<2x1x16x16xf32>
    %251 = arith.addf %218, %250 : vector<2x1x16x16xf32>
    %c62 = arith.constant 62 : index
    %252 = memref.load %arg1[%c62] : memref<160xf32, #tpu.memory_space<smem>>
    %253 = vector.broadcast %252 : f32 to vector<2x1x16x16xf32>
    %254 = arith.mulf %227, %253 : vector<2x1x16x16xf32>
    %255 = arith.addf %222, %254 : vector<2x1x16x16xf32>
    %c63 = arith.constant 63 : index
    %256 = memref.load %arg1[%c63] : memref<160xf32, #tpu.memory_space<smem>>
    %257 = vector.broadcast %256 : f32 to vector<2x1x16x16xf32>
    %258 = arith.mulf %227, %257 : vector<2x1x16x16xf32>
    %259 = arith.addf %226, %258 : vector<2x1x16x16xf32>
    %c0_44 = arith.constant 0 : index
    %c0_45 = arith.constant 0 : index
    %c0_46 = arith.constant 0 : index
    %c2_47 = arith.constant 2 : index
    %260 = vector.load %arg8[%c0_44, %c0_45, %c0_46, %c2_47] : memref<2x4x18x18xf32, #tpu.memory_space<vmem>>, vector<2x1x16x16xf32>
    %c64 = arith.constant 64 : index
    %261 = memref.load %arg1[%c64] : memref<160xf32, #tpu.memory_space<smem>>
    %262 = vector.broadcast %261 : f32 to vector<2x1x16x16xf32>
    %263 = arith.mulf %260, %262 : vector<2x1x16x16xf32>
    %264 = arith.addf %231, %263 : vector<2x1x16x16xf32>
    %c65 = arith.constant 65 : index
    %265 = memref.load %arg1[%c65] : memref<160xf32, #tpu.memory_space<smem>>
    %266 = vector.broadcast %265 : f32 to vector<2x1x16x16xf32>
    %267 = arith.mulf %260, %266 : vector<2x1x16x16xf32>
    %268 = arith.addf %235, %267 : vector<2x1x16x16xf32>
    %c66 = arith.constant 66 : index
    %269 = memref.load %arg1[%c66] : memref<160xf32, #tpu.memory_space<smem>>
    %270 = vector.broadcast %269 : f32 to vector<2x1x16x16xf32>
    %271 = arith.mulf %260, %270 : vector<2x1x16x16xf32>
    %272 = arith.addf %239, %271 : vector<2x1x16x16xf32>
    %c67 = arith.constant 67 : index
    %273 = memref.load %arg1[%c67] : memref<160xf32, #tpu.memory_space<smem>>
    %274 = vector.broadcast %273 : f32 to vector<2x1x16x16xf32>
    %275 = arith.mulf %260, %274 : vector<2x1x16x16xf32>
    %276 = arith.addf %243, %275 : vector<2x1x16x16xf32>
    %c68 = arith.constant 68 : index
    %277 = memref.load %arg1[%c68] : memref<160xf32, #tpu.memory_space<smem>>
    %278 = vector.broadcast %277 : f32 to vector<2x1x16x16xf32>
    %279 = arith.mulf %260, %278 : vector<2x1x16x16xf32>
    %280 = arith.addf %247, %279 : vector<2x1x16x16xf32>
    %c69 = arith.constant 69 : index
    %281 = memref.load %arg1[%c69] : memref<160xf32, #tpu.memory_space<smem>>
    %282 = vector.broadcast %281 : f32 to vector<2x1x16x16xf32>
    %283 = arith.mulf %260, %282 : vector<2x1x16x16xf32>
    %284 = arith.addf %251, %283 : vector<2x1x16x16xf32>
    %c70 = arith.constant 70 : index
    %285 = memref.load %arg1[%c70] : memref<160xf32, #tpu.memory_space<smem>>
    %286 = vector.broadcast %285 : f32 to vector<2x1x16x16xf32>
    %287 = arith.mulf %260, %286 : vector<2x1x16x16xf32>
    %288 = arith.addf %255, %287 : vector<2x1x16x16xf32>
    %c71 = arith.constant 71 : index
    %289 = memref.load %arg1[%c71] : memref<160xf32, #tpu.memory_space<smem>>
    %290 = vector.broadcast %289 : f32 to vector<2x1x16x16xf32>
    %291 = arith.mulf %260, %290 : vector<2x1x16x16xf32>
    %292 = arith.addf %259, %291 : vector<2x1x16x16xf32>
    %c0_48 = arith.constant 0 : index
    %c1_49 = arith.constant 1 : index
    %c0_50 = arith.constant 0 : index
    %c2_51 = arith.constant 2 : index
    %293 = vector.load %arg8[%c0_48, %c1_49, %c0_50, %c2_51] : memref<2x4x18x18xf32, #tpu.memory_space<vmem>>, vector<2x1x16x16xf32>
    %c72 = arith.constant 72 : index
    %294 = memref.load %arg1[%c72] : memref<160xf32, #tpu.memory_space<smem>>
    %295 = vector.broadcast %294 : f32 to vector<2x1x16x16xf32>
    %296 = arith.mulf %293, %295 : vector<2x1x16x16xf32>
    %297 = arith.addf %264, %296 : vector<2x1x16x16xf32>
    %c73 = arith.constant 73 : index
    %298 = memref.load %arg1[%c73] : memref<160xf32, #tpu.memory_space<smem>>
    %299 = vector.broadcast %298 : f32 to vector<2x1x16x16xf32>
    %300 = arith.mulf %293, %299 : vector<2x1x16x16xf32>
    %301 = arith.addf %268, %300 : vector<2x1x16x16xf32>
    %c74 = arith.constant 74 : index
    %302 = memref.load %arg1[%c74] : memref<160xf32, #tpu.memory_space<smem>>
    %303 = vector.broadcast %302 : f32 to vector<2x1x16x16xf32>
    %304 = arith.mulf %293, %303 : vector<2x1x16x16xf32>
    %305 = arith.addf %272, %304 : vector<2x1x16x16xf32>
    %c75 = arith.constant 75 : index
    %306 = memref.load %arg1[%c75] : memref<160xf32, #tpu.memory_space<smem>>
    %307 = vector.broadcast %306 : f32 to vector<2x1x16x16xf32>
    %308 = arith.mulf %293, %307 : vector<2x1x16x16xf32>
    %309 = arith.addf %276, %308 : vector<2x1x16x16xf32>
    %c76 = arith.constant 76 : index
    %310 = memref.load %arg1[%c76] : memref<160xf32, #tpu.memory_space<smem>>
    %311 = vector.broadcast %310 : f32 to vector<2x1x16x16xf32>
    %312 = arith.mulf %293, %311 : vector<2x1x16x16xf32>
    %313 = arith.addf %280, %312 : vector<2x1x16x16xf32>
    %c77 = arith.constant 77 : index
    %314 = memref.load %arg1[%c77] : memref<160xf32, #tpu.memory_space<smem>>
    %315 = vector.broadcast %314 : f32 to vector<2x1x16x16xf32>
    %316 = arith.mulf %293, %315 : vector<2x1x16x16xf32>
    %317 = arith.addf %284, %316 : vector<2x1x16x16xf32>
    %c78 = arith.constant 78 : index
    %318 = memref.load %arg1[%c78] : memref<160xf32, #tpu.memory_space<smem>>
    %319 = vector.broadcast %318 : f32 to vector<2x1x16x16xf32>
    %320 = arith.mulf %293, %319 : vector<2x1x16x16xf32>
    %321 = arith.addf %288, %320 : vector<2x1x16x16xf32>
    %c79 = arith.constant 79 : index
    %322 = memref.load %arg1[%c79] : memref<160xf32, #tpu.memory_space<smem>>
    %323 = vector.broadcast %322 : f32 to vector<2x1x16x16xf32>
    %324 = arith.mulf %293, %323 : vector<2x1x16x16xf32>
    %325 = arith.addf %292, %324 : vector<2x1x16x16xf32>
    %c0_52 = arith.constant 0 : index
    %c2_53 = arith.constant 2 : index
    %c0_54 = arith.constant 0 : index
    %c2_55 = arith.constant 2 : index
    %326 = vector.load %arg8[%c0_52, %c2_53, %c0_54, %c2_55] : memref<2x4x18x18xf32, #tpu.memory_space<vmem>>, vector<2x1x16x16xf32>
    %c80 = arith.constant 80 : index
    %327 = memref.load %arg1[%c80] : memref<160xf32, #tpu.memory_space<smem>>
    %328 = vector.broadcast %327 : f32 to vector<2x1x16x16xf32>
    %329 = arith.mulf %326, %328 : vector<2x1x16x16xf32>
    %330 = arith.addf %297, %329 : vector<2x1x16x16xf32>
    %c81 = arith.constant 81 : index
    %331 = memref.load %arg1[%c81] : memref<160xf32, #tpu.memory_space<smem>>
    %332 = vector.broadcast %331 : f32 to vector<2x1x16x16xf32>
    %333 = arith.mulf %326, %332 : vector<2x1x16x16xf32>
    %334 = arith.addf %301, %333 : vector<2x1x16x16xf32>
    %c82 = arith.constant 82 : index
    %335 = memref.load %arg1[%c82] : memref<160xf32, #tpu.memory_space<smem>>
    %336 = vector.broadcast %335 : f32 to vector<2x1x16x16xf32>
    %337 = arith.mulf %326, %336 : vector<2x1x16x16xf32>
    %338 = arith.addf %305, %337 : vector<2x1x16x16xf32>
    %c83 = arith.constant 83 : index
    %339 = memref.load %arg1[%c83] : memref<160xf32, #tpu.memory_space<smem>>
    %340 = vector.broadcast %339 : f32 to vector<2x1x16x16xf32>
    %341 = arith.mulf %326, %340 : vector<2x1x16x16xf32>
    %342 = arith.addf %309, %341 : vector<2x1x16x16xf32>
    %c84 = arith.constant 84 : index
    %343 = memref.load %arg1[%c84] : memref<160xf32, #tpu.memory_space<smem>>
    %344 = vector.broadcast %343 : f32 to vector<2x1x16x16xf32>
    %345 = arith.mulf %326, %344 : vector<2x1x16x16xf32>
    %346 = arith.addf %313, %345 : vector<2x1x16x16xf32>
    %c85 = arith.constant 85 : index
    %347 = memref.load %arg1[%c85] : memref<160xf32, #tpu.memory_space<smem>>
    %348 = vector.broadcast %347 : f32 to vector<2x1x16x16xf32>
    %349 = arith.mulf %326, %348 : vector<2x1x16x16xf32>
    %350 = arith.addf %317, %349 : vector<2x1x16x16xf32>
    %c86 = arith.constant 86 : index
    %351 = memref.load %arg1[%c86] : memref<160xf32, #tpu.memory_space<smem>>
    %352 = vector.broadcast %351 : f32 to vector<2x1x16x16xf32>
    %353 = arith.mulf %326, %352 : vector<2x1x16x16xf32>
    %354 = arith.addf %321, %353 : vector<2x1x16x16xf32>
    %c87 = arith.constant 87 : index
    %355 = memref.load %arg1[%c87] : memref<160xf32, #tpu.memory_space<smem>>
    %356 = vector.broadcast %355 : f32 to vector<2x1x16x16xf32>
    %357 = arith.mulf %326, %356 : vector<2x1x16x16xf32>
    %358 = arith.addf %325, %357 : vector<2x1x16x16xf32>
    %c0_56 = arith.constant 0 : index
    %c3_57 = arith.constant 3 : index
    %c0_58 = arith.constant 0 : index
    %c2_59 = arith.constant 2 : index
    %359 = vector.load %arg8[%c0_56, %c3_57, %c0_58, %c2_59] : memref<2x4x18x18xf32, #tpu.memory_space<vmem>>, vector<2x1x16x16xf32>
    %c88 = arith.constant 88 : index
    %360 = memref.load %arg1[%c88] : memref<160xf32, #tpu.memory_space<smem>>
    %361 = vector.broadcast %360 : f32 to vector<2x1x16x16xf32>
    %362 = arith.mulf %359, %361 : vector<2x1x16x16xf32>
    %363 = arith.addf %330, %362 : vector<2x1x16x16xf32>
    %c89 = arith.constant 89 : index
    %364 = memref.load %arg1[%c89] : memref<160xf32, #tpu.memory_space<smem>>
    %365 = vector.broadcast %364 : f32 to vector<2x1x16x16xf32>
    %366 = arith.mulf %359, %365 : vector<2x1x16x16xf32>
    %367 = arith.addf %334, %366 : vector<2x1x16x16xf32>
    %c90 = arith.constant 90 : index
    %368 = memref.load %arg1[%c90] : memref<160xf32, #tpu.memory_space<smem>>
    %369 = vector.broadcast %368 : f32 to vector<2x1x16x16xf32>
    %370 = arith.mulf %359, %369 : vector<2x1x16x16xf32>
    %371 = arith.addf %338, %370 : vector<2x1x16x16xf32>
    %c91 = arith.constant 91 : index
    %372 = memref.load %arg1[%c91] : memref<160xf32, #tpu.memory_space<smem>>
    %373 = vector.broadcast %372 : f32 to vector<2x1x16x16xf32>
    %374 = arith.mulf %359, %373 : vector<2x1x16x16xf32>
    %375 = arith.addf %342, %374 : vector<2x1x16x16xf32>
    %c92 = arith.constant 92 : index
    %376 = memref.load %arg1[%c92] : memref<160xf32, #tpu.memory_space<smem>>
    %377 = vector.broadcast %376 : f32 to vector<2x1x16x16xf32>
    %378 = arith.mulf %359, %377 : vector<2x1x16x16xf32>
    %379 = arith.addf %346, %378 : vector<2x1x16x16xf32>
    %c93 = arith.constant 93 : index
    %380 = memref.load %arg1[%c93] : memref<160xf32, #tpu.memory_space<smem>>
    %381 = vector.broadcast %380 : f32 to vector<2x1x16x16xf32>
    %382 = arith.mulf %359, %381 : vector<2x1x16x16xf32>
    %383 = arith.addf %350, %382 : vector<2x1x16x16xf32>
    %c94 = arith.constant 94 : index
    %384 = memref.load %arg1[%c94] : memref<160xf32, #tpu.memory_space<smem>>
    %385 = vector.broadcast %384 : f32 to vector<2x1x16x16xf32>
    %386 = arith.mulf %359, %385 : vector<2x1x16x16xf32>
    %387 = arith.addf %354, %386 : vector<2x1x16x16xf32>
    %c95 = arith.constant 95 : index
    %388 = memref.load %arg1[%c95] : memref<160xf32, #tpu.memory_space<smem>>
    %389 = vector.broadcast %388 : f32 to vector<2x1x16x16xf32>
    %390 = arith.mulf %359, %389 : vector<2x1x16x16xf32>
    %391 = arith.addf %358, %390 : vector<2x1x16x16xf32>
    %c0_60 = arith.constant 0 : index
    %c0_61 = arith.constant 0 : index
    %c1_62 = arith.constant 1 : index
    %c0_63 = arith.constant 0 : index
    %392 = vector.load %arg8[%c0_60, %c0_61, %c1_62, %c0_63] : memref<2x4x18x18xf32, #tpu.memory_space<vmem>>, vector<2x1x16x16xf32>
    %c96 = arith.constant 96 : index
    %393 = memref.load %arg1[%c96] : memref<160xf32, #tpu.memory_space<smem>>
    %394 = vector.broadcast %393 : f32 to vector<2x1x16x16xf32>
    %395 = arith.mulf %392, %394 : vector<2x1x16x16xf32>
    %396 = arith.addf %363, %395 : vector<2x1x16x16xf32>
    %c97 = arith.constant 97 : index
    %397 = memref.load %arg1[%c97] : memref<160xf32, #tpu.memory_space<smem>>
    %398 = vector.broadcast %397 : f32 to vector<2x1x16x16xf32>
    %399 = arith.mulf %392, %398 : vector<2x1x16x16xf32>
    %400 = arith.addf %367, %399 : vector<2x1x16x16xf32>
    %c98 = arith.constant 98 : index
    %401 = memref.load %arg1[%c98] : memref<160xf32, #tpu.memory_space<smem>>
    %402 = vector.broadcast %401 : f32 to vector<2x1x16x16xf32>
    %403 = arith.mulf %392, %402 : vector<2x1x16x16xf32>
    %404 = arith.addf %371, %403 : vector<2x1x16x16xf32>
    %c99 = arith.constant 99 : index
    %405 = memref.load %arg1[%c99] : memref<160xf32, #tpu.memory_space<smem>>
    %406 = vector.broadcast %405 : f32 to vector<2x1x16x16xf32>
    %407 = arith.mulf %392, %406 : vector<2x1x16x16xf32>
    %408 = arith.addf %375, %407 : vector<2x1x16x16xf32>
    %c100 = arith.constant 100 : index
    %409 = memref.load %arg1[%c100] : memref<160xf32, #tpu.memory_space<smem>>
    %410 = vector.broadcast %409 : f32 to vector<2x1x16x16xf32>
    %411 = arith.mulf %392, %410 : vector<2x1x16x16xf32>
    %412 = arith.addf %379, %411 : vector<2x1x16x16xf32>
    %c101 = arith.constant 101 : index
    %413 = memref.load %arg1[%c101] : memref<160xf32, #tpu.memory_space<smem>>
    %414 = vector.broadcast %413 : f32 to vector<2x1x16x16xf32>
    %415 = arith.mulf %392, %414 : vector<2x1x16x16xf32>
    %416 = arith.addf %383, %415 : vector<2x1x16x16xf32>
    %c102 = arith.constant 102 : index
    %417 = memref.load %arg1[%c102] : memref<160xf32, #tpu.memory_space<smem>>
    %418 = vector.broadcast %417 : f32 to vector<2x1x16x16xf32>
    %419 = arith.mulf %392, %418 : vector<2x1x16x16xf32>
    %420 = arith.addf %387, %419 : vector<2x1x16x16xf32>
    %c103 = arith.constant 103 : index
    %421 = memref.load %arg1[%c103] : memref<160xf32, #tpu.memory_space<smem>>
    %422 = vector.broadcast %421 : f32 to vector<2x1x16x16xf32>
    %423 = arith.mulf %392, %422 : vector<2x1x16x16xf32>
    %424 = arith.addf %391, %423 : vector<2x1x16x16xf32>
    %c0_64 = arith.constant 0 : index
    %c1_65 = arith.constant 1 : index
    %c1_66 = arith.constant 1 : index
    %c0_67 = arith.constant 0 : index
    %425 = vector.load %arg8[%c0_64, %c1_65, %c1_66, %c0_67] : memref<2x4x18x18xf32, #tpu.memory_space<vmem>>, vector<2x1x16x16xf32>
    %c104 = arith.constant 104 : index
    %426 = memref.load %arg1[%c104] : memref<160xf32, #tpu.memory_space<smem>>
    %427 = vector.broadcast %426 : f32 to vector<2x1x16x16xf32>
    %428 = arith.mulf %425, %427 : vector<2x1x16x16xf32>
    %429 = arith.addf %396, %428 : vector<2x1x16x16xf32>
    %c105 = arith.constant 105 : index
    %430 = memref.load %arg1[%c105] : memref<160xf32, #tpu.memory_space<smem>>
    %431 = vector.broadcast %430 : f32 to vector<2x1x16x16xf32>
    %432 = arith.mulf %425, %431 : vector<2x1x16x16xf32>
    %433 = arith.addf %400, %432 : vector<2x1x16x16xf32>
    %c106 = arith.constant 106 : index
    %434 = memref.load %arg1[%c106] : memref<160xf32, #tpu.memory_space<smem>>
    %435 = vector.broadcast %434 : f32 to vector<2x1x16x16xf32>
    %436 = arith.mulf %425, %435 : vector<2x1x16x16xf32>
    %437 = arith.addf %404, %436 : vector<2x1x16x16xf32>
    %c107 = arith.constant 107 : index
    %438 = memref.load %arg1[%c107] : memref<160xf32, #tpu.memory_space<smem>>
    %439 = vector.broadcast %438 : f32 to vector<2x1x16x16xf32>
    %440 = arith.mulf %425, %439 : vector<2x1x16x16xf32>
    %441 = arith.addf %408, %440 : vector<2x1x16x16xf32>
    %c108 = arith.constant 108 : index
    %442 = memref.load %arg1[%c108] : memref<160xf32, #tpu.memory_space<smem>>
    %443 = vector.broadcast %442 : f32 to vector<2x1x16x16xf32>
    %444 = arith.mulf %425, %443 : vector<2x1x16x16xf32>
    %445 = arith.addf %412, %444 : vector<2x1x16x16xf32>
    %c109 = arith.constant 109 : index
    %446 = memref.load %arg1[%c109] : memref<160xf32, #tpu.memory_space<smem>>
    %447 = vector.broadcast %446 : f32 to vector<2x1x16x16xf32>
    %448 = arith.mulf %425, %447 : vector<2x1x16x16xf32>
    %449 = arith.addf %416, %448 : vector<2x1x16x16xf32>
    %c110 = arith.constant 110 : index
    %450 = memref.load %arg1[%c110] : memref<160xf32, #tpu.memory_space<smem>>
    %451 = vector.broadcast %450 : f32 to vector<2x1x16x16xf32>
    %452 = arith.mulf %425, %451 : vector<2x1x16x16xf32>
    %453 = arith.addf %420, %452 : vector<2x1x16x16xf32>
    %c111 = arith.constant 111 : index
    %454 = memref.load %arg1[%c111] : memref<160xf32, #tpu.memory_space<smem>>
    %455 = vector.broadcast %454 : f32 to vector<2x1x16x16xf32>
    %456 = arith.mulf %425, %455 : vector<2x1x16x16xf32>
    %457 = arith.addf %424, %456 : vector<2x1x16x16xf32>
    %c0_68 = arith.constant 0 : index
    %c2_69 = arith.constant 2 : index
    %c1_70 = arith.constant 1 : index
    %c0_71 = arith.constant 0 : index
    %458 = vector.load %arg8[%c0_68, %c2_69, %c1_70, %c0_71] : memref<2x4x18x18xf32, #tpu.memory_space<vmem>>, vector<2x1x16x16xf32>
    %c112 = arith.constant 112 : index
    %459 = memref.load %arg1[%c112] : memref<160xf32, #tpu.memory_space<smem>>
    %460 = vector.broadcast %459 : f32 to vector<2x1x16x16xf32>
    %461 = arith.mulf %458, %460 : vector<2x1x16x16xf32>
    %462 = arith.addf %429, %461 : vector<2x1x16x16xf32>
    %c113 = arith.constant 113 : index
    %463 = memref.load %arg1[%c113] : memref<160xf32, #tpu.memory_space<smem>>
    %464 = vector.broadcast %463 : f32 to vector<2x1x16x16xf32>
    %465 = arith.mulf %458, %464 : vector<2x1x16x16xf32>
    %466 = arith.addf %433, %465 : vector<2x1x16x16xf32>
    %c114 = arith.constant 114 : index
    %467 = memref.load %arg1[%c114] : memref<160xf32, #tpu.memory_space<smem>>
    %468 = vector.broadcast %467 : f32 to vector<2x1x16x16xf32>
    %469 = arith.mulf %458, %468 : vector<2x1x16x16xf32>
    %470 = arith.addf %437, %469 : vector<2x1x16x16xf32>
    %c115 = arith.constant 115 : index
    %471 = memref.load %arg1[%c115] : memref<160xf32, #tpu.memory_space<smem>>
    %472 = vector.broadcast %471 : f32 to vector<2x1x16x16xf32>
    %473 = arith.mulf %458, %472 : vector<2x1x16x16xf32>
    %474 = arith.addf %441, %473 : vector<2x1x16x16xf32>
    %c116 = arith.constant 116 : index
    %475 = memref.load %arg1[%c116] : memref<160xf32, #tpu.memory_space<smem>>
    %476 = vector.broadcast %475 : f32 to vector<2x1x16x16xf32>
    %477 = arith.mulf %458, %476 : vector<2x1x16x16xf32>
    %478 = arith.addf %445, %477 : vector<2x1x16x16xf32>
    %c117 = arith.constant 117 : index
    %479 = memref.load %arg1[%c117] : memref<160xf32, #tpu.memory_space<smem>>
    %480 = vector.broadcast %479 : f32 to vector<2x1x16x16xf32>
    %481 = arith.mulf %458, %480 : vector<2x1x16x16xf32>
    %482 = arith.addf %449, %481 : vector<2x1x16x16xf32>
    %c118 = arith.constant 118 : index
    %483 = memref.load %arg1[%c118] : memref<160xf32, #tpu.memory_space<smem>>
    %484 = vector.broadcast %483 : f32 to vector<2x1x16x16xf32>
    %485 = arith.mulf %458, %484 : vector<2x1x16x16xf32>
    %486 = arith.addf %453, %485 : vector<2x1x16x16xf32>
    %c119 = arith.constant 119 : index
    %487 = memref.load %arg1[%c119] : memref<160xf32, #tpu.memory_space<smem>>
    %488 = vector.broadcast %487 : f32 to vector<2x1x16x16xf32>
    %489 = arith.mulf %458, %488 : vector<2x1x16x16xf32>
    %490 = arith.addf %457, %489 : vector<2x1x16x16xf32>
    %c0_72 = arith.constant 0 : index
    %c3_73 = arith.constant 3 : index
    %c1_74 = arith.constant 1 : index
    %c0_75 = arith.constant 0 : index
    %491 = vector.load %arg8[%c0_72, %c3_73, %c1_74, %c0_75] : memref<2x4x18x18xf32, #tpu.memory_space<vmem>>, vector<2x1x16x16xf32>
    %c120 = arith.constant 120 : index
    %492 = memref.load %arg1[%c120] : memref<160xf32, #tpu.memory_space<smem>>
    %493 = vector.broadcast %492 : f32 to vector<2x1x16x16xf32>
    %494 = arith.mulf %491, %493 : vector<2x1x16x16xf32>
    %495 = arith.addf %462, %494 : vector<2x1x16x16xf32>
    %c121 = arith.constant 121 : index
    %496 = memref.load %arg1[%c121] : memref<160xf32, #tpu.memory_space<smem>>
    %497 = vector.broadcast %496 : f32 to vector<2x1x16x16xf32>
    %498 = arith.mulf %491, %497 : vector<2x1x16x16xf32>
    %499 = arith.addf %466, %498 : vector<2x1x16x16xf32>
    %c122 = arith.constant 122 : index
    %500 = memref.load %arg1[%c122] : memref<160xf32, #tpu.memory_space<smem>>
    %501 = vector.broadcast %500 : f32 to vector<2x1x16x16xf32>
    %502 = arith.mulf %491, %501 : vector<2x1x16x16xf32>
    %503 = arith.addf %470, %502 : vector<2x1x16x16xf32>
    %c123 = arith.constant 123 : index
    %504 = memref.load %arg1[%c123] : memref<160xf32, #tpu.memory_space<smem>>
    %505 = vector.broadcast %504 : f32 to vector<2x1x16x16xf32>
    %506 = arith.mulf %491, %505 : vector<2x1x16x16xf32>
    %507 = arith.addf %474, %506 : vector<2x1x16x16xf32>
    %c124 = arith.constant 124 : index
    %508 = memref.load %arg1[%c124] : memref<160xf32, #tpu.memory_space<smem>>
    %509 = vector.broadcast %508 : f32 to vector<2x1x16x16xf32>
    %510 = arith.mulf %491, %509 : vector<2x1x16x16xf32>
    %511 = arith.addf %478, %510 : vector<2x1x16x16xf32>
    %c125 = arith.constant 125 : index
    %512 = memref.load %arg1[%c125] : memref<160xf32, #tpu.memory_space<smem>>
    %513 = vector.broadcast %512 : f32 to vector<2x1x16x16xf32>
    %514 = arith.mulf %491, %513 : vector<2x1x16x16xf32>
    %515 = arith.addf %482, %514 : vector<2x1x16x16xf32>
    %c126 = arith.constant 126 : index
    %516 = memref.load %arg1[%c126] : memref<160xf32, #tpu.memory_space<smem>>
    %517 = vector.broadcast %516 : f32 to vector<2x1x16x16xf32>
    %518 = arith.mulf %491, %517 : vector<2x1x16x16xf32>
    %519 = arith.addf %486, %518 : vector<2x1x16x16xf32>
    %c127 = arith.constant 127 : index
    %520 = memref.load %arg1[%c127] : memref<160xf32, #tpu.memory_space<smem>>
    %521 = vector.broadcast %520 : f32 to vector<2x1x16x16xf32>
    %522 = arith.mulf %491, %521 : vector<2x1x16x16xf32>
    %523 = arith.addf %490, %522 : vector<2x1x16x16xf32>
    %c0_76 = arith.constant 0 : index
    %c0_77 = arith.constant 0 : index
    %c1_78 = arith.constant 1 : index
    %c1_79 = arith.constant 1 : index
    %524 = vector.load %arg8[%c0_76, %c0_77, %c1_78, %c1_79] : memref<2x4x18x18xf32, #tpu.memory_space<vmem>>, vector<2x1x16x16xf32>
    %c128 = arith.constant 128 : index
    %525 = memref.load %arg1[%c128] : memref<160xf32, #tpu.memory_space<smem>>
    %526 = vector.broadcast %525 : f32 to vector<2x1x16x16xf32>
    %527 = arith.mulf %524, %526 : vector<2x1x16x16xf32>
    %528 = arith.addf %495, %527 : vector<2x1x16x16xf32>
    %c129 = arith.constant 129 : index
    %529 = memref.load %arg1[%c129] : memref<160xf32, #tpu.memory_space<smem>>
    %530 = vector.broadcast %529 : f32 to vector<2x1x16x16xf32>
    %531 = arith.mulf %524, %530 : vector<2x1x16x16xf32>
    %532 = arith.addf %499, %531 : vector<2x1x16x16xf32>
    %c130 = arith.constant 130 : index
    %533 = memref.load %arg1[%c130] : memref<160xf32, #tpu.memory_space<smem>>
    %534 = vector.broadcast %533 : f32 to vector<2x1x16x16xf32>
    %535 = arith.mulf %524, %534 : vector<2x1x16x16xf32>
    %536 = arith.addf %503, %535 : vector<2x1x16x16xf32>
    %c131 = arith.constant 131 : index
    %537 = memref.load %arg1[%c131] : memref<160xf32, #tpu.memory_space<smem>>
    %538 = vector.broadcast %537 : f32 to vector<2x1x16x16xf32>
    %539 = arith.mulf %524, %538 : vector<2x1x16x16xf32>
    %540 = arith.addf %507, %539 : vector<2x1x16x16xf32>
    %c132 = arith.constant 132 : index
    %541 = memref.load %arg1[%c132] : memref<160xf32, #tpu.memory_space<smem>>
    %542 = vector.broadcast %541 : f32 to vector<2x1x16x16xf32>
    %543 = arith.mulf %524, %542 : vector<2x1x16x16xf32>
    %544 = arith.addf %511, %543 : vector<2x1x16x16xf32>
    %c133 = arith.constant 133 : index
    %545 = memref.load %arg1[%c133] : memref<160xf32, #tpu.memory_space<smem>>
    %546 = vector.broadcast %545 : f32 to vector<2x1x16x16xf32>
    %547 = arith.mulf %524, %546 : vector<2x1x16x16xf32>
    %548 = arith.addf %515, %547 : vector<2x1x16x16xf32>
    %c134 = arith.constant 134 : index
    %549 = memref.load %arg1[%c134] : memref<160xf32, #tpu.memory_space<smem>>
    %550 = vector.broadcast %549 : f32 to vector<2x1x16x16xf32>
    %551 = arith.mulf %524, %550 : vector<2x1x16x16xf32>
    %552 = arith.addf %519, %551 : vector<2x1x16x16xf32>
    %c135 = arith.constant 135 : index
    %553 = memref.load %arg1[%c135] : memref<160xf32, #tpu.memory_space<smem>>
    %554 = vector.broadcast %553 : f32 to vector<2x1x16x16xf32>
    %555 = arith.mulf %524, %554 : vector<2x1x16x16xf32>
    %556 = arith.addf %523, %555 : vector<2x1x16x16xf32>
    %c0_80 = arith.constant 0 : index
    %c1_81 = arith.constant 1 : index
    %c1_82 = arith.constant 1 : index
    %c1_83 = arith.constant 1 : index
    %557 = vector.load %arg8[%c0_80, %c1_81, %c1_82, %c1_83] : memref<2x4x18x18xf32, #tpu.memory_space<vmem>>, vector<2x1x16x16xf32>
    %c136 = arith.constant 136 : index
    %558 = memref.load %arg1[%c136] : memref<160xf32, #tpu.memory_space<smem>>
    %559 = vector.broadcast %558 : f32 to vector<2x1x16x16xf32>
    %560 = arith.mulf %557, %559 : vector<2x1x16x16xf32>
    %561 = arith.addf %528, %560 : vector<2x1x16x16xf32>
    %c137 = arith.constant 137 : index
    %562 = memref.load %arg1[%c137] : memref<160xf32, #tpu.memory_space<smem>>
    %563 = vector.broadcast %562 : f32 to vector<2x1x16x16xf32>
    %564 = arith.mulf %557, %563 : vector<2x1x16x16xf32>
    %565 = arith.addf %532, %564 : vector<2x1x16x16xf32>
    %c138 = arith.constant 138 : index
    %566 = memref.load %arg1[%c138] : memref<160xf32, #tpu.memory_space<smem>>
    %567 = vector.broadcast %566 : f32 to vector<2x1x16x16xf32>
    %568 = arith.mulf %557, %567 : vector<2x1x16x16xf32>
    %569 = arith.addf %536, %568 : vector<2x1x16x16xf32>
    %c139 = arith.constant 139 : index
    %570 = memref.load %arg1[%c139] : memref<160xf32, #tpu.memory_space<smem>>
    %571 = vector.broadcast %570 : f32 to vector<2x1x16x16xf32>
    %572 = arith.mulf %557, %571 : vector<2x1x16x16xf32>
    %573 = arith.addf %540, %572 : vector<2x1x16x16xf32>
    %c140 = arith.constant 140 : index
    %574 = memref.load %arg1[%c140] : memref<160xf32, #tpu.memory_space<smem>>
    %575 = vector.broadcast %574 : f32 to vector<2x1x16x16xf32>
    %576 = arith.mulf %557, %575 : vector<2x1x16x16xf32>
    %577 = arith.addf %544, %576 : vector<2x1x16x16xf32>
    %c141 = arith.constant 141 : index
    %578 = memref.load %arg1[%c141] : memref<160xf32, #tpu.memory_space<smem>>
    %579 = vector.broadcast %578 : f32 to vector<2x1x16x16xf32>
    %580 = arith.mulf %557, %579 : vector<2x1x16x16xf32>
    %581 = arith.addf %548, %580 : vector<2x1x16x16xf32>
    %c142 = arith.constant 142 : index
    %582 = memref.load %arg1[%c142] : memref<160xf32, #tpu.memory_space<smem>>
    %583 = vector.broadcast %582 : f32 to vector<2x1x16x16xf32>
    %584 = arith.mulf %557, %583 : vector<2x1x16x16xf32>
    %585 = arith.addf %552, %584 : vector<2x1x16x16xf32>
    %c143 = arith.constant 143 : index
    %586 = memref.load %arg1[%c143] : memref<160xf32, #tpu.memory_space<smem>>
    %587 = vector.broadcast %586 : f32 to vector<2x1x16x16xf32>
    %588 = arith.mulf %557, %587 : vector<2x1x16x16xf32>
    %589 = arith.addf %556, %588 : vector<2x1x16x16xf32>
    %c0_84 = arith.constant 0 : index
    %c2_85 = arith.constant 2 : index
    %c1_86 = arith.constant 1 : index
    %c1_87 = arith.constant 1 : index
    %590 = vector.load %arg8[%c0_84, %c2_85, %c1_86, %c1_87] : memref<2x4x18x18xf32, #tpu.memory_space<vmem>>, vector<2x1x16x16xf32>
    %c144 = arith.constant 144 : index
    %591 = memref.load %arg1[%c144] : memref<160xf32, #tpu.memory_space<smem>>
    %592 = vector.broadcast %591 : f32 to vector<2x1x16x16xf32>
    %593 = arith.mulf %590, %592 : vector<2x1x16x16xf32>
    %594 = arith.addf %561, %593 : vector<2x1x16x16xf32>
    %c145 = arith.constant 145 : index
    %595 = memref.load %arg1[%c145] : memref<160xf32, #tpu.memory_space<smem>>
    %596 = vector.broadcast %595 : f32 to vector<2x1x16x16xf32>
    %597 = arith.mulf %590, %596 : vector<2x1x16x16xf32>
    %598 = arith.addf %565, %597 : vector<2x1x16x16xf32>
    %c146 = arith.constant 146 : index
    %599 = memref.load %arg1[%c146] : memref<160xf32, #tpu.memory_space<smem>>
    %600 = vector.broadcast %599 : f32 to vector<2x1x16x16xf32>
    %601 = arith.mulf %590, %600 : vector<2x1x16x16xf32>
    %602 = arith.addf %569, %601 : vector<2x1x16x16xf32>
    %c147 = arith.constant 147 : index
    %603 = memref.load %arg1[%c147] : memref<160xf32, #tpu.memory_space<smem>>
    %604 = vector.broadcast %603 : f32 to vector<2x1x16x16xf32>
    %605 = arith.mulf %590, %604 : vector<2x1x16x16xf32>
    %606 = arith.addf %573, %605 : vector<2x1x16x16xf32>
    %c148 = arith.constant 148 : index
    %607 = memref.load %arg1[%c148] : memref<160xf32, #tpu.memory_space<smem>>
    %608 = vector.broadcast %607 : f32 to vector<2x1x16x16xf32>
    %609 = arith.mulf %590, %608 : vector<2x1x16x16xf32>
    %610 = arith.addf %577, %609 : vector<2x1x16x16xf32>
    %c149 = arith.constant 149 : index
    %611 = memref.load %arg1[%c149] : memref<160xf32, #tpu.memory_space<smem>>
    %612 = vector.broadcast %611 : f32 to vector<2x1x16x16xf32>
    %613 = arith.mulf %590, %612 : vector<2x1x16x16xf32>
    %614 = arith.addf %581, %613 : vector<2x1x16x16xf32>
    %c150 = arith.constant 150 : index
    %615 = memref.load %arg1[%c150] : memref<160xf32, #tpu.memory_space<smem>>
    %616 = vector.broadcast %615 : f32 to vector<2x1x16x16xf32>
    %617 = arith.mulf %590, %616 : vector<2x1x16x16xf32>
    %618 = arith.addf %585, %617 : vector<2x1x16x16xf32>
    %c151 = arith.constant 151 : index
    %619 = memref.load %arg1[%c151] : memref<160xf32, #tpu.memory_space<smem>>
    %620 = vector.broadcast %619 : f32 to vector<2x1x16x16xf32>
    %621 = arith.mulf %590, %620 : vector<2x1x16x16xf32>
    %622 = arith.addf %589, %621 : vector<2x1x16x16xf32>
    %c0_88 = arith.constant 0 : index
    %c3_89 = arith.constant 3 : index
    %c1_90 = arith.constant 1 : index
    %c1_91 = arith.constant 1 : index
    %623 = vector.load %arg8[%c0_88, %c3_89, %c1_90, %c1_91] : memref<2x4x18x18xf32, #tpu.memory_space<vmem>>, vector<2x1x16x16xf32>
    %c152 = arith.constant 152 : index
    %624 = memref.load %arg1[%c152] : memref<160xf32, #tpu.memory_space<smem>>
    %625 = vector.broadcast %624 : f32 to vector<2x1x16x16xf32>
    %626 = arith.mulf %623, %625 : vector<2x1x16x16xf32>
    %627 = arith.addf %594, %626 : vector<2x1x16x16xf32>
    %c153 = arith.constant 153 : index
    %628 = memref.load %arg1[%c153] : memref<160xf32, #tpu.memory_space<smem>>
    %629 = vector.broadcast %628 : f32 to vector<2x1x16x16xf32>
    %630 = arith.mulf %623, %629 : vector<2x1x16x16xf32>
    %631 = arith.addf %598, %630 : vector<2x1x16x16xf32>
    %c154 = arith.constant 154 : index
    %632 = memref.load %arg1[%c154] : memref<160xf32, #tpu.memory_space<smem>>
    %633 = vector.broadcast %632 : f32 to vector<2x1x16x16xf32>
    %634 = arith.mulf %623, %633 : vector<2x1x16x16xf32>
    %635 = arith.addf %602, %634 : vector<2x1x16x16xf32>
    %c155 = arith.constant 155 : index
    %636 = memref.load %arg1[%c155] : memref<160xf32, #tpu.memory_space<smem>>
    %637 = vector.broadcast %636 : f32 to vector<2x1x16x16xf32>
    %638 = arith.mulf %623, %637 : vector<2x1x16x16xf32>
    %639 = arith.addf %606, %638 : vector<2x1x16x16xf32>
    %c156 = arith.constant 156 : index
    %640 = memref.load %arg1[%c156] : memref<160xf32, #tpu.memory_space<smem>>
    %641 = vector.broadcast %640 : f32 to vector<2x1x16x16xf32>
    %642 = arith.mulf %623, %641 : vector<2x1x16x16xf32>
    %643 = arith.addf %610, %642 : vector<2x1x16x16xf32>
    %c157 = arith.constant 157 : index
    %644 = memref.load %arg1[%c157] : memref<160xf32, #tpu.memory_space<smem>>
    %645 = vector.broadcast %644 : f32 to vector<2x1x16x16xf32>
    %646 = arith.mulf %623, %645 : vector<2x1x16x16xf32>
    %647 = arith.addf %614, %646 : vector<2x1x16x16xf32>
    %c158 = arith.constant 158 : index
    %648 = memref.load %arg1[%c158] : memref<160xf32, #tpu.memory_space<smem>>
    %649 = vector.broadcast %648 : f32 to vector<2x1x16x16xf32>
    %650 = arith.mulf %623, %649 : vector<2x1x16x16xf32>
    %651 = arith.addf %618, %650 : vector<2x1x16x16xf32>
    %c159 = arith.constant 159 : index
    %652 = memref.load %arg1[%c159] : memref<160xf32, #tpu.memory_space<smem>>
    %653 = vector.broadcast %652 : f32 to vector<2x1x16x16xf32>
    %654 = arith.mulf %623, %653 : vector<2x1x16x16xf32>
    %655 = arith.addf %622, %654 : vector<2x1x16x16xf32>
    %cst_92 = arith.constant 0.000000e+00 : f32
    %656 = vector.broadcast %cst_92 : f32 to vector<2x8x18x18xf32>
    %c0_93 = arith.constant 0 : index
    %c0_94 = arith.constant 0 : index
    %c0_95 = arith.constant 0 : index
    %c0_96 = arith.constant 0 : index
    %657 = vector.load %arg9[%c0_93, %c0_94, %c0_95, %c0_96] : memref<2x8x18x18xf32, #tpu.memory_space<vmem>>, vector<2x8x18x18xf32>
    tpu.vector_store %arg9[%c0_93, %c0_94, %c0_95, %c0_96], %656 {strides = array<i32>} : memref<2x8x18x18xf32, #tpu.memory_space<vmem>>, vector<2x8x18x18xf32>,
    %c0_97 = arith.constant 0 : index
    %658 = memref.load %arg2[%c0_97] : memref<8xf32, #tpu.memory_space<smem>>
    %c0_98 = arith.constant 0 : index
    %659 = memref.load %arg3[%c0_98] : memref<8xf32, #tpu.memory_space<smem>>
    %cst_99 = arith.constant dense<0.000000e+00> : vector<2x1x16xf32>
    %660 = vector.multi_reduction <add>, %627, %cst_99 [3] : vector<2x1x16x16xf32> to vector<2x1x16xf32>
    %661 = vector.shape_cast %660 : vector<2x1x16xf32> to vector<2x1x16x1xf32>
    %cst_100 = arith.constant dense<0.000000e+00> : vector<1xf32>
    %662 = vector.multi_reduction <add>, %661, %cst_100 [0, 1, 2] : vector<2x1x16x1xf32> to vector<1xf32>
    %663 = vector.shape_cast %662 : vector<1xf32> to vector<1x1x1x1xf32>
    %cst_101 = arith.constant 0.001953125 : f32
    %664 = vector.broadcast %cst_101 : f32 to vector<1x1x1x1xf32>
    %665 = arith.mulf %663, %664 : vector<1x1x1x1xf32>
    %666 = arith.mulf %627, %627 : vector<2x1x16x16xf32>
    %cst_102 = arith.constant dense<0.000000e+00> : vector<2x1x16xf32>
    %667 = vector.multi_reduction <add>, %666, %cst_102 [3] : vector<2x1x16x16xf32> to vector<2x1x16xf32>
    %668 = vector.shape_cast %667 : vector<2x1x16xf32> to vector<2x1x16x1xf32>
    %cst_103 = arith.constant dense<0.000000e+00> : vector<1xf32>
    %669 = vector.multi_reduction <add>, %668, %cst_103 [0, 1, 2] : vector<2x1x16x1xf32> to vector<1xf32>
    %670 = vector.shape_cast %669 : vector<1xf32> to vector<1x1x1x1xf32>
    %cst_104 = arith.constant 0.001953125 : f32
    %671 = vector.broadcast %cst_104 : f32 to vector<1x1x1x1xf32>
    %672 = arith.mulf %670, %671 : vector<1x1x1x1xf32>
    %673 = arith.mulf %665, %665 : vector<1x1x1x1xf32>
    %674 = arith.subf %672, %673 : vector<1x1x1x1xf32>
    %cst_105 = arith.constant 0.000000e+00 : f32
    %675 = vector.broadcast %cst_105 : f32 to vector<1x1x1x1xf32>
    %676 = arith.maximumf %674, %675 : vector<1x1x1x1xf32>
    %cst_106 = arith.constant 9.99999974E-6 : f32
    %677 = vector.broadcast %cst_106 : f32 to vector<1x1x1x1xf32>
    %678 = arith.addf %676, %677 : vector<1x1x1x1xf32>
    %679 = math.rsqrt %678 : vector<1x1x1x1xf32>
    %680 = vector.broadcast %658 : f32 to vector<1x1x1x1xf32>
    %681 = arith.mulf %680, %679 : vector<1x1x1x1xf32>
    %682 = arith.mulf %665, %681 : vector<1x1x1x1xf32>
    %683 = vector.broadcast %659 : f32 to vector<1x1x1x1xf32>
    %684 = arith.subf %683, %682 : vector<1x1x1x1xf32>
    %685 = vector.broadcast %681 : vector<1x1x1x1xf32> to vector<2x1x16x16xf32>
    %686 = arith.mulf %627, %685 : vector<2x1x16x16xf32>
    %687 = vector.broadcast %684 : vector<1x1x1x1xf32> to vector<2x1x16x16xf32>
    %688 = arith.addf %686, %687 : vector<2x1x16x16xf32>
    %cst_107 = arith.constant 0.000000e+00 : f32
    %689 = vector.broadcast %cst_107 : f32 to vector<2x1x16x16xf32>
    %690 = arith.maximumf %688, %689 : vector<2x1x16x16xf32>
    %c0_108 = arith.constant 0 : index
    %c0_109 = arith.constant 0 : index
    %c1_110 = arith.constant 1 : index
    %c1_111 = arith.constant 1 : index
    %691 = vector.load %arg9[%c0_108, %c0_109, %c1_110, %c1_111] : memref<2x8x18x18xf32, #tpu.memory_space<vmem>>, vector<2x1x16x16xf32>
    tpu.vector_store %arg9[%c0_108, %c0_109, %c1_110, %c1_111], %690 {strides = array<i32>} : memref<2x8x18x18xf32, #tpu.memory_space<vmem>>, vector<2x1x16x16xf32>,
    %c1_112 = arith.constant 1 : index
    %692 = memref.load %arg2[%c1_112] : memref<8xf32, #tpu.memory_space<smem>>
    %c1_113 = arith.constant 1 : index
    %693 = memref.load %arg3[%c1_113] : memref<8xf32, #tpu.memory_space<smem>>
    %cst_114 = arith.constant dense<0.000000e+00> : vector<2x1x16xf32>
    %694 = vector.multi_reduction <add>, %631, %cst_114 [3] : vector<2x1x16x16xf32> to vector<2x1x16xf32>
    %695 = vector.shape_cast %694 : vector<2x1x16xf32> to vector<2x1x16x1xf32>
    %cst_115 = arith.constant dense<0.000000e+00> : vector<1xf32>
    %696 = vector.multi_reduction <add>, %695, %cst_115 [0, 1, 2] : vector<2x1x16x1xf32> to vector<1xf32>
    %697 = vector.shape_cast %696 : vector<1xf32> to vector<1x1x1x1xf32>
    %cst_116 = arith.constant 0.001953125 : f32
    %698 = vector.broadcast %cst_116 : f32 to vector<1x1x1x1xf32>
    %699 = arith.mulf %697, %698 : vector<1x1x1x1xf32>
    %700 = arith.mulf %631, %631 : vector<2x1x16x16xf32>
    %cst_117 = arith.constant dense<0.000000e+00> : vector<2x1x16xf32>
    %701 = vector.multi_reduction <add>, %700, %cst_117 [3] : vector<2x1x16x16xf32> to vector<2x1x16xf32>
    %702 = vector.shape_cast %701 : vector<2x1x16xf32> to vector<2x1x16x1xf32>
    %cst_118 = arith.constant dense<0.000000e+00> : vector<1xf32>
    %703 = vector.multi_reduction <add>, %702, %cst_118 [0, 1, 2] : vector<2x1x16x1xf32> to vector<1xf32>
    %704 = vector.shape_cast %703 : vector<1xf32> to vector<1x1x1x1xf32>
    %cst_119 = arith.constant 0.001953125 : f32
    %705 = vector.broadcast %cst_119 : f32 to vector<1x1x1x1xf32>
    %706 = arith.mulf %704, %705 : vector<1x1x1x1xf32>
    %707 = arith.mulf %699, %699 : vector<1x1x1x1xf32>
    %708 = arith.subf %706, %707 : vector<1x1x1x1xf32>
    %cst_120 = arith.constant 0.000000e+00 : f32
    %709 = vector.broadcast %cst_120 : f32 to vector<1x1x1x1xf32>
    %710 = arith.maximumf %708, %709 : vector<1x1x1x1xf32>
    %cst_121 = arith.constant 9.99999974E-6 : f32
    %711 = vector.broadcast %cst_121 : f32 to vector<1x1x1x1xf32>
    %712 = arith.addf %710, %711 : vector<1x1x1x1xf32>
    %713 = math.rsqrt %712 : vector<1x1x1x1xf32>
    %714 = vector.broadcast %692 : f32 to vector<1x1x1x1xf32>
    %715 = arith.mulf %714, %713 : vector<1x1x1x1xf32>
    %716 = arith.mulf %699, %715 : vector<1x1x1x1xf32>
    %717 = vector.broadcast %693 : f32 to vector<1x1x1x1xf32>
    %718 = arith.subf %717, %716 : vector<1x1x1x1xf32>
    %719 = vector.broadcast %715 : vector<1x1x1x1xf32> to vector<2x1x16x16xf32>
    %720 = arith.mulf %631, %719 : vector<2x1x16x16xf32>
    %721 = vector.broadcast %718 : vector<1x1x1x1xf32> to vector<2x1x16x16xf32>
    %722 = arith.addf %720, %721 : vector<2x1x16x16xf32>
    %cst_122 = arith.constant 0.000000e+00 : f32
    %723 = vector.broadcast %cst_122 : f32 to vector<2x1x16x16xf32>
    %724 = arith.maximumf %722, %723 : vector<2x1x16x16xf32>
    %c0_123 = arith.constant 0 : index
    %c1_124 = arith.constant 1 : index
    %c1_125 = arith.constant 1 : index
    %c1_126 = arith.constant 1 : index
    %725 = vector.load %arg9[%c0_123, %c1_124, %c1_125, %c1_126] : memref<2x8x18x18xf32, #tpu.memory_space<vmem>>, vector<2x1x16x16xf32>
    tpu.vector_store %arg9[%c0_123, %c1_124, %c1_125, %c1_126], %724 {strides = array<i32>} : memref<2x8x18x18xf32, #tpu.memory_space<vmem>>, vector<2x1x16x16xf32>,
    %c2_127 = arith.constant 2 : index
    %726 = memref.load %arg2[%c2_127] : memref<8xf32, #tpu.memory_space<smem>>
    %c2_128 = arith.constant 2 : index
    %727 = memref.load %arg3[%c2_128] : memref<8xf32, #tpu.memory_space<smem>>
    %cst_129 = arith.constant dense<0.000000e+00> : vector<2x1x16xf32>
    %728 = vector.multi_reduction <add>, %635, %cst_129 [3] : vector<2x1x16x16xf32> to vector<2x1x16xf32>
    %729 = vector.shape_cast %728 : vector<2x1x16xf32> to vector<2x1x16x1xf32>
    %cst_130 = arith.constant dense<0.000000e+00> : vector<1xf32>
    %730 = vector.multi_reduction <add>, %729, %cst_130 [0, 1, 2] : vector<2x1x16x1xf32> to vector<1xf32>
    %731 = vector.shape_cast %730 : vector<1xf32> to vector<1x1x1x1xf32>
    %cst_131 = arith.constant 0.001953125 : f32
    %732 = vector.broadcast %cst_131 : f32 to vector<1x1x1x1xf32>
    %733 = arith.mulf %731, %732 : vector<1x1x1x1xf32>
    %734 = arith.mulf %635, %635 : vector<2x1x16x16xf32>
    %cst_132 = arith.constant dense<0.000000e+00> : vector<2x1x16xf32>
    %735 = vector.multi_reduction <add>, %734, %cst_132 [3] : vector<2x1x16x16xf32> to vector<2x1x16xf32>
    %736 = vector.shape_cast %735 : vector<2x1x16xf32> to vector<2x1x16x1xf32>
    %cst_133 = arith.constant dense<0.000000e+00> : vector<1xf32>
    %737 = vector.multi_reduction <add>, %736, %cst_133 [0, 1, 2] : vector<2x1x16x1xf32> to vector<1xf32>
    %738 = vector.shape_cast %737 : vector<1xf32> to vector<1x1x1x1xf32>
    %cst_134 = arith.constant 0.001953125 : f32
    %739 = vector.broadcast %cst_134 : f32 to vector<1x1x1x1xf32>
    %740 = arith.mulf %738, %739 : vector<1x1x1x1xf32>
    %741 = arith.mulf %733, %733 : vector<1x1x1x1xf32>
    %742 = arith.subf %740, %741 : vector<1x1x1x1xf32>
    %cst_135 = arith.constant 0.000000e+00 : f32
    %743 = vector.broadcast %cst_135 : f32 to vector<1x1x1x1xf32>
    %744 = arith.maximumf %742, %743 : vector<1x1x1x1xf32>
    %cst_136 = arith.constant 9.99999974E-6 : f32
    %745 = vector.broadcast %cst_136 : f32 to vector<1x1x1x1xf32>
    %746 = arith.addf %744, %745 : vector<1x1x1x1xf32>
    %747 = math.rsqrt %746 : vector<1x1x1x1xf32>
    %748 = vector.broadcast %726 : f32 to vector<1x1x1x1xf32>
    %749 = arith.mulf %748, %747 : vector<1x1x1x1xf32>
    %750 = arith.mulf %733, %749 : vector<1x1x1x1xf32>
    %751 = vector.broadcast %727 : f32 to vector<1x1x1x1xf32>
    %752 = arith.subf %751, %750 : vector<1x1x1x1xf32>
    %753 = vector.broadcast %749 : vector<1x1x1x1xf32> to vector<2x1x16x16xf32>
    %754 = arith.mulf %635, %753 : vector<2x1x16x16xf32>
    %755 = vector.broadcast %752 : vector<1x1x1x1xf32> to vector<2x1x16x16xf32>
    %756 = arith.addf %754, %755 : vector<2x1x16x16xf32>
    %cst_137 = arith.constant 0.000000e+00 : f32
    %757 = vector.broadcast %cst_137 : f32 to vector<2x1x16x16xf32>
    %758 = arith.maximumf %756, %757 : vector<2x1x16x16xf32>
    %c0_138 = arith.constant 0 : index
    %c2_139 = arith.constant 2 : index
    %c1_140 = arith.constant 1 : index
    %c1_141 = arith.constant 1 : index
    %759 = vector.load %arg9[%c0_138, %c2_139, %c1_140, %c1_141] : memref<2x8x18x18xf32, #tpu.memory_space<vmem>>, vector<2x1x16x16xf32>
    tpu.vector_store %arg9[%c0_138, %c2_139, %c1_140, %c1_141], %758 {strides = array<i32>} : memref<2x8x18x18xf32, #tpu.memory_space<vmem>>, vector<2x1x16x16xf32>,
    %c3_142 = arith.constant 3 : index
    %760 = memref.load %arg2[%c3_142] : memref<8xf32, #tpu.memory_space<smem>>
    %c3_143 = arith.constant 3 : index
    %761 = memref.load %arg3[%c3_143] : memref<8xf32, #tpu.memory_space<smem>>
    %cst_144 = arith.constant dense<0.000000e+00> : vector<2x1x16xf32>
    %762 = vector.multi_reduction <add>, %639, %cst_144 [3] : vector<2x1x16x16xf32> to vector<2x1x16xf32>
    %763 = vector.shape_cast %762 : vector<2x1x16xf32> to vector<2x1x16x1xf32>
    %cst_145 = arith.constant dense<0.000000e+00> : vector<1xf32>
    %764 = vector.multi_reduction <add>, %763, %cst_145 [0, 1, 2] : vector<2x1x16x1xf32> to vector<1xf32>
    %765 = vector.shape_cast %764 : vector<1xf32> to vector<1x1x1x1xf32>
    %cst_146 = arith.constant 0.001953125 : f32
    %766 = vector.broadcast %cst_146 : f32 to vector<1x1x1x1xf32>
    %767 = arith.mulf %765, %766 : vector<1x1x1x1xf32>
    %768 = arith.mulf %639, %639 : vector<2x1x16x16xf32>
    %cst_147 = arith.constant dense<0.000000e+00> : vector<2x1x16xf32>
    %769 = vector.multi_reduction <add>, %768, %cst_147 [3] : vector<2x1x16x16xf32> to vector<2x1x16xf32>
    %770 = vector.shape_cast %769 : vector<2x1x16xf32> to vector<2x1x16x1xf32>
    %cst_148 = arith.constant dense<0.000000e+00> : vector<1xf32>
    %771 = vector.multi_reduction <add>, %770, %cst_148 [0, 1, 2] : vector<2x1x16x1xf32> to vector<1xf32>
    %772 = vector.shape_cast %771 : vector<1xf32> to vector<1x1x1x1xf32>
    %cst_149 = arith.constant 0.001953125 : f32
    %773 = vector.broadcast %cst_149 : f32 to vector<1x1x1x1xf32>
    %774 = arith.mulf %772, %773 : vector<1x1x1x1xf32>
    %775 = arith.mulf %767, %767 : vector<1x1x1x1xf32>
    %776 = arith.subf %774, %775 : vector<1x1x1x1xf32>
    %cst_150 = arith.constant 0.000000e+00 : f32
    %777 = vector.broadcast %cst_150 : f32 to vector<1x1x1x1xf32>
    %778 = arith.maximumf %776, %777 : vector<1x1x1x1xf32>
    %cst_151 = arith.constant 9.99999974E-6 : f32
    %779 = vector.broadcast %cst_151 : f32 to vector<1x1x1x1xf32>
    %780 = arith.addf %778, %779 : vector<1x1x1x1xf32>
    %781 = math.rsqrt %780 : vector<1x1x1x1xf32>
    %782 = vector.broadcast %760 : f32 to vector<1x1x1x1xf32>
    %783 = arith.mulf %782, %781 : vector<1x1x1x1xf32>
    %784 = arith.mulf %767, %783 : vector<1x1x1x1xf32>
    %785 = vector.broadcast %761 : f32 to vector<1x1x1x1xf32>
    %786 = arith.subf %785, %784 : vector<1x1x1x1xf32>
    %787 = vector.broadcast %783 : vector<1x1x1x1xf32> to vector<2x1x16x16xf32>
    %788 = arith.mulf %639, %787 : vector<2x1x16x16xf32>
    %789 = vector.broadcast %786 : vector<1x1x1x1xf32> to vector<2x1x16x16xf32>
    %790 = arith.addf %788, %789 : vector<2x1x16x16xf32>
    %cst_152 = arith.constant 0.000000e+00 : f32
    %791 = vector.broadcast %cst_152 : f32 to vector<2x1x16x16xf32>
    %792 = arith.maximumf %790, %791 : vector<2x1x16x16xf32>
    %c0_153 = arith.constant 0 : index
    %c3_154 = arith.constant 3 : index
    %c1_155 = arith.constant 1 : index
    %c1_156 = arith.constant 1 : index
    %793 = vector.load %arg9[%c0_153, %c3_154, %c1_155, %c1_156] : memref<2x8x18x18xf32, #tpu.memory_space<vmem>>, vector<2x1x16x16xf32>
    tpu.vector_store %arg9[%c0_153, %c3_154, %c1_155, %c1_156], %792 {strides = array<i32>} : memref<2x8x18x18xf32, #tpu.memory_space<vmem>>, vector<2x1x16x16xf32>,
    %c4_157 = arith.constant 4 : index
    %794 = memref.load %arg2[%c4_157] : memref<8xf32, #tpu.memory_space<smem>>
    %c4_158 = arith.constant 4 : index
    %795 = memref.load %arg3[%c4_158] : memref<8xf32, #tpu.memory_space<smem>>
    %cst_159 = arith.constant dense<0.000000e+00> : vector<2x1x16xf32>
    %796 = vector.multi_reduction <add>, %643, %cst_159 [3] : vector<2x1x16x16xf32> to vector<2x1x16xf32>
    %797 = vector.shape_cast %796 : vector<2x1x16xf32> to vector<2x1x16x1xf32>
    %cst_160 = arith.constant dense<0.000000e+00> : vector<1xf32>
    %798 = vector.multi_reduction <add>, %797, %cst_160 [0, 1, 2] : vector<2x1x16x1xf32> to vector<1xf32>
    %799 = vector.shape_cast %798 : vector<1xf32> to vector<1x1x1x1xf32>
    %cst_161 = arith.constant 0.001953125 : f32
    %800 = vector.broadcast %cst_161 : f32 to vector<1x1x1x1xf32>
    %801 = arith.mulf %799, %800 : vector<1x1x1x1xf32>
    %802 = arith.mulf %643, %643 : vector<2x1x16x16xf32>
    %cst_162 = arith.constant dense<0.000000e+00> : vector<2x1x16xf32>
    %803 = vector.multi_reduction <add>, %802, %cst_162 [3] : vector<2x1x16x16xf32> to vector<2x1x16xf32>
    %804 = vector.shape_cast %803 : vector<2x1x16xf32> to vector<2x1x16x1xf32>
    %cst_163 = arith.constant dense<0.000000e+00> : vector<1xf32>
    %805 = vector.multi_reduction <add>, %804, %cst_163 [0, 1, 2] : vector<2x1x16x1xf32> to vector<1xf32>
    %806 = vector.shape_cast %805 : vector<1xf32> to vector<1x1x1x1xf32>
    %cst_164 = arith.constant 0.001953125 : f32
    %807 = vector.broadcast %cst_164 : f32 to vector<1x1x1x1xf32>
    %808 = arith.mulf %806, %807 : vector<1x1x1x1xf32>
    %809 = arith.mulf %801, %801 : vector<1x1x1x1xf32>
    %810 = arith.subf %808, %809 : vector<1x1x1x1xf32>
    %cst_165 = arith.constant 0.000000e+00 : f32
    %811 = vector.broadcast %cst_165 : f32 to vector<1x1x1x1xf32>
    %812 = arith.maximumf %810, %811 : vector<1x1x1x1xf32>
    %cst_166 = arith.constant 9.99999974E-6 : f32
    %813 = vector.broadcast %cst_166 : f32 to vector<1x1x1x1xf32>
    %814 = arith.addf %812, %813 : vector<1x1x1x1xf32>
    %815 = math.rsqrt %814 : vector<1x1x1x1xf32>
    %816 = vector.broadcast %794 : f32 to vector<1x1x1x1xf32>
    %817 = arith.mulf %816, %815 : vector<1x1x1x1xf32>
    %818 = arith.mulf %801, %817 : vector<1x1x1x1xf32>
    %819 = vector.broadcast %795 : f32 to vector<1x1x1x1xf32>
    %820 = arith.subf %819, %818 : vector<1x1x1x1xf32>
    %821 = vector.broadcast %817 : vector<1x1x1x1xf32> to vector<2x1x16x16xf32>
    %822 = arith.mulf %643, %821 : vector<2x1x16x16xf32>
    %823 = vector.broadcast %820 : vector<1x1x1x1xf32> to vector<2x1x16x16xf32>
    %824 = arith.addf %822, %823 : vector<2x1x16x16xf32>
    %cst_167 = arith.constant 0.000000e+00 : f32
    %825 = vector.broadcast %cst_167 : f32 to vector<2x1x16x16xf32>
    %826 = arith.maximumf %824, %825 : vector<2x1x16x16xf32>
    %c0_168 = arith.constant 0 : index
    %c4_169 = arith.constant 4 : index
    %c1_170 = arith.constant 1 : index
    %c1_171 = arith.constant 1 : index
    %827 = vector.load %arg9[%c0_168, %c4_169, %c1_170, %c1_171] : memref<2x8x18x18xf32, #tpu.memory_space<vmem>>, vector<2x1x16x16xf32>
    tpu.vector_store %arg9[%c0_168, %c4_169, %c1_170, %c1_171], %826 {strides = array<i32>} : memref<2x8x18x18xf32, #tpu.memory_space<vmem>>, vector<2x1x16x16xf32>,
    %c5_172 = arith.constant 5 : index
    %828 = memref.load %arg2[%c5_172] : memref<8xf32, #tpu.memory_space<smem>>
    %c5_173 = arith.constant 5 : index
    %829 = memref.load %arg3[%c5_173] : memref<8xf32, #tpu.memory_space<smem>>
    %cst_174 = arith.constant dense<0.000000e+00> : vector<2x1x16xf32>
    %830 = vector.multi_reduction <add>, %647, %cst_174 [3] : vector<2x1x16x16xf32> to vector<2x1x16xf32>
    %831 = vector.shape_cast %830 : vector<2x1x16xf32> to vector<2x1x16x1xf32>
    %cst_175 = arith.constant dense<0.000000e+00> : vector<1xf32>
    %832 = vector.multi_reduction <add>, %831, %cst_175 [0, 1, 2] : vector<2x1x16x1xf32> to vector<1xf32>
    %833 = vector.shape_cast %832 : vector<1xf32> to vector<1x1x1x1xf32>
    %cst_176 = arith.constant 0.001953125 : f32
    %834 = vector.broadcast %cst_176 : f32 to vector<1x1x1x1xf32>
    %835 = arith.mulf %833, %834 : vector<1x1x1x1xf32>
    %836 = arith.mulf %647, %647 : vector<2x1x16x16xf32>
    %cst_177 = arith.constant dense<0.000000e+00> : vector<2x1x16xf32>
    %837 = vector.multi_reduction <add>, %836, %cst_177 [3] : vector<2x1x16x16xf32> to vector<2x1x16xf32>
    %838 = vector.shape_cast %837 : vector<2x1x16xf32> to vector<2x1x16x1xf32>
    %cst_178 = arith.constant dense<0.000000e+00> : vector<1xf32>
    %839 = vector.multi_reduction <add>, %838, %cst_178 [0, 1, 2] : vector<2x1x16x1xf32> to vector<1xf32>
    %840 = vector.shape_cast %839 : vector<1xf32> to vector<1x1x1x1xf32>
    %cst_179 = arith.constant 0.001953125 : f32
    %841 = vector.broadcast %cst_179 : f32 to vector<1x1x1x1xf32>
    %842 = arith.mulf %840, %841 : vector<1x1x1x1xf32>
    %843 = arith.mulf %835, %835 : vector<1x1x1x1xf32>
    %844 = arith.subf %842, %843 : vector<1x1x1x1xf32>
    %cst_180 = arith.constant 0.000000e+00 : f32
    %845 = vector.broadcast %cst_180 : f32 to vector<1x1x1x1xf32>
    %846 = arith.maximumf %844, %845 : vector<1x1x1x1xf32>
    %cst_181 = arith.constant 9.99999974E-6 : f32
    %847 = vector.broadcast %cst_181 : f32 to vector<1x1x1x1xf32>
    %848 = arith.addf %846, %847 : vector<1x1x1x1xf32>
    %849 = math.rsqrt %848 : vector<1x1x1x1xf32>
    %850 = vector.broadcast %828 : f32 to vector<1x1x1x1xf32>
    %851 = arith.mulf %850, %849 : vector<1x1x1x1xf32>
    %852 = arith.mulf %835, %851 : vector<1x1x1x1xf32>
    %853 = vector.broadcast %829 : f32 to vector<1x1x1x1xf32>
    %854 = arith.subf %853, %852 : vector<1x1x1x1xf32>
    %855 = vector.broadcast %851 : vector<1x1x1x1xf32> to vector<2x1x16x16xf32>
    %856 = arith.mulf %647, %855 : vector<2x1x16x16xf32>
    %857 = vector.broadcast %854 : vector<1x1x1x1xf32> to vector<2x1x16x16xf32>
    %858 = arith.addf %856, %857 : vector<2x1x16x16xf32>
    %cst_182 = arith.constant 0.000000e+00 : f32
    %859 = vector.broadcast %cst_182 : f32 to vector<2x1x16x16xf32>
    %860 = arith.maximumf %858, %859 : vector<2x1x16x16xf32>
    %c0_183 = arith.constant 0 : index
    %c5_184 = arith.constant 5 : index
    %c1_185 = arith.constant 1 : index
    %c1_186 = arith.constant 1 : index
    %861 = vector.load %arg9[%c0_183, %c5_184, %c1_185, %c1_186] : memref<2x8x18x18xf32, #tpu.memory_space<vmem>>, vector<2x1x16x16xf32>
    tpu.vector_store %arg9[%c0_183, %c5_184, %c1_185, %c1_186], %860 {strides = array<i32>} : memref<2x8x18x18xf32, #tpu.memory_space<vmem>>, vector<2x1x16x16xf32>,
    %c6_187 = arith.constant 6 : index
    %862 = memref.load %arg2[%c6_187] : memref<8xf32, #tpu.memory_space<smem>>
    %c6_188 = arith.constant 6 : index
    %863 = memref.load %arg3[%c6_188] : memref<8xf32, #tpu.memory_space<smem>>
    %cst_189 = arith.constant dense<0.000000e+00> : vector<2x1x16xf32>
    %864 = vector.multi_reduction <add>, %651, %cst_189 [3] : vector<2x1x16x16xf32> to vector<2x1x16xf32>
    %865 = vector.shape_cast %864 : vector<2x1x16xf32> to vector<2x1x16x1xf32>
    %cst_190 = arith.constant dense<0.000000e+00> : vector<1xf32>
    %866 = vector.multi_reduction <add>, %865, %cst_190 [0, 1, 2] : vector<2x1x16x1xf32> to vector<1xf32>
    %867 = vector.shape_cast %866 : vector<1xf32> to vector<1x1x1x1xf32>
    %cst_191 = arith.constant 0.001953125 : f32
    %868 = vector.broadcast %cst_191 : f32 to vector<1x1x1x1xf32>
    %869 = arith.mulf %867, %868 : vector<1x1x1x1xf32>
    %870 = arith.mulf %651, %651 : vector<2x1x16x16xf32>
    %cst_192 = arith.constant dense<0.000000e+00> : vector<2x1x16xf32>
    %871 = vector.multi_reduction <add>, %870, %cst_192 [3] : vector<2x1x16x16xf32> to vector<2x1x16xf32>
    %872 = vector.shape_cast %871 : vector<2x1x16xf32> to vector<2x1x16x1xf32>
    %cst_193 = arith.constant dense<0.000000e+00> : vector<1xf32>
    %873 = vector.multi_reduction <add>, %872, %cst_193 [0, 1, 2] : vector<2x1x16x1xf32> to vector<1xf32>
    %874 = vector.shape_cast %873 : vector<1xf32> to vector<1x1x1x1xf32>
    %cst_194 = arith.constant 0.001953125 : f32
    %875 = vector.broadcast %cst_194 : f32 to vector<1x1x1x1xf32>
    %876 = arith.mulf %874, %875 : vector<1x1x1x1xf32>
    %877 = arith.mulf %869, %869 : vector<1x1x1x1xf32>
    %878 = arith.subf %876, %877 : vector<1x1x1x1xf32>
    %cst_195 = arith.constant 0.000000e+00 : f32
    %879 = vector.broadcast %cst_195 : f32 to vector<1x1x1x1xf32>
    %880 = arith.maximumf %878, %879 : vector<1x1x1x1xf32>
    %cst_196 = arith.constant 9.99999974E-6 : f32
    %881 = vector.broadcast %cst_196 : f32 to vector<1x1x1x1xf32>
    %882 = arith.addf %880, %881 : vector<1x1x1x1xf32>
    %883 = math.rsqrt %882 : vector<1x1x1x1xf32>
    %884 = vector.broadcast %862 : f32 to vector<1x1x1x1xf32>
    %885 = arith.mulf %884, %883 : vector<1x1x1x1xf32>
    %886 = arith.mulf %869, %885 : vector<1x1x1x1xf32>
    %887 = vector.broadcast %863 : f32 to vector<1x1x1x1xf32>
    %888 = arith.subf %887, %886 : vector<1x1x1x1xf32>
    %889 = vector.broadcast %885 : vector<1x1x1x1xf32> to vector<2x1x16x16xf32>
    %890 = arith.mulf %651, %889 : vector<2x1x16x16xf32>
    %891 = vector.broadcast %888 : vector<1x1x1x1xf32> to vector<2x1x16x16xf32>
    %892 = arith.addf %890, %891 : vector<2x1x16x16xf32>
    %cst_197 = arith.constant 0.000000e+00 : f32
    %893 = vector.broadcast %cst_197 : f32 to vector<2x1x16x16xf32>
    %894 = arith.maximumf %892, %893 : vector<2x1x16x16xf32>
    %c0_198 = arith.constant 0 : index
    %c6_199 = arith.constant 6 : index
    %c1_200 = arith.constant 1 : index
    %c1_201 = arith.constant 1 : index
    %895 = vector.load %arg9[%c0_198, %c6_199, %c1_200, %c1_201] : memref<2x8x18x18xf32, #tpu.memory_space<vmem>>, vector<2x1x16x16xf32>
    tpu.vector_store %arg9[%c0_198, %c6_199, %c1_200, %c1_201], %894 {strides = array<i32>} : memref<2x8x18x18xf32, #tpu.memory_space<vmem>>, vector<2x1x16x16xf32>,
    %c7_202 = arith.constant 7 : index
    %896 = memref.load %arg2[%c7_202] : memref<8xf32, #tpu.memory_space<smem>>
    %c7_203 = arith.constant 7 : index
    %897 = memref.load %arg3[%c7_203] : memref<8xf32, #tpu.memory_space<smem>>
    %cst_204 = arith.constant dense<0.000000e+00> : vector<2x1x16xf32>
    %898 = vector.multi_reduction <add>, %655, %cst_204 [3] : vector<2x1x16x16xf32> to vector<2x1x16xf32>
    %899 = vector.shape_cast %898 : vector<2x1x16xf32> to vector<2x1x16x1xf32>
    %cst_205 = arith.constant dense<0.000000e+00> : vector<1xf32>
    %900 = vector.multi_reduction <add>, %899, %cst_205 [0, 1, 2] : vector<2x1x16x1xf32> to vector<1xf32>
    %901 = vector.shape_cast %900 : vector<1xf32> to vector<1x1x1x1xf32>
    %cst_206 = arith.constant 0.001953125 : f32
    %902 = vector.broadcast %cst_206 : f32 to vector<1x1x1x1xf32>
    %903 = arith.mulf %901, %902 : vector<1x1x1x1xf32>
    %904 = arith.mulf %655, %655 : vector<2x1x16x16xf32>
    %cst_207 = arith.constant dense<0.000000e+00> : vector<2x1x16xf32>
    %905 = vector.multi_reduction <add>, %904, %cst_207 [3] : vector<2x1x16x16xf32> to vector<2x1x16xf32>
    %906 = vector.shape_cast %905 : vector<2x1x16xf32> to vector<2x1x16x1xf32>
    %cst_208 = arith.constant dense<0.000000e+00> : vector<1xf32>
    %907 = vector.multi_reduction <add>, %906, %cst_208 [0, 1, 2] : vector<2x1x16x1xf32> to vector<1xf32>
    %908 = vector.shape_cast %907 : vector<1xf32> to vector<1x1x1x1xf32>
    %cst_209 = arith.constant 0.001953125 : f32
    %909 = vector.broadcast %cst_209 : f32 to vector<1x1x1x1xf32>
    %910 = arith.mulf %908, %909 : vector<1x1x1x1xf32>
    %911 = arith.mulf %903, %903 : vector<1x1x1x1xf32>
    %912 = arith.subf %910, %911 : vector<1x1x1x1xf32>
    %cst_210 = arith.constant 0.000000e+00 : f32
    %913 = vector.broadcast %cst_210 : f32 to vector<1x1x1x1xf32>
    %914 = arith.maximumf %912, %913 : vector<1x1x1x1xf32>
    %cst_211 = arith.constant 9.99999974E-6 : f32
    %915 = vector.broadcast %cst_211 : f32 to vector<1x1x1x1xf32>
    %916 = arith.addf %914, %915 : vector<1x1x1x1xf32>
    %917 = math.rsqrt %916 : vector<1x1x1x1xf32>
    %918 = vector.broadcast %896 : f32 to vector<1x1x1x1xf32>
    %919 = arith.mulf %918, %917 : vector<1x1x1x1xf32>
    %920 = arith.mulf %903, %919 : vector<1x1x1x1xf32>
    %921 = vector.broadcast %897 : f32 to vector<1x1x1x1xf32>
    %922 = arith.subf %921, %920 : vector<1x1x1x1xf32>
    %923 = vector.broadcast %919 : vector<1x1x1x1xf32> to vector<2x1x16x16xf32>
    %924 = arith.mulf %655, %923 : vector<2x1x16x16xf32>
    %925 = vector.broadcast %922 : vector<1x1x1x1xf32> to vector<2x1x16x16xf32>
    %926 = arith.addf %924, %925 : vector<2x1x16x16xf32>
    %cst_212 = arith.constant 0.000000e+00 : f32
    %927 = vector.broadcast %cst_212 : f32 to vector<2x1x16x16xf32>
    %928 = arith.maximumf %926, %927 : vector<2x1x16x16xf32>
    %c0_213 = arith.constant 0 : index
    %c7_214 = arith.constant 7 : index
    %c1_215 = arith.constant 1 : index
    %c1_216 = arith.constant 1 : index
    %929 = vector.load %arg9[%c0_213, %c7_214, %c1_215, %c1_216] : memref<2x8x18x18xf32, #tpu.memory_space<vmem>>, vector<2x1x16x16xf32>
    tpu.vector_store %arg9[%c0_213, %c7_214, %c1_215, %c1_216], %928 {strides = array<i32>} : memref<2x8x18x18xf32, #tpu.memory_space<vmem>>, vector<2x1x16x16xf32>,
    %c0_217 = arith.constant 0 : index
    %c0_218 = arith.constant 0 : index
    %c0_219 = arith.constant 0 : index
    %c0_220 = arith.constant 0 : index
    %930 = vector.load %arg9[%c0_217, %c0_218, %c0_219, %c0_220] : memref<2x8x18x18xf32, #tpu.memory_space<vmem>>, vector<2x1x16x16xf32>
    %c0_221 = arith.constant 0 : index
    %931 = memref.load %arg4[%c0_221] : memref<160xf32, #tpu.memory_space<smem>>
    %932 = vector.broadcast %931 : f32 to vector<2x1x16x16xf32>
    %933 = arith.mulf %930, %932 : vector<2x1x16x16xf32>
    %c1_222 = arith.constant 1 : index
    %934 = memref.load %arg4[%c1_222] : memref<160xf32, #tpu.memory_space<smem>>
    %935 = vector.broadcast %934 : f32 to vector<2x1x16x16xf32>
    %936 = arith.mulf %930, %935 : vector<2x1x16x16xf32>
    %c2_223 = arith.constant 2 : index
    %937 = memref.load %arg4[%c2_223] : memref<160xf32, #tpu.memory_space<smem>>
    %938 = vector.broadcast %937 : f32 to vector<2x1x16x16xf32>
    %939 = arith.mulf %930, %938 : vector<2x1x16x16xf32>
    %c3_224 = arith.constant 3 : index
    %940 = memref.load %arg4[%c3_224] : memref<160xf32, #tpu.memory_space<smem>>
    %941 = vector.broadcast %940 : f32 to vector<2x1x16x16xf32>
    %942 = arith.mulf %930, %941 : vector<2x1x16x16xf32>
    %c0_225 = arith.constant 0 : index
    %c1_226 = arith.constant 1 : index
    %c0_227 = arith.constant 0 : index
    %c0_228 = arith.constant 0 : index
    %943 = vector.load %arg9[%c0_225, %c1_226, %c0_227, %c0_228] : memref<2x8x18x18xf32, #tpu.memory_space<vmem>>, vector<2x1x16x16xf32>
    %c4_229 = arith.constant 4 : index
    %944 = memref.load %arg4[%c4_229] : memref<160xf32, #tpu.memory_space<smem>>
    %945 = vector.broadcast %944 : f32 to vector<2x1x16x16xf32>
    %946 = arith.mulf %943, %945 : vector<2x1x16x16xf32>
    %947 = arith.addf %933, %946 : vector<2x1x16x16xf32>
    %c5_230 = arith.constant 5 : index
    %948 = memref.load %arg4[%c5_230] : memref<160xf32, #tpu.memory_space<smem>>
    %949 = vector.broadcast %948 : f32 to vector<2x1x16x16xf32>
    %950 = arith.mulf %943, %949 : vector<2x1x16x16xf32>
    %951 = arith.addf %936, %950 : vector<2x1x16x16xf32>
    %c6_231 = arith.constant 6 : index
    %952 = memref.load %arg4[%c6_231] : memref<160xf32, #tpu.memory_space<smem>>
    %953 = vector.broadcast %952 : f32 to vector<2x1x16x16xf32>
    %954 = arith.mulf %943, %953 : vector<2x1x16x16xf32>
    %955 = arith.addf %939, %954 : vector<2x1x16x16xf32>
    %c7_232 = arith.constant 7 : index
    %956 = memref.load %arg4[%c7_232] : memref<160xf32, #tpu.memory_space<smem>>
    %957 = vector.broadcast %956 : f32 to vector<2x1x16x16xf32>
    %958 = arith.mulf %943, %957 : vector<2x1x16x16xf32>
    %959 = arith.addf %942, %958 : vector<2x1x16x16xf32>
    %c0_233 = arith.constant 0 : index
    %c2_234 = arith.constant 2 : index
    %c0_235 = arith.constant 0 : index
    %c0_236 = arith.constant 0 : index
    %960 = vector.load %arg9[%c0_233, %c2_234, %c0_235, %c0_236] : memref<2x8x18x18xf32, #tpu.memory_space<vmem>>, vector<2x1x16x16xf32>
    %c8_237 = arith.constant 8 : index
    %961 = memref.load %arg4[%c8_237] : memref<160xf32, #tpu.memory_space<smem>>
    %962 = vector.broadcast %961 : f32 to vector<2x1x16x16xf32>
    %963 = arith.mulf %960, %962 : vector<2x1x16x16xf32>
    %964 = arith.addf %947, %963 : vector<2x1x16x16xf32>
    %c9_238 = arith.constant 9 : index
    %965 = memref.load %arg4[%c9_238] : memref<160xf32, #tpu.memory_space<smem>>
    %966 = vector.broadcast %965 : f32 to vector<2x1x16x16xf32>
    %967 = arith.mulf %960, %966 : vector<2x1x16x16xf32>
    %968 = arith.addf %951, %967 : vector<2x1x16x16xf32>
    %c10_239 = arith.constant 10 : index
    %969 = memref.load %arg4[%c10_239] : memref<160xf32, #tpu.memory_space<smem>>
    %970 = vector.broadcast %969 : f32 to vector<2x1x16x16xf32>
    %971 = arith.mulf %960, %970 : vector<2x1x16x16xf32>
    %972 = arith.addf %955, %971 : vector<2x1x16x16xf32>
    %c11_240 = arith.constant 11 : index
    %973 = memref.load %arg4[%c11_240] : memref<160xf32, #tpu.memory_space<smem>>
    %974 = vector.broadcast %973 : f32 to vector<2x1x16x16xf32>
    %975 = arith.mulf %960, %974 : vector<2x1x16x16xf32>
    %976 = arith.addf %959, %975 : vector<2x1x16x16xf32>
    %c0_241 = arith.constant 0 : index
    %c3_242 = arith.constant 3 : index
    %c0_243 = arith.constant 0 : index
    %c0_244 = arith.constant 0 : index
    %977 = vector.load %arg9[%c0_241, %c3_242, %c0_243, %c0_244] : memref<2x8x18x18xf32, #tpu.memory_space<vmem>>, vector<2x1x16x16xf32>
    %c12_245 = arith.constant 12 : index
    %978 = memref.load %arg4[%c12_245] : memref<160xf32, #tpu.memory_space<smem>>
    %979 = vector.broadcast %978 : f32 to vector<2x1x16x16xf32>
    %980 = arith.mulf %977, %979 : vector<2x1x16x16xf32>
    %981 = arith.addf %964, %980 : vector<2x1x16x16xf32>
    %c13_246 = arith.constant 13 : index
    %982 = memref.load %arg4[%c13_246] : memref<160xf32, #tpu.memory_space<smem>>
    %983 = vector.broadcast %982 : f32 to vector<2x1x16x16xf32>
    %984 = arith.mulf %977, %983 : vector<2x1x16x16xf32>
    %985 = arith.addf %968, %984 : vector<2x1x16x16xf32>
    %c14_247 = arith.constant 14 : index
    %986 = memref.load %arg4[%c14_247] : memref<160xf32, #tpu.memory_space<smem>>
    %987 = vector.broadcast %986 : f32 to vector<2x1x16x16xf32>
    %988 = arith.mulf %977, %987 : vector<2x1x16x16xf32>
    %989 = arith.addf %972, %988 : vector<2x1x16x16xf32>
    %c15_248 = arith.constant 15 : index
    %990 = memref.load %arg4[%c15_248] : memref<160xf32, #tpu.memory_space<smem>>
    %991 = vector.broadcast %990 : f32 to vector<2x1x16x16xf32>
    %992 = arith.mulf %977, %991 : vector<2x1x16x16xf32>
    %993 = arith.addf %976, %992 : vector<2x1x16x16xf32>
    %c0_249 = arith.constant 0 : index
    %c4_250 = arith.constant 4 : index
    %c0_251 = arith.constant 0 : index
    %c0_252 = arith.constant 0 : index
    %994 = vector.load %arg9[%c0_249, %c4_250, %c0_251, %c0_252] : memref<2x8x18x18xf32, #tpu.memory_space<vmem>>, vector<2x1x16x16xf32>
    %c16_253 = arith.constant 16 : index
    %995 = memref.load %arg4[%c16_253] : memref<160xf32, #tpu.memory_space<smem>>
    %996 = vector.broadcast %995 : f32 to vector<2x1x16x16xf32>
    %997 = arith.mulf %994, %996 : vector<2x1x16x16xf32>
    %998 = arith.addf %981, %997 : vector<2x1x16x16xf32>
    %c17_254 = arith.constant 17 : index
    %999 = memref.load %arg4[%c17_254] : memref<160xf32, #tpu.memory_space<smem>>
    %1000 = vector.broadcast %999 : f32 to vector<2x1x16x16xf32>
    %1001 = arith.mulf %994, %1000 : vector<2x1x16x16xf32>
    %1002 = arith.addf %985, %1001 : vector<2x1x16x16xf32>
    %c18_255 = arith.constant 18 : index
    %1003 = memref.load %arg4[%c18_255] : memref<160xf32, #tpu.memory_space<smem>>
    %1004 = vector.broadcast %1003 : f32 to vector<2x1x16x16xf32>
    %1005 = arith.mulf %994, %1004 : vector<2x1x16x16xf32>
    %1006 = arith.addf %989, %1005 : vector<2x1x16x16xf32>
    %c19_256 = arith.constant 19 : index
    %1007 = memref.load %arg4[%c19_256] : memref<160xf32, #tpu.memory_space<smem>>
    %1008 = vector.broadcast %1007 : f32 to vector<2x1x16x16xf32>
    %1009 = arith.mulf %994, %1008 : vector<2x1x16x16xf32>
    %1010 = arith.addf %993, %1009 : vector<2x1x16x16xf32>
    %c0_257 = arith.constant 0 : index
    %c5_258 = arith.constant 5 : index
    %c0_259 = arith.constant 0 : index
    %c0_260 = arith.constant 0 : index
    %1011 = vector.load %arg9[%c0_257, %c5_258, %c0_259, %c0_260] : memref<2x8x18x18xf32, #tpu.memory_space<vmem>>, vector<2x1x16x16xf32>
    %c20_261 = arith.constant 20 : index
    %1012 = memref.load %arg4[%c20_261] : memref<160xf32, #tpu.memory_space<smem>>
    %1013 = vector.broadcast %1012 : f32 to vector<2x1x16x16xf32>
    %1014 = arith.mulf %1011, %1013 : vector<2x1x16x16xf32>
    %1015 = arith.addf %998, %1014 : vector<2x1x16x16xf32>
    %c21_262 = arith.constant 21 : index
    %1016 = memref.load %arg4[%c21_262] : memref<160xf32, #tpu.memory_space<smem>>
    %1017 = vector.broadcast %1016 : f32 to vector<2x1x16x16xf32>
    %1018 = arith.mulf %1011, %1017 : vector<2x1x16x16xf32>
    %1019 = arith.addf %1002, %1018 : vector<2x1x16x16xf32>
    %c22_263 = arith.constant 22 : index
    %1020 = memref.load %arg4[%c22_263] : memref<160xf32, #tpu.memory_space<smem>>
    %1021 = vector.broadcast %1020 : f32 to vector<2x1x16x16xf32>
    %1022 = arith.mulf %1011, %1021 : vector<2x1x16x16xf32>
    %1023 = arith.addf %1006, %1022 : vector<2x1x16x16xf32>
    %c23_264 = arith.constant 23 : index
    %1024 = memref.load %arg4[%c23_264] : memref<160xf32, #tpu.memory_space<smem>>
    %1025 = vector.broadcast %1024 : f32 to vector<2x1x16x16xf32>
    %1026 = arith.mulf %1011, %1025 : vector<2x1x16x16xf32>
    %1027 = arith.addf %1010, %1026 : vector<2x1x16x16xf32>
    %c0_265 = arith.constant 0 : index
    %c6_266 = arith.constant 6 : index
    %c0_267 = arith.constant 0 : index
    %c0_268 = arith.constant 0 : index
    %1028 = vector.load %arg9[%c0_265, %c6_266, %c0_267, %c0_268] : memref<2x8x18x18xf32, #tpu.memory_space<vmem>>, vector<2x1x16x16xf32>
    %c24_269 = arith.constant 24 : index
    %1029 = memref.load %arg4[%c24_269] : memref<160xf32, #tpu.memory_space<smem>>
    %1030 = vector.broadcast %1029 : f32 to vector<2x1x16x16xf32>
    %1031 = arith.mulf %1028, %1030 : vector<2x1x16x16xf32>
    %1032 = arith.addf %1015, %1031 : vector<2x1x16x16xf32>
    %c25_270 = arith.constant 25 : index
    %1033 = memref.load %arg4[%c25_270] : memref<160xf32, #tpu.memory_space<smem>>
    %1034 = vector.broadcast %1033 : f32 to vector<2x1x16x16xf32>
    %1035 = arith.mulf %1028, %1034 : vector<2x1x16x16xf32>
    %1036 = arith.addf %1019, %1035 : vector<2x1x16x16xf32>
    %c26_271 = arith.constant 26 : index
    %1037 = memref.load %arg4[%c26_271] : memref<160xf32, #tpu.memory_space<smem>>
    %1038 = vector.broadcast %1037 : f32 to vector<2x1x16x16xf32>
    %1039 = arith.mulf %1028, %1038 : vector<2x1x16x16xf32>
    %1040 = arith.addf %1023, %1039 : vector<2x1x16x16xf32>
    %c27_272 = arith.constant 27 : index
    %1041 = memref.load %arg4[%c27_272] : memref<160xf32, #tpu.memory_space<smem>>
    %1042 = vector.broadcast %1041 : f32 to vector<2x1x16x16xf32>
    %1043 = arith.mulf %1028, %1042 : vector<2x1x16x16xf32>
    %1044 = arith.addf %1027, %1043 : vector<2x1x16x16xf32>
    %c0_273 = arith.constant 0 : index
    %c7_274 = arith.constant 7 : index
    %c0_275 = arith.constant 0 : index
    %c0_276 = arith.constant 0 : index
    %1045 = vector.load %arg9[%c0_273, %c7_274, %c0_275, %c0_276] : memref<2x8x18x18xf32, #tpu.memory_space<vmem>>, vector<2x1x16x16xf32>
    %c28_277 = arith.constant 28 : index
    %1046 = memref.load %arg4[%c28_277] : memref<160xf32, #tpu.memory_space<smem>>
    %1047 = vector.broadcast %1046 : f32 to vector<2x1x16x16xf32>
    %1048 = arith.mulf %1045, %1047 : vector<2x1x16x16xf32>
    %1049 = arith.addf %1032, %1048 : vector<2x1x16x16xf32>
    %c29_278 = arith.constant 29 : index
    %1050 = memref.load %arg4[%c29_278] : memref<160xf32, #tpu.memory_space<smem>>
    %1051 = vector.broadcast %1050 : f32 to vector<2x1x16x16xf32>
    %1052 = arith.mulf %1045, %1051 : vector<2x1x16x16xf32>
    %1053 = arith.addf %1036, %1052 : vector<2x1x16x16xf32>
    %c30_279 = arith.constant 30 : index
    %1054 = memref.load %arg4[%c30_279] : memref<160xf32, #tpu.memory_space<smem>>
    %1055 = vector.broadcast %1054 : f32 to vector<2x1x16x16xf32>
    %1056 = arith.mulf %1045, %1055 : vector<2x1x16x16xf32>
    %1057 = arith.addf %1040, %1056 : vector<2x1x16x16xf32>
    %c31_280 = arith.constant 31 : index
    %1058 = memref.load %arg4[%c31_280] : memref<160xf32, #tpu.memory_space<smem>>
    %1059 = vector.broadcast %1058 : f32 to vector<2x1x16x16xf32>
    %1060 = arith.mulf %1045, %1059 : vector<2x1x16x16xf32>
    %1061 = arith.addf %1044, %1060 : vector<2x1x16x16xf32>
    %c0_281 = arith.constant 0 : index
    %c0_282 = arith.constant 0 : index
    %c0_283 = arith.constant 0 : index
    %c1_284 = arith.constant 1 : index
    %1062 = vector.load %arg9[%c0_281, %c0_282, %c0_283, %c1_284] : memref<2x8x18x18xf32, #tpu.memory_space<vmem>>, vector<2x1x16x16xf32>
    %c32_285 = arith.constant 32 : index
    %1063 = memref.load %arg4[%c32_285] : memref<160xf32, #tpu.memory_space<smem>>
    %1064 = vector.broadcast %1063 : f32 to vector<2x1x16x16xf32>
    %1065 = arith.mulf %1062, %1064 : vector<2x1x16x16xf32>
    %1066 = arith.addf %1049, %1065 : vector<2x1x16x16xf32>
    %c33_286 = arith.constant 33 : index
    %1067 = memref.load %arg4[%c33_286] : memref<160xf32, #tpu.memory_space<smem>>
    %1068 = vector.broadcast %1067 : f32 to vector<2x1x16x16xf32>
    %1069 = arith.mulf %1062, %1068 : vector<2x1x16x16xf32>
    %1070 = arith.addf %1053, %1069 : vector<2x1x16x16xf32>
    %c34_287 = arith.constant 34 : index
    %1071 = memref.load %arg4[%c34_287] : memref<160xf32, #tpu.memory_space<smem>>
    %1072 = vector.broadcast %1071 : f32 to vector<2x1x16x16xf32>
    %1073 = arith.mulf %1062, %1072 : vector<2x1x16x16xf32>
    %1074 = arith.addf %1057, %1073 : vector<2x1x16x16xf32>
    %c35_288 = arith.constant 35 : index
    %1075 = memref.load %arg4[%c35_288] : memref<160xf32, #tpu.memory_space<smem>>
    %1076 = vector.broadcast %1075 : f32 to vector<2x1x16x16xf32>
    %1077 = arith.mulf %1062, %1076 : vector<2x1x16x16xf32>
    %1078 = arith.addf %1061, %1077 : vector<2x1x16x16xf32>
    %c0_289 = arith.constant 0 : index
    %c1_290 = arith.constant 1 : index
    %c0_291 = arith.constant 0 : index
    %c1_292 = arith.constant 1 : index
    %1079 = vector.load %arg9[%c0_289, %c1_290, %c0_291, %c1_292] : memref<2x8x18x18xf32, #tpu.memory_space<vmem>>, vector<2x1x16x16xf32>
    %c36_293 = arith.constant 36 : index
    %1080 = memref.load %arg4[%c36_293] : memref<160xf32, #tpu.memory_space<smem>>
    %1081 = vector.broadcast %1080 : f32 to vector<2x1x16x16xf32>
    %1082 = arith.mulf %1079, %1081 : vector<2x1x16x16xf32>
    %1083 = arith.addf %1066, %1082 : vector<2x1x16x16xf32>
    %c37_294 = arith.constant 37 : index
    %1084 = memref.load %arg4[%c37_294] : memref<160xf32, #tpu.memory_space<smem>>
    %1085 = vector.broadcast %1084 : f32 to vector<2x1x16x16xf32>
    %1086 = arith.mulf %1079, %1085 : vector<2x1x16x16xf32>
    %1087 = arith.addf %1070, %1086 : vector<2x1x16x16xf32>
    %c38_295 = arith.constant 38 : index
    %1088 = memref.load %arg4[%c38_295] : memref<160xf32, #tpu.memory_space<smem>>
    %1089 = vector.broadcast %1088 : f32 to vector<2x1x16x16xf32>
    %1090 = arith.mulf %1079, %1089 : vector<2x1x16x16xf32>
    %1091 = arith.addf %1074, %1090 : vector<2x1x16x16xf32>
    %c39_296 = arith.constant 39 : index
    %1092 = memref.load %arg4[%c39_296] : memref<160xf32, #tpu.memory_space<smem>>
    %1093 = vector.broadcast %1092 : f32 to vector<2x1x16x16xf32>
    %1094 = arith.mulf %1079, %1093 : vector<2x1x16x16xf32>
    %1095 = arith.addf %1078, %1094 : vector<2x1x16x16xf32>
    %c0_297 = arith.constant 0 : index
    %c2_298 = arith.constant 2 : index
    %c0_299 = arith.constant 0 : index
    %c1_300 = arith.constant 1 : index
    %1096 = vector.load %arg9[%c0_297, %c2_298, %c0_299, %c1_300] : memref<2x8x18x18xf32, #tpu.memory_space<vmem>>, vector<2x1x16x16xf32>
    %c40_301 = arith.constant 40 : index
    %1097 = memref.load %arg4[%c40_301] : memref<160xf32, #tpu.memory_space<smem>>
    %1098 = vector.broadcast %1097 : f32 to vector<2x1x16x16xf32>
    %1099 = arith.mulf %1096, %1098 : vector<2x1x16x16xf32>
    %1100 = arith.addf %1083, %1099 : vector<2x1x16x16xf32>
    %c41_302 = arith.constant 41 : index
    %1101 = memref.load %arg4[%c41_302] : memref<160xf32, #tpu.memory_space<smem>>
    %1102 = vector.broadcast %1101 : f32 to vector<2x1x16x16xf32>
    %1103 = arith.mulf %1096, %1102 : vector<2x1x16x16xf32>
    %1104 = arith.addf %1087, %1103 : vector<2x1x16x16xf32>
    %c42_303 = arith.constant 42 : index
    %1105 = memref.load %arg4[%c42_303] : memref<160xf32, #tpu.memory_space<smem>>
    %1106 = vector.broadcast %1105 : f32 to vector<2x1x16x16xf32>
    %1107 = arith.mulf %1096, %1106 : vector<2x1x16x16xf32>
    %1108 = arith.addf %1091, %1107 : vector<2x1x16x16xf32>
    %c43_304 = arith.constant 43 : index
    %1109 = memref.load %arg4[%c43_304] : memref<160xf32, #tpu.memory_space<smem>>
    %1110 = vector.broadcast %1109 : f32 to vector<2x1x16x16xf32>
    %1111 = arith.mulf %1096, %1110 : vector<2x1x16x16xf32>
    %1112 = arith.addf %1095, %1111 : vector<2x1x16x16xf32>
    %c0_305 = arith.constant 0 : index
    %c3_306 = arith.constant 3 : index
    %c0_307 = arith.constant 0 : index
    %c1_308 = arith.constant 1 : index
    %1113 = vector.load %arg9[%c0_305, %c3_306, %c0_307, %c1_308] : memref<2x8x18x18xf32, #tpu.memory_space<vmem>>, vector<2x1x16x16xf32>
    %c44_309 = arith.constant 44 : index
    %1114 = memref.load %arg4[%c44_309] : memref<160xf32, #tpu.memory_space<smem>>
    %1115 = vector.broadcast %1114 : f32 to vector<2x1x16x16xf32>
    %1116 = arith.mulf %1113, %1115 : vector<2x1x16x16xf32>
    %1117 = arith.addf %1100, %1116 : vector<2x1x16x16xf32>
    %c45_310 = arith.constant 45 : index
    %1118 = memref.load %arg4[%c45_310] : memref<160xf32, #tpu.memory_space<smem>>
    %1119 = vector.broadcast %1118 : f32 to vector<2x1x16x16xf32>
    %1120 = arith.mulf %1113, %1119 : vector<2x1x16x16xf32>
    %1121 = arith.addf %1104, %1120 : vector<2x1x16x16xf32>
    %c46_311 = arith.constant 46 : index
    %1122 = memref.load %arg4[%c46_311] : memref<160xf32, #tpu.memory_space<smem>>
    %1123 = vector.broadcast %1122 : f32 to vector<2x1x16x16xf32>
    %1124 = arith.mulf %1113, %1123 : vector<2x1x16x16xf32>
    %1125 = arith.addf %1108, %1124 : vector<2x1x16x16xf32>
    %c47_312 = arith.constant 47 : index
    %1126 = memref.load %arg4[%c47_312] : memref<160xf32, #tpu.memory_space<smem>>
    %1127 = vector.broadcast %1126 : f32 to vector<2x1x16x16xf32>
    %1128 = arith.mulf %1113, %1127 : vector<2x1x16x16xf32>
    %1129 = arith.addf %1112, %1128 : vector<2x1x16x16xf32>
    %c0_313 = arith.constant 0 : index
    %c4_314 = arith.constant 4 : index
    %c0_315 = arith.constant 0 : index
    %c1_316 = arith.constant 1 : index
    %1130 = vector.load %arg9[%c0_313, %c4_314, %c0_315, %c1_316] : memref<2x8x18x18xf32, #tpu.memory_space<vmem>>, vector<2x1x16x16xf32>
    %c48_317 = arith.constant 48 : index
    %1131 = memref.load %arg4[%c48_317] : memref<160xf32, #tpu.memory_space<smem>>
    %1132 = vector.broadcast %1131 : f32 to vector<2x1x16x16xf32>
    %1133 = arith.mulf %1130, %1132 : vector<2x1x16x16xf32>
    %1134 = arith.addf %1117, %1133 : vector<2x1x16x16xf32>
    %c49_318 = arith.constant 49 : index
    %1135 = memref.load %arg4[%c49_318] : memref<160xf32, #tpu.memory_space<smem>>
    %1136 = vector.broadcast %1135 : f32 to vector<2x1x16x16xf32>
    %1137 = arith.mulf %1130, %1136 : vector<2x1x16x16xf32>
    %1138 = arith.addf %1121, %1137 : vector<2x1x16x16xf32>
    %c50_319 = arith.constant 50 : index
    %1139 = memref.load %arg4[%c50_319] : memref<160xf32, #tpu.memory_space<smem>>
    %1140 = vector.broadcast %1139 : f32 to vector<2x1x16x16xf32>
    %1141 = arith.mulf %1130, %1140 : vector<2x1x16x16xf32>
    %1142 = arith.addf %1125, %1141 : vector<2x1x16x16xf32>
    %c51_320 = arith.constant 51 : index
    %1143 = memref.load %arg4[%c51_320] : memref<160xf32, #tpu.memory_space<smem>>
    %1144 = vector.broadcast %1143 : f32 to vector<2x1x16x16xf32>
    %1145 = arith.mulf %1130, %1144 : vector<2x1x16x16xf32>
    %1146 = arith.addf %1129, %1145 : vector<2x1x16x16xf32>
    %c0_321 = arith.constant 0 : index
    %c5_322 = arith.constant 5 : index
    %c0_323 = arith.constant 0 : index
    %c1_324 = arith.constant 1 : index
    %1147 = vector.load %arg9[%c0_321, %c5_322, %c0_323, %c1_324] : memref<2x8x18x18xf32, #tpu.memory_space<vmem>>, vector<2x1x16x16xf32>
    %c52_325 = arith.constant 52 : index
    %1148 = memref.load %arg4[%c52_325] : memref<160xf32, #tpu.memory_space<smem>>
    %1149 = vector.broadcast %1148 : f32 to vector<2x1x16x16xf32>
    %1150 = arith.mulf %1147, %1149 : vector<2x1x16x16xf32>
    %1151 = arith.addf %1134, %1150 : vector<2x1x16x16xf32>
    %c53_326 = arith.constant 53 : index
    %1152 = memref.load %arg4[%c53_326] : memref<160xf32, #tpu.memory_space<smem>>
    %1153 = vector.broadcast %1152 : f32 to vector<2x1x16x16xf32>
    %1154 = arith.mulf %1147, %1153 : vector<2x1x16x16xf32>
    %1155 = arith.addf %1138, %1154 : vector<2x1x16x16xf32>
    %c54_327 = arith.constant 54 : index
    %1156 = memref.load %arg4[%c54_327] : memref<160xf32, #tpu.memory_space<smem>>
    %1157 = vector.broadcast %1156 : f32 to vector<2x1x16x16xf32>
    %1158 = arith.mulf %1147, %1157 : vector<2x1x16x16xf32>
    %1159 = arith.addf %1142, %1158 : vector<2x1x16x16xf32>
    %c55_328 = arith.constant 55 : index
    %1160 = memref.load %arg4[%c55_328] : memref<160xf32, #tpu.memory_space<smem>>
    %1161 = vector.broadcast %1160 : f32 to vector<2x1x16x16xf32>
    %1162 = arith.mulf %1147, %1161 : vector<2x1x16x16xf32>
    %1163 = arith.addf %1146, %1162 : vector<2x1x16x16xf32>
    %c0_329 = arith.constant 0 : index
    %c6_330 = arith.constant 6 : index
    %c0_331 = arith.constant 0 : index
    %c1_332 = arith.constant 1 : index
    %1164 = vector.load %arg9[%c0_329, %c6_330, %c0_331, %c1_332] : memref<2x8x18x18xf32, #tpu.memory_space<vmem>>, vector<2x1x16x16xf32>
    %c56_333 = arith.constant 56 : index
    %1165 = memref.load %arg4[%c56_333] : memref<160xf32, #tpu.memory_space<smem>>
    %1166 = vector.broadcast %1165 : f32 to vector<2x1x16x16xf32>
    %1167 = arith.mulf %1164, %1166 : vector<2x1x16x16xf32>
    %1168 = arith.addf %1151, %1167 : vector<2x1x16x16xf32>
    %c57_334 = arith.constant 57 : index
    %1169 = memref.load %arg4[%c57_334] : memref<160xf32, #tpu.memory_space<smem>>
    %1170 = vector.broadcast %1169 : f32 to vector<2x1x16x16xf32>
    %1171 = arith.mulf %1164, %1170 : vector<2x1x16x16xf32>
    %1172 = arith.addf %1155, %1171 : vector<2x1x16x16xf32>
    %c58_335 = arith.constant 58 : index
    %1173 = memref.load %arg4[%c58_335] : memref<160xf32, #tpu.memory_space<smem>>
    %1174 = vector.broadcast %1173 : f32 to vector<2x1x16x16xf32>
    %1175 = arith.mulf %1164, %1174 : vector<2x1x16x16xf32>
    %1176 = arith.addf %1159, %1175 : vector<2x1x16x16xf32>
    %c59_336 = arith.constant 59 : index
    %1177 = memref.load %arg4[%c59_336] : memref<160xf32, #tpu.memory_space<smem>>
    %1178 = vector.broadcast %1177 : f32 to vector<2x1x16x16xf32>
    %1179 = arith.mulf %1164, %1178 : vector<2x1x16x16xf32>
    %1180 = arith.addf %1163, %1179 : vector<2x1x16x16xf32>
    %c0_337 = arith.constant 0 : index
    %c7_338 = arith.constant 7 : index
    %c0_339 = arith.constant 0 : index
    %c1_340 = arith.constant 1 : index
    %1181 = vector.load %arg9[%c0_337, %c7_338, %c0_339, %c1_340] : memref<2x8x18x18xf32, #tpu.memory_space<vmem>>, vector<2x1x16x16xf32>
    %c60_341 = arith.constant 60 : index
    %1182 = memref.load %arg4[%c60_341] : memref<160xf32, #tpu.memory_space<smem>>
    %1183 = vector.broadcast %1182 : f32 to vector<2x1x16x16xf32>
    %1184 = arith.mulf %1181, %1183 : vector<2x1x16x16xf32>
    %1185 = arith.addf %1168, %1184 : vector<2x1x16x16xf32>
    %c61_342 = arith.constant 61 : index
    %1186 = memref.load %arg4[%c61_342] : memref<160xf32, #tpu.memory_space<smem>>
    %1187 = vector.broadcast %1186 : f32 to vector<2x1x16x16xf32>
    %1188 = arith.mulf %1181, %1187 : vector<2x1x16x16xf32>
    %1189 = arith.addf %1172, %1188 : vector<2x1x16x16xf32>
    %c62_343 = arith.constant 62 : index
    %1190 = memref.load %arg4[%c62_343] : memref<160xf32, #tpu.memory_space<smem>>
    %1191 = vector.broadcast %1190 : f32 to vector<2x1x16x16xf32>
    %1192 = arith.mulf %1181, %1191 : vector<2x1x16x16xf32>
    %1193 = arith.addf %1176, %1192 : vector<2x1x16x16xf32>
    %c63_344 = arith.constant 63 : index
    %1194 = memref.load %arg4[%c63_344] : memref<160xf32, #tpu.memory_space<smem>>
    %1195 = vector.broadcast %1194 : f32 to vector<2x1x16x16xf32>
    %1196 = arith.mulf %1181, %1195 : vector<2x1x16x16xf32>
    %1197 = arith.addf %1180, %1196 : vector<2x1x16x16xf32>
    %c0_345 = arith.constant 0 : index
    %c0_346 = arith.constant 0 : index
    %c0_347 = arith.constant 0 : index
    %c2_348 = arith.constant 2 : index
    %1198 = vector.load %arg9[%c0_345, %c0_346, %c0_347, %c2_348] : memref<2x8x18x18xf32, #tpu.memory_space<vmem>>, vector<2x1x16x16xf32>
    %c64_349 = arith.constant 64 : index
    %1199 = memref.load %arg4[%c64_349] : memref<160xf32, #tpu.memory_space<smem>>
    %1200 = vector.broadcast %1199 : f32 to vector<2x1x16x16xf32>
    %1201 = arith.mulf %1198, %1200 : vector<2x1x16x16xf32>
    %1202 = arith.addf %1185, %1201 : vector<2x1x16x16xf32>
    %c65_350 = arith.constant 65 : index
    %1203 = memref.load %arg4[%c65_350] : memref<160xf32, #tpu.memory_space<smem>>
    %1204 = vector.broadcast %1203 : f32 to vector<2x1x16x16xf32>
    %1205 = arith.mulf %1198, %1204 : vector<2x1x16x16xf32>
    %1206 = arith.addf %1189, %1205 : vector<2x1x16x16xf32>
    %c66_351 = arith.constant 66 : index
    %1207 = memref.load %arg4[%c66_351] : memref<160xf32, #tpu.memory_space<smem>>
    %1208 = vector.broadcast %1207 : f32 to vector<2x1x16x16xf32>
    %1209 = arith.mulf %1198, %1208 : vector<2x1x16x16xf32>
    %1210 = arith.addf %1193, %1209 : vector<2x1x16x16xf32>
    %c67_352 = arith.constant 67 : index
    %1211 = memref.load %arg4[%c67_352] : memref<160xf32, #tpu.memory_space<smem>>
    %1212 = vector.broadcast %1211 : f32 to vector<2x1x16x16xf32>
    %1213 = arith.mulf %1198, %1212 : vector<2x1x16x16xf32>
    %1214 = arith.addf %1197, %1213 : vector<2x1x16x16xf32>
    %c0_353 = arith.constant 0 : index
    %c1_354 = arith.constant 1 : index
    %c0_355 = arith.constant 0 : index
    %c2_356 = arith.constant 2 : index
    %1215 = vector.load %arg9[%c0_353, %c1_354, %c0_355, %c2_356] : memref<2x8x18x18xf32, #tpu.memory_space<vmem>>, vector<2x1x16x16xf32>
    %c68_357 = arith.constant 68 : index
    %1216 = memref.load %arg4[%c68_357] : memref<160xf32, #tpu.memory_space<smem>>
    %1217 = vector.broadcast %1216 : f32 to vector<2x1x16x16xf32>
    %1218 = arith.mulf %1215, %1217 : vector<2x1x16x16xf32>
    %1219 = arith.addf %1202, %1218 : vector<2x1x16x16xf32>
    %c69_358 = arith.constant 69 : index
    %1220 = memref.load %arg4[%c69_358] : memref<160xf32, #tpu.memory_space<smem>>
    %1221 = vector.broadcast %1220 : f32 to vector<2x1x16x16xf32>
    %1222 = arith.mulf %1215, %1221 : vector<2x1x16x16xf32>
    %1223 = arith.addf %1206, %1222 : vector<2x1x16x16xf32>
    %c70_359 = arith.constant 70 : index
    %1224 = memref.load %arg4[%c70_359] : memref<160xf32, #tpu.memory_space<smem>>
    %1225 = vector.broadcast %1224 : f32 to vector<2x1x16x16xf32>
    %1226 = arith.mulf %1215, %1225 : vector<2x1x16x16xf32>
    %1227 = arith.addf %1210, %1226 : vector<2x1x16x16xf32>
    %c71_360 = arith.constant 71 : index
    %1228 = memref.load %arg4[%c71_360] : memref<160xf32, #tpu.memory_space<smem>>
    %1229 = vector.broadcast %1228 : f32 to vector<2x1x16x16xf32>
    %1230 = arith.mulf %1215, %1229 : vector<2x1x16x16xf32>
    %1231 = arith.addf %1214, %1230 : vector<2x1x16x16xf32>
    %c0_361 = arith.constant 0 : index
    %c2_362 = arith.constant 2 : index
    %c0_363 = arith.constant 0 : index
    %c2_364 = arith.constant 2 : index
    %1232 = vector.load %arg9[%c0_361, %c2_362, %c0_363, %c2_364] : memref<2x8x18x18xf32, #tpu.memory_space<vmem>>, vector<2x1x16x16xf32>
    %c72_365 = arith.constant 72 : index
    %1233 = memref.load %arg4[%c72_365] : memref<160xf32, #tpu.memory_space<smem>>
    %1234 = vector.broadcast %1233 : f32 to vector<2x1x16x16xf32>
    %1235 = arith.mulf %1232, %1234 : vector<2x1x16x16xf32>
    %1236 = arith.addf %1219, %1235 : vector<2x1x16x16xf32>
    %c73_366 = arith.constant 73 : index
    %1237 = memref.load %arg4[%c73_366] : memref<160xf32, #tpu.memory_space<smem>>
    %1238 = vector.broadcast %1237 : f32 to vector<2x1x16x16xf32>
    %1239 = arith.mulf %1232, %1238 : vector<2x1x16x16xf32>
    %1240 = arith.addf %1223, %1239 : vector<2x1x16x16xf32>
    %c74_367 = arith.constant 74 : index
    %1241 = memref.load %arg4[%c74_367] : memref<160xf32, #tpu.memory_space<smem>>
    %1242 = vector.broadcast %1241 : f32 to vector<2x1x16x16xf32>
    %1243 = arith.mulf %1232, %1242 : vector<2x1x16x16xf32>
    %1244 = arith.addf %1227, %1243 : vector<2x1x16x16xf32>
    %c75_368 = arith.constant 75 : index
    %1245 = memref.load %arg4[%c75_368] : memref<160xf32, #tpu.memory_space<smem>>
    %1246 = vector.broadcast %1245 : f32 to vector<2x1x16x16xf32>
    %1247 = arith.mulf %1232, %1246 : vector<2x1x16x16xf32>
    %1248 = arith.addf %1231, %1247 : vector<2x1x16x16xf32>
    %c0_369 = arith.constant 0 : index
    %c3_370 = arith.constant 3 : index
    %c0_371 = arith.constant 0 : index
    %c2_372 = arith.constant 2 : index
    %1249 = vector.load %arg9[%c0_369, %c3_370, %c0_371, %c2_372] : memref<2x8x18x18xf32, #tpu.memory_space<vmem>>, vector<2x1x16x16xf32>
    %c76_373 = arith.constant 76 : index
    %1250 = memref.load %arg4[%c76_373] : memref<160xf32, #tpu.memory_space<smem>>
    %1251 = vector.broadcast %1250 : f32 to vector<2x1x16x16xf32>
    %1252 = arith.mulf %1249, %1251 : vector<2x1x16x16xf32>
    %1253 = arith.addf %1236, %1252 : vector<2x1x16x16xf32>
    %c77_374 = arith.constant 77 : index
    %1254 = memref.load %arg4[%c77_374] : memref<160xf32, #tpu.memory_space<smem>>
    %1255 = vector.broadcast %1254 : f32 to vector<2x1x16x16xf32>
    %1256 = arith.mulf %1249, %1255 : vector<2x1x16x16xf32>
    %1257 = arith.addf %1240, %1256 : vector<2x1x16x16xf32>
    %c78_375 = arith.constant 78 : index
    %1258 = memref.load %arg4[%c78_375] : memref<160xf32, #tpu.memory_space<smem>>
    %1259 = vector.broadcast %1258 : f32 to vector<2x1x16x16xf32>
    %1260 = arith.mulf %1249, %1259 : vector<2x1x16x16xf32>
    %1261 = arith.addf %1244, %1260 : vector<2x1x16x16xf32>
    %c79_376 = arith.constant 79 : index
    %1262 = memref.load %arg4[%c79_376] : memref<160xf32, #tpu.memory_space<smem>>
    %1263 = vector.broadcast %1262 : f32 to vector<2x1x16x16xf32>
    %1264 = arith.mulf %1249, %1263 : vector<2x1x16x16xf32>
    %1265 = arith.addf %1248, %1264 : vector<2x1x16x16xf32>
    %c0_377 = arith.constant 0 : index
    %c4_378 = arith.constant 4 : index
    %c0_379 = arith.constant 0 : index
    %c2_380 = arith.constant 2 : index
    %1266 = vector.load %arg9[%c0_377, %c4_378, %c0_379, %c2_380] : memref<2x8x18x18xf32, #tpu.memory_space<vmem>>, vector<2x1x16x16xf32>
    %c80_381 = arith.constant 80 : index
    %1267 = memref.load %arg4[%c80_381] : memref<160xf32, #tpu.memory_space<smem>>
    %1268 = vector.broadcast %1267 : f32 to vector<2x1x16x16xf32>
    %1269 = arith.mulf %1266, %1268 : vector<2x1x16x16xf32>
    %1270 = arith.addf %1253, %1269 : vector<2x1x16x16xf32>
    %c81_382 = arith.constant 81 : index
    %1271 = memref.load %arg4[%c81_382] : memref<160xf32, #tpu.memory_space<smem>>
    %1272 = vector.broadcast %1271 : f32 to vector<2x1x16x16xf32>
    %1273 = arith.mulf %1266, %1272 : vector<2x1x16x16xf32>
    %1274 = arith.addf %1257, %1273 : vector<2x1x16x16xf32>
    %c82_383 = arith.constant 82 : index
    %1275 = memref.load %arg4[%c82_383] : memref<160xf32, #tpu.memory_space<smem>>
    %1276 = vector.broadcast %1275 : f32 to vector<2x1x16x16xf32>
    %1277 = arith.mulf %1266, %1276 : vector<2x1x16x16xf32>
    %1278 = arith.addf %1261, %1277 : vector<2x1x16x16xf32>
    %c83_384 = arith.constant 83 : index
    %1279 = memref.load %arg4[%c83_384] : memref<160xf32, #tpu.memory_space<smem>>
    %1280 = vector.broadcast %1279 : f32 to vector<2x1x16x16xf32>
    %1281 = arith.mulf %1266, %1280 : vector<2x1x16x16xf32>
    %1282 = arith.addf %1265, %1281 : vector<2x1x16x16xf32>
    %c0_385 = arith.constant 0 : index
    %c5_386 = arith.constant 5 : index
    %c0_387 = arith.constant 0 : index
    %c2_388 = arith.constant 2 : index
    %1283 = vector.load %arg9[%c0_385, %c5_386, %c0_387, %c2_388] : memref<2x8x18x18xf32, #tpu.memory_space<vmem>>, vector<2x1x16x16xf32>
    %c84_389 = arith.constant 84 : index
    %1284 = memref.load %arg4[%c84_389] : memref<160xf32, #tpu.memory_space<smem>>
    %1285 = vector.broadcast %1284 : f32 to vector<2x1x16x16xf32>
    %1286 = arith.mulf %1283, %1285 : vector<2x1x16x16xf32>
    %1287 = arith.addf %1270, %1286 : vector<2x1x16x16xf32>
    %c85_390 = arith.constant 85 : index
    %1288 = memref.load %arg4[%c85_390] : memref<160xf32, #tpu.memory_space<smem>>
    %1289 = vector.broadcast %1288 : f32 to vector<2x1x16x16xf32>
    %1290 = arith.mulf %1283, %1289 : vector<2x1x16x16xf32>
    %1291 = arith.addf %1274, %1290 : vector<2x1x16x16xf32>
    %c86_391 = arith.constant 86 : index
    %1292 = memref.load %arg4[%c86_391] : memref<160xf32, #tpu.memory_space<smem>>
    %1293 = vector.broadcast %1292 : f32 to vector<2x1x16x16xf32>
    %1294 = arith.mulf %1283, %1293 : vector<2x1x16x16xf32>
    %1295 = arith.addf %1278, %1294 : vector<2x1x16x16xf32>
    %c87_392 = arith.constant 87 : index
    %1296 = memref.load %arg4[%c87_392] : memref<160xf32, #tpu.memory_space<smem>>
    %1297 = vector.broadcast %1296 : f32 to vector<2x1x16x16xf32>
    %1298 = arith.mulf %1283, %1297 : vector<2x1x16x16xf32>
    %1299 = arith.addf %1282, %1298 : vector<2x1x16x16xf32>
    %c0_393 = arith.constant 0 : index
    %c6_394 = arith.constant 6 : index
    %c0_395 = arith.constant 0 : index
    %c2_396 = arith.constant 2 : index
    %1300 = vector.load %arg9[%c0_393, %c6_394, %c0_395, %c2_396] : memref<2x8x18x18xf32, #tpu.memory_space<vmem>>, vector<2x1x16x16xf32>
    %c88_397 = arith.constant 88 : index
    %1301 = memref.load %arg4[%c88_397] : memref<160xf32, #tpu.memory_space<smem>>
    %1302 = vector.broadcast %1301 : f32 to vector<2x1x16x16xf32>
    %1303 = arith.mulf %1300, %1302 : vector<2x1x16x16xf32>
    %1304 = arith.addf %1287, %1303 : vector<2x1x16x16xf32>
    %c89_398 = arith.constant 89 : index
    %1305 = memref.load %arg4[%c89_398] : memref<160xf32, #tpu.memory_space<smem>>
    %1306 = vector.broadcast %1305 : f32 to vector<2x1x16x16xf32>
    %1307 = arith.mulf %1300, %1306 : vector<2x1x16x16xf32>
    %1308 = arith.addf %1291, %1307 : vector<2x1x16x16xf32>
    %c90_399 = arith.constant 90 : index
    %1309 = memref.load %arg4[%c90_399] : memref<160xf32, #tpu.memory_space<smem>>
    %1310 = vector.broadcast %1309 : f32 to vector<2x1x16x16xf32>
    %1311 = arith.mulf %1300, %1310 : vector<2x1x16x16xf32>
    %1312 = arith.addf %1295, %1311 : vector<2x1x16x16xf32>
    %c91_400 = arith.constant 91 : index
    %1313 = memref.load %arg4[%c91_400] : memref<160xf32, #tpu.memory_space<smem>>
    %1314 = vector.broadcast %1313 : f32 to vector<2x1x16x16xf32>
    %1315 = arith.mulf %1300, %1314 : vector<2x1x16x16xf32>
    %1316 = arith.addf %1299, %1315 : vector<2x1x16x16xf32>
    %c0_401 = arith.constant 0 : index
    %c7_402 = arith.constant 7 : index
    %c0_403 = arith.constant 0 : index
    %c2_404 = arith.constant 2 : index
    %1317 = vector.load %arg9[%c0_401, %c7_402, %c0_403, %c2_404] : memref<2x8x18x18xf32, #tpu.memory_space<vmem>>, vector<2x1x16x16xf32>
    %c92_405 = arith.constant 92 : index
    %1318 = memref.load %arg4[%c92_405] : memref<160xf32, #tpu.memory_space<smem>>
    %1319 = vector.broadcast %1318 : f32 to vector<2x1x16x16xf32>
    %1320 = arith.mulf %1317, %1319 : vector<2x1x16x16xf32>
    %1321 = arith.addf %1304, %1320 : vector<2x1x16x16xf32>
    %c93_406 = arith.constant 93 : index
    %1322 = memref.load %arg4[%c93_406] : memref<160xf32, #tpu.memory_space<smem>>
    %1323 = vector.broadcast %1322 : f32 to vector<2x1x16x16xf32>
    %1324 = arith.mulf %1317, %1323 : vector<2x1x16x16xf32>
    %1325 = arith.addf %1308, %1324 : vector<2x1x16x16xf32>
    %c94_407 = arith.constant 94 : index
    %1326 = memref.load %arg4[%c94_407] : memref<160xf32, #tpu.memory_space<smem>>
    %1327 = vector.broadcast %1326 : f32 to vector<2x1x16x16xf32>
    %1328 = arith.mulf %1317, %1327 : vector<2x1x16x16xf32>
    %1329 = arith.addf %1312, %1328 : vector<2x1x16x16xf32>
    %c95_408 = arith.constant 95 : index
    %1330 = memref.load %arg4[%c95_408] : memref<160xf32, #tpu.memory_space<smem>>
    %1331 = vector.broadcast %1330 : f32 to vector<2x1x16x16xf32>
    %1332 = arith.mulf %1317, %1331 : vector<2x1x16x16xf32>
    %1333 = arith.addf %1316, %1332 : vector<2x1x16x16xf32>
    %c0_409 = arith.constant 0 : index
    %c0_410 = arith.constant 0 : index
    %c1_411 = arith.constant 1 : index
    %c0_412 = arith.constant 0 : index
    %1334 = vector.load %arg9[%c0_409, %c0_410, %c1_411, %c0_412] : memref<2x8x18x18xf32, #tpu.memory_space<vmem>>, vector<2x1x16x16xf32>
    %c96_413 = arith.constant 96 : index
    %1335 = memref.load %arg4[%c96_413] : memref<160xf32, #tpu.memory_space<smem>>
    %1336 = vector.broadcast %1335 : f32 to vector<2x1x16x16xf32>
    %1337 = arith.mulf %1334, %1336 : vector<2x1x16x16xf32>
    %1338 = arith.addf %1321, %1337 : vector<2x1x16x16xf32>
    %c97_414 = arith.constant 97 : index
    %1339 = memref.load %arg4[%c97_414] : memref<160xf32, #tpu.memory_space<smem>>
    %1340 = vector.broadcast %1339 : f32 to vector<2x1x16x16xf32>
    %1341 = arith.mulf %1334, %1340 : vector<2x1x16x16xf32>
    %1342 = arith.addf %1325, %1341 : vector<2x1x16x16xf32>
    %c98_415 = arith.constant 98 : index
    %1343 = memref.load %arg4[%c98_415] : memref<160xf32, #tpu.memory_space<smem>>
    %1344 = vector.broadcast %1343 : f32 to vector<2x1x16x16xf32>
    %1345 = arith.mulf %1334, %1344 : vector<2x1x16x16xf32>
    %1346 = arith.addf %1329, %1345 : vector<2x1x16x16xf32>
    %c99_416 = arith.constant 99 : index
    %1347 = memref.load %arg4[%c99_416] : memref<160xf32, #tpu.memory_space<smem>>
    %1348 = vector.broadcast %1347 : f32 to vector<2x1x16x16xf32>
    %1349 = arith.mulf %1334, %1348 : vector<2x1x16x16xf32>
    %1350 = arith.addf %1333, %1349 : vector<2x1x16x16xf32>
    %c0_417 = arith.constant 0 : index
    %c1_418 = arith.constant 1 : index
    %c1_419 = arith.constant 1 : index
    %c0_420 = arith.constant 0 : index
    %1351 = vector.load %arg9[%c0_417, %c1_418, %c1_419, %c0_420] : memref<2x8x18x18xf32, #tpu.memory_space<vmem>>, vector<2x1x16x16xf32>
    %c100_421 = arith.constant 100 : index
    %1352 = memref.load %arg4[%c100_421] : memref<160xf32, #tpu.memory_space<smem>>
    %1353 = vector.broadcast %1352 : f32 to vector<2x1x16x16xf32>
    %1354 = arith.mulf %1351, %1353 : vector<2x1x16x16xf32>
    %1355 = arith.addf %1338, %1354 : vector<2x1x16x16xf32>
    %c101_422 = arith.constant 101 : index
    %1356 = memref.load %arg4[%c101_422] : memref<160xf32, #tpu.memory_space<smem>>
    %1357 = vector.broadcast %1356 : f32 to vector<2x1x16x16xf32>
    %1358 = arith.mulf %1351, %1357 : vector<2x1x16x16xf32>
    %1359 = arith.addf %1342, %1358 : vector<2x1x16x16xf32>
    %c102_423 = arith.constant 102 : index
    %1360 = memref.load %arg4[%c102_423] : memref<160xf32, #tpu.memory_space<smem>>
    %1361 = vector.broadcast %1360 : f32 to vector<2x1x16x16xf32>
    %1362 = arith.mulf %1351, %1361 : vector<2x1x16x16xf32>
    %1363 = arith.addf %1346, %1362 : vector<2x1x16x16xf32>
    %c103_424 = arith.constant 103 : index
    %1364 = memref.load %arg4[%c103_424] : memref<160xf32, #tpu.memory_space<smem>>
    %1365 = vector.broadcast %1364 : f32 to vector<2x1x16x16xf32>
    %1366 = arith.mulf %1351, %1365 : vector<2x1x16x16xf32>
    %1367 = arith.addf %1350, %1366 : vector<2x1x16x16xf32>
    %c0_425 = arith.constant 0 : index
    %c2_426 = arith.constant 2 : index
    %c1_427 = arith.constant 1 : index
    %c0_428 = arith.constant 0 : index
    %1368 = vector.load %arg9[%c0_425, %c2_426, %c1_427, %c0_428] : memref<2x8x18x18xf32, #tpu.memory_space<vmem>>, vector<2x1x16x16xf32>
    %c104_429 = arith.constant 104 : index
    %1369 = memref.load %arg4[%c104_429] : memref<160xf32, #tpu.memory_space<smem>>
    %1370 = vector.broadcast %1369 : f32 to vector<2x1x16x16xf32>
    %1371 = arith.mulf %1368, %1370 : vector<2x1x16x16xf32>
    %1372 = arith.addf %1355, %1371 : vector<2x1x16x16xf32>
    %c105_430 = arith.constant 105 : index
    %1373 = memref.load %arg4[%c105_430] : memref<160xf32, #tpu.memory_space<smem>>
    %1374 = vector.broadcast %1373 : f32 to vector<2x1x16x16xf32>
    %1375 = arith.mulf %1368, %1374 : vector<2x1x16x16xf32>
    %1376 = arith.addf %1359, %1375 : vector<2x1x16x16xf32>
    %c106_431 = arith.constant 106 : index
    %1377 = memref.load %arg4[%c106_431] : memref<160xf32, #tpu.memory_space<smem>>
    %1378 = vector.broadcast %1377 : f32 to vector<2x1x16x16xf32>
    %1379 = arith.mulf %1368, %1378 : vector<2x1x16x16xf32>
    %1380 = arith.addf %1363, %1379 : vector<2x1x16x16xf32>
    %c107_432 = arith.constant 107 : index
    %1381 = memref.load %arg4[%c107_432] : memref<160xf32, #tpu.memory_space<smem>>
    %1382 = vector.broadcast %1381 : f32 to vector<2x1x16x16xf32>
    %1383 = arith.mulf %1368, %1382 : vector<2x1x16x16xf32>
    %1384 = arith.addf %1367, %1383 : vector<2x1x16x16xf32>
    %c0_433 = arith.constant 0 : index
    %c3_434 = arith.constant 3 : index
    %c1_435 = arith.constant 1 : index
    %c0_436 = arith.constant 0 : index
    %1385 = vector.load %arg9[%c0_433, %c3_434, %c1_435, %c0_436] : memref<2x8x18x18xf32, #tpu.memory_space<vmem>>, vector<2x1x16x16xf32>
    %c108_437 = arith.constant 108 : index
    %1386 = memref.load %arg4[%c108_437] : memref<160xf32, #tpu.memory_space<smem>>
    %1387 = vector.broadcast %1386 : f32 to vector<2x1x16x16xf32>
    %1388 = arith.mulf %1385, %1387 : vector<2x1x16x16xf32>
    %1389 = arith.addf %1372, %1388 : vector<2x1x16x16xf32>
    %c109_438 = arith.constant 109 : index
    %1390 = memref.load %arg4[%c109_438] : memref<160xf32, #tpu.memory_space<smem>>
    %1391 = vector.broadcast %1390 : f32 to vector<2x1x16x16xf32>
    %1392 = arith.mulf %1385, %1391 : vector<2x1x16x16xf32>
    %1393 = arith.addf %1376, %1392 : vector<2x1x16x16xf32>
    %c110_439 = arith.constant 110 : index
    %1394 = memref.load %arg4[%c110_439] : memref<160xf32, #tpu.memory_space<smem>>
    %1395 = vector.broadcast %1394 : f32 to vector<2x1x16x16xf32>
    %1396 = arith.mulf %1385, %1395 : vector<2x1x16x16xf32>
    %1397 = arith.addf %1380, %1396 : vector<2x1x16x16xf32>
    %c111_440 = arith.constant 111 : index
    %1398 = memref.load %arg4[%c111_440] : memref<160xf32, #tpu.memory_space<smem>>
    %1399 = vector.broadcast %1398 : f32 to vector<2x1x16x16xf32>
    %1400 = arith.mulf %1385, %1399 : vector<2x1x16x16xf32>
    %1401 = arith.addf %1384, %1400 : vector<2x1x16x16xf32>
    %c0_441 = arith.constant 0 : index
    %c4_442 = arith.constant 4 : index
    %c1_443 = arith.constant 1 : index
    %c0_444 = arith.constant 0 : index
    %1402 = vector.load %arg9[%c0_441, %c4_442, %c1_443, %c0_444] : memref<2x8x18x18xf32, #tpu.memory_space<vmem>>, vector<2x1x16x16xf32>
    %c112_445 = arith.constant 112 : index
    %1403 = memref.load %arg4[%c112_445] : memref<160xf32, #tpu.memory_space<smem>>
    %1404 = vector.broadcast %1403 : f32 to vector<2x1x16x16xf32>
    %1405 = arith.mulf %1402, %1404 : vector<2x1x16x16xf32>
    %1406 = arith.addf %1389, %1405 : vector<2x1x16x16xf32>
    %c113_446 = arith.constant 113 : index
    %1407 = memref.load %arg4[%c113_446] : memref<160xf32, #tpu.memory_space<smem>>
    %1408 = vector.broadcast %1407 : f32 to vector<2x1x16x16xf32>
    %1409 = arith.mulf %1402, %1408 : vector<2x1x16x16xf32>
    %1410 = arith.addf %1393, %1409 : vector<2x1x16x16xf32>
    %c114_447 = arith.constant 114 : index
    %1411 = memref.load %arg4[%c114_447] : memref<160xf32, #tpu.memory_space<smem>>
    %1412 = vector.broadcast %1411 : f32 to vector<2x1x16x16xf32>
    %1413 = arith.mulf %1402, %1412 : vector<2x1x16x16xf32>
    %1414 = arith.addf %1397, %1413 : vector<2x1x16x16xf32>
    %c115_448 = arith.constant 115 : index
    %1415 = memref.load %arg4[%c115_448] : memref<160xf32, #tpu.memory_space<smem>>
    %1416 = vector.broadcast %1415 : f32 to vector<2x1x16x16xf32>
    %1417 = arith.mulf %1402, %1416 : vector<2x1x16x16xf32>
    %1418 = arith.addf %1401, %1417 : vector<2x1x16x16xf32>
    %c0_449 = arith.constant 0 : index
    %c5_450 = arith.constant 5 : index
    %c1_451 = arith.constant 1 : index
    %c0_452 = arith.constant 0 : index
    %1419 = vector.load %arg9[%c0_449, %c5_450, %c1_451, %c0_452] : memref<2x8x18x18xf32, #tpu.memory_space<vmem>>, vector<2x1x16x16xf32>
    %c116_453 = arith.constant 116 : index
    %1420 = memref.load %arg4[%c116_453] : memref<160xf32, #tpu.memory_space<smem>>
    %1421 = vector.broadcast %1420 : f32 to vector<2x1x16x16xf32>
    %1422 = arith.mulf %1419, %1421 : vector<2x1x16x16xf32>
    %1423 = arith.addf %1406, %1422 : vector<2x1x16x16xf32>
    %c117_454 = arith.constant 117 : index
    %1424 = memref.load %arg4[%c117_454] : memref<160xf32, #tpu.memory_space<smem>>
    %1425 = vector.broadcast %1424 : f32 to vector<2x1x16x16xf32>
    %1426 = arith.mulf %1419, %1425 : vector<2x1x16x16xf32>
    %1427 = arith.addf %1410, %1426 : vector<2x1x16x16xf32>
    %c118_455 = arith.constant 118 : index
    %1428 = memref.load %arg4[%c118_455] : memref<160xf32, #tpu.memory_space<smem>>
    %1429 = vector.broadcast %1428 : f32 to vector<2x1x16x16xf32>
    %1430 = arith.mulf %1419, %1429 : vector<2x1x16x16xf32>
    %1431 = arith.addf %1414, %1430 : vector<2x1x16x16xf32>
    %c119_456 = arith.constant 119 : index
    %1432 = memref.load %arg4[%c119_456] : memref<160xf32, #tpu.memory_space<smem>>
    %1433 = vector.broadcast %1432 : f32 to vector<2x1x16x16xf32>
    %1434 = arith.mulf %1419, %1433 : vector<2x1x16x16xf32>
    %1435 = arith.addf %1418, %1434 : vector<2x1x16x16xf32>
    %c0_457 = arith.constant 0 : index
    %c6_458 = arith.constant 6 : index
    %c1_459 = arith.constant 1 : index
    %c0_460 = arith.constant 0 : index
    %1436 = vector.load %arg9[%c0_457, %c6_458, %c1_459, %c0_460] : memref<2x8x18x18xf32, #tpu.memory_space<vmem>>, vector<2x1x16x16xf32>
    %c120_461 = arith.constant 120 : index
    %1437 = memref.load %arg4[%c120_461] : memref<160xf32, #tpu.memory_space<smem>>
    %1438 = vector.broadcast %1437 : f32 to vector<2x1x16x16xf32>
    %1439 = arith.mulf %1436, %1438 : vector<2x1x16x16xf32>
    %1440 = arith.addf %1423, %1439 : vector<2x1x16x16xf32>
    %c121_462 = arith.constant 121 : index
    %1441 = memref.load %arg4[%c121_462] : memref<160xf32, #tpu.memory_space<smem>>
    %1442 = vector.broadcast %1441 : f32 to vector<2x1x16x16xf32>
    %1443 = arith.mulf %1436, %1442 : vector<2x1x16x16xf32>
    %1444 = arith.addf %1427, %1443 : vector<2x1x16x16xf32>
    %c122_463 = arith.constant 122 : index
    %1445 = memref.load %arg4[%c122_463] : memref<160xf32, #tpu.memory_space<smem>>
    %1446 = vector.broadcast %1445 : f32 to vector<2x1x16x16xf32>
    %1447 = arith.mulf %1436, %1446 : vector<2x1x16x16xf32>
    %1448 = arith.addf %1431, %1447 : vector<2x1x16x16xf32>
    %c123_464 = arith.constant 123 : index
    %1449 = memref.load %arg4[%c123_464] : memref<160xf32, #tpu.memory_space<smem>>
    %1450 = vector.broadcast %1449 : f32 to vector<2x1x16x16xf32>
    %1451 = arith.mulf %1436, %1450 : vector<2x1x16x16xf32>
    %1452 = arith.addf %1435, %1451 : vector<2x1x16x16xf32>
    %c0_465 = arith.constant 0 : index
    %c7_466 = arith.constant 7 : index
    %c1_467 = arith.constant 1 : index
    %c0_468 = arith.constant 0 : index
    %1453 = vector.load %arg9[%c0_465, %c7_466, %c1_467, %c0_468] : memref<2x8x18x18xf32, #tpu.memory_space<vmem>>, vector<2x1x16x16xf32>
    %c124_469 = arith.constant 124 : index
    %1454 = memref.load %arg4[%c124_469] : memref<160xf32, #tpu.memory_space<smem>>
    %1455 = vector.broadcast %1454 : f32 to vector<2x1x16x16xf32>
    %1456 = arith.mulf %1453, %1455 : vector<2x1x16x16xf32>
    %1457 = arith.addf %1440, %1456 : vector<2x1x16x16xf32>
    %c125_470 = arith.constant 125 : index
    %1458 = memref.load %arg4[%c125_470] : memref<160xf32, #tpu.memory_space<smem>>
    %1459 = vector.broadcast %1458 : f32 to vector<2x1x16x16xf32>
    %1460 = arith.mulf %1453, %1459 : vector<2x1x16x16xf32>
    %1461 = arith.addf %1444, %1460 : vector<2x1x16x16xf32>
    %c126_471 = arith.constant 126 : index
    %1462 = memref.load %arg4[%c126_471] : memref<160xf32, #tpu.memory_space<smem>>
    %1463 = vector.broadcast %1462 : f32 to vector<2x1x16x16xf32>
    %1464 = arith.mulf %1453, %1463 : vector<2x1x16x16xf32>
    %1465 = arith.addf %1448, %1464 : vector<2x1x16x16xf32>
    %c127_472 = arith.constant 127 : index
    %1466 = memref.load %arg4[%c127_472] : memref<160xf32, #tpu.memory_space<smem>>
    %1467 = vector.broadcast %1466 : f32 to vector<2x1x16x16xf32>
    %1468 = arith.mulf %1453, %1467 : vector<2x1x16x16xf32>
    %1469 = arith.addf %1452, %1468 : vector<2x1x16x16xf32>
    %c0_473 = arith.constant 0 : index
    %c0_474 = arith.constant 0 : index
    %c1_475 = arith.constant 1 : index
    %c1_476 = arith.constant 1 : index
    %1470 = vector.load %arg9[%c0_473, %c0_474, %c1_475, %c1_476] : memref<2x8x18x18xf32, #tpu.memory_space<vmem>>, vector<2x1x16x16xf32>
    %c128_477 = arith.constant 128 : index
    %1471 = memref.load %arg4[%c128_477] : memref<160xf32, #tpu.memory_space<smem>>
    %1472 = vector.broadcast %1471 : f32 to vector<2x1x16x16xf32>
    %1473 = arith.mulf %1470, %1472 : vector<2x1x16x16xf32>
    %1474 = arith.addf %1457, %1473 : vector<2x1x16x16xf32>
    %c129_478 = arith.constant 129 : index
    %1475 = memref.load %arg4[%c129_478] : memref<160xf32, #tpu.memory_space<smem>>
    %1476 = vector.broadcast %1475 : f32 to vector<2x1x16x16xf32>
    %1477 = arith.mulf %1470, %1476 : vector<2x1x16x16xf32>
    %1478 = arith.addf %1461, %1477 : vector<2x1x16x16xf32>
    %c130_479 = arith.constant 130 : index
    %1479 = memref.load %arg4[%c130_479] : memref<160xf32, #tpu.memory_space<smem>>
    %1480 = vector.broadcast %1479 : f32 to vector<2x1x16x16xf32>
    %1481 = arith.mulf %1470, %1480 : vector<2x1x16x16xf32>
    %1482 = arith.addf %1465, %1481 : vector<2x1x16x16xf32>
    %c131_480 = arith.constant 131 : index
    %1483 = memref.load %arg4[%c131_480] : memref<160xf32, #tpu.memory_space<smem>>
    %1484 = vector.broadcast %1483 : f32 to vector<2x1x16x16xf32>
    %1485 = arith.mulf %1470, %1484 : vector<2x1x16x16xf32>
    %1486 = arith.addf %1469, %1485 : vector<2x1x16x16xf32>
    %c0_481 = arith.constant 0 : index
    %c1_482 = arith.constant 1 : index
    %c1_483 = arith.constant 1 : index
    %c1_484 = arith.constant 1 : index
    %1487 = vector.load %arg9[%c0_481, %c1_482, %c1_483, %c1_484] : memref<2x8x18x18xf32, #tpu.memory_space<vmem>>, vector<2x1x16x16xf32>
    %c132_485 = arith.constant 132 : index
    %1488 = memref.load %arg4[%c132_485] : memref<160xf32, #tpu.memory_space<smem>>
    %1489 = vector.broadcast %1488 : f32 to vector<2x1x16x16xf32>
    %1490 = arith.mulf %1487, %1489 : vector<2x1x16x16xf32>
    %1491 = arith.addf %1474, %1490 : vector<2x1x16x16xf32>
    %c133_486 = arith.constant 133 : index
    %1492 = memref.load %arg4[%c133_486] : memref<160xf32, #tpu.memory_space<smem>>
    %1493 = vector.broadcast %1492 : f32 to vector<2x1x16x16xf32>
    %1494 = arith.mulf %1487, %1493 : vector<2x1x16x16xf32>
    %1495 = arith.addf %1478, %1494 : vector<2x1x16x16xf32>
    %c134_487 = arith.constant 134 : index
    %1496 = memref.load %arg4[%c134_487] : memref<160xf32, #tpu.memory_space<smem>>
    %1497 = vector.broadcast %1496 : f32 to vector<2x1x16x16xf32>
    %1498 = arith.mulf %1487, %1497 : vector<2x1x16x16xf32>
    %1499 = arith.addf %1482, %1498 : vector<2x1x16x16xf32>
    %c135_488 = arith.constant 135 : index
    %1500 = memref.load %arg4[%c135_488] : memref<160xf32, #tpu.memory_space<smem>>
    %1501 = vector.broadcast %1500 : f32 to vector<2x1x16x16xf32>
    %1502 = arith.mulf %1487, %1501 : vector<2x1x16x16xf32>
    %1503 = arith.addf %1486, %1502 : vector<2x1x16x16xf32>
    %c0_489 = arith.constant 0 : index
    %c2_490 = arith.constant 2 : index
    %c1_491 = arith.constant 1 : index
    %c1_492 = arith.constant 1 : index
    %1504 = vector.load %arg9[%c0_489, %c2_490, %c1_491, %c1_492] : memref<2x8x18x18xf32, #tpu.memory_space<vmem>>, vector<2x1x16x16xf32>
    %c136_493 = arith.constant 136 : index
    %1505 = memref.load %arg4[%c136_493] : memref<160xf32, #tpu.memory_space<smem>>
    %1506 = vector.broadcast %1505 : f32 to vector<2x1x16x16xf32>
    %1507 = arith.mulf %1504, %1506 : vector<2x1x16x16xf32>
    %1508 = arith.addf %1491, %1507 : vector<2x1x16x16xf32>
    %c137_494 = arith.constant 137 : index
    %1509 = memref.load %arg4[%c137_494] : memref<160xf32, #tpu.memory_space<smem>>
    %1510 = vector.broadcast %1509 : f32 to vector<2x1x16x16xf32>
    %1511 = arith.mulf %1504, %1510 : vector<2x1x16x16xf32>
    %1512 = arith.addf %1495, %1511 : vector<2x1x16x16xf32>
    %c138_495 = arith.constant 138 : index
    %1513 = memref.load %arg4[%c138_495] : memref<160xf32, #tpu.memory_space<smem>>
    %1514 = vector.broadcast %1513 : f32 to vector<2x1x16x16xf32>
    %1515 = arith.mulf %1504, %1514 : vector<2x1x16x16xf32>
    %1516 = arith.addf %1499, %1515 : vector<2x1x16x16xf32>
    %c139_496 = arith.constant 139 : index
    %1517 = memref.load %arg4[%c139_496] : memref<160xf32, #tpu.memory_space<smem>>
    %1518 = vector.broadcast %1517 : f32 to vector<2x1x16x16xf32>
    %1519 = arith.mulf %1504, %1518 : vector<2x1x16x16xf32>
    %1520 = arith.addf %1503, %1519 : vector<2x1x16x16xf32>
    %c0_497 = arith.constant 0 : index
    %c3_498 = arith.constant 3 : index
    %c1_499 = arith.constant 1 : index
    %c1_500 = arith.constant 1 : index
    %1521 = vector.load %arg9[%c0_497, %c3_498, %c1_499, %c1_500] : memref<2x8x18x18xf32, #tpu.memory_space<vmem>>, vector<2x1x16x16xf32>
    %c140_501 = arith.constant 140 : index
    %1522 = memref.load %arg4[%c140_501] : memref<160xf32, #tpu.memory_space<smem>>
    %1523 = vector.broadcast %1522 : f32 to vector<2x1x16x16xf32>
    %1524 = arith.mulf %1521, %1523 : vector<2x1x16x16xf32>
    %1525 = arith.addf %1508, %1524 : vector<2x1x16x16xf32>
    %c141_502 = arith.constant 141 : index
    %1526 = memref.load %arg4[%c141_502] : memref<160xf32, #tpu.memory_space<smem>>
    %1527 = vector.broadcast %1526 : f32 to vector<2x1x16x16xf32>
    %1528 = arith.mulf %1521, %1527 : vector<2x1x16x16xf32>
    %1529 = arith.addf %1512, %1528 : vector<2x1x16x16xf32>
    %c142_503 = arith.constant 142 : index
    %1530 = memref.load %arg4[%c142_503] : memref<160xf32, #tpu.memory_space<smem>>
    %1531 = vector.broadcast %1530 : f32 to vector<2x1x16x16xf32>
    %1532 = arith.mulf %1521, %1531 : vector<2x1x16x16xf32>
    %1533 = arith.addf %1516, %1532 : vector<2x1x16x16xf32>
    %c143_504 = arith.constant 143 : index
    %1534 = memref.load %arg4[%c143_504] : memref<160xf32, #tpu.memory_space<smem>>
    %1535 = vector.broadcast %1534 : f32 to vector<2x1x16x16xf32>
    %1536 = arith.mulf %1521, %1535 : vector<2x1x16x16xf32>
    %1537 = arith.addf %1520, %1536 : vector<2x1x16x16xf32>
    %c0_505 = arith.constant 0 : index
    %c4_506 = arith.constant 4 : index
    %c1_507 = arith.constant 1 : index
    %c1_508 = arith.constant 1 : index
    %1538 = vector.load %arg9[%c0_505, %c4_506, %c1_507, %c1_508] : memref<2x8x18x18xf32, #tpu.memory_space<vmem>>, vector<2x1x16x16xf32>
    %c144_509 = arith.constant 144 : index
    %1539 = memref.load %arg4[%c144_509] : memref<160xf32, #tpu.memory_space<smem>>
    %1540 = vector.broadcast %1539 : f32 to vector<2x1x16x16xf32>
    %1541 = arith.mulf %1538, %1540 : vector<2x1x16x16xf32>
    %1542 = arith.addf %1525, %1541 : vector<2x1x16x16xf32>
    %c145_510 = arith.constant 145 : index
    %1543 = memref.load %arg4[%c145_510] : memref<160xf32, #tpu.memory_space<smem>>
    %1544 = vector.broadcast %1543 : f32 to vector<2x1x16x16xf32>
    %1545 = arith.mulf %1538, %1544 : vector<2x1x16x16xf32>
    %1546 = arith.addf %1529, %1545 : vector<2x1x16x16xf32>
    %c146_511 = arith.constant 146 : index
    %1547 = memref.load %arg4[%c146_511] : memref<160xf32, #tpu.memory_space<smem>>
    %1548 = vector.broadcast %1547 : f32 to vector<2x1x16x16xf32>
    %1549 = arith.mulf %1538, %1548 : vector<2x1x16x16xf32>
    %1550 = arith.addf %1533, %1549 : vector<2x1x16x16xf32>
    %c147_512 = arith.constant 147 : index
    %1551 = memref.load %arg4[%c147_512] : memref<160xf32, #tpu.memory_space<smem>>
    %1552 = vector.broadcast %1551 : f32 to vector<2x1x16x16xf32>
    %1553 = arith.mulf %1538, %1552 : vector<2x1x16x16xf32>
    %1554 = arith.addf %1537, %1553 : vector<2x1x16x16xf32>
    %c0_513 = arith.constant 0 : index
    %c5_514 = arith.constant 5 : index
    %c1_515 = arith.constant 1 : index
    %c1_516 = arith.constant 1 : index
    %1555 = vector.load %arg9[%c0_513, %c5_514, %c1_515, %c1_516] : memref<2x8x18x18xf32, #tpu.memory_space<vmem>>, vector<2x1x16x16xf32>
    %c148_517 = arith.constant 148 : index
    %1556 = memref.load %arg4[%c148_517] : memref<160xf32, #tpu.memory_space<smem>>
    %1557 = vector.broadcast %1556 : f32 to vector<2x1x16x16xf32>
    %1558 = arith.mulf %1555, %1557 : vector<2x1x16x16xf32>
    %1559 = arith.addf %1542, %1558 : vector<2x1x16x16xf32>
    %c149_518 = arith.constant 149 : index
    %1560 = memref.load %arg4[%c149_518] : memref<160xf32, #tpu.memory_space<smem>>
    %1561 = vector.broadcast %1560 : f32 to vector<2x1x16x16xf32>
    %1562 = arith.mulf %1555, %1561 : vector<2x1x16x16xf32>
    %1563 = arith.addf %1546, %1562 : vector<2x1x16x16xf32>
    %c150_519 = arith.constant 150 : index
    %1564 = memref.load %arg4[%c150_519] : memref<160xf32, #tpu.memory_space<smem>>
    %1565 = vector.broadcast %1564 : f32 to vector<2x1x16x16xf32>
    %1566 = arith.mulf %1555, %1565 : vector<2x1x16x16xf32>
    %1567 = arith.addf %1550, %1566 : vector<2x1x16x16xf32>
    %c151_520 = arith.constant 151 : index
    %1568 = memref.load %arg4[%c151_520] : memref<160xf32, #tpu.memory_space<smem>>
    %1569 = vector.broadcast %1568 : f32 to vector<2x1x16x16xf32>
    %1570 = arith.mulf %1555, %1569 : vector<2x1x16x16xf32>
    %1571 = arith.addf %1554, %1570 : vector<2x1x16x16xf32>
    %c0_521 = arith.constant 0 : index
    %c6_522 = arith.constant 6 : index
    %c1_523 = arith.constant 1 : index
    %c1_524 = arith.constant 1 : index
    %1572 = vector.load %arg9[%c0_521, %c6_522, %c1_523, %c1_524] : memref<2x8x18x18xf32, #tpu.memory_space<vmem>>, vector<2x1x16x16xf32>
    %c152_525 = arith.constant 152 : index
    %1573 = memref.load %arg4[%c152_525] : memref<160xf32, #tpu.memory_space<smem>>
    %1574 = vector.broadcast %1573 : f32 to vector<2x1x16x16xf32>
    %1575 = arith.mulf %1572, %1574 : vector<2x1x16x16xf32>
    %1576 = arith.addf %1559, %1575 : vector<2x1x16x16xf32>
    %c153_526 = arith.constant 153 : index
    %1577 = memref.load %arg4[%c153_526] : memref<160xf32, #tpu.memory_space<smem>>
    %1578 = vector.broadcast %1577 : f32 to vector<2x1x16x16xf32>
    %1579 = arith.mulf %1572, %1578 : vector<2x1x16x16xf32>
    %1580 = arith.addf %1563, %1579 : vector<2x1x16x16xf32>
    %c154_527 = arith.constant 154 : index
    %1581 = memref.load %arg4[%c154_527] : memref<160xf32, #tpu.memory_space<smem>>
    %1582 = vector.broadcast %1581 : f32 to vector<2x1x16x16xf32>
    %1583 = arith.mulf %1572, %1582 : vector<2x1x16x16xf32>
    %1584 = arith.addf %1567, %1583 : vector<2x1x16x16xf32>
    %c155_528 = arith.constant 155 : index
    %1585 = memref.load %arg4[%c155_528] : memref<160xf32, #tpu.memory_space<smem>>
    %1586 = vector.broadcast %1585 : f32 to vector<2x1x16x16xf32>
    %1587 = arith.mulf %1572, %1586 : vector<2x1x16x16xf32>
    %1588 = arith.addf %1571, %1587 : vector<2x1x16x16xf32>
    %c0_529 = arith.constant 0 : index
    %c7_530 = arith.constant 7 : index
    %c1_531 = arith.constant 1 : index
    %c1_532 = arith.constant 1 : index
    %1589 = vector.load %arg9[%c0_529, %c7_530, %c1_531, %c1_532] : memref<2x8x18x18xf32, #tpu.memory_space<vmem>>, vector<2x1x16x16xf32>
    %c156_533 = arith.constant 156 : index
    %1590 = memref.load %arg4[%c156_533] : memref<160xf32, #tpu.memory_space<smem>>
    %1591 = vector.broadcast %1590 : f32 to vector<2x1x16x16xf32>
    %1592 = arith.mulf %1589, %1591 : vector<2x1x16x16xf32>
    %1593 = arith.addf %1576, %1592 : vector<2x1x16x16xf32>
    %c157_534 = arith.constant 157 : index
    %1594 = memref.load %arg4[%c157_534] : memref<160xf32, #tpu.memory_space<smem>>
    %1595 = vector.broadcast %1594 : f32 to vector<2x1x16x16xf32>
    %1596 = arith.mulf %1589, %1595 : vector<2x1x16x16xf32>
    %1597 = arith.addf %1580, %1596 : vector<2x1x16x16xf32>
    %c158_535 = arith.constant 158 : index
    %1598 = memref.load %arg4[%c158_535] : memref<160xf32, #tpu.memory_space<smem>>
    %1599 = vector.broadcast %1598 : f32 to vector<2x1x16x16xf32>
    %1600 = arith.mulf %1589, %1599 : vector<2x1x16x16xf32>
    %1601 = arith.addf %1584, %1600 : vector<2x1x16x16xf32>
    %c159_536 = arith.constant 159 : index
    %1602 = memref.load %arg4[%c159_536] : memref<160xf32, #tpu.memory_space<smem>>
    %1603 = vector.broadcast %1602 : f32 to vector<2x1x16x16xf32>
    %1604 = arith.mulf %1589, %1603 : vector<2x1x16x16xf32>
    %1605 = arith.addf %1588, %1604 : vector<2x1x16x16xf32>
    %c0_537 = arith.constant 0 : index
    %1606 = memref.load %arg5[%c0_537] : memref<4xf32, #tpu.memory_space<smem>>
    %c0_538 = arith.constant 0 : index
    %1607 = memref.load %arg6[%c0_538] : memref<4xf32, #tpu.memory_space<smem>>
    %cst_539 = arith.constant dense<0.000000e+00> : vector<2x1x16xf32>
    %1608 = vector.multi_reduction <add>, %1593, %cst_539 [3] : vector<2x1x16x16xf32> to vector<2x1x16xf32>
    %1609 = vector.shape_cast %1608 : vector<2x1x16xf32> to vector<2x1x16x1xf32>
    %cst_540 = arith.constant dense<0.000000e+00> : vector<1xf32>
    %1610 = vector.multi_reduction <add>, %1609, %cst_540 [0, 1, 2] : vector<2x1x16x1xf32> to vector<1xf32>
    %1611 = vector.shape_cast %1610 : vector<1xf32> to vector<1x1x1x1xf32>
    %cst_541 = arith.constant 0.001953125 : f32
    %1612 = vector.broadcast %cst_541 : f32 to vector<1x1x1x1xf32>
    %1613 = arith.mulf %1611, %1612 : vector<1x1x1x1xf32>
    %1614 = arith.mulf %1593, %1593 : vector<2x1x16x16xf32>
    %cst_542 = arith.constant dense<0.000000e+00> : vector<2x1x16xf32>
    %1615 = vector.multi_reduction <add>, %1614, %cst_542 [3] : vector<2x1x16x16xf32> to vector<2x1x16xf32>
    %1616 = vector.shape_cast %1615 : vector<2x1x16xf32> to vector<2x1x16x1xf32>
    %cst_543 = arith.constant dense<0.000000e+00> : vector<1xf32>
    %1617 = vector.multi_reduction <add>, %1616, %cst_543 [0, 1, 2] : vector<2x1x16x1xf32> to vector<1xf32>
    %1618 = vector.shape_cast %1617 : vector<1xf32> to vector<1x1x1x1xf32>
    %cst_544 = arith.constant 0.001953125 : f32
    %1619 = vector.broadcast %cst_544 : f32 to vector<1x1x1x1xf32>
    %1620 = arith.mulf %1618, %1619 : vector<1x1x1x1xf32>
    %1621 = arith.mulf %1613, %1613 : vector<1x1x1x1xf32>
    %1622 = arith.subf %1620, %1621 : vector<1x1x1x1xf32>
    %cst_545 = arith.constant 0.000000e+00 : f32
    %1623 = vector.broadcast %cst_545 : f32 to vector<1x1x1x1xf32>
    %1624 = arith.maximumf %1622, %1623 : vector<1x1x1x1xf32>
    %cst_546 = arith.constant 9.99999974E-6 : f32
    %1625 = vector.broadcast %cst_546 : f32 to vector<1x1x1x1xf32>
    %1626 = arith.addf %1624, %1625 : vector<1x1x1x1xf32>
    %1627 = math.rsqrt %1626 : vector<1x1x1x1xf32>
    %1628 = vector.broadcast %1606 : f32 to vector<1x1x1x1xf32>
    %1629 = arith.mulf %1628, %1627 : vector<1x1x1x1xf32>
    %1630 = arith.mulf %1613, %1629 : vector<1x1x1x1xf32>
    %1631 = vector.broadcast %1607 : f32 to vector<1x1x1x1xf32>
    %1632 = arith.subf %1631, %1630 : vector<1x1x1x1xf32>
    %1633 = vector.broadcast %1629 : vector<1x1x1x1xf32> to vector<2x1x16x16xf32>
    %1634 = arith.mulf %1593, %1633 : vector<2x1x16x16xf32>
    %1635 = vector.broadcast %1632 : vector<1x1x1x1xf32> to vector<2x1x16x16xf32>
    %1636 = arith.addf %1634, %1635 : vector<2x1x16x16xf32>
    %cst_547 = arith.constant 0.000000e+00 : f32
    %1637 = vector.broadcast %cst_547 : f32 to vector<2x1x16x16xf32>
    %1638 = arith.maximumf %1636, %1637 : vector<2x1x16x16xf32>
    %1639 = vector.extract_strided_slice %0 {offsets = [0, 0, 0, 0], sizes = [2, 1, 16, 16], strides = [1, 1, 1, 1]} : vector<2x4x16x16xf32> to vector<2x1x16x16xf32>
    %1640 = arith.addf %1638, %1639 : vector<2x1x16x16xf32>
    %c0_548 = arith.constant 0 : index
    %c0_549 = arith.constant 0 : index
    %c0_550 = arith.constant 0 : index
    %c0_551 = arith.constant 0 : index
    %1641 = vector.load %arg7[%c0_548, %c0_549, %c0_550, %c0_551] : memref<2x4x16x16xf32, #tpu.memory_space<vmem>>, vector<2x1x16x16xf32>
    tpu.vector_store %arg7[%c0_548, %c0_549, %c0_550, %c0_551], %1640 {strides = array<i32>} : memref<2x4x16x16xf32, #tpu.memory_space<vmem>>, vector<2x1x16x16xf32>,
    %c1_552 = arith.constant 1 : index
    %1642 = memref.load %arg5[%c1_552] : memref<4xf32, #tpu.memory_space<smem>>
    %c1_553 = arith.constant 1 : index
    %1643 = memref.load %arg6[%c1_553] : memref<4xf32, #tpu.memory_space<smem>>
    %cst_554 = arith.constant dense<0.000000e+00> : vector<2x1x16xf32>
    %1644 = vector.multi_reduction <add>, %1597, %cst_554 [3] : vector<2x1x16x16xf32> to vector<2x1x16xf32>
    %1645 = vector.shape_cast %1644 : vector<2x1x16xf32> to vector<2x1x16x1xf32>
    %cst_555 = arith.constant dense<0.000000e+00> : vector<1xf32>
    %1646 = vector.multi_reduction <add>, %1645, %cst_555 [0, 1, 2] : vector<2x1x16x1xf32> to vector<1xf32>
    %1647 = vector.shape_cast %1646 : vector<1xf32> to vector<1x1x1x1xf32>
    %cst_556 = arith.constant 0.001953125 : f32
    %1648 = vector.broadcast %cst_556 : f32 to vector<1x1x1x1xf32>
    %1649 = arith.mulf %1647, %1648 : vector<1x1x1x1xf32>
    %1650 = arith.mulf %1597, %1597 : vector<2x1x16x16xf32>
    %cst_557 = arith.constant dense<0.000000e+00> : vector<2x1x16xf32>
    %1651 = vector.multi_reduction <add>, %1650, %cst_557 [3] : vector<2x1x16x16xf32> to vector<2x1x16xf32>
    %1652 = vector.shape_cast %1651 : vector<2x1x16xf32> to vector<2x1x16x1xf32>
    %cst_558 = arith.constant dense<0.000000e+00> : vector<1xf32>
    %1653 = vector.multi_reduction <add>, %1652, %cst_558 [0, 1, 2] : vector<2x1x16x1xf32> to vector<1xf32>
    %1654 = vector.shape_cast %1653 : vector<1xf32> to vector<1x1x1x1xf32>
    %cst_559 = arith.constant 0.001953125 : f32
    %1655 = vector.broadcast %cst_559 : f32 to vector<1x1x1x1xf32>
    %1656 = arith.mulf %1654, %1655 : vector<1x1x1x1xf32>
    %1657 = arith.mulf %1649, %1649 : vector<1x1x1x1xf32>
    %1658 = arith.subf %1656, %1657 : vector<1x1x1x1xf32>
    %cst_560 = arith.constant 0.000000e+00 : f32
    %1659 = vector.broadcast %cst_560 : f32 to vector<1x1x1x1xf32>
    %1660 = arith.maximumf %1658, %1659 : vector<1x1x1x1xf32>
    %cst_561 = arith.constant 9.99999974E-6 : f32
    %1661 = vector.broadcast %cst_561 : f32 to vector<1x1x1x1xf32>
    %1662 = arith.addf %1660, %1661 : vector<1x1x1x1xf32>
    %1663 = math.rsqrt %1662 : vector<1x1x1x1xf32>
    %1664 = vector.broadcast %1642 : f32 to vector<1x1x1x1xf32>
    %1665 = arith.mulf %1664, %1663 : vector<1x1x1x1xf32>
    %1666 = arith.mulf %1649, %1665 : vector<1x1x1x1xf32>
    %1667 = vector.broadcast %1643 : f32 to vector<1x1x1x1xf32>
    %1668 = arith.subf %1667, %1666 : vector<1x1x1x1xf32>
    %1669 = vector.broadcast %1665 : vector<1x1x1x1xf32> to vector<2x1x16x16xf32>
    %1670 = arith.mulf %1597, %1669 : vector<2x1x16x16xf32>
    %1671 = vector.broadcast %1668 : vector<1x1x1x1xf32> to vector<2x1x16x16xf32>
    %1672 = arith.addf %1670, %1671 : vector<2x1x16x16xf32>
    %cst_562 = arith.constant 0.000000e+00 : f32
    %1673 = vector.broadcast %cst_562 : f32 to vector<2x1x16x16xf32>
    %1674 = arith.maximumf %1672, %1673 : vector<2x1x16x16xf32>
    %1675 = vector.extract_strided_slice %0 {offsets = [0, 1, 0, 0], sizes = [2, 1, 16, 16], strides = [1, 1, 1, 1]} : vector<2x4x16x16xf32> to vector<2x1x16x16xf32>
    %1676 = arith.addf %1674, %1675 : vector<2x1x16x16xf32>
    %c0_563 = arith.constant 0 : index
    %c1_564 = arith.constant 1 : index
    %c0_565 = arith.constant 0 : index
    %c0_566 = arith.constant 0 : index
    %1677 = vector.load %arg7[%c0_563, %c1_564, %c0_565, %c0_566] : memref<2x4x16x16xf32, #tpu.memory_space<vmem>>, vector<2x1x16x16xf32>
    tpu.vector_store %arg7[%c0_563, %c1_564, %c0_565, %c0_566], %1676 {strides = array<i32>} : memref<2x4x16x16xf32, #tpu.memory_space<vmem>>, vector<2x1x16x16xf32>,
    %c2_567 = arith.constant 2 : index
    %1678 = memref.load %arg5[%c2_567] : memref<4xf32, #tpu.memory_space<smem>>
    %c2_568 = arith.constant 2 : index
    %1679 = memref.load %arg6[%c2_568] : memref<4xf32, #tpu.memory_space<smem>>
    %cst_569 = arith.constant dense<0.000000e+00> : vector<2x1x16xf32>
    %1680 = vector.multi_reduction <add>, %1601, %cst_569 [3] : vector<2x1x16x16xf32> to vector<2x1x16xf32>
    %1681 = vector.shape_cast %1680 : vector<2x1x16xf32> to vector<2x1x16x1xf32>
    %cst_570 = arith.constant dense<0.000000e+00> : vector<1xf32>
    %1682 = vector.multi_reduction <add>, %1681, %cst_570 [0, 1, 2] : vector<2x1x16x1xf32> to vector<1xf32>
    %1683 = vector.shape_cast %1682 : vector<1xf32> to vector<1x1x1x1xf32>
    %cst_571 = arith.constant 0.001953125 : f32
    %1684 = vector.broadcast %cst_571 : f32 to vector<1x1x1x1xf32>
    %1685 = arith.mulf %1683, %1684 : vector<1x1x1x1xf32>
    %1686 = arith.mulf %1601, %1601 : vector<2x1x16x16xf32>
    %cst_572 = arith.constant dense<0.000000e+00> : vector<2x1x16xf32>
    %1687 = vector.multi_reduction <add>, %1686, %cst_572 [3] : vector<2x1x16x16xf32> to vector<2x1x16xf32>
    %1688 = vector.shape_cast %1687 : vector<2x1x16xf32> to vector<2x1x16x1xf32>
    %cst_573 = arith.constant dense<0.000000e+00> : vector<1xf32>
    %1689 = vector.multi_reduction <add>, %1688, %cst_573 [0, 1, 2] : vector<2x1x16x1xf32> to vector<1xf32>
    %1690 = vector.shape_cast %1689 : vector<1xf32> to vector<1x1x1x1xf32>
    %cst_574 = arith.constant 0.001953125 : f32
    %1691 = vector.broadcast %cst_574 : f32 to vector<1x1x1x1xf32>
    %1692 = arith.mulf %1690, %1691 : vector<1x1x1x1xf32>
    %1693 = arith.mulf %1685, %1685 : vector<1x1x1x1xf32>
    %1694 = arith.subf %1692, %1693 : vector<1x1x1x1xf32>
    %cst_575 = arith.constant 0.000000e+00 : f32
    %1695 = vector.broadcast %cst_575 : f32 to vector<1x1x1x1xf32>
    %1696 = arith.maximumf %1694, %1695 : vector<1x1x1x1xf32>
    %cst_576 = arith.constant 9.99999974E-6 : f32
    %1697 = vector.broadcast %cst_576 : f32 to vector<1x1x1x1xf32>
    %1698 = arith.addf %1696, %1697 : vector<1x1x1x1xf32>
    %1699 = math.rsqrt %1698 : vector<1x1x1x1xf32>
    %1700 = vector.broadcast %1678 : f32 to vector<1x1x1x1xf32>
    %1701 = arith.mulf %1700, %1699 : vector<1x1x1x1xf32>
    %1702 = arith.mulf %1685, %1701 : vector<1x1x1x1xf32>
    %1703 = vector.broadcast %1679 : f32 to vector<1x1x1x1xf32>
    %1704 = arith.subf %1703, %1702 : vector<1x1x1x1xf32>
    %1705 = vector.broadcast %1701 : vector<1x1x1x1xf32> to vector<2x1x16x16xf32>
    %1706 = arith.mulf %1601, %1705 : vector<2x1x16x16xf32>
    %1707 = vector.broadcast %1704 : vector<1x1x1x1xf32> to vector<2x1x16x16xf32>
    %1708 = arith.addf %1706, %1707 : vector<2x1x16x16xf32>
    %cst_577 = arith.constant 0.000000e+00 : f32
    %1709 = vector.broadcast %cst_577 : f32 to vector<2x1x16x16xf32>
    %1710 = arith.maximumf %1708, %1709 : vector<2x1x16x16xf32>
    %1711 = vector.extract_strided_slice %0 {offsets = [0, 2, 0, 0], sizes = [2, 1, 16, 16], strides = [1, 1, 1, 1]} : vector<2x4x16x16xf32> to vector<2x1x16x16xf32>
    %1712 = arith.addf %1710, %1711 : vector<2x1x16x16xf32>
    %c0_578 = arith.constant 0 : index
    %c2_579 = arith.constant 2 : index
    %c0_580 = arith.constant 0 : index
    %c0_581 = arith.constant 0 : index
    %1713 = vector.load %arg7[%c0_578, %c2_579, %c0_580, %c0_581] : memref<2x4x16x16xf32, #tpu.memory_space<vmem>>, vector<2x1x16x16xf32>
    tpu.vector_store %arg7[%c0_578, %c2_579, %c0_580, %c0_581], %1712 {strides = array<i32>} : memref<2x4x16x16xf32, #tpu.memory_space<vmem>>, vector<2x1x16x16xf32>,
    %c3_582 = arith.constant 3 : index
    %1714 = memref.load %arg5[%c3_582] : memref<4xf32, #tpu.memory_space<smem>>
    %c3_583 = arith.constant 3 : index
    %1715 = memref.load %arg6[%c3_583] : memref<4xf32, #tpu.memory_space<smem>>
    %cst_584 = arith.constant dense<0.000000e+00> : vector<2x1x16xf32>
    %1716 = vector.multi_reduction <add>, %1605, %cst_584 [3] : vector<2x1x16x16xf32> to vector<2x1x16xf32>
    %1717 = vector.shape_cast %1716 : vector<2x1x16xf32> to vector<2x1x16x1xf32>
    %cst_585 = arith.constant dense<0.000000e+00> : vector<1xf32>
    %1718 = vector.multi_reduction <add>, %1717, %cst_585 [0, 1, 2] : vector<2x1x16x1xf32> to vector<1xf32>
    %1719 = vector.shape_cast %1718 : vector<1xf32> to vector<1x1x1x1xf32>
    %cst_586 = arith.constant 0.001953125 : f32
    %1720 = vector.broadcast %cst_586 : f32 to vector<1x1x1x1xf32>
    %1721 = arith.mulf %1719, %1720 : vector<1x1x1x1xf32>
    %1722 = arith.mulf %1605, %1605 : vector<2x1x16x16xf32>
    %cst_587 = arith.constant dense<0.000000e+00> : vector<2x1x16xf32>
    %1723 = vector.multi_reduction <add>, %1722, %cst_587 [3] : vector<2x1x16x16xf32> to vector<2x1x16xf32>
    %1724 = vector.shape_cast %1723 : vector<2x1x16xf32> to vector<2x1x16x1xf32>
    %cst_588 = arith.constant dense<0.000000e+00> : vector<1xf32>
    %1725 = vector.multi_reduction <add>, %1724, %cst_588 [0, 1, 2] : vector<2x1x16x1xf32> to vector<1xf32>
    %1726 = vector.shape_cast %1725 : vector<1xf32> to vector<1x1x1x1xf32>
    %cst_589 = arith.constant 0.001953125 : f32
    %1727 = vector.broadcast %cst_589 : f32 to vector<1x1x1x1xf32>
    %1728 = arith.mulf %1726, %1727 : vector<1x1x1x1xf32>
    %1729 = arith.mulf %1721, %1721 : vector<1x1x1x1xf32>
    %1730 = arith.subf %1728, %1729 : vector<1x1x1x1xf32>
    %cst_590 = arith.constant 0.000000e+00 : f32
    %1731 = vector.broadcast %cst_590 : f32 to vector<1x1x1x1xf32>
    %1732 = arith.maximumf %1730, %1731 : vector<1x1x1x1xf32>
    %cst_591 = arith.constant 9.99999974E-6 : f32
    %1733 = vector.broadcast %cst_591 : f32 to vector<1x1x1x1xf32>
    %1734 = arith.addf %1732, %1733 : vector<1x1x1x1xf32>
    %1735 = math.rsqrt %1734 : vector<1x1x1x1xf32>
    %1736 = vector.broadcast %1714 : f32 to vector<1x1x1x1xf32>
    %1737 = arith.mulf %1736, %1735 : vector<1x1x1x1xf32>
    %1738 = arith.mulf %1721, %1737 : vector<1x1x1x1xf32>
    %1739 = vector.broadcast %1715 : f32 to vector<1x1x1x1xf32>
    %1740 = arith.subf %1739, %1738 : vector<1x1x1x1xf32>
    %1741 = vector.broadcast %1737 : vector<1x1x1x1xf32> to vector<2x1x16x16xf32>
    %1742 = arith.mulf %1605, %1741 : vector<2x1x16x16xf32>
    %1743 = vector.broadcast %1740 : vector<1x1x1x1xf32> to vector<2x1x16x16xf32>
    %1744 = arith.addf %1742, %1743 : vector<2x1x16x16xf32>
    %cst_592 = arith.constant 0.000000e+00 : f32
    %1745 = vector.broadcast %cst_592 : f32 to vector<2x1x16x16xf32>
    %1746 = arith.maximumf %1744, %1745 : vector<2x1x16x16xf32>
    %1747 = vector.extract_strided_slice %0 {offsets = [0, 3, 0, 0], sizes = [2, 1, 16, 16], strides = [1, 1, 1, 1]} : vector<2x4x16x16xf32> to vector<2x1x16x16xf32>
    %1748 = arith.addf %1746, %1747 : vector<2x1x16x16xf32>
    %c0_593 = arith.constant 0 : index
    %c3_594 = arith.constant 3 : index
    %c0_595 = arith.constant 0 : index
    %c0_596 = arith.constant 0 : index
    %1749 = vector.load %arg7[%c0_593, %c3_594, %c0_595, %c0_596] : memref<2x4x16x16xf32, #tpu.memory_space<vmem>>, vector<2x1x16x16xf32>
    tpu.vector_store %arg7[%c0_593, %c3_594, %c0_595, %c0_596], %1748 {strides = array<i32>} : memref<2x4x16x16xf32, #tpu.memory_space<vmem>>, vector<2x1x16x16xf32>,
    return
  }
}

</mosaic_0001>

<llo_original>
// kernel: tpu_custom_call.1
$region0: #{tpu_custom_call.1}
  #allocation0 [shape = 'u32[]', space=smem, size = 0x4, offset = 0x4, fixed_abs, tag = 'smem constant byte address 0x4 - core index']
  #allocation1 [shape = 'u32[144,128]{1,0:T(1,128)}', space=vmem, size = 0x12000, scoped, tag = 'internal scratch']
  #allocation2 [shape = 'f32[2,4,18,18]{3,2,1,0:T(8,128)}', space=vmem, size = 0x18000, scoped, tag = 'scratch operand']
  #allocation3 [shape = 'f32[2,8,18,18]{3,2,1,0:T(8,128)}', space=vmem, size = 0x30000, scoped, tag = 'scratch operand']
  %s0 = inlined_call_operand.hbm [shape: f32[2,4,16,16], index: 0, kind: input, shape index: {}]
  %s1 = inlined_call_operand.hbm [shape: f32[160], index: 1, kind: input, shape index: {}]
  %s2 = inlined_call_operand.vmem [shape: f32[8], index: 2, kind: input, shape index: {}]
  %s3 = inlined_call_operand.vmem [shape: f32[8], index: 3, kind: input, shape index: {}]
  %s4 = inlined_call_operand.vmem [shape: f32[160], index: 4, kind: input, shape index: {}]
  %s5 = inlined_call_operand.vmem [shape: f32[4], index: 5, kind: input, shape index: {}]
  %s6 = inlined_call_operand.vmem [shape: f32[4], index: 6, kind: input, shape index: {}]
  %s7 = inlined_call_operand.hbm [shape: f32[2,4,16,16], index: 7, kind: output, shape index: {}]
  %s8 = sld [smem:[#allocation0]]
  $region66: #{tpu_custom_call.1} parent=0
    _
  %s10 = ssub.s32 1, %s8
  %s11 = scalar_select 0, %s10, %s8
  $region1: #{tpu_custom_call.1} parent=0
    #allocation4 [shape = 'u8[65536]{0}', space=vmem, size = 0x10000, scoped, tag = 'input window, operand 0, single buffered']
    #allocation5 [shape = 's32[1]{0}', space=sflag, size = 0x4, scoped, tag = 'scoped memory for tpu_custom_call.1']
    #allocation6 [shape = 's32[1]{0}', space=sflag, size = 0x4, scoped, tag = 'scoped memory for tpu_custom_call.1']
    #allocation7 [shape = 's32[1]{0}', space=sflag, size = 0x4, scoped, tag = 'scoped memory for tpu_custom_call.1']
    #allocation8 [shape = 's32[1]{0}', space=sflag, size = 0x4, scoped, tag = 'scoped memory for tpu_custom_call.1']
    #allocation9 [shape = 'u8[1024]{0}', space=smem, size = 0x400, scoped, tag = 'input window, operand 1, single buffered']
    #allocation10 [shape = 'u8[512]{0}', space=smem, size = 0x200, scoped, tag = 'input window, operand 2, single buffered']
    #allocation11 [shape = 'u8[512]{0}', space=smem, size = 0x200, scoped, tag = 'input window, operand 3, single buffered']
    #allocation12 [shape = 's32[1]{0}', space=sflag, size = 0x4, scoped, tag = 'scoped memory for tpu_custom_call.1']
    #allocation13 [shape = 'u8[1024]{0}', space=smem, size = 0x400, scoped, tag = 'input window, operand 4, single buffered']
    #allocation14 [shape = 'u8[512]{0}', space=smem, size = 0x200, scoped, tag = 'input window, operand 5, single buffered']
    #allocation15 [shape = 's32[1]{0}', space=sflag, size = 0x4, scoped, tag = 'scoped memory for tpu_custom_call.1']
    #allocation16 [shape = 'u8[512]{0}', space=smem, size = 0x200, scoped, tag = 'input window, operand 6, single buffered']
    #allocation17 [shape = 'u8[65536]{0}', space=vmem, size = 0x10000, scoped, tag = 'output window, operand 0, single buffered']
    %12 = vsyncpa [#allocation5], 0
    %13 = vsyncpa [#allocation7], 0
    %14 = vsyncpa [#allocation8], 0
    %15 = vsyncpa [#allocation12], 0
    %16 = vsyncpa [#allocation15], 0
    %17 = vsyncpa [#allocation6], 0
    // Predicated region
    $region2: #{tpu_custom_call.1} parent=1 // pred_check
      _
    $region3: #{tpu_custom_call.1} parent=1 // pred_check_branch
      %19 = sbr.rel (0) target = $region5
    $region4: #{tpu_custom_call.1} parent=1 // pred_region
      %s21 = ssub.s32 2048, 2048
      %22 = vsyncadd [#allocation5], %s21
      %s23 = sshll.u32 [#allocation4], 4
      %s24 = int_to_ptr.vmem [resolvable:$true] %s23
      %29 = dma.hbm_to_vmem [thread:$0]  %s0, 2048, %s24, [#allocation5], 128, 128, 8
    $region5: #{tpu_custom_call.1} parent=1 // pred_fallthru
      _
    // Predicated region
    $region6: #{tpu_custom_call.1} parent=1 // pred_check
      _
    $region7: #{tpu_custom_call.1} parent=1 // pred_check_branch
      %31 = sbr.rel (0) target = $region9
    $region8: #{tpu_custom_call.1} parent=1 // pred_region
      %s33 = ssub.s32 32, 32
      %34 = vsyncadd [#allocation7], %s33
      %37 = dma.hbm_to_smem %s1, 32, [#allocation9], [#allocation7]
    $region9: #{tpu_custom_call.1} parent=1 // pred_fallthru
      _
    // Predicated region
    $region10: #{tpu_custom_call.1} parent=1 // pred_check
      _
    $region11: #{tpu_custom_call.1} parent=1 // pred_check_branch
      %39 = sbr.rel (0) target = $region13
    $region12: #{tpu_custom_call.1} parent=1 // pred_region
      %s41 = ssub.s32 16, 16
      %42 = vsyncadd [#allocation8], %s41
      %s44 = sshll.u32 %s2, 4
      %s45 = int_to_ptr.vmem [resolvable:$true] %s44
      %47 = dma.vmem_to_smem %s45, 16, [#allocation10], [#allocation8]
    $region13: #{tpu_custom_call.1} parent=1 // pred_fallthru
      _
    // Predicated region
    $region14: #{tpu_custom_call.1} parent=1 // pred_check
      _
    $region15: #{tpu_custom_call.1} parent=1 // pred_check_branch
      %49 = sbr.rel (0) target = $region17
    $region16: #{tpu_custom_call.1} parent=1 // pred_region
      %s51 = ssub.s32 16, 16
      %52 = vsyncadd [#allocation12], %s51
      %s54 = sshll.u32 %s3, 4
      %s55 = int_to_ptr.vmem [resolvable:$true] %s54
      %57 = dma.vmem_to_smem %s55, 16, [#allocation11], [#allocation12]
    $region17: #{tpu_custom_call.1} parent=1 // pred_fallthru
      _
    // Predicated region
    $region18: #{tpu_custom_call.1} parent=1 // pred_check
      _
    $region19: #{tpu_custom_call.1} parent=1 // pred_check_branch
      %59 = sbr.rel (0) target = $region21
    $region20: #{tpu_custom_call.1} parent=1 // pred_region
      %s61 = ssub.s32 32, 32
      %62 = vsyncadd [#allocation12], %s61
      %s64 = sshll.u32 %s4, 4
      %s65 = int_to_ptr.vmem [resolvable:$true] %s64
      %67 = dma.vmem_to_smem %s65, 32, [#allocation13], [#allocation12]
    $region21: #{tpu_custom_call.1} parent=1 // pred_fallthru
      _
    // Predicated region
    $region22: #{tpu_custom_call.1} parent=1 // pred_check
      _
    $region23: #{tpu_custom_call.1} parent=1 // pred_check_branch
      %69 = sbr.rel (0) target = $region25
    $region24: #{tpu_custom_call.1} parent=1 // pred_region
      %s71 = ssub.s32 16, 16
      %72 = vsyncadd [#allocation15], %s71
      %s74 = sshll.u32 %s5, 4
      %s75 = int_to_ptr.vmem [resolvable:$true] %s74
      %77 = dma.vmem_to_smem %s75, 16, [#allocation14], [#allocation15]
    $region25: #{tpu_custom_call.1} parent=1 // pred_fallthru
      _
    // Predicated region
    $region26: #{tpu_custom_call.1} parent=1 // pred_check
      _
    $region27: #{tpu_custom_call.1} parent=1 // pred_check_branch
      %79 = sbr.rel (0) target = $region29
    $region28: #{tpu_custom_call.1} parent=1 // pred_region
      %s81 = ssub.s32 16, 16
      %82 = vsyncadd [#allocation15], %s81
      %s84 = sshll.u32 %s6, 4
      %s85 = int_to_ptr.vmem [resolvable:$true] %s84
      %87 = dma.vmem_to_smem %s85, 16, [#allocation16], [#allocation15]
    $region29: #{tpu_custom_call.1} parent=1 // pred_fallthru
      _
    // Predicated region
    $region30: #{tpu_custom_call.1} parent=1 // pred_check
      _
    $region31: #{tpu_custom_call.1} parent=1 // pred_check_branch
      %89 = sbr.rel (0) target = $region33
    $region32: #{tpu_custom_call.1} parent=1 // pred_region
      %90 = dma.done [#allocation5], 2048
    $region33: #{tpu_custom_call.1} parent=1 // pred_fallthru
      _
    // Predicated region
    $region34: #{tpu_custom_call.1} parent=1 // pred_check
      _
    $region35: #{tpu_custom_call.1} parent=1 // pred_check_branch
      %92 = sbr.rel (0) target = $region37
    $region36: #{tpu_custom_call.1} parent=1 // pred_region
      %93 = dma.done [#allocation7], 32
    $region37: #{tpu_custom_call.1} parent=1 // pred_fallthru
      _
    // Predicated region
    $region38: #{tpu_custom_call.1} parent=1 // pred_check
      _
    $region39: #{tpu_custom_call.1} parent=1 // pred_check_branch
      %95 = sbr.rel (0) target = $region41
    $region40: #{tpu_custom_call.1} parent=1 // pred_region
      %96 = dma.done [#allocation8], 16
    $region41: #{tpu_custom_call.1} parent=1 // pred_fallthru
      _
    // Predicated region
    $region42: #{tpu_custom_call.1} parent=1 // pred_check
      _
    $region43: #{tpu_custom_call.1} parent=1 // pred_check_branch
      %98 = sbr.rel (0) target = $region45
    $region44: #{tpu_custom_call.1} parent=1 // pred_region
      %99 = dma.done [#allocation12], 16
    $region45: #{tpu_custom_call.1} parent=1 // pred_fallthru
      _
    // Predicated region
    $region46: #{tpu_custom_call.1} parent=1 // pred_check
      _
    $region47: #{tpu_custom_call.1} parent=1 // pred_check_branch
      %101 = sbr.rel (0) target = $region49
    $region48: #{tpu_custom_call.1} parent=1 // pred_region
      %102 = dma.done [#allocation12], 32
    $region49: #{tpu_custom_call.1} parent=1 // pred_fallthru
      _
    // Predicated region
    $region50: #{tpu_custom_call.1} parent=1 // pred_check
      _
    $region51: #{tpu_custom_call.1} parent=1 // pred_check_branch
      %104 = sbr.rel (0) target = $region53
    $region52: #{tpu_custom_call.1} parent=1 // pred_region
      %105 = dma.done [#allocation15], 16
    $region53: #{tpu_custom_call.1} parent=1 // pred_fallthru
      _
    // Predicated region
    $region54: #{tpu_custom_call.1} parent=1 // pred_check
      _
    $region55: #{tpu_custom_call.1} parent=1 // pred_check_branch
      %107 = sbr.rel (0) target = $region57
    $region56: #{tpu_custom_call.1} parent=1 // pred_region
      %108 = dma.done [#allocation15], 16
    $region57: #{tpu_custom_call.1} parent=1 // pred_fallthru
      _
    %109 = sfence
    %v110 = vld [vmem:[#allocation4] sm:$0xff]
    %v111 = vld [vmem:[#allocation4 + $0x8] sm:$0xff]
    %v112 = vld [vmem:[#allocation4 + $0x10] sm:$0xff]
    %v113 = vld [vmem:[#allocation4 + $0x18] sm:$0xff]
    %v114 = vld [vmem:[#allocation4 + $0x20] sm:$0xff]
    %v115 = vld [vmem:[#allocation4 + $0x28] sm:$0xff]
    %v116 = vld [vmem:[#allocation4 + $0x30] sm:$0xff]
    %v117 = vld [vmem:[#allocation4 + $0x38] sm:$0xff]
    %v118 = vld [vmem:[#allocation4 + $0x40] sm:$0xff]
    %v119 = vld [vmem:[#allocation4 + $0x48] sm:$0xff]
    %v120 = vld [vmem:[#allocation4 + $0x50] sm:$0xff]
    %v121 = vld [vmem:[#allocation4 + $0x58] sm:$0xff]
    %v122 = vld [vmem:[#allocation4 + $0x60] sm:$0xff]
    %v123 = vld [vmem:[#allocation4 + $0x68] sm:$0xff]
    %v124 = vld [vmem:[#allocation4 + $0x70] sm:$0xff]
    %v125 = vld [vmem:[#allocation4 + $0x78] sm:$0xff]
    %vm126 = vcmask 146432
    %127 = vst.msk [vmem:[#allocation2] sm:$0xff] %vm126, 0.0
    %128 = vst.msk [vmem:[#allocation2 + $0x8] sm:$0xff] %vm126, 0.0
    %vm129 = vcmask 140288
    %130 = vst.msk [vmem:[#allocation2 + $0x10] sm:$0x3] %vm129, 0.0
    %131 = vst.msk [vmem:[#allocation2 + $0x18] sm:$0xff] %vm126, 0.0
    %132 = vst.msk [vmem:[#allocation2 + $0x20] sm:$0xff] %vm126, 0.0
    %133 = vst.msk [vmem:[#allocation2 + $0x28] sm:$0x3] %vm129, 0.0
    %134 = vst.msk [vmem:[#allocation2 + $0x30] sm:$0xff] %vm126, 0.0
    %135 = vst.msk [vmem:[#allocation2 + $0x38] sm:$0xff] %vm126, 0.0
    %136 = vst.msk [vmem:[#allocation2 + $0x40] sm:$0x3] %vm129, 0.0
    %137 = vst.msk [vmem:[#allocation2 + $0x48] sm:$0xff] %vm126, 0.0
    %138 = vst.msk [vmem:[#allocation2 + $0x50] sm:$0xff] %vm126, 0.0
    %139 = vst.msk [vmem:[#allocation2 + $0x58] sm:$0x3] %vm129, 0.0
    %140 = vst.msk [vmem:[#allocation2 + $0x60] sm:$0xff] %vm126, 0.0
    %141 = vst.msk [vmem:[#allocation2 + $0x68] sm:$0xff] %vm126, 0.0
    %142 = vst.msk [vmem:[#allocation2 + $0x70] sm:$0x3] %vm129, 0.0
    %143 = vst.msk [vmem:[#allocation2 + $0x78] sm:$0xff] %vm126, 0.0
    %144 = vst.msk [vmem:[#allocation2 + $0x80] sm:$0xff] %vm126, 0.0
    %145 = vst.msk [vmem:[#allocation2 + $0x88] sm:$0x3] %vm129, 0.0
    %146 = vst.msk [vmem:[#allocation2 + $0x90] sm:$0xff] %vm126, 0.0
    %147 = vst.msk [vmem:[#allocation2 + $0x98] sm:$0xff] %vm126, 0.0
    %148 = vst.msk [vmem:[#allocation2 + $0xa0] sm:$0x3] %vm129, 0.0
    %149 = vst.msk [vmem:[#allocation2 + $0xa8] sm:$0xff] %vm126, 0.0
    %150 = vst.msk [vmem:[#allocation2 + $0xb0] sm:$0xff] %vm126, 0.0
    %151 = vst.msk [vmem:[#allocation2 + $0xb8] sm:$0x3] %vm129, 0.0
    %168 = vrot.lane.b32.xlu0 %v110, 1
    %v169 = vpop.permute.xlu0 %168
    %170 = vrot.lane.b32.xlu0 %v111, 1
    %v171 = vpop.permute.xlu0 %170
    %172 = vrot.lane.b32.xlu0 %v112, 1
    %v173 = vpop.permute.xlu0 %172
    %174 = vrot.lane.b32.xlu0 %v113, 1
    %v175 = vpop.permute.xlu0 %174
    %176 = vrot.lane.b32.xlu0 %v114, 1
    %v177 = vpop.permute.xlu0 %176
    %178 = vrot.lane.b32.xlu0 %v115, 1
    %v179 = vpop.permute.xlu0 %178
    %180 = vrot.lane.b32.xlu0 %v116, 1
    %v181 = vpop.permute.xlu0 %180
    %182 = vrot.lane.b32.xlu0 %v117, 1
    %v183 = vpop.permute.xlu0 %182
    %184 = vrot.lane.b32.xlu0 %v118, 1
    %v185 = vpop.permute.xlu0 %184
    %186 = vrot.lane.b32.xlu0 %v119, 1
    %v187 = vpop.permute.xlu0 %186
    %188 = vrot.lane.b32.xlu0 %v120, 1
    %v189 = vpop.permute.xlu0 %188
    %190 = vrot.lane.b32.xlu0 %v121, 1
    %v191 = vpop.permute.xlu0 %190
    %192 = vrot.lane.b32.xlu0 %v122, 1
    %v193 = vpop.permute.xlu0 %192
    %194 = vrot.lane.b32.xlu0 %v123, 1
    %v195 = vpop.permute.xlu0 %194
    %196 = vrot.lane.b32.xlu0 %v124, 1
    %v197 = vpop.permute.xlu0 %196
    %198 = vrot.lane.b32.xlu0 %v125, 1
    %v199 = vpop.permute.xlu0 %198
    %vm216 = vcmask 138248
    %217 = vst.msk [vmem:[#allocation2 + $0x1] sm:$0xff] %vm216, %v169
    %218 = vst.msk [vmem:[#allocation2 + $0x9] sm:$0xff] %vm216, %v171
    %219 = vst.msk [vmem:[#allocation2 + $0x19] sm:$0xff] %vm216, %v173
    %220 = vst.msk [vmem:[#allocation2 + $0x21] sm:$0xff] %vm216, %v175
    %221 = vst.msk [vmem:[#allocation2 + $0x31] sm:$0xff] %vm216, %v177
    %222 = vst.msk [vmem:[#allocation2 + $0x39] sm:$0xff] %vm216, %v179
    %223 = vst.msk [vmem:[#allocation2 + $0x49] sm:$0xff] %vm216, %v181
    %224 = vst.msk [vmem:[#allocation2 + $0x51] sm:$0xff] %vm216, %v183
    %225 = vst.msk [vmem:[#allocation2 + $0x61] sm:$0xff] %vm216, %v185
    %226 = vst.msk [vmem:[#allocation2 + $0x69] sm:$0xff] %vm216, %v187
    %227 = vst.msk [vmem:[#allocation2 + $0x79] sm:$0xff] %vm216, %v189
    %228 = vst.msk [vmem:[#allocation2 + $0x81] sm:$0xff] %vm216, %v191
    %229 = vst.msk [vmem:[#allocation2 + $0x91] sm:$0xff] %vm216, %v193
    %230 = vst.msk [vmem:[#allocation2 + $0x99] sm:$0xff] %vm216, %v195
    %231 = vst.msk [vmem:[#allocation2 + $0xa9] sm:$0xff] %vm216, %v197
    %232 = vst.msk [vmem:[#allocation2 + $0xb1] sm:$0xff] %vm216, %v199
    %v233 = vld [vmem:[#allocation2] sm:$0xff]
    %v234 = vld [vmem:[#allocation2 + $0x8] sm:$0xff]
    %v235 = vld [vmem:[#allocation2 + $0x60] sm:$0xff]
    %v236 = vld [vmem:[#allocation2 + $0x68] sm:$0xff]
    %s237 = sld [smem:[#allocation9]]
    %v238 = vstv %s237
    %v239 = vmul.f32 %v233, %v238
    %v240 = vmul.f32 %v234, %v238
    %v241 = vmul.f32 %v235, %v238
    %v242 = vmul.f32 %v236, %v238
    %s243 = sld [smem:[#allocation9 + $0x1]]
    %v244 = vstv %s243
    %v245 = vmul.f32 %v233, %v244
    %v246 = vmul.f32 %v234, %v244
    %v247 = vmul.f32 %v235, %v244
    %v248 = vmul.f32 %v236, %v244
    %s249 = sld [smem:[#allocation9 + $0x2]]
    %v250 = vstv %s249
    %v251 = vmul.f32 %v233, %v250
    %v252 = vmul.f32 %v234, %v250
    %v253 = vmul.f32 %v235, %v250
    %v254 = vmul.f32 %v236, %v250
    %s255 = sld [smem:[#allocation9 + $0x3]]
    %v256 = vstv %s255
    %v257 = vmul.f32 %v233, %v256
    %v258 = vmul.f32 %v234, %v256
    %v259 = vmul.f32 %v235, %v256
    %v260 = vmul.f32 %v236, %v256
    %s261 = sld [smem:[#allocation9 + $0x4]]
    %v262 = vstv %s261
    %v263 = vmul.f32 %v233, %v262
    %v264 = vmul.f32 %v234, %v262
    %v265 = vmul.f32 %v235, %v262
    %v266 = vmul.f32 %v236, %v262
    %s267 = sld [smem:[#allocation9 + $0x5]]
    %v268 = vstv %s267
    %v269 = vmul.f32 %v233, %v268
    %v270 = vmul.f32 %v234, %v268
    %v271 = vmul.f32 %v235, %v268
    %v272 = vmul.f32 %v236, %v268
    %s273 = sld [smem:[#allocation9 + $0x6]]
    %v274 = vstv %s273
    %v275 = vmul.f32 %v233, %v274
    %v276 = vmul.f32 %v234, %v274
    %v277 = vmul.f32 %v235, %v274
    %v278 = vmul.f32 %v236, %v274
    %s279 = sld [smem:[#allocation9 + $0x7]]
    %v280 = vstv %s279
    %v281 = vmul.f32 %v233, %v280
    %v282 = vmul.f32 %v234, %v280
    %v283 = vmul.f32 %v235, %v280
    %v284 = vmul.f32 %v236, %v280
    %s285 = scalar_lea.vmem [#allocation2], 24
    %v286 = vld [vmem:[%s285] sm:$0xff]
    %v287 = vld [vmem:[%s285 + $0x8] sm:$0xff]
    %v288 = vld [vmem:[%s285 + $0x60] sm:$0xff]
    %v289 = vld [vmem:[%s285 + $0x68] sm:$0xff]
    %s290 = sld [smem:[#allocation9 + $0x8]]
    %v291 = vstv %s290
    %v292 = vmul.f32 %v286, %v291
    %v293 = vmul.f32 %v287, %v291
    %v294 = vmul.f32 %v288, %v291
    %v295 = vmul.f32 %v289, %v291
    %v296 = vadd.f32 %v239, %v292
    %v297 = vadd.f32 %v240, %v293
    %v298 = vadd.f32 %v241, %v294
    %v299 = vadd.f32 %v242, %v295
    %s300 = sld [smem:[#allocation9 + $0x9]]
    %v301 = vstv %s300
    %v302 = vmul.f32 %v286, %v301
    %v303 = vmul.f32 %v287, %v301
    %v304 = vmul.f32 %v288, %v301
    %v305 = vmul.f32 %v289, %v301
    %v306 = vadd.f32 %v245, %v302
    %v307 = vadd.f32 %v246, %v303
    %v308 = vadd.f32 %v247, %v304
    %v309 = vadd.f32 %v248, %v305
    %s310 = sld [smem:[#allocation9 + $0xa]]
    %v311 = vstv %s310
    %v312 = vmul.f32 %v286, %v311
    %v313 = vmul.f32 %v287, %v311
    %v314 = vmul.f32 %v288, %v311
    %v315 = vmul.f32 %v289, %v311
    %v316 = vadd.f32 %v251, %v312
    %v317 = vadd.f32 %v252, %v313
    %v318 = vadd.f32 %v253, %v314
    %v319 = vadd.f32 %v254, %v315
    %s320 = sld [smem:[#allocation9 + $0xb]]
    %v321 = vstv %s320
    %v322 = vmul.f32 %v286, %v321
    %v323 = vmul.f32 %v287, %v321
    %v324 = vmul.f32 %v288, %v321
    %v325 = vmul.f32 %v289, %v321
    %v326 = vadd.f32 %v257, %v322
    %v327 = vadd.f32 %v258, %v323
    %v328 = vadd.f32 %v259, %v324
    %v329 = vadd.f32 %v260, %v325
    %s330 = sld [smem:[#allocation9 + $0xc]]
    %v331 = vstv %s330
    %v332 = vmul.f32 %v286, %v331
    %v333 = vmul.f32 %v287, %v331
    %v334 = vmul.f32 %v288, %v331
    %v335 = vmul.f32 %v289, %v331
    %v336 = vadd.f32 %v263, %v332
    %v337 = vadd.f32 %v264, %v333
    %v338 = vadd.f32 %v265, %v334
    %v339 = vadd.f32 %v266, %v335
    %s340 = sld [smem:[#allocation9 + $0xd]]
    %v341 = vstv %s340
    %v342 = vmul.f32 %v286, %v341
    %v343 = vmul.f32 %v287, %v341
    %v344 = vmul.f32 %v288, %v341
    %v345 = vmul.f32 %v289, %v341
    %v346 = vadd.f32 %v269, %v342
    %v347 = vadd.f32 %v270, %v343
    %v348 = vadd.f32 %v271, %v344
    %v349 = vadd.f32 %v272, %v345
    %s350 = sld [smem:[#allocation9 + $0xe]]
    %v351 = vstv %s350
    %v352 = vmul.f32 %v286, %v351
    %v353 = vmul.f32 %v287, %v351
    %v354 = vmul.f32 %v288, %v351
    %v355 = vmul.f32 %v289, %v351
    %v356 = vadd.f32 %v275, %v352
    %v357 = vadd.f32 %v276, %v353
    %v358 = vadd.f32 %v277, %v354
    %v359 = vadd.f32 %v278, %v355
    %s360 = sld [smem:[#allocation9 + $0xf]]
    %v361 = vstv %s360
    %v362 = vmul.f32 %v286, %v361
    %v363 = vmul.f32 %v287, %v361
    %v364 = vmul.f32 %v288, %v361
    %v365 = vmul.f32 %v289, %v361
    %v366 = vadd.f32 %v281, %v362
    %v367 = vadd.f32 %v282, %v363
    %v368 = vadd.f32 %v283, %v364
    %v369 = vadd.f32 %v284, %v365
    %s370 = scalar_lea.vmem [#allocation2], 48
    %v371 = vld [vmem:[%s370] sm:$0xff]
    %v372 = vld [vmem:[%s370 + $0x8] sm:$0xff]
    %v373 = vld [vmem:[%s370 + $0x60] sm:$0xff]
    %v374 = vld [vmem:[%s370 + $0x68] sm:$0xff]
    %s375 = sld [smem:[#allocation9 + $0x10]]
    %v376 = vstv %s375
    %v377 = vmul.f32 %v371, %v376
    %v378 = vmul.f32 %v372, %v376
    %v379 = vmul.f32 %v373, %v376
    %v380 = vmul.f32 %v374, %v376
    %v381 = vadd.f32 %v296, %v377
    %v382 = vadd.f32 %v297, %v378
    %v383 = vadd.f32 %v298, %v379
    %v384 = vadd.f32 %v299, %v380
    %s385 = sld [smem:[#allocation9 + $0x11]]
    %v386 = vstv %s385
    %v387 = vmul.f32 %v371, %v386
    %v388 = vmul.f32 %v372, %v386
    %v389 = vmul.f32 %v373, %v386
    %v390 = vmul.f32 %v374, %v386
    %v391 = vadd.f32 %v306, %v387
    %v392 = vadd.f32 %v307, %v388
    %v393 = vadd.f32 %v308, %v389
    %v394 = vadd.f32 %v309, %v390
    %s395 = sld [smem:[#allocation9 + $0x12]]
    %v396 = vstv %s395
    %v397 = vmul.f32 %v371, %v396
    %v398 = vmul.f32 %v372, %v396
    %v399 = vmul.f32 %v373, %v396
    %v400 = vmul.f32 %v374, %v396
    %v401 = vadd.f32 %v316, %v397
    %v402 = vadd.f32 %v317, %v398
    %v403 = vadd.f32 %v318, %v399
    %v404 = vadd.f32 %v319, %v400
    %s405 = sld [smem:[#allocation9 + $0x13]]
    %v406 = vstv %s405
    %v407 = vmul.f32 %v371, %v406
    %v408 = vmul.f32 %v372, %v406
    %v409 = vmul.f32 %v373, %v406
    %v410 = vmul.f32 %v374, %v406
    %v411 = vadd.f32 %v326, %v407
    %v412 = vadd.f32 %v327, %v408
    %v413 = vadd.f32 %v328, %v409
    %v414 = vadd.f32 %v329, %v410
    %s415 = sld [smem:[#allocation9 + $0x14]]
    %v416 = vstv %s415
    %v417 = vmul.f32 %v371, %v416
    %v418 = vmul.f32 %v372, %v416
    %v419 = vmul.f32 %v373, %v416
    %v420 = vmul.f32 %v374, %v416
    %v421 = vadd.f32 %v336, %v417
    %v422 = vadd.f32 %v337, %v418
    %v423 = vadd.f32 %v338, %v419
    %v424 = vadd.f32 %v339, %v420
    %s425 = sld [smem:[#allocation9 + $0x15]]
    %v426 = vstv %s425
    %v427 = vmul.f32 %v371, %v426
    %v428 = vmul.f32 %v372, %v426
    %v429 = vmul.f32 %v373, %v426
    %v430 = vmul.f32 %v374, %v426
    %v431 = vadd.f32 %v346, %v427
    %v432 = vadd.f32 %v347, %v428
    %v433 = vadd.f32 %v348, %v429
    %v434 = vadd.f32 %v349, %v430
    %s435 = sld [smem:[#allocation9 + $0x16]]
    %v436 = vstv %s435
    %v437 = vmul.f32 %v371, %v436
    %v438 = vmul.f32 %v372, %v436
    %v439 = vmul.f32 %v373, %v436
    %v440 = vmul.f32 %v374, %v436
    %v441 = vadd.f32 %v356, %v437
    %v442 = vadd.f32 %v357, %v438
    %v443 = vadd.f32 %v358, %v439
    %v444 = vadd.f32 %v359, %v440
    %s445 = sld [smem:[#allocation9 + $0x17]]
    %v446 = vstv %s445
    %v447 = vmul.f32 %v371, %v446
    %v448 = vmul.f32 %v372, %v446
    %v449 = vmul.f32 %v373, %v446
    %v450 = vmul.f32 %v374, %v446
    %v451 = vadd.f32 %v366, %v447
    %v452 = vadd.f32 %v367, %v448
    %v453 = vadd.f32 %v368, %v449
    %v454 = vadd.f32 %v369, %v450
    %s455 = scalar_lea.vmem [#allocation2], 72
    %v456 = vld [vmem:[%s455] sm:$0xff]
    %v457 = vld [vmem:[%s455 + $0x8] sm:$0xff]
    %v458 = vld [vmem:[%s455 + $0x60] sm:$0xff]
    %v459 = vld [vmem:[%s455 + $0x68] sm:$0xff]
    %s460 = sld [smem:[#allocation9 + $0x18]]
    %v461 = vstv %s460
    %v462 = vmul.f32 %v456, %v461
    %v463 = vmul.f32 %v457, %v461
    %v464 = vmul.f32 %v458, %v461
    %v465 = vmul.f32 %v459, %v461
    %v466 = vadd.f32 %v381, %v462
    %v467 = vadd.f32 %v382, %v463
    %v468 = vadd.f32 %v383, %v464
    %v469 = vadd.f32 %v384, %v465
    %s470 = sld [smem:[#allocation9 + $0x19]]
    %v471 = vstv %s470
    %v472 = vmul.f32 %v456, %v471
    %v473 = vmul.f32 %v457, %v471
    %v474 = vmul.f32 %v458, %v471
    %v475 = vmul.f32 %v459, %v471
    %v476 = vadd.f32 %v391, %v472
    %v477 = vadd.f32 %v392, %v473
    %v478 = vadd.f32 %v393, %v474
    %v479 = vadd.f32 %v394, %v475
    %s480 = sld [smem:[#allocation9 + $0x1a]]
    %v481 = vstv %s480
    %v482 = vmul.f32 %v456, %v481
    %v483 = vmul.f32 %v457, %v481
    %v484 = vmul.f32 %v458, %v481
    %v485 = vmul.f32 %v459, %v481
    %v486 = vadd.f32 %v401, %v482
    %v487 = vadd.f32 %v402, %v483
    %v488 = vadd.f32 %v403, %v484
    %v489 = vadd.f32 %v404, %v485
    %s490 = sld [smem:[#allocation9 + $0x1b]]
    %v491 = vstv %s490
    %v492 = vmul.f32 %v456, %v491
    %v493 = vmul.f32 %v457, %v491
    %v494 = vmul.f32 %v458, %v491
    %v495 = vmul.f32 %v459, %v491
    %v496 = vadd.f32 %v411, %v492
    %v497 = vadd.f32 %v412, %v493
    %v498 = vadd.f32 %v413, %v494
    %v499 = vadd.f32 %v414, %v495
    %s500 = sld [smem:[#allocation9 + $0x1c]]
    %v501 = vstv %s500
    %v502 = vmul.f32 %v456, %v501
    %v503 = vmul.f32 %v457, %v501
    %v504 = vmul.f32 %v458, %v501
    %v505 = vmul.f32 %v459, %v501
    %v506 = vadd.f32 %v421, %v502
    %v507 = vadd.f32 %v422, %v503
    %v508 = vadd.f32 %v423, %v504
    %v509 = vadd.f32 %v424, %v505
    %s510 = sld [smem:[#allocation9 + $0x1d]]
    %v511 = vstv %s510
    %v512 = vmul.f32 %v456, %v511
    %v513 = vmul.f32 %v457, %v511
    %v514 = vmul.f32 %v458, %v511
    %v515 = vmul.f32 %v459, %v511
    %v516 = vadd.f32 %v431, %v512
    %v517 = vadd.f32 %v432, %v513
    %v518 = vadd.f32 %v433, %v514
    %v519 = vadd.f32 %v434, %v515
    %s520 = sld [smem:[#allocation9 + $0x1e]]
    %v521 = vstv %s520
    %v522 = vmul.f32 %v456, %v521
    %v523 = vmul.f32 %v457, %v521
    %v524 = vmul.f32 %v458, %v521
    %v525 = vmul.f32 %v459, %v521
    %v526 = vadd.f32 %v441, %v522
    %v527 = vadd.f32 %v442, %v523
    %v528 = vadd.f32 %v443, %v524
    %v529 = vadd.f32 %v444, %v525
    %s530 = sld [smem:[#allocation9 + $0x1f]]
    %v531 = vstv %s530
    %v532 = vmul.f32 %v456, %v531
    %v533 = vmul.f32 %v457, %v531
    %v534 = vmul.f32 %v458, %v531
    %v535 = vmul.f32 %v459, %v531
    %v536 = vadd.f32 %v451, %v532
    %v537 = vadd.f32 %v452, %v533
    %v538 = vadd.f32 %v453, %v534
    %v539 = vadd.f32 %v454, %v535
    %s540 = sld [smem:[#allocation9 + $0x20]]
    %v541 = vstv %s540
    %v542 = vmul.f32 %v233, %v541
    %v543 = vmul.f32 %v234, %v541
    %v544 = vmul.f32 %v235, %v541
    %v545 = vmul.f32 %v236, %v541
    %550 = vrot.lane.b32.xlu0 %v542, 127
    %v551 = vpop.permute.xlu0 %550
    %552 = vrot.lane.b32.xlu0 %v543, 127
    %v553 = vpop.permute.xlu0 %552
    %554 = vrot.lane.b32.xlu0 %v544, 127
    %v555 = vpop.permute.xlu0 %554
    %556 = vrot.lane.b32.xlu0 %v545, 127
    %v557 = vpop.permute.xlu0 %556
    %v562 = vadd.f32 %v466, %v551
    %v563 = vadd.f32 %v467, %v553
    %v564 = vadd.f32 %v468, %v555
    %v565 = vadd.f32 %v469, %v557
    %s566 = sld [smem:[#allocation9 + $0x21]]
    %v567 = vstv %s566
    %v568 = vmul.f32 %v233, %v567
    %v569 = vmul.f32 %v234, %v567
    %v570 = vmul.f32 %v235, %v567
    %v571 = vmul.f32 %v236, %v567
    %576 = vrot.lane.b32.xlu0 %v568, 127
    %v577 = vpop.permute.xlu0 %576
    %578 = vrot.lane.b32.xlu0 %v569, 127
    %v579 = vpop.permute.xlu0 %578
    %580 = vrot.lane.b32.xlu0 %v570, 127
    %v581 = vpop.permute.xlu0 %580
    %582 = vrot.lane.b32.xlu0 %v571, 127
    %v583 = vpop.permute.xlu0 %582
    %v588 = vadd.f32 %v476, %v577
    %v589 = vadd.f32 %v477, %v579
    %v590 = vadd.f32 %v478, %v581
    %v591 = vadd.f32 %v479, %v583
    %s592 = sld [smem:[#allocation9 + $0x22]]
    %v593 = vstv %s592
    %v594 = vmul.f32 %v233, %v593
    %v595 = vmul.f32 %v234, %v593
    %v596 = vmul.f32 %v235, %v593
    %v597 = vmul.f32 %v236, %v593
    %602 = vrot.lane.b32.xlu0 %v594, 127
    %v603 = vpop.permute.xlu0 %602
    %604 = vrot.lane.b32.xlu0 %v595, 127
    %v605 = vpop.permute.xlu0 %604
    %606 = vrot.lane.b32.xlu0 %v596, 127
    %v607 = vpop.permute.xlu0 %606
    %608 = vrot.lane.b32.xlu0 %v597, 127
    %v609 = vpop.permute.xlu0 %608
    %v614 = vadd.f32 %v486, %v603
    %v615 = vadd.f32 %v487, %v605
    %v616 = vadd.f32 %v488, %v607
    %v617 = vadd.f32 %v489, %v609
    %s618 = sld [smem:[#allocation9 + $0x23]]
    %v619 = vstv %s618
    %v620 = vmul.f32 %v233, %v619
    %v621 = vmul.f32 %v234, %v619
    %v622 = vmul.f32 %v235, %v619
    %v623 = vmul.f32 %v236, %v619
    %628 = vrot.lane.b32.xlu0 %v620, 127
    %v629 = vpop.permute.xlu0 %628
    %630 = vrot.lane.b32.xlu0 %v621, 127
    %v631 = vpop.permute.xlu0 %630
    %632 = vrot.lane.b32.xlu0 %v622, 127
    %v633 = vpop.permute.xlu0 %632
    %634 = vrot.lane.b32.xlu0 %v623, 127
    %v635 = vpop.permute.xlu0 %634
    %v640 = vadd.f32 %v496, %v629
    %v641 = vadd.f32 %v497, %v631
    %v642 = vadd.f32 %v498, %v633
    %v643 = vadd.f32 %v499, %v635
    %s644 = sld [smem:[#allocation9 + $0x24]]
    %v645 = vstv %s644
    %v646 = vmul.f32 %v233, %v645
    %v647 = vmul.f32 %v234, %v645
    %v648 = vmul.f32 %v235, %v645
    %v649 = vmul.f32 %v236, %v645
    %654 = vrot.lane.b32.xlu0 %v646, 127
    %v655 = vpop.permute.xlu0 %654
    %656 = vrot.lane.b32.xlu0 %v647, 127
    %v657 = vpop.permute.xlu0 %656
    %658 = vrot.lane.b32.xlu0 %v648, 127
    %v659 = vpop.permute.xlu0 %658
    %660 = vrot.lane.b32.xlu0 %v649, 127
    %v661 = vpop.permute.xlu0 %660
    %v666 = vadd.f32 %v506, %v655
    %v667 = vadd.f32 %v507, %v657
    %v668 = vadd.f32 %v508, %v659
    %v669 = vadd.f32 %v509, %v661
    %s670 = sld [smem:[#allocation9 + $0x25]]
    %v671 = vstv %s670
    %v672 = vmul.f32 %v233, %v671
    %v673 = vmul.f32 %v234, %v671
    %v674 = vmul.f32 %v235, %v671
    %v675 = vmul.f32 %v236, %v671
    %680 = vrot.lane.b32.xlu0 %v672, 127
    %v681 = vpop.permute.xlu0 %680
    %682 = vrot.lane.b32.xlu0 %v673, 127
    %v683 = vpop.permute.xlu0 %682
    %684 = vrot.lane.b32.xlu0 %v674, 127
    %v685 = vpop.permute.xlu0 %684
    %686 = vrot.lane.b32.xlu0 %v675, 127
    %v687 = vpop.permute.xlu0 %686
    %v692 = vadd.f32 %v516, %v681
    %v693 = vadd.f32 %v517, %v683
    %v694 = vadd.f32 %v518, %v685
    %v695 = vadd.f32 %v519, %v687
    %s696 = sld [smem:[#allocation9 + $0x26]]
    %v697 = vstv %s696
    %v698 = vmul.f32 %v233, %v697
    %v699 = vmul.f32 %v234, %v697
    %v700 = vmul.f32 %v235, %v697
    %v701 = vmul.f32 %v236, %v697
    %706 = vrot.lane.b32.xlu0 %v698, 127
    %v707 = vpop.permute.xlu0 %706
    %708 = vrot.lane.b32.xlu0 %v699, 127
    %v709 = vpop.permute.xlu0 %708
    %710 = vrot.lane.b32.xlu0 %v700, 127
    %v711 = vpop.permute.xlu0 %710
    %712 = vrot.lane.b32.xlu0 %v701, 127
    %v713 = vpop.permute.xlu0 %712
    %v718 = vadd.f32 %v526, %v707
    %v719 = vadd.f32 %v527, %v709
    %v720 = vadd.f32 %v528, %v711
    %v721 = vadd.f32 %v529, %v713
    %s722 = sld [smem:[#allocation9 + $0x27]]
    %v723 = vstv %s722
    %v724 = vmul.f32 %v233, %v723
    %v725 = vmul.f32 %v234, %v723
    %v726 = vmul.f32 %v235, %v723
    %v727 = vmul.f32 %v236, %v723
    %732 = vrot.lane.b32.xlu0 %v724, 127
    %v733 = vpop.permute.xlu0 %732
    %734 = vrot.lane.b32.xlu0 %v725, 127
    %v735 = vpop.permute.xlu0 %734
    %736 = vrot.lane.b32.xlu0 %v726, 127
    %v737 = vpop.permute.xlu0 %736
    %738 = vrot.lane.b32.xlu0 %v727, 127
    %v739 = vpop.permute.xlu0 %738
    %v744 = vadd.f32 %v536, %v733
    %v745 = vadd.f32 %v537, %v735
    %v746 = vadd.f32 %v538, %v737
    %v747 = vadd.f32 %v539, %v739
    %s748 = sld [smem:[#allocation9 + $0x28]]
    %v749 = vstv %s748
    %v750 = vmul.f32 %v286, %v749
    %v751 = vmul.f32 %v287, %v749
    %v752 = vmul.f32 %v288, %v749
    %v753 = vmul.f32 %v289, %v749
    %758 = vrot.lane.b32.xlu0 %v750, 127
    %v759 = vpop.permute.xlu0 %758
    %760 = vrot.lane.b32.xlu0 %v751, 127
    %v761 = vpop.permute.xlu0 %760
    %762 = vrot.lane.b32.xlu0 %v752, 127
    %v763 = vpop.permute.xlu0 %762
    %764 = vrot.lane.b32.xlu0 %v753, 127
    %v765 = vpop.permute.xlu0 %764
    %v770 = vadd.f32 %v562, %v759
    %v771 = vadd.f32 %v563, %v761
    %v772 = vadd.f32 %v564, %v763
    %v773 = vadd.f32 %v565, %v765
    %s774 = sld [smem:[#allocation9 + $0x29]]
    %v775 = vstv %s774
    %v776 = vmul.f32 %v286, %v775
    %v777 = vmul.f32 %v287, %v775
    %v778 = vmul.f32 %v288, %v775
    %v779 = vmul.f32 %v289, %v775
    %784 = vrot.lane.b32.xlu0 %v776, 127
    %v785 = vpop.permute.xlu0 %784
    %786 = vrot.lane.b32.xlu0 %v777, 127
    %v787 = vpop.permute.xlu0 %786
    %788 = vrot.lane.b32.xlu0 %v778, 127
    %v789 = vpop.permute.xlu0 %788
    %790 = vrot.lane.b32.xlu0 %v779, 127
    %v791 = vpop.permute.xlu0 %790
    %v796 = vadd.f32 %v588, %v785
    %v797 = vadd.f32 %v589, %v787
    %v798 = vadd.f32 %v590, %v789
    %v799 = vadd.f32 %v591, %v791
    %s800 = sld [smem:[#allocation9 + $0x2a]]
    %v801 = vstv %s800
    %v802 = vmul.f32 %v286, %v801
    %v803 = vmul.f32 %v287, %v801
    %v804 = vmul.f32 %v288, %v801
    %v805 = vmul.f32 %v289, %v801
    %810 = vrot.lane.b32.xlu0 %v802, 127
    %v811 = vpop.permute.xlu0 %810
    %812 = vrot.lane.b32.xlu0 %v803, 127
    %v813 = vpop.permute.xlu0 %812
    %814 = vrot.lane.b32.xlu0 %v804, 127
    %v815 = vpop.permute.xlu0 %814
    %816 = vrot.lane.b32.xlu0 %v805, 127
    %v817 = vpop.permute.xlu0 %816
    %v822 = vadd.f32 %v614, %v811
    %v823 = vadd.f32 %v615, %v813
    %v824 = vadd.f32 %v616, %v815
    %v825 = vadd.f32 %v617, %v817
    %s826 = sld [smem:[#allocation9 + $0x2b]]
    %v827 = vstv %s826
    %v828 = vmul.f32 %v286, %v827
    %v829 = vmul.f32 %v287, %v827
    %v830 = vmul.f32 %v288, %v827
    %v831 = vmul.f32 %v289, %v827
    %836 = vrot.lane.b32.xlu0 %v828, 127
    %v837 = vpop.permute.xlu0 %836
    %838 = vrot.lane.b32.xlu0 %v829, 127
    %v839 = vpop.permute.xlu0 %838
    %840 = vrot.lane.b32.xlu0 %v830, 127
    %v841 = vpop.permute.xlu0 %840
    %842 = vrot.lane.b32.xlu0 %v831, 127
    %v843 = vpop.permute.xlu0 %842
    %v848 = vadd.f32 %v640, %v837
    %v849 = vadd.f32 %v641, %v839
    %v850 = vadd.f32 %v642, %v841
    %v851 = vadd.f32 %v643, %v843
    %s852 = sld [smem:[#allocation9 + $0x2c]]
    %v853 = vstv %s852
    %v854 = vmul.f32 %v286, %v853
    %v855 = vmul.f32 %v287, %v853
    %v856 = vmul.f32 %v288, %v853
    %v857 = vmul.f32 %v289, %v853
    %862 = vrot.lane.b32.xlu0 %v854, 127
    %v863 = vpop.permute.xlu0 %862
    %864 = vrot.lane.b32.xlu0 %v855, 127
    %v865 = vpop.permute.xlu0 %864
    %866 = vrot.lane.b32.xlu0 %v856, 127
    %v867 = vpop.permute.xlu0 %866
    %868 = vrot.lane.b32.xlu0 %v857, 127
    %v869 = vpop.permute.xlu0 %868
    %v874 = vadd.f32 %v666, %v863
    %v875 = vadd.f32 %v667, %v865
    %v876 = vadd.f32 %v668, %v867
    %v877 = vadd.f32 %v669, %v869
    %s878 = sld [smem:[#allocation9 + $0x2d]]
    %v879 = vstv %s878
    %v880 = vmul.f32 %v286, %v879
    %v881 = vmul.f32 %v287, %v879
    %v882 = vmul.f32 %v288, %v879
    %v883 = vmul.f32 %v289, %v879
    %888 = vrot.lane.b32.xlu0 %v880, 127
    %v889 = vpop.permute.xlu0 %888
    %890 = vrot.lane.b32.xlu0 %v881, 127
    %v891 = vpop.permute.xlu0 %890
    %892 = vrot.lane.b32.xlu0 %v882, 127
    %v893 = vpop.permute.xlu0 %892
    %894 = vrot.lane.b32.xlu0 %v883, 127
    %v895 = vpop.permute.xlu0 %894
    %v900 = vadd.f32 %v692, %v889
    %v901 = vadd.f32 %v693, %v891
    %v902 = vadd.f32 %v694, %v893
    %v903 = vadd.f32 %v695, %v895
    %s904 = sld [smem:[#allocation9 + $0x2e]]
    %v905 = vstv %s904
    %v906 = vmul.f32 %v286, %v905
    %v907 = vmul.f32 %v287, %v905
    %v908 = vmul.f32 %v288, %v905
    %v909 = vmul.f32 %v289, %v905
    %914 = vrot.lane.b32.xlu0 %v906, 127
    %v915 = vpop.permute.xlu0 %914
    %916 = vrot.lane.b32.xlu0 %v907, 127
    %v917 = vpop.permute.xlu0 %916
    %918 = vrot.lane.b32.xlu0 %v908, 127
    %v919 = vpop.permute.xlu0 %918
    %920 = vrot.lane.b32.xlu0 %v909, 127
    %v921 = vpop.permute.xlu0 %920
    %v926 = vadd.f32 %v718, %v915
    %v927 = vadd.f32 %v719, %v917
    %v928 = vadd.f32 %v720, %v919
    %v929 = vadd.f32 %v721, %v921
    %s930 = sld [smem:[#allocation9 + $0x2f]]
    %v931 = vstv %s930
    %v932 = vmul.f32 %v286, %v931
    %v933 = vmul.f32 %v287, %v931
    %v934 = vmul.f32 %v288, %v931
    %v935 = vmul.f32 %v289, %v931
    %940 = vrot.lane.b32.xlu0 %v932, 127
    %v941 = vpop.permute.xlu0 %940
    %942 = vrot.lane.b32.xlu0 %v933, 127
    %v943 = vpop.permute.xlu0 %942
    %944 = vrot.lane.b32.xlu0 %v934, 127
    %v945 = vpop.permute.xlu0 %944
    %946 = vrot.lane.b32.xlu0 %v935, 127
    %v947 = vpop.permute.xlu0 %946
    %v952 = vadd.f32 %v744, %v941
    %v953 = vadd.f32 %v745, %v943
    %v954 = vadd.f32 %v746, %v945
    %v955 = vadd.f32 %v747, %v947
    %s956 = sld [smem:[#allocation9 + $0x30]]
    %v957 = vstv %s956
    %v958 = vmul.f32 %v371, %v957
    %v959 = vmul.f32 %v372, %v957
    %v960 = vmul.f32 %v373, %v957
    %v961 = vmul.f32 %v374, %v957
    %966 = vrot.lane.b32.xlu0 %v958, 127
    %v967 = vpop.permute.xlu0 %966
    %968 = vrot.lane.b32.xlu0 %v959, 127
    %v969 = vpop.permute.xlu0 %968
    %970 = vrot.lane.b32.xlu0 %v960, 127
    %v971 = vpop.permute.xlu0 %970
    %972 = vrot.lane.b32.xlu0 %v961, 127
    %v973 = vpop.permute.xlu0 %972
    %v978 = vadd.f32 %v770, %v967
    %v979 = vadd.f32 %v771, %v969
    %v980 = vadd.f32 %v772, %v971
    %v981 = vadd.f32 %v773, %v973
    %s982 = sld [smem:[#allocation9 + $0x31]]
    %v983 = vstv %s982
    %v984 = vmul.f32 %v371, %v983
    %v985 = vmul.f32 %v372, %v983
    %v986 = vmul.f32 %v373, %v983
    %v987 = vmul.f32 %v374, %v983
    %992 = vrot.lane.b32.xlu0 %v984, 127
    %v993 = vpop.permute.xlu0 %992
    %994 = vrot.lane.b32.xlu0 %v985, 127
    %v995 = vpop.permute.xlu0 %994
    %996 = vrot.lane.b32.xlu0 %v986, 127
    %v997 = vpop.permute.xlu0 %996
    %998 = vrot.lane.b32.xlu0 %v987, 127
    %v999 = vpop.permute.xlu0 %998
    %v1004 = vadd.f32 %v796, %v993
    %v1005 = vadd.f32 %v797, %v995
    %v1006 = vadd.f32 %v798, %v997
    %v1007 = vadd.f32 %v799, %v999
    %s1008 = sld [smem:[#allocation9 + $0x32]]
    %v1009 = vstv %s1008
    %v1010 = vmul.f32 %v371, %v1009
    %v1011 = vmul.f32 %v372, %v1009
    %v1012 = vmul.f32 %v373, %v1009
    %v1013 = vmul.f32 %v374, %v1009
    %1018 = vrot.lane.b32.xlu0 %v1010, 127
    %v1019 = vpop.permute.xlu0 %1018
    %1020 = vrot.lane.b32.xlu0 %v1011, 127
    %v1021 = vpop.permute.xlu0 %1020
    %1022 = vrot.lane.b32.xlu0 %v1012, 127
    %v1023 = vpop.permute.xlu0 %1022
    %1024 = vrot.lane.b32.xlu0 %v1013, 127
    %v1025 = vpop.permute.xlu0 %1024
    %v1030 = vadd.f32 %v822, %v1019
    %v1031 = vadd.f32 %v823, %v1021
    %v1032 = vadd.f32 %v824, %v1023
    %v1033 = vadd.f32 %v825, %v1025
    %s1034 = sld [smem:[#allocation9 + $0x33]]
    %v1035 = vstv %s1034
    %v1036 = vmul.f32 %v371, %v1035
    %v1037 = vmul.f32 %v372, %v1035
    %v1038 = vmul.f32 %v373, %v1035
    %v1039 = vmul.f32 %v374, %v1035
    %1044 = vrot.lane.b32.xlu0 %v1036, 127
    %v1045 = vpop.permute.xlu0 %1044
    %1046 = vrot.lane.b32.xlu0 %v1037, 127
    %v1047 = vpop.permute.xlu0 %1046
    %1048 = vrot.lane.b32.xlu0 %v1038, 127
    %v1049 = vpop.permute.xlu0 %1048
    %1050 = vrot.lane.b32.xlu0 %v1039, 127
    %v1051 = vpop.permute.xlu0 %1050
    %v1056 = vadd.f32 %v848, %v1045
    %v1057 = vadd.f32 %v849, %v1047
    %v1058 = vadd.f32 %v850, %v1049
    %v1059 = vadd.f32 %v851, %v1051
    %s1060 = sld [smem:[#allocation9 + $0x34]]
    %v1061 = vstv %s1060
    %v1062 = vmul.f32 %v371, %v1061
    %v1063 = vmul.f32 %v372, %v1061
    %v1064 = vmul.f32 %v373, %v1061
    %v1065 = vmul.f32 %v374, %v1061
    %1070 = vrot.lane.b32.xlu0 %v1062, 127
    %v1071 = vpop.permute.xlu0 %1070
    %1072 = vrot.lane.b32.xlu0 %v1063, 127
    %v1073 = vpop.permute.xlu0 %1072
    %1074 = vrot.lane.b32.xlu0 %v1064, 127
    %v1075 = vpop.permute.xlu0 %1074
    %1076 = vrot.lane.b32.xlu0 %v1065, 127
    %v1077 = vpop.permute.xlu0 %1076
    %v1082 = vadd.f32 %v874, %v1071
    %v1083 = vadd.f32 %v875, %v1073
    %v1084 = vadd.f32 %v876, %v1075
    %v1085 = vadd.f32 %v877, %v1077
    %s1086 = sld [smem:[#allocation9 + $0x35]]
    %v1087 = vstv %s1086
    %v1088 = vmul.f32 %v371, %v1087
    %v1089 = vmul.f32 %v372, %v1087
    %v1090 = vmul.f32 %v373, %v1087
    %v1091 = vmul.f32 %v374, %v1087
    %1096 = vrot.lane.b32.xlu0 %v1088, 127
    %v1097 = vpop.permute.xlu0 %1096
    %1098 = vrot.lane.b32.xlu0 %v1089, 127
    %v1099 = vpop.permute.xlu0 %1098
    %1100 = vrot.lane.b32.xlu0 %v1090, 127
    %v1101 = vpop.permute.xlu0 %1100
    %1102 = vrot.lane.b32.xlu0 %v1091, 127
    %v1103 = vpop.permute.xlu0 %1102
    %v1108 = vadd.f32 %v900, %v1097
    %v1109 = vadd.f32 %v901, %v1099
    %v1110 = vadd.f32 %v902, %v1101
    %v1111 = vadd.f32 %v903, %v1103
    %s1112 = sld [smem:[#allocation9 + $0x36]]
    %v1113 = vstv %s1112
    %v1114 = vmul.f32 %v371, %v1113
    %v1115 = vmul.f32 %v372, %v1113
    %v1116 = vmul.f32 %v373, %v1113
    %v1117 = vmul.f32 %v374, %v1113
    %1122 = vrot.lane.b32.xlu0 %v1114, 127
    %v1123 = vpop.permute.xlu0 %1122
    %1124 = vrot.lane.b32.xlu0 %v1115, 127
    %v1125 = vpop.permute.xlu0 %1124
    %1126 = vrot.lane.b32.xlu0 %v1116, 127
    %v1127 = vpop.permute.xlu0 %1126
    %1128 = vrot.lane.b32.xlu0 %v1117, 127
    %v1129 = vpop.permute.xlu0 %1128
    %v1134 = vadd.f32 %v926, %v1123
    %v1135 = vadd.f32 %v927, %v1125
    %v1136 = vadd.f32 %v928, %v1127
    %v1137 = vadd.f32 %v929, %v1129
    %s1138 = sld [smem:[#allocation9 + $0x37]]
    %v1139 = vstv %s1138
    %v1140 = vmul.f32 %v371, %v1139
    %v1141 = vmul.f32 %v372, %v1139
    %v1142 = vmul.f32 %v373, %v1139
    %v1143 = vmul.f32 %v374, %v1139
    %1148 = vrot.lane.b32.xlu0 %v1140, 127
    %v1149 = vpop.permute.xlu0 %1148
    %1150 = vrot.lane.b32.xlu0 %v1141, 127
    %v1151 = vpop.permute.xlu0 %1150
    %1152 = vrot.lane.b32.xlu0 %v1142, 127
    %v1153 = vpop.permute.xlu0 %1152
    %1154 = vrot.lane.b32.xlu0 %v1143, 127
    %v1155 = vpop.permute.xlu0 %1154
    %v1160 = vadd.f32 %v952, %v1149
    %v1161 = vadd.f32 %v953, %v1151
    %v1162 = vadd.f32 %v954, %v1153
    %v1163 = vadd.f32 %v955, %v1155
    %s1164 = sld [smem:[#allocation9 + $0x38]]
    %v1165 = vstv %s1164
    %v1166 = vmul.f32 %v456, %v1165
    %v1167 = vmul.f32 %v457, %v1165
    %v1168 = vmul.f32 %v458, %v1165
    %v1169 = vmul.f32 %v459, %v1165
    %1174 = vrot.lane.b32.xlu0 %v1166, 127
    %v1175 = vpop.permute.xlu0 %1174
    %1176 = vrot.lane.b32.xlu0 %v1167, 127
    %v1177 = vpop.permute.xlu0 %1176
    %1178 = vrot.lane.b32.xlu0 %v1168, 127
    %v1179 = vpop.permute.xlu0 %1178
    %1180 = vrot.lane.b32.xlu0 %v1169, 127
    %v1181 = vpop.permute.xlu0 %1180
    %v1186 = vadd.f32 %v978, %v1175
    %v1187 = vadd.f32 %v979, %v1177
    %v1188 = vadd.f32 %v980, %v1179
    %v1189 = vadd.f32 %v981, %v1181
    %s1190 = sld [smem:[#allocation9 + $0x39]]
    %v1191 = vstv %s1190
    %v1192 = vmul.f32 %v456, %v1191
    %v1193 = vmul.f32 %v457, %v1191
    %v1194 = vmul.f32 %v458, %v1191
    %v1195 = vmul.f32 %v459, %v1191
    %1200 = vrot.lane.b32.xlu0 %v1192, 127
    %v1201 = vpop.permute.xlu0 %1200
    %1202 = vrot.lane.b32.xlu0 %v1193, 127
    %v1203 = vpop.permute.xlu0 %1202
    %1204 = vrot.lane.b32.xlu0 %v1194, 127
    %v1205 = vpop.permute.xlu0 %1204
    %1206 = vrot.lane.b32.xlu0 %v1195, 127
    %v1207 = vpop.permute.xlu0 %1206
    %v1212 = vadd.f32 %v1004, %v1201
    %v1213 = vadd.f32 %v1005, %v1203
    %v1214 = vadd.f32 %v1006, %v1205
    %v1215 = vadd.f32 %v1007, %v1207
    %s1216 = sld [smem:[#allocation9 + $0x3a]]
    %v1217 = vstv %s1216
    %v1218 = vmul.f32 %v456, %v1217
    %v1219 = vmul.f32 %v457, %v1217
    %v1220 = vmul.f32 %v458, %v1217
    %v1221 = vmul.f32 %v459, %v1217
    %1226 = vrot.lane.b32.xlu0 %v1218, 127
    %v1227 = vpop.permute.xlu0 %1226
    %1228 = vrot.lane.b32.xlu0 %v1219, 127
    %v1229 = vpop.permute.xlu0 %1228
    %1230 = vrot.lane.b32.xlu0 %v1220, 127
    %v1231 = vpop.permute.xlu0 %1230
    %1232 = vrot.lane.b32.xlu0 %v1221, 127
    %v1233 = vpop.permute.xlu0 %1232
    %v1238 = vadd.f32 %v1030, %v1227
    %v1239 = vadd.f32 %v1031, %v1229
    %v1240 = vadd.f32 %v1032, %v1231
    %v1241 = vadd.f32 %v1033, %v1233
    %s1242 = sld [smem:[#allocation9 + $0x3b]]
    %v1243 = vstv %s1242
    %v1244 = vmul.f32 %v456, %v1243
    %v1245 = vmul.f32 %v457, %v1243
    %v1246 = vmul.f32 %v458, %v1243
    %v1247 = vmul.f32 %v459, %v1243
    %1252 = vrot.lane.b32.xlu0 %v1244, 127
    %v1253 = vpop.permute.xlu0 %1252
    %1254 = vrot.lane.b32.xlu0 %v1245, 127
    %v1255 = vpop.permute.xlu0 %1254
    %1256 = vrot.lane.b32.xlu0 %v1246, 127
    %v1257 = vpop.permute.xlu0 %1256
    %1258 = vrot.lane.b32.xlu0 %v1247, 127
    %v1259 = vpop.permute.xlu0 %1258
    %v1264 = vadd.f32 %v1056, %v1253
    %v1265 = vadd.f32 %v1057, %v1255
    %v1266 = vadd.f32 %v1058, %v1257
    %v1267 = vadd.f32 %v1059, %v1259
    %s1268 = sld [smem:[#allocation9 + $0x3c]]
    %v1269 = vstv %s1268
    %v1270 = vmul.f32 %v456, %v1269
    %v1271 = vmul.f32 %v457, %v1269
    %v1272 = vmul.f32 %v458, %v1269
    %v1273 = vmul.f32 %v459, %v1269
    %1278 = vrot.lane.b32.xlu0 %v1270, 127
    %v1279 = vpop.permute.xlu0 %1278
    %1280 = vrot.lane.b32.xlu0 %v1271, 127
    %v1281 = vpop.permute.xlu0 %1280
    %1282 = vrot.lane.b32.xlu0 %v1272, 127
    %v1283 = vpop.permute.xlu0 %1282
    %1284 = vrot.lane.b32.xlu0 %v1273, 127
    %v1285 = vpop.permute.xlu0 %1284
    %v1290 = vadd.f32 %v1082, %v1279
    %v1291 = vadd.f32 %v1083, %v1281
    %v1292 = vadd.f32 %v1084, %v1283
    %v1293 = vadd.f32 %v1085, %v1285
    %s1294 = sld [smem:[#allocation9 + $0x3d]]
    %v1295 = vstv %s1294
    %v1296 = vmul.f32 %v456, %v1295
    %v1297 = vmul.f32 %v457, %v1295
    %v1298 = vmul.f32 %v458, %v1295
    %v1299 = vmul.f32 %v459, %v1295
    %1304 = vrot.lane.b32.xlu0 %v1296, 127
    %v1305 = vpop.permute.xlu0 %1304
    %1306 = vrot.lane.b32.xlu0 %v1297, 127
    %v1307 = vpop.permute.xlu0 %1306
    %1308 = vrot.lane.b32.xlu0 %v1298, 127
    %v1309 = vpop.permute.xlu0 %1308
    %1310 = vrot.lane.b32.xlu0 %v1299, 127
    %v1311 = vpop.permute.xlu0 %1310
    %v1316 = vadd.f32 %v1108, %v1305
    %v1317 = vadd.f32 %v1109, %v1307
    %v1318 = vadd.f32 %v1110, %v1309
    %v1319 = vadd.f32 %v1111, %v1311
    %s1320 = sld [smem:[#allocation9 + $0x3e]]
    %v1321 = vstv %s1320
    %v1322 = vmul.f32 %v456, %v1321
    %v1323 = vmul.f32 %v457, %v1321
    %v1324 = vmul.f32 %v458, %v1321
    %v1325 = vmul.f32 %v459, %v1321
    %1330 = vrot.lane.b32.xlu0 %v1322, 127
    %v1331 = vpop.permute.xlu0 %1330
    %1332 = vrot.lane.b32.xlu0 %v1323, 127
    %v1333 = vpop.permute.xlu0 %1332
    %1334 = vrot.lane.b32.xlu0 %v1324, 127
    %v1335 = vpop.permute.xlu0 %1334
    %1336 = vrot.lane.b32.xlu0 %v1325, 127
    %v1337 = vpop.permute.xlu0 %1336
    %v1342 = vadd.f32 %v1134, %v1331
    %v1343 = vadd.f32 %v1135, %v1333
    %v1344 = vadd.f32 %v1136, %v1335
    %v1345 = vadd.f32 %v1137, %v1337
    %s1346 = sld [smem:[#allocation9 + $0x3f]]
    %v1347 = vstv %s1346
    %v1348 = vmul.f32 %v456, %v1347
    %v1349 = vmul.f32 %v457, %v1347
    %v1350 = vmul.f32 %v458, %v1347
    %v1351 = vmul.f32 %v459, %v1347
    %1356 = vrot.lane.b32.xlu0 %v1348, 127
    %v1357 = vpop.permute.xlu0 %1356
    %1358 = vrot.lane.b32.xlu0 %v1349, 127
    %v1359 = vpop.permute.xlu0 %1358
    %1360 = vrot.lane.b32.xlu0 %v1350, 127
    %v1361 = vpop.permute.xlu0 %1360
    %1362 = vrot.lane.b32.xlu0 %v1351, 127
    %v1363 = vpop.permute.xlu0 %1362
    %v1368 = vadd.f32 %v1160, %v1357
    %v1369 = vadd.f32 %v1161, %v1359
    %v1370 = vadd.f32 %v1162, %v1361
    %v1371 = vadd.f32 %v1163, %v1363
    %s1372 = sld [smem:[#allocation9 + $0x40]]
    %v1373 = vstv %s1372
    %v1374 = vmul.f32 %v233, %v1373
    %v1375 = vmul.f32 %v234, %v1373
    %v1376 = vmul.f32 %v235, %v1373
    %v1377 = vmul.f32 %v236, %v1373
    %1382 = vrot.lane.b32.xlu0 %v1374, 126
    %v1383 = vpop.permute.xlu0 %1382
    %1384 = vrot.lane.b32.xlu0 %v1375, 126
    %v1385 = vpop.permute.xlu0 %1384
    %1386 = vrot.lane.b32.xlu0 %v1376, 126
    %v1387 = vpop.permute.xlu0 %1386
    %1388 = vrot.lane.b32.xlu0 %v1377, 126
    %v1389 = vpop.permute.xlu0 %1388
    %v1394 = vadd.f32 %v1186, %v1383
    %v1395 = vadd.f32 %v1187, %v1385
    %v1396 = vadd.f32 %v1188, %v1387
    %v1397 = vadd.f32 %v1189, %v1389
    %s1398 = sld [smem:[#allocation9 + $0x41]]
    %v1399 = vstv %s1398
    %v1400 = vmul.f32 %v233, %v1399
    %v1401 = vmul.f32 %v234, %v1399
    %v1402 = vmul.f32 %v235, %v1399
    %v1403 = vmul.f32 %v236, %v1399
    %1408 = vrot.lane.b32.xlu0 %v1400, 126
    %v1409 = vpop.permute.xlu0 %1408
    %1410 = vrot.lane.b32.xlu0 %v1401, 126
    %v1411 = vpop.permute.xlu0 %1410
    %1412 = vrot.lane.b32.xlu0 %v1402, 126
    %v1413 = vpop.permute.xlu0 %1412
    %1414 = vrot.lane.b32.xlu0 %v1403, 126
    %v1415 = vpop.permute.xlu0 %1414
    %v1420 = vadd.f32 %v1212, %v1409
    %v1421 = vadd.f32 %v1213, %v1411
    %v1422 = vadd.f32 %v1214, %v1413
    %v1423 = vadd.f32 %v1215, %v1415
    %s1424 = sld [smem:[#allocation9 + $0x42]]
    %v1425 = vstv %s1424
    %v1426 = vmul.f32 %v233, %v1425
    %v1427 = vmul.f32 %v234, %v1425
    %v1428 = vmul.f32 %v235, %v1425
    %v1429 = vmul.f32 %v236, %v1425
    %1434 = vrot.lane.b32.xlu0 %v1426, 126
    %v1435 = vpop.permute.xlu0 %1434
    %1436 = vrot.lane.b32.xlu0 %v1427, 126
    %v1437 = vpop.permute.xlu0 %1436
    %1438 = vrot.lane.b32.xlu0 %v1428, 126
    %v1439 = vpop.permute.xlu0 %1438
    %1440 = vrot.lane.b32.xlu0 %v1429, 126
    %v1441 = vpop.permute.xlu0 %1440
    %v1446 = vadd.f32 %v1238, %v1435
    %v1447 = vadd.f32 %v1239, %v1437
    %v1448 = vadd.f32 %v1240, %v1439
    %v1449 = vadd.f32 %v1241, %v1441
    %s1450 = sld [smem:[#allocation9 + $0x43]]
    %v1451 = vstv %s1450
    %v1452 = vmul.f32 %v233, %v1451
    %v1453 = vmul.f32 %v234, %v1451
    %v1454 = vmul.f32 %v235, %v1451
    %v1455 = vmul.f32 %v236, %v1451
    %1460 = vrot.lane.b32.xlu0 %v1452, 126
    %v1461 = vpop.permute.xlu0 %1460
    %1462 = vrot.lane.b32.xlu0 %v1453, 126
    %v1463 = vpop.permute.xlu0 %1462
    %1464 = vrot.lane.b32.xlu0 %v1454, 126
    %v1465 = vpop.permute.xlu0 %1464
    %1466 = vrot.lane.b32.xlu0 %v1455, 126
    %v1467 = vpop.permute.xlu0 %1466
    %v1472 = vadd.f32 %v1264, %v1461
    %v1473 = vadd.f32 %v1265, %v1463
    %v1474 = vadd.f32 %v1266, %v1465
    %v1475 = vadd.f32 %v1267, %v1467
    %s1476 = sld [smem:[#allocation9 + $0x44]]
    %v1477 = vstv %s1476
    %v1478 = vmul.f32 %v233, %v1477
    %v1479 = vmul.f32 %v234, %v1477
    %v1480 = vmul.f32 %v235, %v1477
    %v1481 = vmul.f32 %v236, %v1477
    %1486 = vrot.lane.b32.xlu0 %v1478, 126
    %v1487 = vpop.permute.xlu0 %1486
    %1488 = vrot.lane.b32.xlu0 %v1479, 126
    %v1489 = vpop.permute.xlu0 %1488
    %1490 = vrot.lane.b32.xlu0 %v1480, 126
    %v1491 = vpop.permute.xlu0 %1490
    %1492 = vrot.lane.b32.xlu0 %v1481, 126
    %v1493 = vpop.permute.xlu0 %1492
    %v1498 = vadd.f32 %v1290, %v1487
    %v1499 = vadd.f32 %v1291, %v1489
    %v1500 = vadd.f32 %v1292, %v1491
    %v1501 = vadd.f32 %v1293, %v1493
    %s1502 = sld [smem:[#allocation9 + $0x45]]
    %v1503 = vstv %s1502
    %v1504 = vmul.f32 %v233, %v1503
    %v1505 = vmul.f32 %v234, %v1503
    %v1506 = vmul.f32 %v235, %v1503
    %v1507 = vmul.f32 %v236, %v1503
    %1512 = vrot.lane.b32.xlu0 %v1504, 126
    %v1513 = vpop.permute.xlu0 %1512
    %1514 = vrot.lane.b32.xlu0 %v1505, 126
    %v1515 = vpop.permute.xlu0 %1514
    %1516 = vrot.lane.b32.xlu0 %v1506, 126
    %v1517 = vpop.permute.xlu0 %1516
    %1518 = vrot.lane.b32.xlu0 %v1507, 126
    %v1519 = vpop.permute.xlu0 %1518
    %v1524 = vadd.f32 %v1316, %v1513
    %v1525 = vadd.f32 %v1317, %v1515
    %v1526 = vadd.f32 %v1318, %v1517
    %v1527 = vadd.f32 %v1319, %v1519
    %s1528 = sld [smem:[#allocation9 + $0x46]]
    %v1529 = vstv %s1528
    %v1530 = vmul.f32 %v233, %v1529
    %v1531 = vmul.f32 %v234, %v1529
    %v1532 = vmul.f32 %v235, %v1529
    %v1533 = vmul.f32 %v236, %v1529
    %1538 = vrot.lane.b32.xlu0 %v1530, 126
    %v1539 = vpop.permute.xlu0 %1538
    %1540 = vrot.lane.b32.xlu0 %v1531, 126
    %v1541 = vpop.permute.xlu0 %1540
    %1542 = vrot.lane.b32.xlu0 %v1532, 126
    %v1543 = vpop.permute.xlu0 %1542
    %1544 = vrot.lane.b32.xlu0 %v1533, 126
    %v1545 = vpop.permute.xlu0 %1544
    %v1550 = vadd.f32 %v1342, %v1539
    %v1551 = vadd.f32 %v1343, %v1541
    %v1552 = vadd.f32 %v1344, %v1543
    %v1553 = vadd.f32 %v1345, %v1545
    %s1554 = sld [smem:[#allocation9 + $0x47]]
    %v1555 = vstv %s1554
    %v1556 = vmul.f32 %v233, %v1555
    %v1557 = vmul.f32 %v234, %v1555
    %v1558 = vmul.f32 %v235, %v1555
    %v1559 = vmul.f32 %v236, %v1555
    %1564 = vrot.lane.b32.xlu0 %v1556, 126
    %v1565 = vpop.permute.xlu0 %1564
    %1566 = vrot.lane.b32.xlu0 %v1557, 126
    %v1567 = vpop.permute.xlu0 %1566
    %1568 = vrot.lane.b32.xlu0 %v1558, 126
    %v1569 = vpop.permute.xlu0 %1568
    %1570 = vrot.lane.b32.xlu0 %v1559, 126
    %v1571 = vpop.permute.xlu0 %1570
    %v1576 = vadd.f32 %v1368, %v1565
    %v1577 = vadd.f32 %v1369, %v1567
    %v1578 = vadd.f32 %v1370, %v1569
    %v1579 = vadd.f32 %v1371, %v1571
    %s1580 = sld [smem:[#allocation9 + $0x48]]
    %v1581 = vstv %s1580
    %v1582 = vmul.f32 %v286, %v1581
    %v1583 = vmul.f32 %v287, %v1581
    %v1584 = vmul.f32 %v288, %v1581
    %v1585 = vmul.f32 %v289, %v1581
    %1590 = vrot.lane.b32.xlu0 %v1582, 126
    %v1591 = vpop.permute.xlu0 %1590
    %1592 = vrot.lane.b32.xlu0 %v1583, 126
    %v1593 = vpop.permute.xlu0 %1592
    %1594 = vrot.lane.b32.xlu0 %v1584, 126
    %v1595 = vpop.permute.xlu0 %1594
    %1596 = vrot.lane.b32.xlu0 %v1585, 126
    %v1597 = vpop.permute.xlu0 %1596
    %v1602 = vadd.f32 %v1394, %v1591
    %v1603 = vadd.f32 %v1395, %v1593
    %v1604 = vadd.f32 %v1396, %v1595
    %v1605 = vadd.f32 %v1397, %v1597
    %s1606 = sld [smem:[#allocation9 + $0x49]]
    %v1607 = vstv %s1606
    %v1608 = vmul.f32 %v286, %v1607
    %v1609 = vmul.f32 %v287, %v1607
    %v1610 = vmul.f32 %v288, %v1607
    %v1611 = vmul.f32 %v289, %v1607
    %1616 = vrot.lane.b32.xlu0 %v1608, 126
    %v1617 = vpop.permute.xlu0 %1616
    %1618 = vrot.lane.b32.xlu0 %v1609, 126
    %v1619 = vpop.permute.xlu0 %1618
    %1620 = vrot.lane.b32.xlu0 %v1610, 126
    %v1621 = vpop.permute.xlu0 %1620
    %1622 = vrot.lane.b32.xlu0 %v1611, 126
    %v1623 = vpop.permute.xlu0 %1622
    %v1628 = vadd.f32 %v1420, %v1617
    %v1629 = vadd.f32 %v1421, %v1619
    %v1630 = vadd.f32 %v1422, %v1621
    %v1631 = vadd.f32 %v1423, %v1623
    %s1632 = sld [smem:[#allocation9 + $0x4a]]
    %v1633 = vstv %s1632
    %v1634 = vmul.f32 %v286, %v1633
    %v1635 = vmul.f32 %v287, %v1633
    %v1636 = vmul.f32 %v288, %v1633
    %v1637 = vmul.f32 %v289, %v1633
    %1642 = vrot.lane.b32.xlu0 %v1634, 126
    %v1643 = vpop.permute.xlu0 %1642
    %1644 = vrot.lane.b32.xlu0 %v1635, 126
    %v1645 = vpop.permute.xlu0 %1644
    %1646 = vrot.lane.b32.xlu0 %v1636, 126
    %v1647 = vpop.permute.xlu0 %1646
    %1648 = vrot.lane.b32.xlu0 %v1637, 126
    %v1649 = vpop.permute.xlu0 %1648
    %v1654 = vadd.f32 %v1446, %v1643
    %v1655 = vadd.f32 %v1447, %v1645
    %v1656 = vadd.f32 %v1448, %v1647
    %v1657 = vadd.f32 %v1449, %v1649
    %s1658 = sld [smem:[#allocation9 + $0x4b]]
    %v1659 = vstv %s1658
    %v1660 = vmul.f32 %v286, %v1659
    %v1661 = vmul.f32 %v287, %v1659
    %v1662 = vmul.f32 %v288, %v1659
    %v1663 = vmul.f32 %v289, %v1659
    %1668 = vrot.lane.b32.xlu0 %v1660, 126
    %v1669 = vpop.permute.xlu0 %1668
    %1670 = vrot.lane.b32.xlu0 %v1661, 126
    %v1671 = vpop.permute.xlu0 %1670
    %1672 = vrot.lane.b32.xlu0 %v1662, 126
    %v1673 = vpop.permute.xlu0 %1672
    %1674 = vrot.lane.b32.xlu0 %v1663, 126
    %v1675 = vpop.permute.xlu0 %1674
    %v1680 = vadd.f32 %v1472, %v1669
    %v1681 = vadd.f32 %v1473, %v1671
    %v1682 = vadd.f32 %v1474, %v1673
    %v1683 = vadd.f32 %v1475, %v1675
    %s1684 = sld [smem:[#allocation9 + $0x4c]]
    %v1685 = vstv %s1684
    %v1686 = vmul.f32 %v286, %v1685
    %v1687 = vmul.f32 %v287, %v1685
    %v1688 = vmul.f32 %v288, %v1685
    %v1689 = vmul.f32 %v289, %v1685
    %1694 = vrot.lane.b32.xlu0 %v1686, 126
    %v1695 = vpop.permute.xlu0 %1694
    %1696 = vrot.lane.b32.xlu0 %v1687, 126
    %v1697 = vpop.permute.xlu0 %1696
    %1698 = vrot.lane.b32.xlu0 %v1688, 126
    %v1699 = vpop.permute.xlu0 %1698
    %1700 = vrot.lane.b32.xlu0 %v1689, 126
    %v1701 = vpop.permute.xlu0 %1700
    %v1706 = vadd.f32 %v1498, %v1695
    %v1707 = vadd.f32 %v1499, %v1697
    %v1708 = vadd.f32 %v1500, %v1699
    %v1709 = vadd.f32 %v1501, %v1701
    %s1710 = sld [smem:[#allocation9 + $0x4d]]
    %v1711 = vstv %s1710
    %v1712 = vmul.f32 %v286, %v1711
    %v1713 = vmul.f32 %v287, %v1711
    %v1714 = vmul.f32 %v288, %v1711
    %v1715 = vmul.f32 %v289, %v1711
    %1720 = vrot.lane.b32.xlu0 %v1712, 126
    %v1721 = vpop.permute.xlu0 %1720
    %1722 = vrot.lane.b32.xlu0 %v1713, 126
    %v1723 = vpop.permute.xlu0 %1722
    %1724 = vrot.lane.b32.xlu0 %v1714, 126
    %v1725 = vpop.permute.xlu0 %1724
    %1726 = vrot.lane.b32.xlu0 %v1715, 126
    %v1727 = vpop.permute.xlu0 %1726
    %v1732 = vadd.f32 %v1524, %v1721
    %v1733 = vadd.f32 %v1525, %v1723
    %v1734 = vadd.f32 %v1526, %v1725
    %v1735 = vadd.f32 %v1527, %v1727
    %s1736 = sld [smem:[#allocation9 + $0x4e]]
    %v1737 = vstv %s1736
    %v1738 = vmul.f32 %v286, %v1737
    %v1739 = vmul.f32 %v287, %v1737
    %v1740 = vmul.f32 %v288, %v1737
    %v1741 = vmul.f32 %v289, %v1737
    %1746 = vrot.lane.b32.xlu0 %v1738, 126
    %v1747 = vpop.permute.xlu0 %1746
    %1748 = vrot.lane.b32.xlu0 %v1739, 126
    %v1749 = vpop.permute.xlu0 %1748
    %1750 = vrot.lane.b32.xlu0 %v1740, 126
    %v1751 = vpop.permute.xlu0 %1750
    %1752 = vrot.lane.b32.xlu0 %v1741, 126
    %v1753 = vpop.permute.xlu0 %1752
    %v1758 = vadd.f32 %v1550, %v1747
    %v1759 = vadd.f32 %v1551, %v1749
    %v1760 = vadd.f32 %v1552, %v1751
    %v1761 = vadd.f32 %v1553, %v1753
    %s1762 = sld [smem:[#allocation9 + $0x4f]]
    %v1763 = vstv %s1762
    %v1764 = vmul.f32 %v286, %v1763
    %v1765 = vmul.f32 %v287, %v1763
    %v1766 = vmul.f32 %v288, %v1763
    %v1767 = vmul.f32 %v289, %v1763
    %1772 = vrot.lane.b32.xlu0 %v1764, 126
    %v1773 = vpop.permute.xlu0 %1772
    %1774 = vrot.lane.b32.xlu0 %v1765, 126
    %v1775 = vpop.permute.xlu0 %1774
    %1776 = vrot.lane.b32.xlu0 %v1766, 126
    %v1777 = vpop.permute.xlu0 %1776
    %1778 = vrot.lane.b32.xlu0 %v1767, 126
    %v1779 = vpop.permute.xlu0 %1778
    %v1784 = vadd.f32 %v1576, %v1773
    %v1785 = vadd.f32 %v1577, %v1775
    %v1786 = vadd.f32 %v1578, %v1777
    %v1787 = vadd.f32 %v1579, %v1779
    %s1788 = sld [smem:[#allocation9 + $0x50]]
    %v1789 = vstv %s1788
    %v1790 = vmul.f32 %v371, %v1789
    %v1791 = vmul.f32 %v372, %v1789
    %v1792 = vmul.f32 %v373, %v1789
    %v1793 = vmul.f32 %v374, %v1789
    %1798 = vrot.lane.b32.xlu0 %v1790, 126
    %v1799 = vpop.permute.xlu0 %1798
    %1800 = vrot.lane.b32.xlu0 %v1791, 126
    %v1801 = vpop.permute.xlu0 %1800
    %1802 = vrot.lane.b32.xlu0 %v1792, 126
    %v1803 = vpop.permute.xlu0 %1802
    %1804 = vrot.lane.b32.xlu0 %v1793, 126
    %v1805 = vpop.permute.xlu0 %1804
    %v1810 = vadd.f32 %v1602, %v1799
    %v1811 = vadd.f32 %v1603, %v1801
    %v1812 = vadd.f32 %v1604, %v1803
    %v1813 = vadd.f32 %v1605, %v1805
    %s1814 = sld [smem:[#allocation9 + $0x51]]
    %v1815 = vstv %s1814
    %v1816 = vmul.f32 %v371, %v1815
    %v1817 = vmul.f32 %v372, %v1815
    %v1818 = vmul.f32 %v373, %v1815
    %v1819 = vmul.f32 %v374, %v1815
    %1824 = vrot.lane.b32.xlu0 %v1816, 126
    %v1825 = vpop.permute.xlu0 %1824
    %1826 = vrot.lane.b32.xlu0 %v1817, 126
    %v1827 = vpop.permute.xlu0 %1826
    %1828 = vrot.lane.b32.xlu0 %v1818, 126
    %v1829 = vpop.permute.xlu0 %1828
    %1830 = vrot.lane.b32.xlu0 %v1819, 126
    %v1831 = vpop.permute.xlu0 %1830
    %v1836 = vadd.f32 %v1628, %v1825
    %v1837 = vadd.f32 %v1629, %v1827
    %v1838 = vadd.f32 %v1630, %v1829
    %v1839 = vadd.f32 %v1631, %v1831
    %s1840 = sld [smem:[#allocation9 + $0x52]]
    %v1841 = vstv %s1840
    %v1842 = vmul.f32 %v371, %v1841
    %v1843 = vmul.f32 %v372, %v1841
    %v1844 = vmul.f32 %v373, %v1841
    %v1845 = vmul.f32 %v374, %v1841
    %1850 = vrot.lane.b32.xlu0 %v1842, 126
    %v1851 = vpop.permute.xlu0 %1850
    %1852 = vrot.lane.b32.xlu0 %v1843, 126
    %v1853 = vpop.permute.xlu0 %1852
    %1854 = vrot.lane.b32.xlu0 %v1844, 126
    %v1855 = vpop.permute.xlu0 %1854
    %1856 = vrot.lane.b32.xlu0 %v1845, 126
    %v1857 = vpop.permute.xlu0 %1856
    %v1862 = vadd.f32 %v1654, %v1851
    %v1863 = vadd.f32 %v1655, %v1853
    %v1864 = vadd.f32 %v1656, %v1855
    %v1865 = vadd.f32 %v1657, %v1857
    %s1866 = sld [smem:[#allocation9 + $0x53]]
    %v1867 = vstv %s1866
    %v1868 = vmul.f32 %v371, %v1867
    %v1869 = vmul.f32 %v372, %v1867
    %v1870 = vmul.f32 %v373, %v1867
    %v1871 = vmul.f32 %v374, %v1867
    %1876 = vrot.lane.b32.xlu0 %v1868, 126
    %v1877 = vpop.permute.xlu0 %1876
    %1878 = vrot.lane.b32.xlu0 %v1869, 126
    %v1879 = vpop.permute.xlu0 %1878
    %1880 = vrot.lane.b32.xlu0 %v1870, 126
    %v1881 = vpop.permute.xlu0 %1880
    %1882 = vrot.lane.b32.xlu0 %v1871, 126
    %v1883 = vpop.permute.xlu0 %1882
    %v1888 = vadd.f32 %v1680, %v1877
    %v1889 = vadd.f32 %v1681, %v1879
    %v1890 = vadd.f32 %v1682, %v1881
    %v1891 = vadd.f32 %v1683, %v1883
    %s1892 = sld [smem:[#allocation9 + $0x54]]
    %v1893 = vstv %s1892
    %v1894 = vmul.f32 %v371, %v1893
    %v1895 = vmul.f32 %v372, %v1893
    %v1896 = vmul.f32 %v373, %v1893
    %v1897 = vmul.f32 %v374, %v1893
    %1902 = vrot.lane.b32.xlu0 %v1894, 126
    %v1903 = vpop.permute.xlu0 %1902
    %1904 = vrot.lane.b32.xlu0 %v1895, 126
    %v1905 = vpop.permute.xlu0 %1904
    %1906 = vrot.lane.b32.xlu0 %v1896, 126
    %v1907 = vpop.permute.xlu0 %1906
    %1908 = vrot.lane.b32.xlu0 %v1897, 126
    %v1909 = vpop.permute.xlu0 %1908
    %v1914 = vadd.f32 %v1706, %v1903
    %v1915 = vadd.f32 %v1707, %v1905
    %v1916 = vadd.f32 %v1708, %v1907
    %v1917 = vadd.f32 %v1709, %v1909
    %s1918 = sld [smem:[#allocation9 + $0x55]]
    %v1919 = vstv %s1918
    %v1920 = vmul.f32 %v371, %v1919
    %v1921 = vmul.f32 %v372, %v1919
    %v1922 = vmul.f32 %v373, %v1919
    %v1923 = vmul.f32 %v374, %v1919
    %1928 = vrot.lane.b32.xlu0 %v1920, 126
    %v1929 = vpop.permute.xlu0 %1928
    %1930 = vrot.lane.b32.xlu0 %v1921, 126
    %v1931 = vpop.permute.xlu0 %1930
    %1932 = vrot.lane.b32.xlu0 %v1922, 126
    %v1933 = vpop.permute.xlu0 %1932
    %1934 = vrot.lane.b32.xlu0 %v1923, 126
    %v1935 = vpop.permute.xlu0 %1934
    %v1940 = vadd.f32 %v1732, %v1929
    %v1941 = vadd.f32 %v1733, %v1931
    %v1942 = vadd.f32 %v1734, %v1933
    %v1943 = vadd.f32 %v1735, %v1935
    %s1944 = sld [smem:[#allocation9 + $0x56]]
    %v1945 = vstv %s1944
    %v1946 = vmul.f32 %v371, %v1945
    %v1947 = vmul.f32 %v372, %v1945
    %v1948 = vmul.f32 %v373, %v1945
    %v1949 = vmul.f32 %v374, %v1945
    %1954 = vrot.lane.b32.xlu0 %v1946, 126
    %v1955 = vpop.permute.xlu0 %1954
    %1956 = vrot.lane.b32.xlu0 %v1947, 126
    %v1957 = vpop.permute.xlu0 %1956
    %1958 = vrot.lane.b32.xlu0 %v1948, 126
    %v1959 = vpop.permute.xlu0 %1958
    %1960 = vrot.lane.b32.xlu0 %v1949, 126
    %v1961 = vpop.permute.xlu0 %1960
    %v1966 = vadd.f32 %v1758, %v1955
    %v1967 = vadd.f32 %v1759, %v1957
    %v1968 = vadd.f32 %v1760, %v1959
    %v1969 = vadd.f32 %v1761, %v1961
    %s1970 = sld [smem:[#allocation9 + $0x57]]
    %v1971 = vstv %s1970
    %v1972 = vmul.f32 %v371, %v1971
    %v1973 = vmul.f32 %v372, %v1971
    %v1974 = vmul.f32 %v373, %v1971
    %v1975 = vmul.f32 %v374, %v1971
    %1980 = vrot.lane.b32.xlu0 %v1972, 126
    %v1981 = vpop.permute.xlu0 %1980
    %1982 = vrot.lane.b32.xlu0 %v1973, 126
    %v1983 = vpop.permute.xlu0 %1982
    %1984 = vrot.lane.b32.xlu0 %v1974, 126
    %v1985 = vpop.permute.xlu0 %1984
    %1986 = vrot.lane.b32.xlu0 %v1975, 126
    %v1987 = vpop.permute.xlu0 %1986
    %v1992 = vadd.f32 %v1784, %v1981
    %v1993 = vadd.f32 %v1785, %v1983
    %v1994 = vadd.f32 %v1786, %v1985
    %v1995 = vadd.f32 %v1787, %v1987
    %s1996 = sld [smem:[#allocation9 + $0x58]]
    %v1997 = vstv %s1996
    %v1998 = vmul.f32 %v456, %v1997
    %v1999 = vmul.f32 %v457, %v1997
    %v2000 = vmul.f32 %v458, %v1997
    %v2001 = vmul.f32 %v459, %v1997
    %2006 = vrot.lane.b32.xlu0 %v1998, 126
    %v2007 = vpop.permute.xlu0 %2006
    %2008 = vrot.lane.b32.xlu0 %v1999, 126
    %v2009 = vpop.permute.xlu0 %2008
    %2010 = vrot.lane.b32.xlu0 %v2000, 126
    %v2011 = vpop.permute.xlu0 %2010
    %2012 = vrot.lane.b32.xlu0 %v2001, 126
    %v2013 = vpop.permute.xlu0 %2012
    %v2018 = vadd.f32 %v1810, %v2007
    %v2019 = vadd.f32 %v1811, %v2009
    %v2020 = vadd.f32 %v1812, %v2011
    %v2021 = vadd.f32 %v1813, %v2013
    %s2022 = sld [smem:[#allocation9 + $0x59]]
    %v2023 = vstv %s2022
    %v2024 = vmul.f32 %v456, %v2023
    %v2025 = vmul.f32 %v457, %v2023
    %v2026 = vmul.f32 %v458, %v2023
    %v2027 = vmul.f32 %v459, %v2023
    %2032 = vrot.lane.b32.xlu0 %v2024, 126
    %v2033 = vpop.permute.xlu0 %2032
    %2034 = vrot.lane.b32.xlu0 %v2025, 126
    %v2035 = vpop.permute.xlu0 %2034
    %2036 = vrot.lane.b32.xlu0 %v2026, 126
    %v2037 = vpop.permute.xlu0 %2036
    %2038 = vrot.lane.b32.xlu0 %v2027, 126
    %v2039 = vpop.permute.xlu0 %2038
    %v2044 = vadd.f32 %v1836, %v2033
    %v2045 = vadd.f32 %v1837, %v2035
    %v2046 = vadd.f32 %v1838, %v2037
    %v2047 = vadd.f32 %v1839, %v2039
    %s2048 = sld [smem:[#allocation9 + $0x5a]]
    %v2049 = vstv %s2048
    %v2050 = vmul.f32 %v456, %v2049
    %v2051 = vmul.f32 %v457, %v2049
    %v2052 = vmul.f32 %v458, %v2049
    %v2053 = vmul.f32 %v459, %v2049
    %2058 = vrot.lane.b32.xlu0 %v2050, 126
    %v2059 = vpop.permute.xlu0 %2058
    %2060 = vrot.lane.b32.xlu0 %v2051, 126
    %v2061 = vpop.permute.xlu0 %2060
    %2062 = vrot.lane.b32.xlu0 %v2052, 126
    %v2063 = vpop.permute.xlu0 %2062
    %2064 = vrot.lane.b32.xlu0 %v2053, 126
    %v2065 = vpop.permute.xlu0 %2064
    %v2070 = vadd.f32 %v1862, %v2059
    %v2071 = vadd.f32 %v1863, %v2061
    %v2072 = vadd.f32 %v1864, %v2063
    %v2073 = vadd.f32 %v1865, %v2065
    %s2074 = sld [smem:[#allocation9 + $0x5b]]
    %v2075 = vstv %s2074
    %v2076 = vmul.f32 %v456, %v2075
    %v2077 = vmul.f32 %v457, %v2075
    %v2078 = vmul.f32 %v458, %v2075
    %v2079 = vmul.f32 %v459, %v2075
    %2084 = vrot.lane.b32.xlu0 %v2076, 126
    %v2085 = vpop.permute.xlu0 %2084
    %2086 = vrot.lane.b32.xlu0 %v2077, 126
    %v2087 = vpop.permute.xlu0 %2086
    %2088 = vrot.lane.b32.xlu0 %v2078, 126
    %v2089 = vpop.permute.xlu0 %2088
    %2090 = vrot.lane.b32.xlu0 %v2079, 126
    %v2091 = vpop.permute.xlu0 %2090
    %v2096 = vadd.f32 %v1888, %v2085
    %v2097 = vadd.f32 %v1889, %v2087
    %v2098 = vadd.f32 %v1890, %v2089
    %v2099 = vadd.f32 %v1891, %v2091
    %s2100 = sld [smem:[#allocation9 + $0x5c]]
    %v2101 = vstv %s2100
    %v2102 = vmul.f32 %v456, %v2101
    %v2103 = vmul.f32 %v457, %v2101
    %v2104 = vmul.f32 %v458, %v2101
    %v2105 = vmul.f32 %v459, %v2101
    %2110 = vrot.lane.b32.xlu0 %v2102, 126
    %v2111 = vpop.permute.xlu0 %2110
    %2112 = vrot.lane.b32.xlu0 %v2103, 126
    %v2113 = vpop.permute.xlu0 %2112
    %2114 = vrot.lane.b32.xlu0 %v2104, 126
    %v2115 = vpop.permute.xlu0 %2114
    %2116 = vrot.lane.b32.xlu0 %v2105, 126
    %v2117 = vpop.permute.xlu0 %2116
    %v2122 = vadd.f32 %v1914, %v2111
    %v2123 = vadd.f32 %v1915, %v2113
    %v2124 = vadd.f32 %v1916, %v2115
    %v2125 = vadd.f32 %v1917, %v2117
    %s2126 = sld [smem:[#allocation9 + $0x5d]]
    %v2127 = vstv %s2126
    %v2128 = vmul.f32 %v456, %v2127
    %v2129 = vmul.f32 %v457, %v2127
    %v2130 = vmul.f32 %v458, %v2127
    %v2131 = vmul.f32 %v459, %v2127
    %2136 = vrot.lane.b32.xlu0 %v2128, 126
    %v2137 = vpop.permute.xlu0 %2136
    %2138 = vrot.lane.b32.xlu0 %v2129, 126
    %v2139 = vpop.permute.xlu0 %2138
    %2140 = vrot.lane.b32.xlu0 %v2130, 126
    %v2141 = vpop.permute.xlu0 %2140
    %2142 = vrot.lane.b32.xlu0 %v2131, 126
    %v2143 = vpop.permute.xlu0 %2142
    %v2148 = vadd.f32 %v1940, %v2137
    %v2149 = vadd.f32 %v1941, %v2139
    %v2150 = vadd.f32 %v1942, %v2141
    %v2151 = vadd.f32 %v1943, %v2143
    %s2152 = sld [smem:[#allocation9 + $0x5e]]
    %v2153 = vstv %s2152
    %v2154 = vmul.f32 %v456, %v2153
    %v2155 = vmul.f32 %v457, %v2153
    %v2156 = vmul.f32 %v458, %v2153
    %v2157 = vmul.f32 %v459, %v2153
    %2162 = vrot.lane.b32.xlu0 %v2154, 126
    %v2163 = vpop.permute.xlu0 %2162
    %2164 = vrot.lane.b32.xlu0 %v2155, 126
    %v2165 = vpop.permute.xlu0 %2164
    %2166 = vrot.lane.b32.xlu0 %v2156, 126
    %v2167 = vpop.permute.xlu0 %2166
    %2168 = vrot.lane.b32.xlu0 %v2157, 126
    %v2169 = vpop.permute.xlu0 %2168
    %v2174 = vadd.f32 %v1966, %v2163
    %v2175 = vadd.f32 %v1967, %v2165
    %v2176 = vadd.f32 %v1968, %v2167
    %v2177 = vadd.f32 %v1969, %v2169
    %s2178 = sld [smem:[#allocation9 + $0x5f]]
    %v2179 = vstv %s2178
    %v2180 = vmul.f32 %v456, %v2179
    %v2181 = vmul.f32 %v457, %v2179
    %v2182 = vmul.f32 %v458, %v2179
    %v2183 = vmul.f32 %v459, %v2179
    %2188 = vrot.lane.b32.xlu0 %v2180, 126
    %v2189 = vpop.permute.xlu0 %2188
    %2190 = vrot.lane.b32.xlu0 %v2181, 126
    %v2191 = vpop.permute.xlu0 %2190
    %2192 = vrot.lane.b32.xlu0 %v2182, 126
    %v2193 = vpop.permute.xlu0 %2192
    %2194 = vrot.lane.b32.xlu0 %v2183, 126
    %v2195 = vpop.permute.xlu0 %2194
    %v2200 = vadd.f32 %v1992, %v2189
    %v2201 = vadd.f32 %v1993, %v2191
    %v2202 = vadd.f32 %v1994, %v2193
    %v2203 = vadd.f32 %v1995, %v2195
    %v2204 = vld [vmem:[#allocation2 + $0x1] sm:$0xff]
    %v2205 = vld [vmem:[#allocation2 + $0x9] sm:$0xff]
    %v2206 = vld [vmem:[#allocation2 + $0x61] sm:$0xff]
    %v2207 = vld [vmem:[#allocation2 + $0x69] sm:$0xff]
    %s2208 = sld [smem:[#allocation9 + $0x60]]
    %v2209 = vstv %s2208
    %v2210 = vmul.f32 %v2204, %v2209
    %v2211 = vmul.f32 %v2205, %v2209
    %v2212 = vmul.f32 %v2206, %v2209
    %v2213 = vmul.f32 %v2207, %v2209
    %v2214 = vadd.f32 %v2018, %v2210
    %v2215 = vadd.f32 %v2019, %v2211
    %v2216 = vadd.f32 %v2020, %v2212
    %v2217 = vadd.f32 %v2021, %v2213
    %s2218 = sld [smem:[#allocation9 + $0x61]]
    %v2219 = vstv %s2218
    %v2220 = vmul.f32 %v2204, %v2219
    %v2221 = vmul.f32 %v2205, %v2219
    %v2222 = vmul.f32 %v2206, %v2219
    %v2223 = vmul.f32 %v2207, %v2219
    %v2224 = vadd.f32 %v2044, %v2220
    %v2225 = vadd.f32 %v2045, %v2221
    %v2226 = vadd.f32 %v2046, %v2222
    %v2227 = vadd.f32 %v2047, %v2223
    %s2228 = sld [smem:[#allocation9 + $0x62]]
    %v2229 = vstv %s2228
    %v2230 = vmul.f32 %v2204, %v2229
    %v2231 = vmul.f32 %v2205, %v2229
    %v2232 = vmul.f32 %v2206, %v2229
    %v2233 = vmul.f32 %v2207, %v2229
    %v2234 = vadd.f32 %v2070, %v2230
    %v2235 = vadd.f32 %v2071, %v2231
    %v2236 = vadd.f32 %v2072, %v2232
    %v2237 = vadd.f32 %v2073, %v2233
    %s2238 = sld [smem:[#allocation9 + $0x63]]
    %v2239 = vstv %s2238
    %v2240 = vmul.f32 %v2204, %v2239
    %v2241 = vmul.f32 %v2205, %v2239
    %v2242 = vmul.f32 %v2206, %v2239
    %v2243 = vmul.f32 %v2207, %v2239
    %v2244 = vadd.f32 %v2096, %v2240
    %v2245 = vadd.f32 %v2097, %v2241
    %v2246 = vadd.f32 %v2098, %v2242
    %v2247 = vadd.f32 %v2099, %v2243
    %s2248 = sld [smem:[#allocation9 + $0x64]]
    %v2249 = vstv %s2248
    %v2250 = vmul.f32 %v2204, %v2249
    %v2251 = vmul.f32 %v2205, %v2249
    %v2252 = vmul.f32 %v2206, %v2249
    %v2253 = vmul.f32 %v2207, %v2249
    %v2254 = vadd.f32 %v2122, %v2250
    %v2255 = vadd.f32 %v2123, %v2251
    %v2256 = vadd.f32 %v2124, %v2252
    %v2257 = vadd.f32 %v2125, %v2253
    %s2258 = sld [smem:[#allocation9 + $0x65]]
    %v2259 = vstv %s2258
    %v2260 = vmul.f32 %v2204, %v2259
    %v2261 = vmul.f32 %v2205, %v2259
    %v2262 = vmul.f32 %v2206, %v2259
    %v2263 = vmul.f32 %v2207, %v2259
    %v2264 = vadd.f32 %v2148, %v2260
    %v2265 = vadd.f32 %v2149, %v2261
    %v2266 = vadd.f32 %v2150, %v2262
    %v2267 = vadd.f32 %v2151, %v2263
    %s2268 = sld [smem:[#allocation9 + $0x66]]
    %v2269 = vstv %s2268
    %v2270 = vmul.f32 %v2204, %v2269
    %v2271 = vmul.f32 %v2205, %v2269
    %v2272 = vmul.f32 %v2206, %v2269
    %v2273 = vmul.f32 %v2207, %v2269
    %v2274 = vadd.f32 %v2174, %v2270
    %v2275 = vadd.f32 %v2175, %v2271
    %v2276 = vadd.f32 %v2176, %v2272
    %v2277 = vadd.f32 %v2177, %v2273
    %s2278 = sld [smem:[#allocation9 + $0x67]]
    %v2279 = vstv %s2278
    %v2280 = vmul.f32 %v2204, %v2279
    %v2281 = vmul.f32 %v2205, %v2279
    %v2282 = vmul.f32 %v2206, %v2279
    %v2283 = vmul.f32 %v2207, %v2279
    %v2284 = vadd.f32 %v2200, %v2280
    %v2285 = vadd.f32 %v2201, %v2281
    %v2286 = vadd.f32 %v2202, %v2282
    %v2287 = vadd.f32 %v2203, %v2283
    %v2288 = vld [vmem:[%s285 + $0x1] sm:$0xff]
    %v2289 = vld [vmem:[%s285 + $0x9] sm:$0xff]
    %v2290 = vld [vmem:[%s285 + $0x61] sm:$0xff]
    %v2291 = vld [vmem:[%s285 + $0x69] sm:$0xff]
    %s2292 = sld [smem:[#allocation9 + $0x68]]
    %v2293 = vstv %s2292
    %v2294 = vmul.f32 %v2288, %v2293
    %v2295 = vmul.f32 %v2289, %v2293
    %v2296 = vmul.f32 %v2290, %v2293
    %v2297 = vmul.f32 %v2291, %v2293
    %v2298 = vadd.f32 %v2214, %v2294
    %v2299 = vadd.f32 %v2215, %v2295
    %v2300 = vadd.f32 %v2216, %v2296
    %v2301 = vadd.f32 %v2217, %v2297
    %s2302 = sld [smem:[#allocation9 + $0x69]]
    %v2303 = vstv %s2302
    %v2304 = vmul.f32 %v2288, %v2303
    %v2305 = vmul.f32 %v2289, %v2303
    %v2306 = vmul.f32 %v2290, %v2303
    %v2307 = vmul.f32 %v2291, %v2303
    %v2308 = vadd.f32 %v2224, %v2304
    %v2309 = vadd.f32 %v2225, %v2305
    %v2310 = vadd.f32 %v2226, %v2306
    %v2311 = vadd.f32 %v2227, %v2307
    %s2312 = sld [smem:[#allocation9 + $0x6a]]
    %v2313 = vstv %s2312
    %v2314 = vmul.f32 %v2288, %v2313
    %v2315 = vmul.f32 %v2289, %v2313
    %v2316 = vmul.f32 %v2290, %v2313
    %v2317 = vmul.f32 %v2291, %v2313
    %v2318 = vadd.f32 %v2234, %v2314
    %v2319 = vadd.f32 %v2235, %v2315
    %v2320 = vadd.f32 %v2236, %v2316
    %v2321 = vadd.f32 %v2237, %v2317
    %s2322 = sld [smem:[#allocation9 + $0x6b]]
    %v2323 = vstv %s2322
    %v2324 = vmul.f32 %v2288, %v2323
    %v2325 = vmul.f32 %v2289, %v2323
    %v2326 = vmul.f32 %v2290, %v2323
    %v2327 = vmul.f32 %v2291, %v2323
    %v2328 = vadd.f32 %v2244, %v2324
    %v2329 = vadd.f32 %v2245, %v2325
    %v2330 = vadd.f32 %v2246, %v2326
    %v2331 = vadd.f32 %v2247, %v2327
    %s2332 = sld [smem:[#allocation9 + $0x6c]]
    %v2333 = vstv %s2332
    %v2334 = vmul.f32 %v2288, %v2333
    %v2335 = vmul.f32 %v2289, %v2333
    %v2336 = vmul.f32 %v2290, %v2333
    %v2337 = vmul.f32 %v2291, %v2333
    %v2338 = vadd.f32 %v2254, %v2334
    %v2339 = vadd.f32 %v2255, %v2335
    %v2340 = vadd.f32 %v2256, %v2336
    %v2341 = vadd.f32 %v2257, %v2337
    %s2342 = sld [smem:[#allocation9 + $0x6d]]
    %v2343 = vstv %s2342
    %v2344 = vmul.f32 %v2288, %v2343
    %v2345 = vmul.f32 %v2289, %v2343
    %v2346 = vmul.f32 %v2290, %v2343
    %v2347 = vmul.f32 %v2291, %v2343
    %v2348 = vadd.f32 %v2264, %v2344
    %v2349 = vadd.f32 %v2265, %v2345
    %v2350 = vadd.f32 %v2266, %v2346
    %v2351 = vadd.f32 %v2267, %v2347
    %s2352 = sld [smem:[#allocation9 + $0x6e]]
    %v2353 = vstv %s2352
    %v2354 = vmul.f32 %v2288, %v2353
    %v2355 = vmul.f32 %v2289, %v2353
    %v2356 = vmul.f32 %v2290, %v2353
    %v2357 = vmul.f32 %v2291, %v2353
    %v2358 = vadd.f32 %v2274, %v2354
    %v2359 = vadd.f32 %v2275, %v2355
    %v2360 = vadd.f32 %v2276, %v2356
    %v2361 = vadd.f32 %v2277, %v2357
    %s2362 = sld [smem:[#allocation9 + $0x6f]]
    %v2363 = vstv %s2362
    %v2364 = vmul.f32 %v2288, %v2363
    %v2365 = vmul.f32 %v2289, %v2363
    %v2366 = vmul.f32 %v2290, %v2363
    %v2367 = vmul.f32 %v2291, %v2363
    %v2368 = vadd.f32 %v2284, %v2364
    %v2369 = vadd.f32 %v2285, %v2365
    %v2370 = vadd.f32 %v2286, %v2366
    %v2371 = vadd.f32 %v2287, %v2367
    %v2372 = vld [vmem:[%s370 + $0x1] sm:$0xff]
    %v2373 = vld [vmem:[%s370 + $0x9] sm:$0xff]
    %v2374 = vld [vmem:[%s370 + $0x61] sm:$0xff]
    %v2375 = vld [vmem:[%s370 + $0x69] sm:$0xff]
    %s2376 = sld [smem:[#allocation9 + $0x70]]
    %v2377 = vstv %s2376
    %v2378 = vmul.f32 %v2372, %v2377
    %v2379 = vmul.f32 %v2373, %v2377
    %v2380 = vmul.f32 %v2374, %v2377
    %v2381 = vmul.f32 %v2375, %v2377
    %v2382 = vadd.f32 %v2298, %v2378
    %v2383 = vadd.f32 %v2299, %v2379
    %v2384 = vadd.f32 %v2300, %v2380
    %v2385 = vadd.f32 %v2301, %v2381
    %s2386 = sld [smem:[#allocation9 + $0x71]]
    %v2387 = vstv %s2386
    %v2388 = vmul.f32 %v2372, %v2387
    %v2389 = vmul.f32 %v2373, %v2387
    %v2390 = vmul.f32 %v2374, %v2387
    %v2391 = vmul.f32 %v2375, %v2387
    %v2392 = vadd.f32 %v2308, %v2388
    %v2393 = vadd.f32 %v2309, %v2389
    %v2394 = vadd.f32 %v2310, %v2390
    %v2395 = vadd.f32 %v2311, %v2391
    %s2396 = sld [smem:[#allocation9 + $0x72]]
    %v2397 = vstv %s2396
    %v2398 = vmul.f32 %v2372, %v2397
    %v2399 = vmul.f32 %v2373, %v2397
    %v2400 = vmul.f32 %v2374, %v2397
    %v2401 = vmul.f32 %v2375, %v2397
    %v2402 = vadd.f32 %v2318, %v2398
    %v2403 = vadd.f32 %v2319, %v2399
    %v2404 = vadd.f32 %v2320, %v2400
    %v2405 = vadd.f32 %v2321, %v2401
    %s2406 = sld [smem:[#allocation9 + $0x73]]
    %v2407 = vstv %s2406
    %v2408 = vmul.f32 %v2372, %v2407
    %v2409 = vmul.f32 %v2373, %v2407
    %v2410 = vmul.f32 %v2374, %v2407
    %v2411 = vmul.f32 %v2375, %v2407
    %v2412 = vadd.f32 %v2328, %v2408
    %v2413 = vadd.f32 %v2329, %v2409
    %v2414 = vadd.f32 %v2330, %v2410
    %v2415 = vadd.f32 %v2331, %v2411
    %s2416 = sld [smem:[#allocation9 + $0x74]]
    %v2417 = vstv %s2416
    %v2418 = vmul.f32 %v2372, %v2417
    %v2419 = vmul.f32 %v2373, %v2417
    %v2420 = vmul.f32 %v2374, %v2417
    %v2421 = vmul.f32 %v2375, %v2417
    %v2422 = vadd.f32 %v2338, %v2418
    %v2423 = vadd.f32 %v2339, %v2419
    %v2424 = vadd.f32 %v2340, %v2420
    %v2425 = vadd.f32 %v2341, %v2421
    %s2426 = sld [smem:[#allocation9 + $0x75]]
    %v2427 = vstv %s2426
    %v2428 = vmul.f32 %v2372, %v2427
    %v2429 = vmul.f32 %v2373, %v2427
    %v2430 = vmul.f32 %v2374, %v2427
    %v2431 = vmul.f32 %v2375, %v2427
    %v2432 = vadd.f32 %v2348, %v2428
    %v2433 = vadd.f32 %v2349, %v2429
    %v2434 = vadd.f32 %v2350, %v2430
    %v2435 = vadd.f32 %v2351, %v2431
    %s2436 = sld [smem:[#allocation9 + $0x76]]
    %v2437 = vstv %s2436
    %v2438 = vmul.f32 %v2372, %v2437
    %v2439 = vmul.f32 %v2373, %v2437
    %v2440 = vmul.f32 %v2374, %v2437
    %v2441 = vmul.f32 %v2375, %v2437
    %v2442 = vadd.f32 %v2358, %v2438
    %v2443 = vadd.f32 %v2359, %v2439
    %v2444 = vadd.f32 %v2360, %v2440
    %v2445 = vadd.f32 %v2361, %v2441
    %s2446 = sld [smem:[#allocation9 + $0x77]]
    %v2447 = vstv %s2446
    %v2448 = vmul.f32 %v2372, %v2447
    %v2449 = vmul.f32 %v2373, %v2447
    %v2450 = vmul.f32 %v2374, %v2447
    %v2451 = vmul.f32 %v2375, %v2447
    %v2452 = vadd.f32 %v2368, %v2448
    %v2453 = vadd.f32 %v2369, %v2449
    %v2454 = vadd.f32 %v2370, %v2450
    %v2455 = vadd.f32 %v2371, %v2451
    %v2456 = vld [vmem:[%s455 + $0x1] sm:$0xff]
    %v2457 = vld [vmem:[%s455 + $0x9] sm:$0xff]
    %v2458 = vld [vmem:[%s455 + $0x61] sm:$0xff]
    %v2459 = vld [vmem:[%s455 + $0x69] sm:$0xff]
    %s2460 = sld [smem:[#allocation9 + $0x78]]
    %v2461 = vstv %s2460
    %v2462 = vmul.f32 %v2456, %v2461
    %v2463 = vmul.f32 %v2457, %v2461
    %v2464 = vmul.f32 %v2458, %v2461
    %v2465 = vmul.f32 %v2459, %v2461
    %v2466 = vadd.f32 %v2382, %v2462
    %v2467 = vadd.f32 %v2383, %v2463
    %v2468 = vadd.f32 %v2384, %v2464
    %v2469 = vadd.f32 %v2385, %v2465
    %s2470 = sld [smem:[#allocation9 + $0x79]]
    %v2471 = vstv %s2470
    %v2472 = vmul.f32 %v2456, %v2471
    %v2473 = vmul.f32 %v2457, %v2471
    %v2474 = vmul.f32 %v2458, %v2471
    %v2475 = vmul.f32 %v2459, %v2471
    %v2476 = vadd.f32 %v2392, %v2472
    %v2477 = vadd.f32 %v2393, %v2473
    %v2478 = vadd.f32 %v2394, %v2474
    %v2479 = vadd.f32 %v2395, %v2475
    %s2480 = sld [smem:[#allocation9 + $0x7a]]
    %v2481 = vstv %s2480
    %v2482 = vmul.f32 %v2456, %v2481
    %v2483 = vmul.f32 %v2457, %v2481
    %v2484 = vmul.f32 %v2458, %v2481
    %v2485 = vmul.f32 %v2459, %v2481
    %v2486 = vadd.f32 %v2402, %v2482
    %v2487 = vadd.f32 %v2403, %v2483
    %v2488 = vadd.f32 %v2404, %v2484
    %v2489 = vadd.f32 %v2405, %v2485
    %s2490 = sld [smem:[#allocation9 + $0x7b]]
    %v2491 = vstv %s2490
    %v2492 = vmul.f32 %v2456, %v2491
    %v2493 = vmul.f32 %v2457, %v2491
    %v2494 = vmul.f32 %v2458, %v2491
    %v2495 = vmul.f32 %v2459, %v2491
    %v2496 = vadd.f32 %v2412, %v2492
    %v2497 = vadd.f32 %v2413, %v2493
    %v2498 = vadd.f32 %v2414, %v2494
    %v2499 = vadd.f32 %v2415, %v2495
    %s2500 = sld [smem:[#allocation9 + $0x7c]]
    %v2501 = vstv %s2500
    %v2502 = vmul.f32 %v2456, %v2501
    %v2503 = vmul.f32 %v2457, %v2501
    %v2504 = vmul.f32 %v2458, %v2501
    %v2505 = vmul.f32 %v2459, %v2501
    %v2506 = vadd.f32 %v2422, %v2502
    %v2507 = vadd.f32 %v2423, %v2503
    %v2508 = vadd.f32 %v2424, %v2504
    %v2509 = vadd.f32 %v2425, %v2505
    %s2510 = sld [smem:[#allocation9 + $0x7d]]
    %v2511 = vstv %s2510
    %v2512 = vmul.f32 %v2456, %v2511
    %v2513 = vmul.f32 %v2457, %v2511
    %v2514 = vmul.f32 %v2458, %v2511
    %v2515 = vmul.f32 %v2459, %v2511
    %v2516 = vadd.f32 %v2432, %v2512
    %v2517 = vadd.f32 %v2433, %v2513
    %v2518 = vadd.f32 %v2434, %v2514
    %v2519 = vadd.f32 %v2435, %v2515
    %s2520 = sld [smem:[#allocation9 + $0x7e]]
    %v2521 = vstv %s2520
    %v2522 = vmul.f32 %v2456, %v2521
    %v2523 = vmul.f32 %v2457, %v2521
    %v2524 = vmul.f32 %v2458, %v2521
    %v2525 = vmul.f32 %v2459, %v2521
    %v2526 = vadd.f32 %v2442, %v2522
    %v2527 = vadd.f32 %v2443, %v2523
    %v2528 = vadd.f32 %v2444, %v2524
    %v2529 = vadd.f32 %v2445, %v2525
    %s2530 = sld [smem:[#allocation9 + $0x7f]]
    %v2531 = vstv %s2530
    %v2532 = vmul.f32 %v2456, %v2531
    %v2533 = vmul.f32 %v2457, %v2531
    %v2534 = vmul.f32 %v2458, %v2531
    %v2535 = vmul.f32 %v2459, %v2531
    %v2536 = vadd.f32 %v2452, %v2532
    %v2537 = vadd.f32 %v2453, %v2533
    %v2538 = vadd.f32 %v2454, %v2534
    %v2539 = vadd.f32 %v2455, %v2535
    %s2540 = sld [smem:[#allocation9 + $0x80]]
    %v2541 = vstv %s2540
    %v2542 = vmul.f32 %v2204, %v2541
    %v2543 = vmul.f32 %v2205, %v2541
    %v2544 = vmul.f32 %v2206, %v2541
    %v2545 = vmul.f32 %v2207, %v2541
    %2550 = vrot.lane.b32.xlu0 %v2542, 127
    %v2551 = vpop.permute.xlu0 %2550
    %2552 = vrot.lane.b32.xlu0 %v2543, 127
    %v2553 = vpop.permute.xlu0 %2552
    %2554 = vrot.lane.b32.xlu0 %v2544, 127
    %v2555 = vpop.permute.xlu0 %2554
    %2556 = vrot.lane.b32.xlu0 %v2545, 127
    %v2557 = vpop.permute.xlu0 %2556
    %v2562 = vadd.f32 %v2466, %v2551
    %v2563 = vadd.f32 %v2467, %v2553
    %v2564 = vadd.f32 %v2468, %v2555
    %v2565 = vadd.f32 %v2469, %v2557
    %s2566 = sld [smem:[#allocation9 + $0x81]]
    %v2567 = vstv %s2566
    %v2568 = vmul.f32 %v2204, %v2567
    %v2569 = vmul.f32 %v2205, %v2567
    %v2570 = vmul.f32 %v2206, %v2567
    %v2571 = vmul.f32 %v2207, %v2567
    %2576 = vrot.lane.b32.xlu0 %v2568, 127
    %v2577 = vpop.permute.xlu0 %2576
    %2578 = vrot.lane.b32.xlu0 %v2569, 127
    %v2579 = vpop.permute.xlu0 %2578
    %2580 = vrot.lane.b32.xlu0 %v2570, 127
    %v2581 = vpop.permute.xlu0 %2580
    %2582 = vrot.lane.b32.xlu0 %v2571, 127
    %v2583 = vpop.permute.xlu0 %2582
    %v2588 = vadd.f32 %v2476, %v2577
    %v2589 = vadd.f32 %v2477, %v2579
    %v2590 = vadd.f32 %v2478, %v2581
    %v2591 = vadd.f32 %v2479, %v2583
    %s2592 = sld [smem:[#allocation9 + $0x82]]
    %v2593 = vstv %s2592
    %v2594 = vmul.f32 %v2204, %v2593
    %v2595 = vmul.f32 %v2205, %v2593
    %v2596 = vmul.f32 %v2206, %v2593
    %v2597 = vmul.f32 %v2207, %v2593
    %2602 = vrot.lane.b32.xlu0 %v2594, 127
    %v2603 = vpop.permute.xlu0 %2602
    %2604 = vrot.lane.b32.xlu0 %v2595, 127
    %v2605 = vpop.permute.xlu0 %2604
    %2606 = vrot.lane.b32.xlu0 %v2596, 127
    %v2607 = vpop.permute.xlu0 %2606
    %2608 = vrot.lane.b32.xlu0 %v2597, 127
    %v2609 = vpop.permute.xlu0 %2608
    %v2614 = vadd.f32 %v2486, %v2603
    %v2615 = vadd.f32 %v2487, %v2605
    %v2616 = vadd.f32 %v2488, %v2607
    %v2617 = vadd.f32 %v2489, %v2609
    %s2618 = sld [smem:[#allocation9 + $0x83]]
    %v2619 = vstv %s2618
    %v2620 = vmul.f32 %v2204, %v2619
    %v2621 = vmul.f32 %v2205, %v2619
    %v2622 = vmul.f32 %v2206, %v2619
    %v2623 = vmul.f32 %v2207, %v2619
    %2628 = vrot.lane.b32.xlu0 %v2620, 127
    %v2629 = vpop.permute.xlu0 %2628
    %2630 = vrot.lane.b32.xlu0 %v2621, 127
    %v2631 = vpop.permute.xlu0 %2630
    %2632 = vrot.lane.b32.xlu0 %v2622, 127
    %v2633 = vpop.permute.xlu0 %2632
    %2634 = vrot.lane.b32.xlu0 %v2623, 127
    %v2635 = vpop.permute.xlu0 %2634
    %v2640 = vadd.f32 %v2496, %v2629
    %v2641 = vadd.f32 %v2497, %v2631
    %v2642 = vadd.f32 %v2498, %v2633
    %v2643 = vadd.f32 %v2499, %v2635
    %s2644 = sld [smem:[#allocation9 + $0x84]]
    %v2645 = vstv %s2644
    %v2646 = vmul.f32 %v2204, %v2645
    %v2647 = vmul.f32 %v2205, %v2645
    %v2648 = vmul.f32 %v2206, %v2645
    %v2649 = vmul.f32 %v2207, %v2645
    %2654 = vrot.lane.b32.xlu0 %v2646, 127
    %v2655 = vpop.permute.xlu0 %2654
    %2656 = vrot.lane.b32.xlu0 %v2647, 127
    %v2657 = vpop.permute.xlu0 %2656
    %2658 = vrot.lane.b32.xlu0 %v2648, 127
    %v2659 = vpop.permute.xlu0 %2658
    %2660 = vrot.lane.b32.xlu0 %v2649, 127
    %v2661 = vpop.permute.xlu0 %2660
    %v2666 = vadd.f32 %v2506, %v2655
    %v2667 = vadd.f32 %v2507, %v2657
    %v2668 = vadd.f32 %v2508, %v2659
    %v2669 = vadd.f32 %v2509, %v2661
    %s2670 = sld [smem:[#allocation9 + $0x85]]
    %v2671 = vstv %s2670
    %v2672 = vmul.f32 %v2204, %v2671
    %v2673 = vmul.f32 %v2205, %v2671
    %v2674 = vmul.f32 %v2206, %v2671
    %v2675 = vmul.f32 %v2207, %v2671
    %2680 = vrot.lane.b32.xlu0 %v2672, 127
    %v2681 = vpop.permute.xlu0 %2680
    %2682 = vrot.lane.b32.xlu0 %v2673, 127
    %v2683 = vpop.permute.xlu0 %2682
    %2684 = vrot.lane.b32.xlu0 %v2674, 127
    %v2685 = vpop.permute.xlu0 %2684
    %2686 = vrot.lane.b32.xlu0 %v2675, 127
    %v2687 = vpop.permute.xlu0 %2686
    %v2692 = vadd.f32 %v2516, %v2681
    %v2693 = vadd.f32 %v2517, %v2683
    %v2694 = vadd.f32 %v2518, %v2685
    %v2695 = vadd.f32 %v2519, %v2687
    %s2696 = sld [smem:[#allocation9 + $0x86]]
    %v2697 = vstv %s2696
    %v2698 = vmul.f32 %v2204, %v2697
    %v2699 = vmul.f32 %v2205, %v2697
    %v2700 = vmul.f32 %v2206, %v2697
    %v2701 = vmul.f32 %v2207, %v2697
    %2706 = vrot.lane.b32.xlu0 %v2698, 127
    %v2707 = vpop.permute.xlu0 %2706
    %2708 = vrot.lane.b32.xlu0 %v2699, 127
    %v2709 = vpop.permute.xlu0 %2708
    %2710 = vrot.lane.b32.xlu0 %v2700, 127
    %v2711 = vpop.permute.xlu0 %2710
    %2712 = vrot.lane.b32.xlu0 %v2701, 127
    %v2713 = vpop.permute.xlu0 %2712
    %v2718 = vadd.f32 %v2526, %v2707
    %v2719 = vadd.f32 %v2527, %v2709
    %v2720 = vadd.f32 %v2528, %v2711
    %v2721 = vadd.f32 %v2529, %v2713
    %s2722 = sld [smem:[#allocation9 + $0x87]]
    %v2723 = vstv %s2722
    %v2724 = vmul.f32 %v2204, %v2723
    %v2725 = vmul.f32 %v2205, %v2723
    %v2726 = vmul.f32 %v2206, %v2723
    %v2727 = vmul.f32 %v2207, %v2723
    %2732 = vrot.lane.b32.xlu0 %v2724, 127
    %v2733 = vpop.permute.xlu0 %2732
    %2734 = vrot.lane.b32.xlu0 %v2725, 127
    %v2735 = vpop.permute.xlu0 %2734
    %2736 = vrot.lane.b32.xlu0 %v2726, 127
    %v2737 = vpop.permute.xlu0 %2736
    %2738 = vrot.lane.b32.xlu0 %v2727, 127
    %v2739 = vpop.permute.xlu0 %2738
    %v2744 = vadd.f32 %v2536, %v2733
    %v2745 = vadd.f32 %v2537, %v2735
    %v2746 = vadd.f32 %v2538, %v2737
    %v2747 = vadd.f32 %v2539, %v2739
    %s2748 = sld [smem:[#allocation9 + $0x88]]
    %v2749 = vstv %s2748
    %v2750 = vmul.f32 %v2288, %v2749
    %v2751 = vmul.f32 %v2289, %v2749
    %v2752 = vmul.f32 %v2290, %v2749
    %v2753 = vmul.f32 %v2291, %v2749
    %2758 = vrot.lane.b32.xlu0 %v2750, 127
    %v2759 = vpop.permute.xlu0 %2758
    %2760 = vrot.lane.b32.xlu0 %v2751, 127
    %v2761 = vpop.permute.xlu0 %2760
    %2762 = vrot.lane.b32.xlu0 %v2752, 127
    %v2763 = vpop.permute.xlu0 %2762
    %2764 = vrot.lane.b32.xlu0 %v2753, 127
    %v2765 = vpop.permute.xlu0 %2764
    %v2770 = vadd.f32 %v2562, %v2759
    %v2771 = vadd.f32 %v2563, %v2761
    %v2772 = vadd.f32 %v2564, %v2763
    %v2773 = vadd.f32 %v2565, %v2765
    %s2774 = sld [smem:[#allocation9 + $0x89]]
    %v2775 = vstv %s2774
    %v2776 = vmul.f32 %v2288, %v2775
    %v2777 = vmul.f32 %v2289, %v2775
    %v2778 = vmul.f32 %v2290, %v2775
    %v2779 = vmul.f32 %v2291, %v2775
    %2784 = vrot.lane.b32.xlu0 %v2776, 127
    %v2785 = vpop.permute.xlu0 %2784
    %2786 = vrot.lane.b32.xlu0 %v2777, 127
    %v2787 = vpop.permute.xlu0 %2786
    %2788 = vrot.lane.b32.xlu0 %v2778, 127
    %v2789 = vpop.permute.xlu0 %2788
    %2790 = vrot.lane.b32.xlu0 %v2779, 127
    %v2791 = vpop.permute.xlu0 %2790
    %v2796 = vadd.f32 %v2588, %v2785
    %v2797 = vadd.f32 %v2589, %v2787
    %v2798 = vadd.f32 %v2590, %v2789
    %v2799 = vadd.f32 %v2591, %v2791
    %s2800 = sld [smem:[#allocation9 + $0x8a]]
    %v2801 = vstv %s2800
    %v2802 = vmul.f32 %v2288, %v2801
    %v2803 = vmul.f32 %v2289, %v2801
    %v2804 = vmul.f32 %v2290, %v2801
    %v2805 = vmul.f32 %v2291, %v2801
    %2810 = vrot.lane.b32.xlu0 %v2802, 127
    %v2811 = vpop.permute.xlu0 %2810
    %2812 = vrot.lane.b32.xlu0 %v2803, 127
    %v2813 = vpop.permute.xlu0 %2812
    %2814 = vrot.lane.b32.xlu0 %v2804, 127
    %v2815 = vpop.permute.xlu0 %2814
    %2816 = vrot.lane.b32.xlu0 %v2805, 127
    %v2817 = vpop.permute.xlu0 %2816
    %v2822 = vadd.f32 %v2614, %v2811
    %v2823 = vadd.f32 %v2615, %v2813
    %v2824 = vadd.f32 %v2616, %v2815
    %v2825 = vadd.f32 %v2617, %v2817
    %s2826 = sld [smem:[#allocation9 + $0x8b]]
    %v2827 = vstv %s2826
    %v2828 = vmul.f32 %v2288, %v2827
    %v2829 = vmul.f32 %v2289, %v2827
    %v2830 = vmul.f32 %v2290, %v2827
    %v2831 = vmul.f32 %v2291, %v2827
    %2836 = vrot.lane.b32.xlu0 %v2828, 127
    %v2837 = vpop.permute.xlu0 %2836
    %2838 = vrot.lane.b32.xlu0 %v2829, 127
    %v2839 = vpop.permute.xlu0 %2838
    %2840 = vrot.lane.b32.xlu0 %v2830, 127
    %v2841 = vpop.permute.xlu0 %2840
    %2842 = vrot.lane.b32.xlu0 %v2831, 127
    %v2843 = vpop.permute.xlu0 %2842
    %v2848 = vadd.f32 %v2640, %v2837
    %v2849 = vadd.f32 %v2641, %v2839
    %v2850 = vadd.f32 %v2642, %v2841
    %v2851 = vadd.f32 %v2643, %v2843
    %s2852 = sld [smem:[#allocation9 + $0x8c]]
    %v2853 = vstv %s2852
    %v2854 = vmul.f32 %v2288, %v2853
    %v2855 = vmul.f32 %v2289, %v2853
    %v2856 = vmul.f32 %v2290, %v2853
    %v2857 = vmul.f32 %v2291, %v2853
    %2862 = vrot.lane.b32.xlu0 %v2854, 127
    %v2863 = vpop.permute.xlu0 %2862
    %2864 = vrot.lane.b32.xlu0 %v2855, 127
    %v2865 = vpop.permute.xlu0 %2864
    %2866 = vrot.lane.b32.xlu0 %v2856, 127
    %v2867 = vpop.permute.xlu0 %2866
    %2868 = vrot.lane.b32.xlu0 %v2857, 127
    %v2869 = vpop.permute.xlu0 %2868
    %v2874 = vadd.f32 %v2666, %v2863
    %v2875 = vadd.f32 %v2667, %v2865
    %v2876 = vadd.f32 %v2668, %v2867
    %v2877 = vadd.f32 %v2669, %v2869
    %s2878 = sld [smem:[#allocation9 + $0x8d]]
    %v2879 = vstv %s2878
    %v2880 = vmul.f32 %v2288, %v2879
    %v2881 = vmul.f32 %v2289, %v2879
    %v2882 = vmul.f32 %v2290, %v2879
    %v2883 = vmul.f32 %v2291, %v2879
    %2888 = vrot.lane.b32.xlu0 %v2880, 127
    %v2889 = vpop.permute.xlu0 %2888
    %2890 = vrot.lane.b32.xlu0 %v2881, 127
    %v2891 = vpop.permute.xlu0 %2890
    %2892 = vrot.lane.b32.xlu0 %v2882, 127
    %v2893 = vpop.permute.xlu0 %2892
    %2894 = vrot.lane.b32.xlu0 %v2883, 127
    %v2895 = vpop.permute.xlu0 %2894
    %v2900 = vadd.f32 %v2692, %v2889
    %v2901 = vadd.f32 %v2693, %v2891
    %v2902 = vadd.f32 %v2694, %v2893
    %v2903 = vadd.f32 %v2695, %v2895
    %s2904 = sld [smem:[#allocation9 + $0x8e]]
    %v2905 = vstv %s2904
    %v2906 = vmul.f32 %v2288, %v2905
    %v2907 = vmul.f32 %v2289, %v2905
    %v2908 = vmul.f32 %v2290, %v2905
    %v2909 = vmul.f32 %v2291, %v2905
    %2914 = vrot.lane.b32.xlu0 %v2906, 127
    %v2915 = vpop.permute.xlu0 %2914
    %2916 = vrot.lane.b32.xlu0 %v2907, 127
    %v2917 = vpop.permute.xlu0 %2916
    %2918 = vrot.lane.b32.xlu0 %v2908, 127
    %v2919 = vpop.permute.xlu0 %2918
    %2920 = vrot.lane.b32.xlu0 %v2909, 127
    %v2921 = vpop.permute.xlu0 %2920
    %v2926 = vadd.f32 %v2718, %v2915
    %v2927 = vadd.f32 %v2719, %v2917
    %v2928 = vadd.f32 %v2720, %v2919
    %v2929 = vadd.f32 %v2721, %v2921
    %s2930 = sld [smem:[#allocation9 + $0x8f]]
    %v2931 = vstv %s2930
    %v2932 = vmul.f32 %v2288, %v2931
    %v2933 = vmul.f32 %v2289, %v2931
    %v2934 = vmul.f32 %v2290, %v2931
    %v2935 = vmul.f32 %v2291, %v2931
    %2940 = vrot.lane.b32.xlu0 %v2932, 127
    %v2941 = vpop.permute.xlu0 %2940
    %2942 = vrot.lane.b32.xlu0 %v2933, 127
    %v2943 = vpop.permute.xlu0 %2942
    %2944 = vrot.lane.b32.xlu0 %v2934, 127
    %v2945 = vpop.permute.xlu0 %2944
    %2946 = vrot.lane.b32.xlu0 %v2935, 127
    %v2947 = vpop.permute.xlu0 %2946
    %v2952 = vadd.f32 %v2744, %v2941
    %v2953 = vadd.f32 %v2745, %v2943
    %v2954 = vadd.f32 %v2746, %v2945
    %v2955 = vadd.f32 %v2747, %v2947
    %s2956 = sld [smem:[#allocation9 + $0x90]]
    %v2957 = vstv %s2956
    %v2958 = vmul.f32 %v2372, %v2957
    %v2959 = vmul.f32 %v2373, %v2957
    %v2960 = vmul.f32 %v2374, %v2957
    %v2961 = vmul.f32 %v2375, %v2957
    %2966 = vrot.lane.b32.xlu0 %v2958, 127
    %v2967 = vpop.permute.xlu0 %2966
    %2968 = vrot.lane.b32.xlu0 %v2959, 127
    %v2969 = vpop.permute.xlu0 %2968
    %2970 = vrot.lane.b32.xlu0 %v2960, 127
    %v2971 = vpop.permute.xlu0 %2970
    %2972 = vrot.lane.b32.xlu0 %v2961, 127
    %v2973 = vpop.permute.xlu0 %2972
    %v2978 = vadd.f32 %v2770, %v2967
    %v2979 = vadd.f32 %v2771, %v2969
    %v2980 = vadd.f32 %v2772, %v2971
    %v2981 = vadd.f32 %v2773, %v2973
    %s2982 = sld [smem:[#allocation9 + $0x91]]
    %v2983 = vstv %s2982
    %v2984 = vmul.f32 %v2372, %v2983
    %v2985 = vmul.f32 %v2373, %v2983
    %v2986 = vmul.f32 %v2374, %v2983
    %v2987 = vmul.f32 %v2375, %v2983
    %2992 = vrot.lane.b32.xlu0 %v2984, 127
    %v2993 = vpop.permute.xlu0 %2992
    %2994 = vrot.lane.b32.xlu0 %v2985, 127
    %v2995 = vpop.permute.xlu0 %2994
    %2996 = vrot.lane.b32.xlu0 %v2986, 127
    %v2997 = vpop.permute.xlu0 %2996
    %2998 = vrot.lane.b32.xlu0 %v2987, 127
    %v2999 = vpop.permute.xlu0 %2998
    %v3004 = vadd.f32 %v2796, %v2993
    %v3005 = vadd.f32 %v2797, %v2995
    %v3006 = vadd.f32 %v2798, %v2997
    %v3007 = vadd.f32 %v2799, %v2999
    %s3008 = sld [smem:[#allocation9 + $0x92]]
    %v3009 = vstv %s3008
    %v3010 = vmul.f32 %v2372, %v3009
    %v3011 = vmul.f32 %v2373, %v3009
    %v3012 = vmul.f32 %v2374, %v3009
    %v3013 = vmul.f32 %v2375, %v3009
    %3018 = vrot.lane.b32.xlu0 %v3010, 127
    %v3019 = vpop.permute.xlu0 %3018
    %3020 = vrot.lane.b32.xlu0 %v3011, 127
    %v3021 = vpop.permute.xlu0 %3020
    %3022 = vrot.lane.b32.xlu0 %v3012, 127
    %v3023 = vpop.permute.xlu0 %3022
    %3024 = vrot.lane.b32.xlu0 %v3013, 127
    %v3025 = vpop.permute.xlu0 %3024
    %v3030 = vadd.f32 %v2822, %v3019
    %v3031 = vadd.f32 %v2823, %v3021
    %v3032 = vadd.f32 %v2824, %v3023
    %v3033 = vadd.f32 %v2825, %v3025
    %s3034 = sld [smem:[#allocation9 + $0x93]]
    %v3035 = vstv %s3034
    %v3036 = vmul.f32 %v2372, %v3035
    %v3037 = vmul.f32 %v2373, %v3035
    %v3038 = vmul.f32 %v2374, %v3035
    %v3039 = vmul.f32 %v2375, %v3035
    %3044 = vrot.lane.b32.xlu0 %v3036, 127
    %v3045 = vpop.permute.xlu0 %3044
    %3046 = vrot.lane.b32.xlu0 %v3037, 127
    %v3047 = vpop.permute.xlu0 %3046
    %3048 = vrot.lane.b32.xlu0 %v3038, 127
    %v3049 = vpop.permute.xlu0 %3048
    %3050 = vrot.lane.b32.xlu0 %v3039, 127
    %v3051 = vpop.permute.xlu0 %3050
    %v3056 = vadd.f32 %v2848, %v3045
    %v3057 = vadd.f32 %v2849, %v3047
    %v3058 = vadd.f32 %v2850, %v3049
    %v3059 = vadd.f32 %v2851, %v3051
    %s3060 = sld [smem:[#allocation9 + $0x94]]
    %v3061 = vstv %s3060
    %v3062 = vmul.f32 %v2372, %v3061
    %v3063 = vmul.f32 %v2373, %v3061
    %v3064 = vmul.f32 %v2374, %v3061
    %v3065 = vmul.f32 %v2375, %v3061
    %3070 = vrot.lane.b32.xlu0 %v3062, 127
    %v3071 = vpop.permute.xlu0 %3070
    %3072 = vrot.lane.b32.xlu0 %v3063, 127
    %v3073 = vpop.permute.xlu0 %3072
    %3074 = vrot.lane.b32.xlu0 %v3064, 127
    %v3075 = vpop.permute.xlu0 %3074
    %3076 = vrot.lane.b32.xlu0 %v3065, 127
    %v3077 = vpop.permute.xlu0 %3076
    %v3082 = vadd.f32 %v2874, %v3071
    %v3083 = vadd.f32 %v2875, %v3073
    %v3084 = vadd.f32 %v2876, %v3075
    %v3085 = vadd.f32 %v2877, %v3077
    %s3086 = sld [smem:[#allocation9 + $0x95]]
    %v3087 = vstv %s3086
    %v3088 = vmul.f32 %v2372, %v3087
    %v3089 = vmul.f32 %v2373, %v3087
    %v3090 = vmul.f32 %v2374, %v3087
    %v3091 = vmul.f32 %v2375, %v3087
    %3096 = vrot.lane.b32.xlu0 %v3088, 127
    %v3097 = vpop.permute.xlu0 %3096
    %3098 = vrot.lane.b32.xlu0 %v3089, 127
    %v3099 = vpop.permute.xlu0 %3098
    %3100 = vrot.lane.b32.xlu0 %v3090, 127
    %v3101 = vpop.permute.xlu0 %3100
    %3102 = vrot.lane.b32.xlu0 %v3091, 127
    %v3103 = vpop.permute.xlu0 %3102
    %v3108 = vadd.f32 %v2900, %v3097
    %v3109 = vadd.f32 %v2901, %v3099
    %v3110 = vadd.f32 %v2902, %v3101
    %v3111 = vadd.f32 %v2903, %v3103
    %s3112 = sld [smem:[#allocation9 + $0x96]]
    %v3113 = vstv %s3112
    %v3114 = vmul.f32 %v2372, %v3113
    %v3115 = vmul.f32 %v2373, %v3113
    %v3116 = vmul.f32 %v2374, %v3113
    %v3117 = vmul.f32 %v2375, %v3113
    %3122 = vrot.lane.b32.xlu0 %v3114, 127
    %v3123 = vpop.permute.xlu0 %3122
    %3124 = vrot.lane.b32.xlu0 %v3115, 127
    %v3125 = vpop.permute.xlu0 %3124
    %3126 = vrot.lane.b32.xlu0 %v3116, 127
    %v3127 = vpop.permute.xlu0 %3126
    %3128 = vrot.lane.b32.xlu0 %v3117, 127
    %v3129 = vpop.permute.xlu0 %3128
    %v3134 = vadd.f32 %v2926, %v3123
    %v3135 = vadd.f32 %v2927, %v3125
    %v3136 = vadd.f32 %v2928, %v3127
    %v3137 = vadd.f32 %v2929, %v3129
    %s3138 = sld [smem:[#allocation9 + $0x97]]
    %v3139 = vstv %s3138
    %v3140 = vmul.f32 %v2372, %v3139
    %v3141 = vmul.f32 %v2373, %v3139
    %v3142 = vmul.f32 %v2374, %v3139
    %v3143 = vmul.f32 %v2375, %v3139
    %3148 = vrot.lane.b32.xlu0 %v3140, 127
    %v3149 = vpop.permute.xlu0 %3148
    %3150 = vrot.lane.b32.xlu0 %v3141, 127
    %v3151 = vpop.permute.xlu0 %3150
    %3152 = vrot.lane.b32.xlu0 %v3142, 127
    %v3153 = vpop.permute.xlu0 %3152
    %3154 = vrot.lane.b32.xlu0 %v3143, 127
    %v3155 = vpop.permute.xlu0 %3154
    %v3160 = vadd.f32 %v2952, %v3149
    %v3161 = vadd.f32 %v2953, %v3151
    %v3162 = vadd.f32 %v2954, %v3153
    %v3163 = vadd.f32 %v2955, %v3155
    %s3164 = sld [smem:[#allocation9 + $0x98]]
    %v3165 = vstv %s3164
    %v3166 = vmul.f32 %v2456, %v3165
    %v3167 = vmul.f32 %v2457, %v3165
    %v3168 = vmul.f32 %v2458, %v3165
    %v3169 = vmul.f32 %v2459, %v3165
    %3174 = vrot.lane.b32.xlu0 %v3166, 127
    %v3175 = vpop.permute.xlu0 %3174
    %3176 = vrot.lane.b32.xlu0 %v3167, 127
    %v3177 = vpop.permute.xlu0 %3176
    %3178 = vrot.lane.b32.xlu0 %v3168, 127
    %v3179 = vpop.permute.xlu0 %3178
    %3180 = vrot.lane.b32.xlu0 %v3169, 127
    %v3181 = vpop.permute.xlu0 %3180
    %v3186 = vadd.f32 %v2978, %v3175
    %v3187 = vadd.f32 %v2979, %v3177
    %v3188 = vadd.f32 %v2980, %v3179
    %v3189 = vadd.f32 %v2981, %v3181
    %s3190 = sld [smem:[#allocation9 + $0x99]]
    %v3191 = vstv %s3190
    %v3192 = vmul.f32 %v2456, %v3191
    %v3193 = vmul.f32 %v2457, %v3191
    %v3194 = vmul.f32 %v2458, %v3191
    %v3195 = vmul.f32 %v2459, %v3191
    %3200 = vrot.lane.b32.xlu0 %v3192, 127
    %v3201 = vpop.permute.xlu0 %3200
    %3202 = vrot.lane.b32.xlu0 %v3193, 127
    %v3203 = vpop.permute.xlu0 %3202
    %3204 = vrot.lane.b32.xlu0 %v3194, 127
    %v3205 = vpop.permute.xlu0 %3204
    %3206 = vrot.lane.b32.xlu0 %v3195, 127
    %v3207 = vpop.permute.xlu0 %3206
    %v3212 = vadd.f32 %v3004, %v3201
    %v3213 = vadd.f32 %v3005, %v3203
    %v3214 = vadd.f32 %v3006, %v3205
    %v3215 = vadd.f32 %v3007, %v3207
    %s3216 = sld [smem:[#allocation9 + $0x9a]]
    %v3217 = vstv %s3216
    %v3218 = vmul.f32 %v2456, %v3217
    %v3219 = vmul.f32 %v2457, %v3217
    %v3220 = vmul.f32 %v2458, %v3217
    %v3221 = vmul.f32 %v2459, %v3217
    %3226 = vrot.lane.b32.xlu0 %v3218, 127
    %v3227 = vpop.permute.xlu0 %3226
    %3228 = vrot.lane.b32.xlu0 %v3219, 127
    %v3229 = vpop.permute.xlu0 %3228
    %3230 = vrot.lane.b32.xlu0 %v3220, 127
    %v3231 = vpop.permute.xlu0 %3230
    %3232 = vrot.lane.b32.xlu0 %v3221, 127
    %v3233 = vpop.permute.xlu0 %3232
    %v3238 = vadd.f32 %v3030, %v3227
    %v3239 = vadd.f32 %v3031, %v3229
    %v3240 = vadd.f32 %v3032, %v3231
    %v3241 = vadd.f32 %v3033, %v3233
    %s3242 = sld [smem:[#allocation9 + $0x9b]]
    %v3243 = vstv %s3242
    %v3244 = vmul.f32 %v2456, %v3243
    %v3245 = vmul.f32 %v2457, %v3243
    %v3246 = vmul.f32 %v2458, %v3243
    %v3247 = vmul.f32 %v2459, %v3243
    %3252 = vrot.lane.b32.xlu0 %v3244, 127
    %v3253 = vpop.permute.xlu0 %3252
    %3254 = vrot.lane.b32.xlu0 %v3245, 127
    %v3255 = vpop.permute.xlu0 %3254
    %3256 = vrot.lane.b32.xlu0 %v3246, 127
    %v3257 = vpop.permute.xlu0 %3256
    %3258 = vrot.lane.b32.xlu0 %v3247, 127
    %v3259 = vpop.permute.xlu0 %3258
    %v3264 = vadd.f32 %v3056, %v3253
    %v3265 = vadd.f32 %v3057, %v3255
    %v3266 = vadd.f32 %v3058, %v3257
    %v3267 = vadd.f32 %v3059, %v3259
    %s3268 = sld [smem:[#allocation9 + $0x9c]]
    %v3269 = vstv %s3268
    %v3270 = vmul.f32 %v2456, %v3269
    %v3271 = vmul.f32 %v2457, %v3269
    %v3272 = vmul.f32 %v2458, %v3269
    %v3273 = vmul.f32 %v2459, %v3269
    %3278 = vrot.lane.b32.xlu0 %v3270, 127
    %v3279 = vpop.permute.xlu0 %3278
    %3280 = vrot.lane.b32.xlu0 %v3271, 127
    %v3281 = vpop.permute.xlu0 %3280
    %3282 = vrot.lane.b32.xlu0 %v3272, 127
    %v3283 = vpop.permute.xlu0 %3282
    %3284 = vrot.lane.b32.xlu0 %v3273, 127
    %v3285 = vpop.permute.xlu0 %3284
    %v3290 = vadd.f32 %v3082, %v3279
    %v3291 = vadd.f32 %v3083, %v3281
    %v3292 = vadd.f32 %v3084, %v3283
    %v3293 = vadd.f32 %v3085, %v3285
    %s3294 = sld [smem:[#allocation9 + $0x9d]]
    %v3295 = vstv %s3294
    %v3296 = vmul.f32 %v2456, %v3295
    %v3297 = vmul.f32 %v2457, %v3295
    %v3298 = vmul.f32 %v2458, %v3295
    %v3299 = vmul.f32 %v2459, %v3295
    %3304 = vrot.lane.b32.xlu0 %v3296, 127
    %v3305 = vpop.permute.xlu0 %3304
    %3306 = vrot.lane.b32.xlu0 %v3297, 127
    %v3307 = vpop.permute.xlu0 %3306
    %3308 = vrot.lane.b32.xlu0 %v3298, 127
    %v3309 = vpop.permute.xlu0 %3308
    %3310 = vrot.lane.b32.xlu0 %v3299, 127
    %v3311 = vpop.permute.xlu0 %3310
    %v3316 = vadd.f32 %v3108, %v3305
    %v3317 = vadd.f32 %v3109, %v3307
    %v3318 = vadd.f32 %v3110, %v3309
    %v3319 = vadd.f32 %v3111, %v3311
    %s3320 = sld [smem:[#allocation9 + $0x9e]]
    %v3321 = vstv %s3320
    %v3322 = vmul.f32 %v2456, %v3321
    %v3323 = vmul.f32 %v2457, %v3321
    %v3324 = vmul.f32 %v2458, %v3321
    %v3325 = vmul.f32 %v2459, %v3321
    %3330 = vrot.lane.b32.xlu0 %v3322, 127
    %v3331 = vpop.permute.xlu0 %3330
    %3332 = vrot.lane.b32.xlu0 %v3323, 127
    %v3333 = vpop.permute.xlu0 %3332
    %3334 = vrot.lane.b32.xlu0 %v3324, 127
    %v3335 = vpop.permute.xlu0 %3334
    %3336 = vrot.lane.b32.xlu0 %v3325, 127
    %v3337 = vpop.permute.xlu0 %3336
    %v3342 = vadd.f32 %v3134, %v3331
    %v3343 = vadd.f32 %v3135, %v3333
    %v3344 = vadd.f32 %v3136, %v3335
    %v3345 = vadd.f32 %v3137, %v3337
    %s3346 = sld [smem:[#allocation9 + $0x9f]]
    %v3347 = vstv %s3346
    %v3348 = vmul.f32 %v2456, %v3347
    %v3349 = vmul.f32 %v2457, %v3347
    %v3350 = vmul.f32 %v2458, %v3347
    %v3351 = vmul.f32 %v2459, %v3347
    %3356 = vrot.lane.b32.xlu0 %v3348, 127
    %v3357 = vpop.permute.xlu0 %3356
    %3358 = vrot.lane.b32.xlu0 %v3349, 127
    %v3359 = vpop.permute.xlu0 %3358
    %3360 = vrot.lane.b32.xlu0 %v3350, 127
    %v3361 = vpop.permute.xlu0 %3360
    %3362 = vrot.lane.b32.xlu0 %v3351, 127
    %v3363 = vpop.permute.xlu0 %3362
    %v3368 = vadd.f32 %v3160, %v3357
    %v3369 = vadd.f32 %v3161, %v3359
    %v3370 = vadd.f32 %v3162, %v3361
    %v3371 = vadd.f32 %v3163, %v3363
    %3372 = vst.msk [vmem:[#allocation3] sm:$0xff] %vm126, 0.0
    %3373 = vst.msk [vmem:[#allocation3 + $0x8] sm:$0xff] %vm126, 0.0
    %3374 = vst.msk [vmem:[#allocation3 + $0x10] sm:$0x3] %vm129, 0.0
    %3375 = vst.msk [vmem:[#allocation3 + $0x18] sm:$0xff] %vm126, 0.0
    %3376 = vst.msk [vmem:[#allocation3 + $0x20] sm:$0xff] %vm126, 0.0
    %3377 = vst.msk [vmem:[#allocation3 + $0x28] sm:$0x3] %vm129, 0.0
    %3378 = vst.msk [vmem:[#allocation3 + $0x30] sm:$0xff] %vm126, 0.0
    %3379 = vst.msk [vmem:[#allocation3 + $0x38] sm:$0xff] %vm126, 0.0
    %3380 = vst.msk [vmem:[#allocation3 + $0x40] sm:$0x3] %vm129, 0.0
    %3381 = vst.msk [vmem:[#allocation3 + $0x48] sm:$0xff] %vm126, 0.0
    %3382 = vst.msk [vmem:[#allocation3 + $0x50] sm:$0xff] %vm126, 0.0
    %3383 = vst.msk [vmem:[#allocation3 + $0x58] sm:$0x3] %vm129, 0.0
    %3384 = vst.msk [vmem:[#allocation3 + $0x60] sm:$0xff] %vm126, 0.0
    %3385 = vst.msk [vmem:[#allocation3 + $0x68] sm:$0xff] %vm126, 0.0
    %3386 = vst.msk [vmem:[#allocation3 + $0x70] sm:$0x3] %vm129, 0.0
    %3387 = vst.msk [vmem:[#allocation3 + $0x78] sm:$0xff] %vm126, 0.0
    %3388 = vst.msk [vmem:[#allocation3 + $0x80] sm:$0xff] %vm126, 0.0
    %3389 = vst.msk [vmem:[#allocation3 + $0x88] sm:$0x3] %vm129, 0.0
    %3390 = vst.msk [vmem:[#allocation3 + $0x90] sm:$0xff] %vm126, 0.0
    %3391 = vst.msk [vmem:[#allocation3 + $0x98] sm:$0xff] %vm126, 0.0
    %3392 = vst.msk [vmem:[#allocation3 + $0xa0] sm:$0x3] %vm129, 0.0
    %3393 = vst.msk [vmem:[#allocation3 + $0xa8] sm:$0xff] %vm126, 0.0
    %3394 = vst.msk [vmem:[#allocation3 + $0xb0] sm:$0xff] %vm126, 0.0
    %3395 = vst.msk [vmem:[#allocation3 + $0xb8] sm:$0x3] %vm129, 0.0
    %3396 = vst.msk [vmem:[#allocation3 + $0xc0] sm:$0xff] %vm126, 0.0
    %3397 = vst.msk [vmem:[#allocation3 + $0xc8] sm:$0xff] %vm126, 0.0
    %3398 = vst.msk [vmem:[#allocation3 + $0xd0] sm:$0x3] %vm129, 0.0
    %3399 = vst.msk [vmem:[#allocation3 + $0xd8] sm:$0xff] %vm126, 0.0
    %3400 = vst.msk [vmem:[#allocation3 + $0xe0] sm:$0xff] %vm126, 0.0
    %3401 = vst.msk [vmem:[#allocation3 + $0xe8] sm:$0x3] %vm129, 0.0
    %3402 = vst.msk [vmem:[#allocation3 + $0xf0] sm:$0xff] %vm126, 0.0
    %3403 = vst.msk [vmem:[#allocation3 + $0xf8] sm:$0xff] %vm126, 0.0
    %3404 = vst.msk [vmem:[#allocation3 + $0x100] sm:$0x3] %vm129, 0.0
    %3405 = vst.msk [vmem:[#allocation3 + $0x108] sm:$0xff] %vm126, 0.0
    %3406 = vst.msk [vmem:[#allocation3 + $0x110] sm:$0xff] %vm126, 0.0
    %3407 = vst.msk [vmem:[#allocation3 + $0x118] sm:$0x3] %vm129, 0.0
    %3408 = vst.msk [vmem:[#allocation3 + $0x120] sm:$0xff] %vm126, 0.0
    %3409 = vst.msk [vmem:[#allocation3 + $0x128] sm:$0xff] %vm126, 0.0
    %3410 = vst.msk [vmem:[#allocation3 + $0x130] sm:$0x3] %vm129, 0.0
    %3411 = vst.msk [vmem:[#allocation3 + $0x138] sm:$0xff] %vm126, 0.0
    %3412 = vst.msk [vmem:[#allocation3 + $0x140] sm:$0xff] %vm126, 0.0
    %3413 = vst.msk [vmem:[#allocation3 + $0x148] sm:$0x3] %vm129, 0.0
    %3414 = vst.msk [vmem:[#allocation3 + $0x150] sm:$0xff] %vm126, 0.0
    %3415 = vst.msk [vmem:[#allocation3 + $0x158] sm:$0xff] %vm126, 0.0
    %3416 = vst.msk [vmem:[#allocation3 + $0x160] sm:$0x3] %vm129, 0.0
    %3417 = vst.msk [vmem:[#allocation3 + $0x168] sm:$0xff] %vm126, 0.0
    %3418 = vst.msk [vmem:[#allocation3 + $0x170] sm:$0xff] %vm126, 0.0
    %3419 = vst.msk [vmem:[#allocation3 + $0x178] sm:$0x3] %vm129, 0.0
    %s3420 = sld [smem:[#allocation10]]
    %s3421 = sld [smem:[#allocation11]]
    %vm3422 = vcmask 130048
    %v3423 = vsel %vm3422, %v3186, 0.0
    %3424 = vadd.xlane.f32.xlu0 %v3423
    %v3425 = vpop.xlane.xlu0 %3424
    %v3426 = vsel %vm3422, %v3187, 0.0
    %3427 = vadd.xlane.f32.xlu0 %v3426
    %v3428 = vpop.xlane.xlu0 %3427
    %v3429 = vsel %vm3422, %v3188, 0.0
    %3430 = vadd.xlane.f32.xlu0 %v3429
    %v3431 = vpop.xlane.xlu0 %3430
    %v3432 = vsel %vm3422, %v3189, 0.0
    %3433 = vadd.xlane.f32.xlu0 %v3432
    %v3434 = vpop.xlane.xlu0 %3433
    %v3435 = vadd.f32 %v3425, %v3428
    %v3436 = vadd.f32 %v3435, %v3431
    %v3437 = vadd.f32 %v3436, %v3434
    %v3438 = vrot.slane %v3437, 4
    %v3439 = vadd.f32 %v3437, %v3438
    %v3440 = vrot.slane %v3439, 2
    %v3441 = vadd.f32 %v3439, %v3440
    %v3442 = vrot.slane %v3441, 1
    %v3443 = vadd.f32 %v3441, %v3442
    %v3444 = vmul.f32 %v3443, 0.001953125
    %v3445 = vmul.f32 %v3186, %v3186
    %v3446 = vmul.f32 %v3187, %v3187
    %v3447 = vmul.f32 %v3188, %v3188
    %v3448 = vmul.f32 %v3189, %v3189
    %v3449 = vsel %vm3422, %v3445, 0.0
    %3450 = vadd.xlane.f32.xlu0 %v3449
    %v3451 = vpop.xlane.xlu0 %3450
    %v3452 = vsel %vm3422, %v3446, 0.0
    %3453 = vadd.xlane.f32.xlu0 %v3452
    %v3454 = vpop.xlane.xlu0 %3453
    %v3455 = vsel %vm3422, %v3447, 0.0
    %3456 = vadd.xlane.f32.xlu0 %v3455
    %v3457 = vpop.xlane.xlu0 %3456
    %v3458 = vsel %vm3422, %v3448, 0.0
    %3459 = vadd.xlane.f32.xlu0 %v3458
    %v3460 = vpop.xlane.xlu0 %3459
    %v3461 = vadd.f32 %v3451, %v3454
    %v3462 = vadd.f32 %v3461, %v3457
    %v3463 = vadd.f32 %v3462, %v3460
    %v3464 = vrot.slane %v3463, 4
    %v3465 = vadd.f32 %v3463, %v3464
    %v3466 = vrot.slane %v3465, 2
    %v3467 = vadd.f32 %v3465, %v3466
    %v3468 = vrot.slane %v3467, 1
    %v3469 = vadd.f32 %v3467, %v3468
    %v3470 = vmul.f32 %v3469, 0.001953125
    %v3471 = vmul.f32 %v3444, %v3444
    %v3472 = vsub.f32 %v3470, %v3471
    %v3473 = vmax.f32 %v3472, 0.0
    %v3474 = vadd.f32 %v3473, 1e-05
    %v3475 = vrsqrt.pop %v3474
    %v3476 = vstv %s3420
    %v3477 = vmul.f32 %v3476, %v3475
    %v3478 = vmul.f32 %v3444, %v3477
    %v3479 = vstv %s3421
    %v3480 = vsub.f32 %v3479, %v3478
    %v3481 = vmul.f32 %v3186, %v3477
    %v3482 = vmul.f32 %v3187, %v3477
    %v3483 = vmul.f32 %v3188, %v3477
    %v3484 = vmul.f32 %v3189, %v3477
    %v3485 = vadd.f32 %v3481, %v3480
    %v3486 = vadd.f32 %v3482, %v3480
    %v3487 = vadd.f32 %v3483, %v3480
    %v3488 = vadd.f32 %v3484, %v3480
    %v3489 = vmax.f32 %v3485, 0.0
    %v3490 = vmax.f32 %v3486, 0.0
    %v3491 = vmax.f32 %v3487, 0.0
    %v3492 = vmax.f32 %v3488, 0.0
    %3497 = vrot.lane.b32.xlu0 %v3489, 1
    %v3498 = vpop.permute.xlu0 %3497
    %3499 = vrot.lane.b32.xlu0 %v3490, 1
    %v3500 = vpop.permute.xlu0 %3499
    %3501 = vrot.lane.b32.xlu0 %v3491, 1
    %v3502 = vpop.permute.xlu0 %3501
    %3503 = vrot.lane.b32.xlu0 %v3492, 1
    %v3504 = vpop.permute.xlu0 %3503
    %3509 = vst.msk [vmem:[#allocation3 + $0x1] sm:$0xff] %vm216, %v3498
    %3510 = vst.msk [vmem:[#allocation3 + $0x9] sm:$0xff] %vm216, %v3500
    %3511 = vst.msk [vmem:[#allocation3 + $0xc1] sm:$0xff] %vm216, %v3502
    %3512 = vst.msk [vmem:[#allocation3 + $0xc9] sm:$0xff] %vm216, %v3504
    %s3513 = sld [smem:[#allocation10 + $0x1]]
    %s3514 = sld [smem:[#allocation11 + $0x1]]
    %v3515 = vsel %vm3422, %v3212, 0.0
    %3516 = vadd.xlane.f32.xlu0 %v3515
    %v3517 = vpop.xlane.xlu0 %3516
    %v3518 = vsel %vm3422, %v3213, 0.0
    %3519 = vadd.xlane.f32.xlu0 %v3518
    %v3520 = vpop.xlane.xlu0 %3519
    %v3521 = vsel %vm3422, %v3214, 0.0
    %3522 = vadd.xlane.f32.xlu0 %v3521
    %v3523 = vpop.xlane.xlu0 %3522
    %v3524 = vsel %vm3422, %v3215, 0.0
    %3525 = vadd.xlane.f32.xlu0 %v3524
    %v3526 = vpop.xlane.xlu0 %3525
    %v3527 = vadd.f32 %v3517, %v3520
    %v3528 = vadd.f32 %v3527, %v3523
    %v3529 = vadd.f32 %v3528, %v3526
    %v3530 = vrot.slane %v3529, 4
    %v3531 = vadd.f32 %v3529, %v3530
    %v3532 = vrot.slane %v3531, 2
    %v3533 = vadd.f32 %v3531, %v3532
    %v3534 = vrot.slane %v3533, 1
    %v3535 = vadd.f32 %v3533, %v3534
    %v3536 = vmul.f32 %v3535, 0.001953125
    %v3537 = vmul.f32 %v3212, %v3212
    %v3538 = vmul.f32 %v3213, %v3213
    %v3539 = vmul.f32 %v3214, %v3214
    %v3540 = vmul.f32 %v3215, %v3215
    %v3541 = vsel %vm3422, %v3537, 0.0
    %3542 = vadd.xlane.f32.xlu0 %v3541
    %v3543 = vpop.xlane.xlu0 %3542
    %v3544 = vsel %vm3422, %v3538, 0.0
    %3545 = vadd.xlane.f32.xlu0 %v3544
    %v3546 = vpop.xlane.xlu0 %3545
    %v3547 = vsel %vm3422, %v3539, 0.0
    %3548 = vadd.xlane.f32.xlu0 %v3547
    %v3549 = vpop.xlane.xlu0 %3548
    %v3550 = vsel %vm3422, %v3540, 0.0
    %3551 = vadd.xlane.f32.xlu0 %v3550
    %v3552 = vpop.xlane.xlu0 %3551
    %v3553 = vadd.f32 %v3543, %v3546
    %v3554 = vadd.f32 %v3553, %v3549
    %v3555 = vadd.f32 %v3554, %v3552
    %v3556 = vrot.slane %v3555, 4
    %v3557 = vadd.f32 %v3555, %v3556
    %v3558 = vrot.slane %v3557, 2
    %v3559 = vadd.f32 %v3557, %v3558
    %v3560 = vrot.slane %v3559, 1
    %v3561 = vadd.f32 %v3559, %v3560
    %v3562 = vmul.f32 %v3561, 0.001953125
    %v3563 = vmul.f32 %v3536, %v3536
    %v3564 = vsub.f32 %v3562, %v3563
    %v3565 = vmax.f32 %v3564, 0.0
    %v3566 = vadd.f32 %v3565, 1e-05
    %v3567 = vrsqrt.pop %v3566
    %v3568 = vstv %s3513
    %v3569 = vmul.f32 %v3568, %v3567
    %v3570 = vmul.f32 %v3536, %v3569
    %v3571 = vstv %s3514
    %v3572 = vsub.f32 %v3571, %v3570
    %v3573 = vmul.f32 %v3212, %v3569
    %v3574 = vmul.f32 %v3213, %v3569
    %v3575 = vmul.f32 %v3214, %v3569
    %v3576 = vmul.f32 %v3215, %v3569
    %v3577 = vadd.f32 %v3573, %v3572
    %v3578 = vadd.f32 %v3574, %v3572
    %v3579 = vadd.f32 %v3575, %v3572
    %v3580 = vadd.f32 %v3576, %v3572
    %v3581 = vmax.f32 %v3577, 0.0
    %v3582 = vmax.f32 %v3578, 0.0
    %v3583 = vmax.f32 %v3579, 0.0
    %v3584 = vmax.f32 %v3580, 0.0
    %3589 = vrot.lane.b32.xlu0 %v3581, 1
    %v3590 = vpop.permute.xlu0 %3589
    %3591 = vrot.lane.b32.xlu0 %v3582, 1
    %v3592 = vpop.permute.xlu0 %3591
    %3593 = vrot.lane.b32.xlu0 %v3583, 1
    %v3594 = vpop.permute.xlu0 %3593
    %3595 = vrot.lane.b32.xlu0 %v3584, 1
    %v3596 = vpop.permute.xlu0 %3595
    %s3601 = scalar_lea.vmem [#allocation3], 24
    %3602 = vst.msk [vmem:[%s3601 + $0x1] sm:$0xff] %vm216, %v3590
    %3603 = vst.msk [vmem:[%s3601 + $0x9] sm:$0xff] %vm216, %v3592
    %3604 = vst.msk [vmem:[%s3601 + $0xc1] sm:$0xff] %vm216, %v3594
    %3605 = vst.msk [vmem:[%s3601 + $0xc9] sm:$0xff] %vm216, %v3596
    %s3606 = sld [smem:[#allocation10 + $0x2]]
    %s3607 = sld [smem:[#allocation11 + $0x2]]
    %v3608 = vsel %vm3422, %v3238, 0.0
    %3609 = vadd.xlane.f32.xlu0 %v3608
    %v3610 = vpop.xlane.xlu0 %3609
    %v3611 = vsel %vm3422, %v3239, 0.0
    %3612 = vadd.xlane.f32.xlu0 %v3611
    %v3613 = vpop.xlane.xlu0 %3612
    %v3614 = vsel %vm3422, %v3240, 0.0
    %3615 = vadd.xlane.f32.xlu0 %v3614
    %v3616 = vpop.xlane.xlu0 %3615
    %v3617 = vsel %vm3422, %v3241, 0.0
    %3618 = vadd.xlane.f32.xlu0 %v3617
    %v3619 = vpop.xlane.xlu0 %3618
    %v3620 = vadd.f32 %v3610, %v3613
    %v3621 = vadd.f32 %v3620, %v3616
    %v3622 = vadd.f32 %v3621, %v3619
    %v3623 = vrot.slane %v3622, 4
    %v3624 = vadd.f32 %v3622, %v3623
    %v3625 = vrot.slane %v3624, 2
    %v3626 = vadd.f32 %v3624, %v3625
    %v3627 = vrot.slane %v3626, 1
    %v3628 = vadd.f32 %v3626, %v3627
    %v3629 = vmul.f32 %v3628, 0.001953125
    %v3630 = vmul.f32 %v3238, %v3238
    %v3631 = vmul.f32 %v3239, %v3239
    %v3632 = vmul.f32 %v3240, %v3240
    %v3633 = vmul.f32 %v3241, %v3241
    %v3634 = vsel %vm3422, %v3630, 0.0
    %3635 = vadd.xlane.f32.xlu0 %v3634
    %v3636 = vpop.xlane.xlu0 %3635
    %v3637 = vsel %vm3422, %v3631, 0.0
    %3638 = vadd.xlane.f32.xlu0 %v3637
    %v3639 = vpop.xlane.xlu0 %3638
    %v3640 = vsel %vm3422, %v3632, 0.0
    %3641 = vadd.xlane.f32.xlu0 %v3640
    %v3642 = vpop.xlane.xlu0 %3641
    %v3643 = vsel %vm3422, %v3633, 0.0
    %3644 = vadd.xlane.f32.xlu0 %v3643
    %v3645 = vpop.xlane.xlu0 %3644
    %v3646 = vadd.f32 %v3636, %v3639
    %v3647 = vadd.f32 %v3646, %v3642
    %v3648 = vadd.f32 %v3647, %v3645
    %v3649 = vrot.slane %v3648, 4
    %v3650 = vadd.f32 %v3648, %v3649
    %v3651 = vrot.slane %v3650, 2
    %v3652 = vadd.f32 %v3650, %v3651
    %v3653 = vrot.slane %v3652, 1
    %v3654 = vadd.f32 %v3652, %v3653
    %v3655 = vmul.f32 %v3654, 0.001953125
    %v3656 = vmul.f32 %v3629, %v3629
    %v3657 = vsub.f32 %v3655, %v3656
    %v3658 = vmax.f32 %v3657, 0.0
    %v3659 = vadd.f32 %v3658, 1e-05
    %v3660 = vrsqrt.pop %v3659
    %v3661 = vstv %s3606
    %v3662 = vmul.f32 %v3661, %v3660
    %v3663 = vmul.f32 %v3629, %v3662
    %v3664 = vstv %s3607
    %v3665 = vsub.f32 %v3664, %v3663
    %v3666 = vmul.f32 %v3238, %v3662
    %v3667 = vmul.f32 %v3239, %v3662
    %v3668 = vmul.f32 %v3240, %v3662
    %v3669 = vmul.f32 %v3241, %v3662
    %v3670 = vadd.f32 %v3666, %v3665
    %v3671 = vadd.f32 %v3667, %v3665
    %v3672 = vadd.f32 %v3668, %v3665
    %v3673 = vadd.f32 %v3669, %v3665
    %v3674 = vmax.f32 %v3670, 0.0
    %v3675 = vmax.f32 %v3671, 0.0
    %v3676 = vmax.f32 %v3672, 0.0
    %v3677 = vmax.f32 %v3673, 0.0
    %3682 = vrot.lane.b32.xlu0 %v3674, 1
    %v3683 = vpop.permute.xlu0 %3682
    %3684 = vrot.lane.b32.xlu0 %v3675, 1
    %v3685 = vpop.permute.xlu0 %3684
    %3686 = vrot.lane.b32.xlu0 %v3676, 1
    %v3687 = vpop.permute.xlu0 %3686
    %3688 = vrot.lane.b32.xlu0 %v3677, 1
    %v3689 = vpop.permute.xlu0 %3688
    %s3694 = scalar_lea.vmem [#allocation3], 48
    %3695 = vst.msk [vmem:[%s3694 + $0x1] sm:$0xff] %vm216, %v3683
    %3696 = vst.msk [vmem:[%s3694 + $0x9] sm:$0xff] %vm216, %v3685
    %3697 = vst.msk [vmem:[%s3694 + $0xc1] sm:$0xff] %vm216, %v3687
    %3698 = vst.msk [vmem:[%s3694 + $0xc9] sm:$0xff] %vm216, %v3689
    %s3699 = sld [smem:[#allocation10 + $0x3]]
    %s3700 = sld [smem:[#allocation11 + $0x3]]
    %v3701 = vsel %vm3422, %v3264, 0.0
    %3702 = vadd.xlane.f32.xlu0 %v3701
    %v3703 = vpop.xlane.xlu0 %3702
    %v3704 = vsel %vm3422, %v3265, 0.0
    %3705 = vadd.xlane.f32.xlu0 %v3704
    %v3706 = vpop.xlane.xlu0 %3705
    %v3707 = vsel %vm3422, %v3266, 0.0
    %3708 = vadd.xlane.f32.xlu0 %v3707
    %v3709 = vpop.xlane.xlu0 %3708
    %v3710 = vsel %vm3422, %v3267, 0.0
    %3711 = vadd.xlane.f32.xlu0 %v3710
    %v3712 = vpop.xlane.xlu0 %3711
    %v3713 = vadd.f32 %v3703, %v3706
    %v3714 = vadd.f32 %v3713, %v3709
    %v3715 = vadd.f32 %v3714, %v3712
    %v3716 = vrot.slane %v3715, 4
    %v3717 = vadd.f32 %v3715, %v3716
    %v3718 = vrot.slane %v3717, 2
    %v3719 = vadd.f32 %v3717, %v3718
    %v3720 = vrot.slane %v3719, 1
    %v3721 = vadd.f32 %v3719, %v3720
    %v3722 = vmul.f32 %v3721, 0.001953125
    %v3723 = vmul.f32 %v3264, %v3264
    %v3724 = vmul.f32 %v3265, %v3265
    %v3725 = vmul.f32 %v3266, %v3266
    %v3726 = vmul.f32 %v3267, %v3267
    %v3727 = vsel %vm3422, %v3723, 0.0
    %3728 = vadd.xlane.f32.xlu0 %v3727
    %v3729 = vpop.xlane.xlu0 %3728
    %v3730 = vsel %vm3422, %v3724, 0.0
    %3731 = vadd.xlane.f32.xlu0 %v3730
    %v3732 = vpop.xlane.xlu0 %3731
    %v3733 = vsel %vm3422, %v3725, 0.0
    %3734 = vadd.xlane.f32.xlu0 %v3733
    %v3735 = vpop.xlane.xlu0 %3734
    %v3736 = vsel %vm3422, %v3726, 0.0
    %3737 = vadd.xlane.f32.xlu0 %v3736
    %v3738 = vpop.xlane.xlu0 %3737
    %v3739 = vadd.f32 %v3729, %v3732
    %v3740 = vadd.f32 %v3739, %v3735
    %v3741 = vadd.f32 %v3740, %v3738
    %v3742 = vrot.slane %v3741, 4
    %v3743 = vadd.f32 %v3741, %v3742
    %v3744 = vrot.slane %v3743, 2
    %v3745 = vadd.f32 %v3743, %v3744
    %v3746 = vrot.slane %v3745, 1
    %v3747 = vadd.f32 %v3745, %v3746
    %v3748 = vmul.f32 %v3747, 0.001953125
    %v3749 = vmul.f32 %v3722, %v3722
    %v3750 = vsub.f32 %v3748, %v3749
    %v3751 = vmax.f32 %v3750, 0.0
    %v3752 = vadd.f32 %v3751, 1e-05
    %v3753 = vrsqrt.pop %v3752
    %v3754 = vstv %s3699
    %v3755 = vmul.f32 %v3754, %v3753
    %v3756 = vmul.f32 %v3722, %v3755
    %v3757 = vstv %s3700
    %v3758 = vsub.f32 %v3757, %v3756
    %v3759 = vmul.f32 %v3264, %v3755
    %v3760 = vmul.f32 %v3265, %v3755
    %v3761 = vmul.f32 %v3266, %v3755
    %v3762 = vmul.f32 %v3267, %v3755
    %v3763 = vadd.f32 %v3759, %v3758
    %v3764 = vadd.f32 %v3760, %v3758
    %v3765 = vadd.f32 %v3761, %v3758
    %v3766 = vadd.f32 %v3762, %v3758
    %v3767 = vmax.f32 %v3763, 0.0
    %v3768 = vmax.f32 %v3764, 0.0
    %v3769 = vmax.f32 %v3765, 0.0
    %v3770 = vmax.f32 %v3766, 0.0
    %3775 = vrot.lane.b32.xlu0 %v3767, 1
    %v3776 = vpop.permute.xlu0 %3775
    %3777 = vrot.lane.b32.xlu0 %v3768, 1
    %v3778 = vpop.permute.xlu0 %3777
    %3779 = vrot.lane.b32.xlu0 %v3769, 1
    %v3780 = vpop.permute.xlu0 %3779
    %3781 = vrot.lane.b32.xlu0 %v3770, 1
    %v3782 = vpop.permute.xlu0 %3781
    %s3787 = scalar_lea.vmem [#allocation3], 72
    %3788 = vst.msk [vmem:[%s3787 + $0x1] sm:$0xff] %vm216, %v3776
    %3789 = vst.msk [vmem:[%s3787 + $0x9] sm:$0xff] %vm216, %v3778
    %3790 = vst.msk [vmem:[%s3787 + $0xc1] sm:$0xff] %vm216, %v3780
    %3791 = vst.msk [vmem:[%s3787 + $0xc9] sm:$0xff] %vm216, %v3782
    %s3792 = sld [smem:[#allocation10 + $0x4]]
    %s3793 = sld [smem:[#allocation11 + $0x4]]
    %v3794 = vsel %vm3422, %v3290, 0.0
    %3795 = vadd.xlane.f32.xlu0 %v3794
    %v3796 = vpop.xlane.xlu0 %3795
    %v3797 = vsel %vm3422, %v3291, 0.0
    %3798 = vadd.xlane.f32.xlu0 %v3797
    %v3799 = vpop.xlane.xlu0 %3798
    %v3800 = vsel %vm3422, %v3292, 0.0
    %3801 = vadd.xlane.f32.xlu0 %v3800
    %v3802 = vpop.xlane.xlu0 %3801
    %v3803 = vsel %vm3422, %v3293, 0.0
    %3804 = vadd.xlane.f32.xlu0 %v3803
    %v3805 = vpop.xlane.xlu0 %3804
    %v3806 = vadd.f32 %v3796, %v3799
    %v3807 = vadd.f32 %v3806, %v3802
    %v3808 = vadd.f32 %v3807, %v3805
    %v3809 = vrot.slane %v3808, 4
    %v3810 = vadd.f32 %v3808, %v3809
    %v3811 = vrot.slane %v3810, 2
    %v3812 = vadd.f32 %v3810, %v3811
    %v3813 = vrot.slane %v3812, 1
    %v3814 = vadd.f32 %v3812, %v3813
    %v3815 = vmul.f32 %v3814, 0.001953125
    %v3816 = vmul.f32 %v3290, %v3290
    %v3817 = vmul.f32 %v3291, %v3291
    %v3818 = vmul.f32 %v3292, %v3292
    %v3819 = vmul.f32 %v3293, %v3293
    %v3820 = vsel %vm3422, %v3816, 0.0
    %3821 = vadd.xlane.f32.xlu0 %v3820
    %v3822 = vpop.xlane.xlu0 %3821
    %v3823 = vsel %vm3422, %v3817, 0.0
    %3824 = vadd.xlane.f32.xlu0 %v3823
    %v3825 = vpop.xlane.xlu0 %3824
    %v3826 = vsel %vm3422, %v3818, 0.0
    %3827 = vadd.xlane.f32.xlu0 %v3826
    %v3828 = vpop.xlane.xlu0 %3827
    %v3829 = vsel %vm3422, %v3819, 0.0
    %3830 = vadd.xlane.f32.xlu0 %v3829
    %v3831 = vpop.xlane.xlu0 %3830
    %v3832 = vadd.f32 %v3822, %v3825
    %v3833 = vadd.f32 %v3832, %v3828
    %v3834 = vadd.f32 %v3833, %v3831
    %v3835 = vrot.slane %v3834, 4
    %v3836 = vadd.f32 %v3834, %v3835
    %v3837 = vrot.slane %v3836, 2
    %v3838 = vadd.f32 %v3836, %v3837
    %v3839 = vrot.slane %v3838, 1
    %v3840 = vadd.f32 %v3838, %v3839
    %v3841 = vmul.f32 %v3840, 0.001953125
    %v3842 = vmul.f32 %v3815, %v3815
    %v3843 = vsub.f32 %v3841, %v3842
    %v3844 = vmax.f32 %v3843, 0.0
    %v3845 = vadd.f32 %v3844, 1e-05
    %v3846 = vrsqrt.pop %v3845
    %v3847 = vstv %s3792
    %v3848 = vmul.f32 %v3847, %v3846
    %v3849 = vmul.f32 %v3815, %v3848
    %v3850 = vstv %s3793
    %v3851 = vsub.f32 %v3850, %v3849
    %v3852 = vmul.f32 %v3290, %v3848
    %v3853 = vmul.f32 %v3291, %v3848
    %v3854 = vmul.f32 %v3292, %v3848
    %v3855 = vmul.f32 %v3293, %v3848
    %v3856 = vadd.f32 %v3852, %v3851
    %v3857 = vadd.f32 %v3853, %v3851
    %v3858 = vadd.f32 %v3854, %v3851
    %v3859 = vadd.f32 %v3855, %v3851
    %v3860 = vmax.f32 %v3856, 0.0
    %v3861 = vmax.f32 %v3857, 0.0
    %v3862 = vmax.f32 %v3858, 0.0
    %v3863 = vmax.f32 %v3859, 0.0
    %3868 = vrot.lane.b32.xlu0 %v3860, 1
    %v3869 = vpop.permute.xlu0 %3868
    %3870 = vrot.lane.b32.xlu0 %v3861, 1
    %v3871 = vpop.permute.xlu0 %3870
    %3872 = vrot.lane.b32.xlu0 %v3862, 1
    %v3873 = vpop.permute.xlu0 %3872
    %3874 = vrot.lane.b32.xlu0 %v3863, 1
    %v3875 = vpop.permute.xlu0 %3874
    %s3880 = scalar_lea.vmem [#allocation3], 96
    %3881 = vst.msk [vmem:[%s3880 + $0x1] sm:$0xff] %vm216, %v3869
    %3882 = vst.msk [vmem:[%s3880 + $0x9] sm:$0xff] %vm216, %v3871
    %3883 = vst.msk [vmem:[%s3880 + $0xc1] sm:$0xff] %vm216, %v3873
    %3884 = vst.msk [vmem:[%s3880 + $0xc9] sm:$0xff] %vm216, %v3875
    %s3885 = sld [smem:[#allocation10 + $0x5]]
    %s3886 = sld [smem:[#allocation11 + $0x5]]
    %v3887 = vsel %vm3422, %v3316, 0.0
    %3888 = vadd.xlane.f32.xlu0 %v3887
    %v3889 = vpop.xlane.xlu0 %3888
    %v3890 = vsel %vm3422, %v3317, 0.0
    %3891 = vadd.xlane.f32.xlu0 %v3890
    %v3892 = vpop.xlane.xlu0 %3891
    %v3893 = vsel %vm3422, %v3318, 0.0
    %3894 = vadd.xlane.f32.xlu0 %v3893
    %v3895 = vpop.xlane.xlu0 %3894
    %v3896 = vsel %vm3422, %v3319, 0.0
    %3897 = vadd.xlane.f32.xlu0 %v3896
    %v3898 = vpop.xlane.xlu0 %3897
    %v3899 = vadd.f32 %v3889, %v3892
    %v3900 = vadd.f32 %v3899, %v3895
    %v3901 = vadd.f32 %v3900, %v3898
    %v3902 = vrot.slane %v3901, 4
    %v3903 = vadd.f32 %v3901, %v3902
    %v3904 = vrot.slane %v3903, 2
    %v3905 = vadd.f32 %v3903, %v3904
    %v3906 = vrot.slane %v3905, 1
    %v3907 = vadd.f32 %v3905, %v3906
    %v3908 = vmul.f32 %v3907, 0.001953125
    %v3909 = vmul.f32 %v3316, %v3316
    %v3910 = vmul.f32 %v3317, %v3317
    %v3911 = vmul.f32 %v3318, %v3318
    %v3912 = vmul.f32 %v3319, %v3319
    %v3913 = vsel %vm3422, %v3909, 0.0
    %3914 = vadd.xlane.f32.xlu0 %v3913
    %v3915 = vpop.xlane.xlu0 %3914
    %v3916 = vsel %vm3422, %v3910, 0.0
    %3917 = vadd.xlane.f32.xlu0 %v3916
    %v3918 = vpop.xlane.xlu0 %3917
    %v3919 = vsel %vm3422, %v3911, 0.0
    %3920 = vadd.xlane.f32.xlu0 %v3919
    %v3921 = vpop.xlane.xlu0 %3920
    %v3922 = vsel %vm3422, %v3912, 0.0
    %3923 = vadd.xlane.f32.xlu0 %v3922
    %v3924 = vpop.xlane.xlu0 %3923
    %v3925 = vadd.f32 %v3915, %v3918
    %v3926 = vadd.f32 %v3925, %v3921
    %v3927 = vadd.f32 %v3926, %v3924
    %v3928 = vrot.slane %v3927, 4
    %v3929 = vadd.f32 %v3927, %v3928
    %v3930 = vrot.slane %v3929, 2
    %v3931 = vadd.f32 %v3929, %v3930
    %v3932 = vrot.slane %v3931, 1
    %v3933 = vadd.f32 %v3931, %v3932
    %v3934 = vmul.f32 %v3933, 0.001953125
    %v3935 = vmul.f32 %v3908, %v3908
    %v3936 = vsub.f32 %v3934, %v3935
    %v3937 = vmax.f32 %v3936, 0.0
    %v3938 = vadd.f32 %v3937, 1e-05
    %v3939 = vrsqrt.pop %v3938
    %v3940 = vstv %s3885
    %v3941 = vmul.f32 %v3940, %v3939
    %v3942 = vmul.f32 %v3908, %v3941
    %v3943 = vstv %s3886
    %v3944 = vsub.f32 %v3943, %v3942
    %v3945 = vmul.f32 %v3316, %v3941
    %v3946 = vmul.f32 %v3317, %v3941
    %v3947 = vmul.f32 %v3318, %v3941
    %v3948 = vmul.f32 %v3319, %v3941
    %v3949 = vadd.f32 %v3945, %v3944
    %v3950 = vadd.f32 %v3946, %v3944
    %v3951 = vadd.f32 %v3947, %v3944
    %v3952 = vadd.f32 %v3948, %v3944
    %v3953 = vmax.f32 %v3949, 0.0
    %v3954 = vmax.f32 %v3950, 0.0
    %v3955 = vmax.f32 %v3951, 0.0
    %v3956 = vmax.f32 %v3952, 0.0
    %3961 = vrot.lane.b32.xlu0 %v3953, 1
    %v3962 = vpop.permute.xlu0 %3961
    %3963 = vrot.lane.b32.xlu0 %v3954, 1
    %v3964 = vpop.permute.xlu0 %3963
    %3965 = vrot.lane.b32.xlu0 %v3955, 1
    %v3966 = vpop.permute.xlu0 %3965
    %3967 = vrot.lane.b32.xlu0 %v3956, 1
    %v3968 = vpop.permute.xlu0 %3967
    %s3973 = scalar_lea.vmem [#allocation3], 120
    %3974 = vst.msk [vmem:[%s3973 + $0x1] sm:$0xff] %vm216, %v3962
    %3975 = vst.msk [vmem:[%s3973 + $0x9] sm:$0xff] %vm216, %v3964
    %3976 = vst.msk [vmem:[%s3973 + $0xc1] sm:$0xff] %vm216, %v3966
    %3977 = vst.msk [vmem:[%s3973 + $0xc9] sm:$0xff] %vm216, %v3968
    %s3978 = sld [smem:[#allocation10 + $0x6]]
    %s3979 = sld [smem:[#allocation11 + $0x6]]
    %v3980 = vsel %vm3422, %v3342, 0.0
    %3981 = vadd.xlane.f32.xlu0 %v3980
    %v3982 = vpop.xlane.xlu0 %3981
    %v3983 = vsel %vm3422, %v3343, 0.0
    %3984 = vadd.xlane.f32.xlu0 %v3983
    %v3985 = vpop.xlane.xlu0 %3984
    %v3986 = vsel %vm3422, %v3344, 0.0
    %3987 = vadd.xlane.f32.xlu0 %v3986
    %v3988 = vpop.xlane.xlu0 %3987
    %v3989 = vsel %vm3422, %v3345, 0.0
    %3990 = vadd.xlane.f32.xlu0 %v3989
    %v3991 = vpop.xlane.xlu0 %3990
    %v3992 = vadd.f32 %v3982, %v3985
    %v3993 = vadd.f32 %v3992, %v3988
    %v3994 = vadd.f32 %v3993, %v3991
    %v3995 = vrot.slane %v3994, 4
    %v3996 = vadd.f32 %v3994, %v3995
    %v3997 = vrot.slane %v3996, 2
    %v3998 = vadd.f32 %v3996, %v3997
    %v3999 = vrot.slane %v3998, 1
    %v4000 = vadd.f32 %v3998, %v3999
    %v4001 = vmul.f32 %v4000, 0.001953125
    %v4002 = vmul.f32 %v3342, %v3342
    %v4003 = vmul.f32 %v3343, %v3343
    %v4004 = vmul.f32 %v3344, %v3344
    %v4005 = vmul.f32 %v3345, %v3345
    %v4006 = vsel %vm3422, %v4002, 0.0
    %4007 = vadd.xlane.f32.xlu0 %v4006
    %v4008 = vpop.xlane.xlu0 %4007
    %v4009 = vsel %vm3422, %v4003, 0.0
    %4010 = vadd.xlane.f32.xlu0 %v4009
    %v4011 = vpop.xlane.xlu0 %4010
    %v4012 = vsel %vm3422, %v4004, 0.0
    %4013 = vadd.xlane.f32.xlu0 %v4012
    %v4014 = vpop.xlane.xlu0 %4013
    %v4015 = vsel %vm3422, %v4005, 0.0
    %4016 = vadd.xlane.f32.xlu0 %v4015
    %v4017 = vpop.xlane.xlu0 %4016
    %v4018 = vadd.f32 %v4008, %v4011
    %v4019 = vadd.f32 %v4018, %v4014
    %v4020 = vadd.f32 %v4019, %v4017
    %v4021 = vrot.slane %v4020, 4
    %v4022 = vadd.f32 %v4020, %v4021
    %v4023 = vrot.slane %v4022, 2
    %v4024 = vadd.f32 %v4022, %v4023
    %v4025 = vrot.slane %v4024, 1
    %v4026 = vadd.f32 %v4024, %v4025
    %v4027 = vmul.f32 %v4026, 0.001953125
    %v4028 = vmul.f32 %v4001, %v4001
    %v4029 = vsub.f32 %v4027, %v4028
    %v4030 = vmax.f32 %v4029, 0.0
    %v4031 = vadd.f32 %v4030, 1e-05
    %v4032 = vrsqrt.pop %v4031
    %v4033 = vstv %s3978
    %v4034 = vmul.f32 %v4033, %v4032
    %v4035 = vmul.f32 %v4001, %v4034
    %v4036 = vstv %s3979
    %v4037 = vsub.f32 %v4036, %v4035
    %v4038 = vmul.f32 %v3342, %v4034
    %v4039 = vmul.f32 %v3343, %v4034
    %v4040 = vmul.f32 %v3344, %v4034
    %v4041 = vmul.f32 %v3345, %v4034
    %v4042 = vadd.f32 %v4038, %v4037
    %v4043 = vadd.f32 %v4039, %v4037
    %v4044 = vadd.f32 %v4040, %v4037
    %v4045 = vadd.f32 %v4041, %v4037
    %v4046 = vmax.f32 %v4042, 0.0
    %v4047 = vmax.f32 %v4043, 0.0
    %v4048 = vmax.f32 %v4044, 0.0
    %v4049 = vmax.f32 %v4045, 0.0
    %4054 = vrot.lane.b32.xlu0 %v4046, 1
    %v4055 = vpop.permute.xlu0 %4054
    %4056 = vrot.lane.b32.xlu0 %v4047, 1
    %v4057 = vpop.permute.xlu0 %4056
    %4058 = vrot.lane.b32.xlu0 %v4048, 1
    %v4059 = vpop.permute.xlu0 %4058
    %4060 = vrot.lane.b32.xlu0 %v4049, 1
    %v4061 = vpop.permute.xlu0 %4060
    %s4066 = scalar_lea.vmem [#allocation3], 144
    %4067 = vst.msk [vmem:[%s4066 + $0x1] sm:$0xff] %vm216, %v4055
    %4068 = vst.msk [vmem:[%s4066 + $0x9] sm:$0xff] %vm216, %v4057
    %4069 = vst.msk [vmem:[%s4066 + $0xc1] sm:$0xff] %vm216, %v4059
    %4070 = vst.msk [vmem:[%s4066 + $0xc9] sm:$0xff] %vm216, %v4061
    %s4071 = sld [smem:[#allocation10 + $0x7]]
    %s4072 = sld [smem:[#allocation11 + $0x7]]
    %v4073 = vsel %vm3422, %v3368, 0.0
    %4074 = vadd.xlane.f32.xlu0 %v4073
    %v4075 = vpop.xlane.xlu0 %4074
    %v4076 = vsel %vm3422, %v3369, 0.0
    %4077 = vadd.xlane.f32.xlu0 %v4076
    %v4078 = vpop.xlane.xlu0 %4077
    %v4079 = vsel %vm3422, %v3370, 0.0
    %4080 = vadd.xlane.f32.xlu0 %v4079
    %v4081 = vpop.xlane.xlu0 %4080
    %v4082 = vsel %vm3422, %v3371, 0.0
    %4083 = vadd.xlane.f32.xlu0 %v4082
    %v4084 = vpop.xlane.xlu0 %4083
    %v4085 = vadd.f32 %v4075, %v4078
    %v4086 = vadd.f32 %v4085, %v4081
    %v4087 = vadd.f32 %v4086, %v4084
    %v4088 = vrot.slane %v4087, 4
    %v4089 = vadd.f32 %v4087, %v4088
    %v4090 = vrot.slane %v4089, 2
    %v4091 = vadd.f32 %v4089, %v4090
    %v4092 = vrot.slane %v4091, 1
    %v4093 = vadd.f32 %v4091, %v4092
    %v4094 = vmul.f32 %v4093, 0.001953125
    %v4095 = vmul.f32 %v3368, %v3368
    %v4096 = vmul.f32 %v3369, %v3369
    %v4097 = vmul.f32 %v3370, %v3370
    %v4098 = vmul.f32 %v3371, %v3371
    %v4099 = vsel %vm3422, %v4095, 0.0
    %4100 = vadd.xlane.f32.xlu0 %v4099
    %v4101 = vpop.xlane.xlu0 %4100
    %v4102 = vsel %vm3422, %v4096, 0.0
    %4103 = vadd.xlane.f32.xlu0 %v4102
    %v4104 = vpop.xlane.xlu0 %4103
    %v4105 = vsel %vm3422, %v4097, 0.0
    %4106 = vadd.xlane.f32.xlu0 %v4105
    %v4107 = vpop.xlane.xlu0 %4106
    %v4108 = vsel %vm3422, %v4098, 0.0
    %4109 = vadd.xlane.f32.xlu0 %v4108
    %v4110 = vpop.xlane.xlu0 %4109
    %v4111 = vadd.f32 %v4101, %v4104
    %v4112 = vadd.f32 %v4111, %v4107
    %v4113 = vadd.f32 %v4112, %v4110
    %v4114 = vrot.slane %v4113, 4
    %v4115 = vadd.f32 %v4113, %v4114
    %v4116 = vrot.slane %v4115, 2
    %v4117 = vadd.f32 %v4115, %v4116
    %v4118 = vrot.slane %v4117, 1
    %v4119 = vadd.f32 %v4117, %v4118
    %v4120 = vmul.f32 %v4119, 0.001953125
    %v4121 = vmul.f32 %v4094, %v4094
    %v4122 = vsub.f32 %v4120, %v4121
    %v4123 = vmax.f32 %v4122, 0.0
    %v4124 = vadd.f32 %v4123, 1e-05
    %v4125 = vrsqrt.pop %v4124
    %v4126 = vstv %s4071
    %v4127 = vmul.f32 %v4126, %v4125
    %v4128 = vmul.f32 %v4094, %v4127
    %v4129 = vstv %s4072
    %v4130 = vsub.f32 %v4129, %v4128
    %v4131 = vmul.f32 %v3368, %v4127
    %v4132 = vmul.f32 %v3369, %v4127
    %v4133 = vmul.f32 %v3370, %v4127
    %v4134 = vmul.f32 %v3371, %v4127
    %v4135 = vadd.f32 %v4131, %v4130
    %v4136 = vadd.f32 %v4132, %v4130
    %v4137 = vadd.f32 %v4133, %v4130
    %v4138 = vadd.f32 %v4134, %v4130
    %v4139 = vmax.f32 %v4135, 0.0
    %v4140 = vmax.f32 %v4136, 0.0
    %v4141 = vmax.f32 %v4137, 0.0
    %v4142 = vmax.f32 %v4138, 0.0
    %4147 = vrot.lane.b32.xlu0 %v4139, 1
    %v4148 = vpop.permute.xlu0 %4147
    %4149 = vrot.lane.b32.xlu0 %v4140, 1
    %v4150 = vpop.permute.xlu0 %4149
    %4151 = vrot.lane.b32.xlu0 %v4141, 1
    %v4152 = vpop.permute.xlu0 %4151
    %4153 = vrot.lane.b32.xlu0 %v4142, 1
    %v4154 = vpop.permute.xlu0 %4153
    %s4159 = scalar_lea.vmem [#allocation3], 168
    %4160 = vst.msk [vmem:[%s4159 + $0x1] sm:$0xff] %vm216, %v4148
    %4161 = vst.msk [vmem:[%s4159 + $0x9] sm:$0xff] %vm216, %v4150
    %4162 = vst.msk [vmem:[%s4159 + $0xc1] sm:$0xff] %vm216, %v4152
    %4163 = vst.msk [vmem:[%s4159 + $0xc9] sm:$0xff] %vm216, %v4154
    %v4164 = vld [vmem:[#allocation3] sm:$0xff]
    %v4165 = vld [vmem:[#allocation3 + $0x8] sm:$0xff]
    %v4166 = vld [vmem:[#allocation3 + $0xc0] sm:$0xff]
    %v4167 = vld [vmem:[#allocation3 + $0xc8] sm:$0xff]
    %s4168 = sld [smem:[#allocation13]]
    %v4169 = vstv %s4168
    %v4170 = vmul.f32 %v4164, %v4169
    %v4171 = vmul.f32 %v4165, %v4169
    %v4172 = vmul.f32 %v4166, %v4169
    %v4173 = vmul.f32 %v4167, %v4169
    %s4174 = sld [smem:[#allocation13 + $0x1]]
    %v4175 = vstv %s4174
    %v4176 = vmul.f32 %v4164, %v4175
    %v4177 = vmul.f32 %v4165, %v4175
    %v4178 = vmul.f32 %v4166, %v4175
    %v4179 = vmul.f32 %v4167, %v4175
    %s4180 = sld [smem:[#allocation13 + $0x2]]
    %v4181 = vstv %s4180
    %v4182 = vmul.f32 %v4164, %v4181
    %v4183 = vmul.f32 %v4165, %v4181
    %v4184 = vmul.f32 %v4166, %v4181
    %v4185 = vmul.f32 %v4167, %v4181
    %s4186 = sld [smem:[#allocation13 + $0x3]]
    %v4187 = vstv %s4186
    %v4188 = vmul.f32 %v4164, %v4187
    %v4189 = vmul.f32 %v4165, %v4187
    %v4190 = vmul.f32 %v4166, %v4187
    %v4191 = vmul.f32 %v4167, %v4187
    %v4192 = vld [vmem:[%s3601] sm:$0xff]
    %v4193 = vld [vmem:[%s3601 + $0x8] sm:$0xff]
    %v4194 = vld [vmem:[%s3601 + $0xc0] sm:$0xff]
    %v4195 = vld [vmem:[%s3601 + $0xc8] sm:$0xff]
    %s4196 = sld [smem:[#allocation13 + $0x4]]
    %v4197 = vstv %s4196
    %v4198 = vmul.f32 %v4192, %v4197
    %v4199 = vmul.f32 %v4193, %v4197
    %v4200 = vmul.f32 %v4194, %v4197
    %v4201 = vmul.f32 %v4195, %v4197
    %v4202 = vadd.f32 %v4170, %v4198
    %v4203 = vadd.f32 %v4171, %v4199
    %v4204 = vadd.f32 %v4172, %v4200
    %v4205 = vadd.f32 %v4173, %v4201
    %s4206 = sld [smem:[#allocation13 + $0x5]]
    %v4207 = vstv %s4206
    %v4208 = vmul.f32 %v4192, %v4207
    %v4209 = vmul.f32 %v4193, %v4207
    %v4210 = vmul.f32 %v4194, %v4207
    %v4211 = vmul.f32 %v4195, %v4207
    %v4212 = vadd.f32 %v4176, %v4208
    %v4213 = vadd.f32 %v4177, %v4209
    %v4214 = vadd.f32 %v4178, %v4210
    %v4215 = vadd.f32 %v4179, %v4211
    %s4216 = sld [smem:[#allocation13 + $0x6]]
    %v4217 = vstv %s4216
    %v4218 = vmul.f32 %v4192, %v4217
    %v4219 = vmul.f32 %v4193, %v4217
    %v4220 = vmul.f32 %v4194, %v4217
    %v4221 = vmul.f32 %v4195, %v4217
    %v4222 = vadd.f32 %v4182, %v4218
    %v4223 = vadd.f32 %v4183, %v4219
    %v4224 = vadd.f32 %v4184, %v4220
    %v4225 = vadd.f32 %v4185, %v4221
    %s4226 = sld [smem:[#allocation13 + $0x7]]
    %v4227 = vstv %s4226
    %v4228 = vmul.f32 %v4192, %v4227
    %v4229 = vmul.f32 %v4193, %v4227
    %v4230 = vmul.f32 %v4194, %v4227
    %v4231 = vmul.f32 %v4195, %v4227
    %v4232 = vadd.f32 %v4188, %v4228
    %v4233 = vadd.f32 %v4189, %v4229
    %v4234 = vadd.f32 %v4190, %v4230
    %v4235 = vadd.f32 %v4191, %v4231
    %v4236 = vld [vmem:[%s3694] sm:$0xff]
    %v4237 = vld [vmem:[%s3694 + $0x8] sm:$0xff]
    %v4238 = vld [vmem:[%s3694 + $0xc0] sm:$0xff]
    %v4239 = vld [vmem:[%s3694 + $0xc8] sm:$0xff]
    %s4240 = sld [smem:[#allocation13 + $0x8]]
    %v4241 = vstv %s4240
    %v4242 = vmul.f32 %v4236, %v4241
    %v4243 = vmul.f32 %v4237, %v4241
    %v4244 = vmul.f32 %v4238, %v4241
    %v4245 = vmul.f32 %v4239, %v4241
    %v4246 = vadd.f32 %v4202, %v4242
    %v4247 = vadd.f32 %v4203, %v4243
    %v4248 = vadd.f32 %v4204, %v4244
    %v4249 = vadd.f32 %v4205, %v4245
    %s4250 = sld [smem:[#allocation13 + $0x9]]
    %v4251 = vstv %s4250
    %v4252 = vmul.f32 %v4236, %v4251
    %v4253 = vmul.f32 %v4237, %v4251
    %v4254 = vmul.f32 %v4238, %v4251
    %v4255 = vmul.f32 %v4239, %v4251
    %v4256 = vadd.f32 %v4212, %v4252
    %v4257 = vadd.f32 %v4213, %v4253
    %v4258 = vadd.f32 %v4214, %v4254
    %v4259 = vadd.f32 %v4215, %v4255
    %s4260 = sld [smem:[#allocation13 + $0xa]]
    %v4261 = vstv %s4260
    %v4262 = vmul.f32 %v4236, %v4261
    %v4263 = vmul.f32 %v4237, %v4261
    %v4264 = vmul.f32 %v4238, %v4261
    %v4265 = vmul.f32 %v4239, %v4261
    %v4266 = vadd.f32 %v4222, %v4262
    %v4267 = vadd.f32 %v4223, %v4263
    %v4268 = vadd.f32 %v4224, %v4264
    %v4269 = vadd.f32 %v4225, %v4265
    %s4270 = sld [smem:[#allocation13 + $0xb]]
    %v4271 = vstv %s4270
    %v4272 = vmul.f32 %v4236, %v4271
    %v4273 = vmul.f32 %v4237, %v4271
    %v4274 = vmul.f32 %v4238, %v4271
    %v4275 = vmul.f32 %v4239, %v4271
    %v4276 = vadd.f32 %v4232, %v4272
    %v4277 = vadd.f32 %v4233, %v4273
    %v4278 = vadd.f32 %v4234, %v4274
    %v4279 = vadd.f32 %v4235, %v4275
    %v4280 = vld [vmem:[%s3787] sm:$0xff]
    %v4281 = vld [vmem:[%s3787 + $0x8] sm:$0xff]
    %v4282 = vld [vmem:[%s3787 + $0xc0] sm:$0xff]
    %v4283 = vld [vmem:[%s3787 + $0xc8] sm:$0xff]
    %s4284 = sld [smem:[#allocation13 + $0xc]]
    %v4285 = vstv %s4284
    %v4286 = vmul.f32 %v4280, %v4285
    %v4287 = vmul.f32 %v4281, %v4285
    %v4288 = vmul.f32 %v4282, %v4285
    %v4289 = vmul.f32 %v4283, %v4285
    %v4290 = vadd.f32 %v4246, %v4286
    %v4291 = vadd.f32 %v4247, %v4287
    %v4292 = vadd.f32 %v4248, %v4288
    %v4293 = vadd.f32 %v4249, %v4289
    %s4294 = sld [smem:[#allocation13 + $0xd]]
    %v4295 = vstv %s4294
    %v4296 = vmul.f32 %v4280, %v4295
    %v4297 = vmul.f32 %v4281, %v4295
    %v4298 = vmul.f32 %v4282, %v4295
    %v4299 = vmul.f32 %v4283, %v4295
    %v4300 = vadd.f32 %v4256, %v4296
    %v4301 = vadd.f32 %v4257, %v4297
    %v4302 = vadd.f32 %v4258, %v4298
    %v4303 = vadd.f32 %v4259, %v4299
    %s4304 = sld [smem:[#allocation13 + $0xe]]
    %v4305 = vstv %s4304
    %v4306 = vmul.f32 %v4280, %v4305
    %v4307 = vmul.f32 %v4281, %v4305
    %v4308 = vmul.f32 %v4282, %v4305
    %v4309 = vmul.f32 %v4283, %v4305
    %v4310 = vadd.f32 %v4266, %v4306
    %v4311 = vadd.f32 %v4267, %v4307
    %v4312 = vadd.f32 %v4268, %v4308
    %v4313 = vadd.f32 %v4269, %v4309
    %s4314 = sld [smem:[#allocation13 + $0xf]]
    %v4315 = vstv %s4314
    %v4316 = vmul.f32 %v4280, %v4315
    %v4317 = vmul.f32 %v4281, %v4315
    %v4318 = vmul.f32 %v4282, %v4315
    %v4319 = vmul.f32 %v4283, %v4315
    %v4320 = vadd.f32 %v4276, %v4316
    %v4321 = vadd.f32 %v4277, %v4317
    %v4322 = vadd.f32 %v4278, %v4318
    %v4323 = vadd.f32 %v4279, %v4319
    %v4324 = vld [vmem:[%s3880] sm:$0xff]
    %v4325 = vld [vmem:[%s3880 + $0x8] sm:$0xff]
    %v4326 = vld [vmem:[%s3880 + $0xc0] sm:$0xff]
    %v4327 = vld [vmem:[%s3880 + $0xc8] sm:$0xff]
    %s4328 = sld [smem:[#allocation13 + $0x10]]
    %v4329 = vstv %s4328
    %v4330 = vmul.f32 %v4324, %v4329
    %v4331 = vmul.f32 %v4325, %v4329
    %v4332 = vmul.f32 %v4326, %v4329
    %v4333 = vmul.f32 %v4327, %v4329
    %v4334 = vadd.f32 %v4290, %v4330
    %v4335 = vadd.f32 %v4291, %v4331
    %v4336 = vadd.f32 %v4292, %v4332
    %v4337 = vadd.f32 %v4293, %v4333
    %s4338 = sld [smem:[#allocation13 + $0x11]]
    %v4339 = vstv %s4338
    %v4340 = vmul.f32 %v4324, %v4339
    %v4341 = vmul.f32 %v4325, %v4339
    %v4342 = vmul.f32 %v4326, %v4339
    %v4343 = vmul.f32 %v4327, %v4339
    %v4344 = vadd.f32 %v4300, %v4340
    %v4345 = vadd.f32 %v4301, %v4341
    %v4346 = vadd.f32 %v4302, %v4342
    %v4347 = vadd.f32 %v4303, %v4343
    %s4348 = sld [smem:[#allocation13 + $0x12]]
    %v4349 = vstv %s4348
    %v4350 = vmul.f32 %v4324, %v4349
    %v4351 = vmul.f32 %v4325, %v4349
    %v4352 = vmul.f32 %v4326, %v4349
    %v4353 = vmul.f32 %v4327, %v4349
    %v4354 = vadd.f32 %v4310, %v4350
    %v4355 = vadd.f32 %v4311, %v4351
    %v4356 = vadd.f32 %v4312, %v4352
    %v4357 = vadd.f32 %v4313, %v4353
    %s4358 = sld [smem:[#allocation13 + $0x13]]
    %v4359 = vstv %s4358
    %v4360 = vmul.f32 %v4324, %v4359
    %v4361 = vmul.f32 %v4325, %v4359
    %v4362 = vmul.f32 %v4326, %v4359
    %v4363 = vmul.f32 %v4327, %v4359
    %v4364 = vadd.f32 %v4320, %v4360
    %v4365 = vadd.f32 %v4321, %v4361
    %v4366 = vadd.f32 %v4322, %v4362
    %v4367 = vadd.f32 %v4323, %v4363
    %v4368 = vld [vmem:[%s3973] sm:$0xff]
    %v4369 = vld [vmem:[%s3973 + $0x8] sm:$0xff]
    %v4370 = vld [vmem:[%s3973 + $0xc0] sm:$0xff]
    %v4371 = vld [vmem:[%s3973 + $0xc8] sm:$0xff]
    %s4372 = sld [smem:[#allocation13 + $0x14]]
    %v4373 = vstv %s4372
    %v4374 = vmul.f32 %v4368, %v4373
    %v4375 = vmul.f32 %v4369, %v4373
    %v4376 = vmul.f32 %v4370, %v4373
    %v4377 = vmul.f32 %v4371, %v4373
    %v4378 = vadd.f32 %v4334, %v4374
    %v4379 = vadd.f32 %v4335, %v4375
    %v4380 = vadd.f32 %v4336, %v4376
    %v4381 = vadd.f32 %v4337, %v4377
    %s4382 = sld [smem:[#allocation13 + $0x15]]
    %v4383 = vstv %s4382
    %v4384 = vmul.f32 %v4368, %v4383
    %v4385 = vmul.f32 %v4369, %v4383
    %v4386 = vmul.f32 %v4370, %v4383
    %v4387 = vmul.f32 %v4371, %v4383
    %v4388 = vadd.f32 %v4344, %v4384
    %v4389 = vadd.f32 %v4345, %v4385
    %v4390 = vadd.f32 %v4346, %v4386
    %v4391 = vadd.f32 %v4347, %v4387
    %s4392 = sld [smem:[#allocation13 + $0x16]]
    %v4393 = vstv %s4392
    %v4394 = vmul.f32 %v4368, %v4393
    %v4395 = vmul.f32 %v4369, %v4393
    %v4396 = vmul.f32 %v4370, %v4393
    %v4397 = vmul.f32 %v4371, %v4393
    %v4398 = vadd.f32 %v4354, %v4394
    %v4399 = vadd.f32 %v4355, %v4395
    %v4400 = vadd.f32 %v4356, %v4396
    %v4401 = vadd.f32 %v4357, %v4397
    %s4402 = sld [smem:[#allocation13 + $0x17]]
    %v4403 = vstv %s4402
    %v4404 = vmul.f32 %v4368, %v4403
    %v4405 = vmul.f32 %v4369, %v4403
    %v4406 = vmul.f32 %v4370, %v4403
    %v4407 = vmul.f32 %v4371, %v4403
    %v4408 = vadd.f32 %v4364, %v4404
    %v4409 = vadd.f32 %v4365, %v4405
    %v4410 = vadd.f32 %v4366, %v4406
    %v4411 = vadd.f32 %v4367, %v4407
    %v4412 = vld [vmem:[%s4066] sm:$0xff]
    %v4413 = vld [vmem:[%s4066 + $0x8] sm:$0xff]
    %v4414 = vld [vmem:[%s4066 + $0xc0] sm:$0xff]
    %v4415 = vld [vmem:[%s4066 + $0xc8] sm:$0xff]
    %s4416 = sld [smem:[#allocation13 + $0x18]]
    %v4417 = vstv %s4416
    %v4418 = vmul.f32 %v4412, %v4417
    %v4419 = vmul.f32 %v4413, %v4417
    %v4420 = vmul.f32 %v4414, %v4417
    %v4421 = vmul.f32 %v4415, %v4417
    %v4422 = vadd.f32 %v4378, %v4418
    %v4423 = vadd.f32 %v4379, %v4419
    %v4424 = vadd.f32 %v4380, %v4420
    %v4425 = vadd.f32 %v4381, %v4421
    %s4426 = sld [smem:[#allocation13 + $0x19]]
    %v4427 = vstv %s4426
    %v4428 = vmul.f32 %v4412, %v4427
    %v4429 = vmul.f32 %v4413, %v4427
    %v4430 = vmul.f32 %v4414, %v4427
    %v4431 = vmul.f32 %v4415, %v4427
    %v4432 = vadd.f32 %v4388, %v4428
    %v4433 = vadd.f32 %v4389, %v4429
    %v4434 = vadd.f32 %v4390, %v4430
    %v4435 = vadd.f32 %v4391, %v4431
    %s4436 = sld [smem:[#allocation13 + $0x1a]]
    %v4437 = vstv %s4436
    %v4438 = vmul.f32 %v4412, %v4437
    %v4439 = vmul.f32 %v4413, %v4437
    %v4440 = vmul.f32 %v4414, %v4437
    %v4441 = vmul.f32 %v4415, %v4437
    %v4442 = vadd.f32 %v4398, %v4438
    %v4443 = vadd.f32 %v4399, %v4439
    %v4444 = vadd.f32 %v4400, %v4440
    %v4445 = vadd.f32 %v4401, %v4441
    %s4446 = sld [smem:[#allocation13 + $0x1b]]
    %v4447 = vstv %s4446
    %v4448 = vmul.f32 %v4412, %v4447
    %v4449 = vmul.f32 %v4413, %v4447
    %v4450 = vmul.f32 %v4414, %v4447
    %v4451 = vmul.f32 %v4415, %v4447
    %v4452 = vadd.f32 %v4408, %v4448
    %v4453 = vadd.f32 %v4409, %v4449
    %v4454 = vadd.f32 %v4410, %v4450
    %v4455 = vadd.f32 %v4411, %v4451
    %v4456 = vld [vmem:[%s4159] sm:$0xff]
    %v4457 = vld [vmem:[%s4159 + $0x8] sm:$0xff]
    %v4458 = vld [vmem:[%s4159 + $0xc0] sm:$0xff]
    %v4459 = vld [vmem:[%s4159 + $0xc8] sm:$0xff]
    %s4460 = sld [smem:[#allocation13 + $0x1c]]
    %v4461 = vstv %s4460
    %v4462 = vmul.f32 %v4456, %v4461
    %v4463 = vmul.f32 %v4457, %v4461
    %v4464 = vmul.f32 %v4458, %v4461
    %v4465 = vmul.f32 %v4459, %v4461
    %v4466 = vadd.f32 %v4422, %v4462
    %v4467 = vadd.f32 %v4423, %v4463
    %v4468 = vadd.f32 %v4424, %v4464
    %v4469 = vadd.f32 %v4425, %v4465
    %s4470 = sld [smem:[#allocation13 + $0x1d]]
    %v4471 = vstv %s4470
    %v4472 = vmul.f32 %v4456, %v4471
    %v4473 = vmul.f32 %v4457, %v4471
    %v4474 = vmul.f32 %v4458, %v4471
    %v4475 = vmul.f32 %v4459, %v4471
    %v4476 = vadd.f32 %v4432, %v4472
    %v4477 = vadd.f32 %v4433, %v4473
    %v4478 = vadd.f32 %v4434, %v4474
    %v4479 = vadd.f32 %v4435, %v4475
    %s4480 = sld [smem:[#allocation13 + $0x1e]]
    %v4481 = vstv %s4480
    %v4482 = vmul.f32 %v4456, %v4481
    %v4483 = vmul.f32 %v4457, %v4481
    %v4484 = vmul.f32 %v4458, %v4481
    %v4485 = vmul.f32 %v4459, %v4481
    %v4486 = vadd.f32 %v4442, %v4482
    %v4487 = vadd.f32 %v4443, %v4483
    %v4488 = vadd.f32 %v4444, %v4484
    %v4489 = vadd.f32 %v4445, %v4485
    %s4490 = sld [smem:[#allocation13 + $0x1f]]
    %v4491 = vstv %s4490
    %v4492 = vmul.f32 %v4456, %v4491
    %v4493 = vmul.f32 %v4457, %v4491
    %v4494 = vmul.f32 %v4458, %v4491
    %v4495 = vmul.f32 %v4459, %v4491
    %v4496 = vadd.f32 %v4452, %v4492
    %v4497 = vadd.f32 %v4453, %v4493
    %v4498 = vadd.f32 %v4454, %v4494
    %v4499 = vadd.f32 %v4455, %v4495
    %s4500 = sld [smem:[#allocation13 + $0x20]]
    %v4501 = vstv %s4500
    %v4502 = vmul.f32 %v4164, %v4501
    %v4503 = vmul.f32 %v4165, %v4501
    %v4504 = vmul.f32 %v4166, %v4501
    %v4505 = vmul.f32 %v4167, %v4501
    %4510 = vrot.lane.b32.xlu0 %v4502, 127
    %v4511 = vpop.permute.xlu0 %4510
    %4512 = vrot.lane.b32.xlu0 %v4503, 127
    %v4513 = vpop.permute.xlu0 %4512
    %4514 = vrot.lane.b32.xlu0 %v4504, 127
    %v4515 = vpop.permute.xlu0 %4514
    %4516 = vrot.lane.b32.xlu0 %v4505, 127
    %v4517 = vpop.permute.xlu0 %4516
    %v4522 = vadd.f32 %v4466, %v4511
    %v4523 = vadd.f32 %v4467, %v4513
    %v4524 = vadd.f32 %v4468, %v4515
    %v4525 = vadd.f32 %v4469, %v4517
    %s4526 = sld [smem:[#allocation13 + $0x21]]
    %v4527 = vstv %s4526
    %v4528 = vmul.f32 %v4164, %v4527
    %v4529 = vmul.f32 %v4165, %v4527
    %v4530 = vmul.f32 %v4166, %v4527
    %v4531 = vmul.f32 %v4167, %v4527
    %4536 = vrot.lane.b32.xlu0 %v4528, 127
    %v4537 = vpop.permute.xlu0 %4536
    %4538 = vrot.lane.b32.xlu0 %v4529, 127
    %v4539 = vpop.permute.xlu0 %4538
    %4540 = vrot.lane.b32.xlu0 %v4530, 127
    %v4541 = vpop.permute.xlu0 %4540
    %4542 = vrot.lane.b32.xlu0 %v4531, 127
    %v4543 = vpop.permute.xlu0 %4542
    %v4548 = vadd.f32 %v4476, %v4537
    %v4549 = vadd.f32 %v4477, %v4539
    %v4550 = vadd.f32 %v4478, %v4541
    %v4551 = vadd.f32 %v4479, %v4543
    %s4552 = sld [smem:[#allocation13 + $0x22]]
    %v4553 = vstv %s4552
    %v4554 = vmul.f32 %v4164, %v4553
    %v4555 = vmul.f32 %v4165, %v4553
    %v4556 = vmul.f32 %v4166, %v4553
    %v4557 = vmul.f32 %v4167, %v4553
    %4562 = vrot.lane.b32.xlu0 %v4554, 127
    %v4563 = vpop.permute.xlu0 %4562
    %4564 = vrot.lane.b32.xlu0 %v4555, 127
    %v4565 = vpop.permute.xlu0 %4564
    %4566 = vrot.lane.b32.xlu0 %v4556, 127
    %v4567 = vpop.permute.xlu0 %4566
    %4568 = vrot.lane.b32.xlu0 %v4557, 127
    %v4569 = vpop.permute.xlu0 %4568
    %v4574 = vadd.f32 %v4486, %v4563
    %v4575 = vadd.f32 %v4487, %v4565
    %v4576 = vadd.f32 %v4488, %v4567
    %v4577 = vadd.f32 %v4489, %v4569
    %s4578 = sld [smem:[#allocation13 + $0x23]]
    %v4579 = vstv %s4578
    %v4580 = vmul.f32 %v4164, %v4579
    %v4581 = vmul.f32 %v4165, %v4579
    %v4582 = vmul.f32 %v4166, %v4579
    %v4583 = vmul.f32 %v4167, %v4579
    %4588 = vrot.lane.b32.xlu0 %v4580, 127
    %v4589 = vpop.permute.xlu0 %4588
    %4590 = vrot.lane.b32.xlu0 %v4581, 127
    %v4591 = vpop.permute.xlu0 %4590
    %4592 = vrot.lane.b32.xlu0 %v4582, 127
    %v4593 = vpop.permute.xlu0 %4592
    %4594 = vrot.lane.b32.xlu0 %v4583, 127
    %v4595 = vpop.permute.xlu0 %4594
    %v4600 = vadd.f32 %v4496, %v4589
    %v4601 = vadd.f32 %v4497, %v4591
    %v4602 = vadd.f32 %v4498, %v4593
    %v4603 = vadd.f32 %v4499, %v4595
    %s4604 = sld [smem:[#allocation13 + $0x24]]
    %v4605 = vstv %s4604
    %v4606 = vmul.f32 %v4192, %v4605
    %v4607 = vmul.f32 %v4193, %v4605
    %v4608 = vmul.f32 %v4194, %v4605
    %v4609 = vmul.f32 %v4195, %v4605
    %4614 = vrot.lane.b32.xlu0 %v4606, 127
    %v4615 = vpop.permute.xlu0 %4614
    %4616 = vrot.lane.b32.xlu0 %v4607, 127
    %v4617 = vpop.permute.xlu0 %4616
    %4618 = vrot.lane.b32.xlu0 %v4608, 127
    %v4619 = vpop.permute.xlu0 %4618
    %4620 = vrot.lane.b32.xlu0 %v4609, 127
    %v4621 = vpop.permute.xlu0 %4620
    %v4626 = vadd.f32 %v4522, %v4615
    %v4627 = vadd.f32 %v4523, %v4617
    %v4628 = vadd.f32 %v4524, %v4619
    %v4629 = vadd.f32 %v4525, %v4621
    %s4630 = sld [smem:[#allocation13 + $0x25]]
    %v4631 = vstv %s4630
    %v4632 = vmul.f32 %v4192, %v4631
    %v4633 = vmul.f32 %v4193, %v4631
    %v4634 = vmul.f32 %v4194, %v4631
    %v4635 = vmul.f32 %v4195, %v4631
    %4640 = vrot.lane.b32.xlu0 %v4632, 127
    %v4641 = vpop.permute.xlu0 %4640
    %4642 = vrot.lane.b32.xlu0 %v4633, 127
    %v4643 = vpop.permute.xlu0 %4642
    %4644 = vrot.lane.b32.xlu0 %v4634, 127
    %v4645 = vpop.permute.xlu0 %4644
    %4646 = vrot.lane.b32.xlu0 %v4635, 127
    %v4647 = vpop.permute.xlu0 %4646
    %v4652 = vadd.f32 %v4548, %v4641
    %v4653 = vadd.f32 %v4549, %v4643
    %v4654 = vadd.f32 %v4550, %v4645
    %v4655 = vadd.f32 %v4551, %v4647
    %s4656 = sld [smem:[#allocation13 + $0x26]]
    %v4657 = vstv %s4656
    %v4658 = vmul.f32 %v4192, %v4657
    %v4659 = vmul.f32 %v4193, %v4657
    %v4660 = vmul.f32 %v4194, %v4657
    %v4661 = vmul.f32 %v4195, %v4657
    %4666 = vrot.lane.b32.xlu0 %v4658, 127
    %v4667 = vpop.permute.xlu0 %4666
    %4668 = vrot.lane.b32.xlu0 %v4659, 127
    %v4669 = vpop.permute.xlu0 %4668
    %4670 = vrot.lane.b32.xlu0 %v4660, 127
    %v4671 = vpop.permute.xlu0 %4670
    %4672 = vrot.lane.b32.xlu0 %v4661, 127
    %v4673 = vpop.permute.xlu0 %4672
    %v4678 = vadd.f32 %v4574, %v4667
    %v4679 = vadd.f32 %v4575, %v4669
    %v4680 = vadd.f32 %v4576, %v4671
    %v4681 = vadd.f32 %v4577, %v4673
    %s4682 = sld [smem:[#allocation13 + $0x27]]
    %v4683 = vstv %s4682
    %v4684 = vmul.f32 %v4192, %v4683
    %v4685 = vmul.f32 %v4193, %v4683
    %v4686 = vmul.f32 %v4194, %v4683
    %v4687 = vmul.f32 %v4195, %v4683
    %4692 = vrot.lane.b32.xlu0 %v4684, 127
    %v4693 = vpop.permute.xlu0 %4692
    %4694 = vrot.lane.b32.xlu0 %v4685, 127
    %v4695 = vpop.permute.xlu0 %4694
    %4696 = vrot.lane.b32.xlu0 %v4686, 127
    %v4697 = vpop.permute.xlu0 %4696
    %4698 = vrot.lane.b32.xlu0 %v4687, 127
    %v4699 = vpop.permute.xlu0 %4698
    %v4704 = vadd.f32 %v4600, %v4693
    %v4705 = vadd.f32 %v4601, %v4695
    %v4706 = vadd.f32 %v4602, %v4697
    %v4707 = vadd.f32 %v4603, %v4699
    %s4708 = sld [smem:[#allocation13 + $0x28]]
    %v4709 = vstv %s4708
    %v4710 = vmul.f32 %v4236, %v4709
    %v4711 = vmul.f32 %v4237, %v4709
    %v4712 = vmul.f32 %v4238, %v4709
    %v4713 = vmul.f32 %v4239, %v4709
    %4718 = vrot.lane.b32.xlu0 %v4710, 127
    %v4719 = vpop.permute.xlu0 %4718
    %4720 = vrot.lane.b32.xlu0 %v4711, 127
    %v4721 = vpop.permute.xlu0 %4720
    %4722 = vrot.lane.b32.xlu0 %v4712, 127
    %v4723 = vpop.permute.xlu0 %4722
    %4724 = vrot.lane.b32.xlu0 %v4713, 127
    %v4725 = vpop.permute.xlu0 %4724
    %v4730 = vadd.f32 %v4626, %v4719
    %v4731 = vadd.f32 %v4627, %v4721
    %v4732 = vadd.f32 %v4628, %v4723
    %v4733 = vadd.f32 %v4629, %v4725
    %s4734 = sld [smem:[#allocation13 + $0x29]]
    %v4735 = vstv %s4734
    %v4736 = vmul.f32 %v4236, %v4735
    %v4737 = vmul.f32 %v4237, %v4735
    %v4738 = vmul.f32 %v4238, %v4735
    %v4739 = vmul.f32 %v4239, %v4735
    %4744 = vrot.lane.b32.xlu0 %v4736, 127
    %v4745 = vpop.permute.xlu0 %4744
    %4746 = vrot.lane.b32.xlu0 %v4737, 127
    %v4747 = vpop.permute.xlu0 %4746
    %4748 = vrot.lane.b32.xlu0 %v4738, 127
    %v4749 = vpop.permute.xlu0 %4748
    %4750 = vrot.lane.b32.xlu0 %v4739, 127
    %v4751 = vpop.permute.xlu0 %4750
    %v4756 = vadd.f32 %v4652, %v4745
    %v4757 = vadd.f32 %v4653, %v4747
    %v4758 = vadd.f32 %v4654, %v4749
    %v4759 = vadd.f32 %v4655, %v4751
    %s4760 = sld [smem:[#allocation13 + $0x2a]]
    %v4761 = vstv %s4760
    %v4762 = vmul.f32 %v4236, %v4761
    %v4763 = vmul.f32 %v4237, %v4761
    %v4764 = vmul.f32 %v4238, %v4761
    %v4765 = vmul.f32 %v4239, %v4761
    %4770 = vrot.lane.b32.xlu0 %v4762, 127
    %v4771 = vpop.permute.xlu0 %4770
    %4772 = vrot.lane.b32.xlu0 %v4763, 127
    %v4773 = vpop.permute.xlu0 %4772
    %4774 = vrot.lane.b32.xlu0 %v4764, 127
    %v4775 = vpop.permute.xlu0 %4774
    %4776 = vrot.lane.b32.xlu0 %v4765, 127
    %v4777 = vpop.permute.xlu0 %4776
    %v4782 = vadd.f32 %v4678, %v4771
    %v4783 = vadd.f32 %v4679, %v4773
    %v4784 = vadd.f32 %v4680, %v4775
    %v4785 = vadd.f32 %v4681, %v4777
    %s4786 = sld [smem:[#allocation13 + $0x2b]]
    %v4787 = vstv %s4786
    %v4788 = vmul.f32 %v4236, %v4787
    %v4789 = vmul.f32 %v4237, %v4787
    %v4790 = vmul.f32 %v4238, %v4787
    %v4791 = vmul.f32 %v4239, %v4787
    %4796 = vrot.lane.b32.xlu0 %v4788, 127
    %v4797 = vpop.permute.xlu0 %4796
    %4798 = vrot.lane.b32.xlu0 %v4789, 127
    %v4799 = vpop.permute.xlu0 %4798
    %4800 = vrot.lane.b32.xlu0 %v4790, 127
    %v4801 = vpop.permute.xlu0 %4800
    %4802 = vrot.lane.b32.xlu0 %v4791, 127
    %v4803 = vpop.permute.xlu0 %4802
    %v4808 = vadd.f32 %v4704, %v4797
    %v4809 = vadd.f32 %v4705, %v4799
    %v4810 = vadd.f32 %v4706, %v4801
    %v4811 = vadd.f32 %v4707, %v4803
    %s4812 = sld [smem:[#allocation13 + $0x2c]]
    %v4813 = vstv %s4812
    %v4814 = vmul.f32 %v4280, %v4813
    %v4815 = vmul.f32 %v4281, %v4813
    %v4816 = vmul.f32 %v4282, %v4813
    %v4817 = vmul.f32 %v4283, %v4813
    %4822 = vrot.lane.b32.xlu0 %v4814, 127
    %v4823 = vpop.permute.xlu0 %4822
    %4824 = vrot.lane.b32.xlu0 %v4815, 127
    %v4825 = vpop.permute.xlu0 %4824
    %4826 = vrot.lane.b32.xlu0 %v4816, 127
    %v4827 = vpop.permute.xlu0 %4826
    %4828 = vrot.lane.b32.xlu0 %v4817, 127
    %v4829 = vpop.permute.xlu0 %4828
    %v4834 = vadd.f32 %v4730, %v4823
    %v4835 = vadd.f32 %v4731, %v4825
    %v4836 = vadd.f32 %v4732, %v4827
    %v4837 = vadd.f32 %v4733, %v4829
    %s4838 = sld [smem:[#allocation13 + $0x2d]]
    %v4839 = vstv %s4838
    %v4840 = vmul.f32 %v4280, %v4839
    %v4841 = vmul.f32 %v4281, %v4839
    %v4842 = vmul.f32 %v4282, %v4839
    %v4843 = vmul.f32 %v4283, %v4839
    %4848 = vrot.lane.b32.xlu0 %v4840, 127
    %v4849 = vpop.permute.xlu0 %4848
    %4850 = vrot.lane.b32.xlu0 %v4841, 127
    %v4851 = vpop.permute.xlu0 %4850
    %4852 = vrot.lane.b32.xlu0 %v4842, 127
    %v4853 = vpop.permute.xlu0 %4852
    %4854 = vrot.lane.b32.xlu0 %v4843, 127
    %v4855 = vpop.permute.xlu0 %4854
    %v4860 = vadd.f32 %v4756, %v4849
    %v4861 = vadd.f32 %v4757, %v4851
    %v4862 = vadd.f32 %v4758, %v4853
    %v4863 = vadd.f32 %v4759, %v4855
    %s4864 = sld [smem:[#allocation13 + $0x2e]]
    %v4865 = vstv %s4864
    %v4866 = vmul.f32 %v4280, %v4865
    %v4867 = vmul.f32 %v4281, %v4865
    %v4868 = vmul.f32 %v4282, %v4865
    %v4869 = vmul.f32 %v4283, %v4865
    %4874 = vrot.lane.b32.xlu0 %v4866, 127
    %v4875 = vpop.permute.xlu0 %4874
    %4876 = vrot.lane.b32.xlu0 %v4867, 127
    %v4877 = vpop.permute.xlu0 %4876
    %4878 = vrot.lane.b32.xlu0 %v4868, 127
    %v4879 = vpop.permute.xlu0 %4878
    %4880 = vrot.lane.b32.xlu0 %v4869, 127
    %v4881 = vpop.permute.xlu0 %4880
    %v4886 = vadd.f32 %v4782, %v4875
    %v4887 = vadd.f32 %v4783, %v4877
    %v4888 = vadd.f32 %v4784, %v4879
    %v4889 = vadd.f32 %v4785, %v4881
    %s4890 = sld [smem:[#allocation13 + $0x2f]]
    %v4891 = vstv %s4890
    %v4892 = vmul.f32 %v4280, %v4891
    %v4893 = vmul.f32 %v4281, %v4891
    %v4894 = vmul.f32 %v4282, %v4891
    %v4895 = vmul.f32 %v4283, %v4891
    %4900 = vrot.lane.b32.xlu0 %v4892, 127
    %v4901 = vpop.permute.xlu0 %4900
    %4902 = vrot.lane.b32.xlu0 %v4893, 127
    %v4903 = vpop.permute.xlu0 %4902
    %4904 = vrot.lane.b32.xlu0 %v4894, 127
    %v4905 = vpop.permute.xlu0 %4904
    %4906 = vrot.lane.b32.xlu0 %v4895, 127
    %v4907 = vpop.permute.xlu0 %4906
    %v4912 = vadd.f32 %v4808, %v4901
    %v4913 = vadd.f32 %v4809, %v4903
    %v4914 = vadd.f32 %v4810, %v4905
    %v4915 = vadd.f32 %v4811, %v4907
    %s4916 = sld [smem:[#allocation13 + $0x30]]
    %v4917 = vstv %s4916
    %v4918 = vmul.f32 %v4324, %v4917
    %v4919 = vmul.f32 %v4325, %v4917
    %v4920 = vmul.f32 %v4326, %v4917
    %v4921 = vmul.f32 %v4327, %v4917
    %4926 = vrot.lane.b32.xlu0 %v4918, 127
    %v4927 = vpop.permute.xlu0 %4926
    %4928 = vrot.lane.b32.xlu0 %v4919, 127
    %v4929 = vpop.permute.xlu0 %4928
    %4930 = vrot.lane.b32.xlu0 %v4920, 127
    %v4931 = vpop.permute.xlu0 %4930
    %4932 = vrot.lane.b32.xlu0 %v4921, 127
    %v4933 = vpop.permute.xlu0 %4932
    %v4938 = vadd.f32 %v4834, %v4927
    %v4939 = vadd.f32 %v4835, %v4929
    %v4940 = vadd.f32 %v4836, %v4931
    %v4941 = vadd.f32 %v4837, %v4933
    %s4942 = sld [smem:[#allocation13 + $0x31]]
    %v4943 = vstv %s4942
    %v4944 = vmul.f32 %v4324, %v4943
    %v4945 = vmul.f32 %v4325, %v4943
    %v4946 = vmul.f32 %v4326, %v4943
    %v4947 = vmul.f32 %v4327, %v4943
    %4952 = vrot.lane.b32.xlu0 %v4944, 127
    %v4953 = vpop.permute.xlu0 %4952
    %4954 = vrot.lane.b32.xlu0 %v4945, 127
    %v4955 = vpop.permute.xlu0 %4954
    %4956 = vrot.lane.b32.xlu0 %v4946, 127
    %v4957 = vpop.permute.xlu0 %4956
    %4958 = vrot.lane.b32.xlu0 %v4947, 127
    %v4959 = vpop.permute.xlu0 %4958
    %v4964 = vadd.f32 %v4860, %v4953
    %v4965 = vadd.f32 %v4861, %v4955
    %v4966 = vadd.f32 %v4862, %v4957
    %v4967 = vadd.f32 %v4863, %v4959
    %s4968 = sld [smem:[#allocation13 + $0x32]]
    %v4969 = vstv %s4968
    %v4970 = vmul.f32 %v4324, %v4969
    %v4971 = vmul.f32 %v4325, %v4969
    %v4972 = vmul.f32 %v4326, %v4969
    %v4973 = vmul.f32 %v4327, %v4969
    %4978 = vrot.lane.b32.xlu0 %v4970, 127
    %v4979 = vpop.permute.xlu0 %4978
    %4980 = vrot.lane.b32.xlu0 %v4971, 127
    %v4981 = vpop.permute.xlu0 %4980
    %4982 = vrot.lane.b32.xlu0 %v4972, 127
    %v4983 = vpop.permute.xlu0 %4982
    %4984 = vrot.lane.b32.xlu0 %v4973, 127
    %v4985 = vpop.permute.xlu0 %4984
    %v4990 = vadd.f32 %v4886, %v4979
    %v4991 = vadd.f32 %v4887, %v4981
    %v4992 = vadd.f32 %v4888, %v4983
    %v4993 = vadd.f32 %v4889, %v4985
    %s4994 = sld [smem:[#allocation13 + $0x33]]
    %v4995 = vstv %s4994
    %v4996 = vmul.f32 %v4324, %v4995
    %v4997 = vmul.f32 %v4325, %v4995
    %v4998 = vmul.f32 %v4326, %v4995
    %v4999 = vmul.f32 %v4327, %v4995
    %5004 = vrot.lane.b32.xlu0 %v4996, 127
    %v5005 = vpop.permute.xlu0 %5004
    %5006 = vrot.lane.b32.xlu0 %v4997, 127
    %v5007 = vpop.permute.xlu0 %5006
    %5008 = vrot.lane.b32.xlu0 %v4998, 127
    %v5009 = vpop.permute.xlu0 %5008
    %5010 = vrot.lane.b32.xlu0 %v4999, 127
    %v5011 = vpop.permute.xlu0 %5010
    %v5016 = vadd.f32 %v4912, %v5005
    %v5017 = vadd.f32 %v4913, %v5007
    %v5018 = vadd.f32 %v4914, %v5009
    %v5019 = vadd.f32 %v4915, %v5011
    %s5020 = sld [smem:[#allocation13 + $0x34]]
    %v5021 = vstv %s5020
    %v5022 = vmul.f32 %v4368, %v5021
    %v5023 = vmul.f32 %v4369, %v5021
    %v5024 = vmul.f32 %v4370, %v5021
    %v5025 = vmul.f32 %v4371, %v5021
    %5030 = vrot.lane.b32.xlu0 %v5022, 127
    %v5031 = vpop.permute.xlu0 %5030
    %5032 = vrot.lane.b32.xlu0 %v5023, 127
    %v5033 = vpop.permute.xlu0 %5032
    %5034 = vrot.lane.b32.xlu0 %v5024, 127
    %v5035 = vpop.permute.xlu0 %5034
    %5036 = vrot.lane.b32.xlu0 %v5025, 127
    %v5037 = vpop.permute.xlu0 %5036
    %v5042 = vadd.f32 %v4938, %v5031
    %v5043 = vadd.f32 %v4939, %v5033
    %v5044 = vadd.f32 %v4940, %v5035
    %v5045 = vadd.f32 %v4941, %v5037
    %s5046 = sld [smem:[#allocation13 + $0x35]]
    %v5047 = vstv %s5046
    %v5048 = vmul.f32 %v4368, %v5047
    %v5049 = vmul.f32 %v4369, %v5047
    %v5050 = vmul.f32 %v4370, %v5047
    %v5051 = vmul.f32 %v4371, %v5047
    %5056 = vrot.lane.b32.xlu0 %v5048, 127
    %v5057 = vpop.permute.xlu0 %5056
    %5058 = vrot.lane.b32.xlu0 %v5049, 127
    %v5059 = vpop.permute.xlu0 %5058
    %5060 = vrot.lane.b32.xlu0 %v5050, 127
    %v5061 = vpop.permute.xlu0 %5060
    %5062 = vrot.lane.b32.xlu0 %v5051, 127
    %v5063 = vpop.permute.xlu0 %5062
    %v5068 = vadd.f32 %v4964, %v5057
    %v5069 = vadd.f32 %v4965, %v5059
    %v5070 = vadd.f32 %v4966, %v5061
    %v5071 = vadd.f32 %v4967, %v5063
    %s5072 = sld [smem:[#allocation13 + $0x36]]
    %v5073 = vstv %s5072
    %v5074 = vmul.f32 %v4368, %v5073
    %v5075 = vmul.f32 %v4369, %v5073
    %v5076 = vmul.f32 %v4370, %v5073
    %v5077 = vmul.f32 %v4371, %v5073
    %5082 = vrot.lane.b32.xlu0 %v5074, 127
    %v5083 = vpop.permute.xlu0 %5082
    %5084 = vrot.lane.b32.xlu0 %v5075, 127
    %v5085 = vpop.permute.xlu0 %5084
    %5086 = vrot.lane.b32.xlu0 %v5076, 127
    %v5087 = vpop.permute.xlu0 %5086
    %5088 = vrot.lane.b32.xlu0 %v5077, 127
    %v5089 = vpop.permute.xlu0 %5088
    %v5094 = vadd.f32 %v4990, %v5083
    %v5095 = vadd.f32 %v4991, %v5085
    %v5096 = vadd.f32 %v4992, %v5087
    %v5097 = vadd.f32 %v4993, %v5089
    %s5098 = sld [smem:[#allocation13 + $0x37]]
    %v5099 = vstv %s5098
    %v5100 = vmul.f32 %v4368, %v5099
    %v5101 = vmul.f32 %v4369, %v5099
    %v5102 = vmul.f32 %v4370, %v5099
    %v5103 = vmul.f32 %v4371, %v5099
    %5108 = vrot.lane.b32.xlu0 %v5100, 127
    %v5109 = vpop.permute.xlu0 %5108
    %5110 = vrot.lane.b32.xlu0 %v5101, 127
    %v5111 = vpop.permute.xlu0 %5110
    %5112 = vrot.lane.b32.xlu0 %v5102, 127
    %v5113 = vpop.permute.xlu0 %5112
    %5114 = vrot.lane.b32.xlu0 %v5103, 127
    %v5115 = vpop.permute.xlu0 %5114
    %v5120 = vadd.f32 %v5016, %v5109
    %v5121 = vadd.f32 %v5017, %v5111
    %v5122 = vadd.f32 %v5018, %v5113
    %v5123 = vadd.f32 %v5019, %v5115
    %s5124 = sld [smem:[#allocation13 + $0x38]]
    %v5125 = vstv %s5124
    %v5126 = vmul.f32 %v4412, %v5125
    %v5127 = vmul.f32 %v4413, %v5125
    %v5128 = vmul.f32 %v4414, %v5125
    %v5129 = vmul.f32 %v4415, %v5125
    %5134 = vrot.lane.b32.xlu0 %v5126, 127
    %v5135 = vpop.permute.xlu0 %5134
    %5136 = vrot.lane.b32.xlu0 %v5127, 127
    %v5137 = vpop.permute.xlu0 %5136
    %5138 = vrot.lane.b32.xlu0 %v5128, 127
    %v5139 = vpop.permute.xlu0 %5138
    %5140 = vrot.lane.b32.xlu0 %v5129, 127
    %v5141 = vpop.permute.xlu0 %5140
    %v5146 = vadd.f32 %v5042, %v5135
    %v5147 = vadd.f32 %v5043, %v5137
    %v5148 = vadd.f32 %v5044, %v5139
    %v5149 = vadd.f32 %v5045, %v5141
    %s5150 = sld [smem:[#allocation13 + $0x39]]
    %v5151 = vstv %s5150
    %v5152 = vmul.f32 %v4412, %v5151
    %v5153 = vmul.f32 %v4413, %v5151
    %v5154 = vmul.f32 %v4414, %v5151
    %v5155 = vmul.f32 %v4415, %v5151
    %5160 = vrot.lane.b32.xlu0 %v5152, 127
    %v5161 = vpop.permute.xlu0 %5160
    %5162 = vrot.lane.b32.xlu0 %v5153, 127
    %v5163 = vpop.permute.xlu0 %5162
    %5164 = vrot.lane.b32.xlu0 %v5154, 127
    %v5165 = vpop.permute.xlu0 %5164
    %5166 = vrot.lane.b32.xlu0 %v5155, 127
    %v5167 = vpop.permute.xlu0 %5166
    %v5172 = vadd.f32 %v5068, %v5161
    %v5173 = vadd.f32 %v5069, %v5163
    %v5174 = vadd.f32 %v5070, %v5165
    %v5175 = vadd.f32 %v5071, %v5167
    %s5176 = sld [smem:[#allocation13 + $0x3a]]
    %v5177 = vstv %s5176
    %v5178 = vmul.f32 %v4412, %v5177
    %v5179 = vmul.f32 %v4413, %v5177
    %v5180 = vmul.f32 %v4414, %v5177
    %v5181 = vmul.f32 %v4415, %v5177
    %5186 = vrot.lane.b32.xlu0 %v5178, 127
    %v5187 = vpop.permute.xlu0 %5186
    %5188 = vrot.lane.b32.xlu0 %v5179, 127
    %v5189 = vpop.permute.xlu0 %5188
    %5190 = vrot.lane.b32.xlu0 %v5180, 127
    %v5191 = vpop.permute.xlu0 %5190
    %5192 = vrot.lane.b32.xlu0 %v5181, 127
    %v5193 = vpop.permute.xlu0 %5192
    %v5198 = vadd.f32 %v5094, %v5187
    %v5199 = vadd.f32 %v5095, %v5189
    %v5200 = vadd.f32 %v5096, %v5191
    %v5201 = vadd.f32 %v5097, %v5193
    %s5202 = sld [smem:[#allocation13 + $0x3b]]
    %v5203 = vstv %s5202
    %v5204 = vmul.f32 %v4412, %v5203
    %v5205 = vmul.f32 %v4413, %v5203
    %v5206 = vmul.f32 %v4414, %v5203
    %v5207 = vmul.f32 %v4415, %v5203
    %5212 = vrot.lane.b32.xlu0 %v5204, 127
    %v5213 = vpop.permute.xlu0 %5212
    %5214 = vrot.lane.b32.xlu0 %v5205, 127
    %v5215 = vpop.permute.xlu0 %5214
    %5216 = vrot.lane.b32.xlu0 %v5206, 127
    %v5217 = vpop.permute.xlu0 %5216
    %5218 = vrot.lane.b32.xlu0 %v5207, 127
    %v5219 = vpop.permute.xlu0 %5218
    %v5224 = vadd.f32 %v5120, %v5213
    %v5225 = vadd.f32 %v5121, %v5215
    %v5226 = vadd.f32 %v5122, %v5217
    %v5227 = vadd.f32 %v5123, %v5219
    %s5228 = sld [smem:[#allocation13 + $0x3c]]
    %v5229 = vstv %s5228
    %v5230 = vmul.f32 %v4456, %v5229
    %v5231 = vmul.f32 %v4457, %v5229
    %v5232 = vmul.f32 %v4458, %v5229
    %v5233 = vmul.f32 %v4459, %v5229
    %5238 = vrot.lane.b32.xlu0 %v5230, 127
    %v5239 = vpop.permute.xlu0 %5238
    %5240 = vrot.lane.b32.xlu0 %v5231, 127
    %v5241 = vpop.permute.xlu0 %5240
    %5242 = vrot.lane.b32.xlu0 %v5232, 127
    %v5243 = vpop.permute.xlu0 %5242
    %5244 = vrot.lane.b32.xlu0 %v5233, 127
    %v5245 = vpop.permute.xlu0 %5244
    %v5250 = vadd.f32 %v5146, %v5239
    %v5251 = vadd.f32 %v5147, %v5241
    %v5252 = vadd.f32 %v5148, %v5243
    %v5253 = vadd.f32 %v5149, %v5245
    %s5254 = sld [smem:[#allocation13 + $0x3d]]
    %v5255 = vstv %s5254
    %v5256 = vmul.f32 %v4456, %v5255
    %v5257 = vmul.f32 %v4457, %v5255
    %v5258 = vmul.f32 %v4458, %v5255
    %v5259 = vmul.f32 %v4459, %v5255
    %5264 = vrot.lane.b32.xlu0 %v5256, 127
    %v5265 = vpop.permute.xlu0 %5264
    %5266 = vrot.lane.b32.xlu0 %v5257, 127
    %v5267 = vpop.permute.xlu0 %5266
    %5268 = vrot.lane.b32.xlu0 %v5258, 127
    %v5269 = vpop.permute.xlu0 %5268
    %5270 = vrot.lane.b32.xlu0 %v5259, 127
    %v5271 = vpop.permute.xlu0 %5270
    %v5276 = vadd.f32 %v5172, %v5265
    %v5277 = vadd.f32 %v5173, %v5267
    %v5278 = vadd.f32 %v5174, %v5269
    %v5279 = vadd.f32 %v5175, %v5271
    %s5280 = sld [smem:[#allocation13 + $0x3e]]
    %v5281 = vstv %s5280
    %v5282 = vmul.f32 %v4456, %v5281
    %v5283 = vmul.f32 %v4457, %v5281
    %v5284 = vmul.f32 %v4458, %v5281
    %v5285 = vmul.f32 %v4459, %v5281
    %5290 = vrot.lane.b32.xlu0 %v5282, 127
    %v5291 = vpop.permute.xlu0 %5290
    %5292 = vrot.lane.b32.xlu0 %v5283, 127
    %v5293 = vpop.permute.xlu0 %5292
    %5294 = vrot.lane.b32.xlu0 %v5284, 127
    %v5295 = vpop.permute.xlu0 %5294
    %5296 = vrot.lane.b32.xlu0 %v5285, 127
    %v5297 = vpop.permute.xlu0 %5296
    %v5302 = vadd.f32 %v5198, %v5291
    %v5303 = vadd.f32 %v5199, %v5293
    %v5304 = vadd.f32 %v5200, %v5295
    %v5305 = vadd.f32 %v5201, %v5297
    %s5306 = sld [smem:[#allocation13 + $0x3f]]
    %v5307 = vstv %s5306
    %v5308 = vmul.f32 %v4456, %v5307
    %v5309 = vmul.f32 %v4457, %v5307
    %v5310 = vmul.f32 %v4458, %v5307
    %v5311 = vmul.f32 %v4459, %v5307
    %5316 = vrot.lane.b32.xlu0 %v5308, 127
    %v5317 = vpop.permute.xlu0 %5316
    %5318 = vrot.lane.b32.xlu0 %v5309, 127
    %v5319 = vpop.permute.xlu0 %5318
    %5320 = vrot.lane.b32.xlu0 %v5310, 127
    %v5321 = vpop.permute.xlu0 %5320
    %5322 = vrot.lane.b32.xlu0 %v5311, 127
    %v5323 = vpop.permute.xlu0 %5322
    %v5328 = vadd.f32 %v5224, %v5317
    %v5329 = vadd.f32 %v5225, %v5319
    %v5330 = vadd.f32 %v5226, %v5321
    %v5331 = vadd.f32 %v5227, %v5323
    %s5332 = sld [smem:[#allocation13 + $0x40]]
    %v5333 = vstv %s5332
    %v5334 = vmul.f32 %v4164, %v5333
    %v5335 = vmul.f32 %v4165, %v5333
    %v5336 = vmul.f32 %v4166, %v5333
    %v5337 = vmul.f32 %v4167, %v5333
    %5342 = vrot.lane.b32.xlu0 %v5334, 126
    %v5343 = vpop.permute.xlu0 %5342
    %5344 = vrot.lane.b32.xlu0 %v5335, 126
    %v5345 = vpop.permute.xlu0 %5344
    %5346 = vrot.lane.b32.xlu0 %v5336, 126
    %v5347 = vpop.permute.xlu0 %5346
    %5348 = vrot.lane.b32.xlu0 %v5337, 126
    %v5349 = vpop.permute.xlu0 %5348
    %v5354 = vadd.f32 %v5250, %v5343
    %v5355 = vadd.f32 %v5251, %v5345
    %v5356 = vadd.f32 %v5252, %v5347
    %v5357 = vadd.f32 %v5253, %v5349
    %s5358 = sld [smem:[#allocation13 + $0x41]]
    %v5359 = vstv %s5358
    %v5360 = vmul.f32 %v4164, %v5359
    %v5361 = vmul.f32 %v4165, %v5359
    %v5362 = vmul.f32 %v4166, %v5359
    %v5363 = vmul.f32 %v4167, %v5359
    %5368 = vrot.lane.b32.xlu0 %v5360, 126
    %v5369 = vpop.permute.xlu0 %5368
    %5370 = vrot.lane.b32.xlu0 %v5361, 126
    %v5371 = vpop.permute.xlu0 %5370
    %5372 = vrot.lane.b32.xlu0 %v5362, 126
    %v5373 = vpop.permute.xlu0 %5372
    %5374 = vrot.lane.b32.xlu0 %v5363, 126
    %v5375 = vpop.permute.xlu0 %5374
    %v5380 = vadd.f32 %v5276, %v5369
    %v5381 = vadd.f32 %v5277, %v5371
    %v5382 = vadd.f32 %v5278, %v5373
    %v5383 = vadd.f32 %v5279, %v5375
    %s5384 = sld [smem:[#allocation13 + $0x42]]
    %v5385 = vstv %s5384
    %v5386 = vmul.f32 %v4164, %v5385
    %v5387 = vmul.f32 %v4165, %v5385
    %v5388 = vmul.f32 %v4166, %v5385
    %v5389 = vmul.f32 %v4167, %v5385
    %5394 = vrot.lane.b32.xlu0 %v5386, 126
    %v5395 = vpop.permute.xlu0 %5394
    %5396 = vrot.lane.b32.xlu0 %v5387, 126
    %v5397 = vpop.permute.xlu0 %5396
    %5398 = vrot.lane.b32.xlu0 %v5388, 126
    %v5399 = vpop.permute.xlu0 %5398
    %5400 = vrot.lane.b32.xlu0 %v5389, 126
    %v5401 = vpop.permute.xlu0 %5400
    %v5406 = vadd.f32 %v5302, %v5395
    %v5407 = vadd.f32 %v5303, %v5397
    %v5408 = vadd.f32 %v5304, %v5399
    %v5409 = vadd.f32 %v5305, %v5401
    %s5410 = sld [smem:[#allocation13 + $0x43]]
    %v5411 = vstv %s5410
    %v5412 = vmul.f32 %v4164, %v5411
    %v5413 = vmul.f32 %v4165, %v5411
    %v5414 = vmul.f32 %v4166, %v5411
    %v5415 = vmul.f32 %v4167, %v5411
    %5420 = vrot.lane.b32.xlu0 %v5412, 126
    %v5421 = vpop.permute.xlu0 %5420
    %5422 = vrot.lane.b32.xlu0 %v5413, 126
    %v5423 = vpop.permute.xlu0 %5422
    %5424 = vrot.lane.b32.xlu0 %v5414, 126
    %v5425 = vpop.permute.xlu0 %5424
    %5426 = vrot.lane.b32.xlu0 %v5415, 126
    %v5427 = vpop.permute.xlu0 %5426
    %v5432 = vadd.f32 %v5328, %v5421
    %v5433 = vadd.f32 %v5329, %v5423
    %v5434 = vadd.f32 %v5330, %v5425
    %v5435 = vadd.f32 %v5331, %v5427
    %s5436 = sld [smem:[#allocation13 + $0x44]]
    %v5437 = vstv %s5436
    %v5438 = vmul.f32 %v4192, %v5437
    %v5439 = vmul.f32 %v4193, %v5437
    %v5440 = vmul.f32 %v4194, %v5437
    %v5441 = vmul.f32 %v4195, %v5437
    %5446 = vrot.lane.b32.xlu0 %v5438, 126
    %v5447 = vpop.permute.xlu0 %5446
    %5448 = vrot.lane.b32.xlu0 %v5439, 126
    %v5449 = vpop.permute.xlu0 %5448
    %5450 = vrot.lane.b32.xlu0 %v5440, 126
    %v5451 = vpop.permute.xlu0 %5450
    %5452 = vrot.lane.b32.xlu0 %v5441, 126
    %v5453 = vpop.permute.xlu0 %5452
    %v5458 = vadd.f32 %v5354, %v5447
    %v5459 = vadd.f32 %v5355, %v5449
    %v5460 = vadd.f32 %v5356, %v5451
    %v5461 = vadd.f32 %v5357, %v5453
    %s5462 = sld [smem:[#allocation13 + $0x45]]
    %v5463 = vstv %s5462
    %v5464 = vmul.f32 %v4192, %v5463
    %v5465 = vmul.f32 %v4193, %v5463
    %v5466 = vmul.f32 %v4194, %v5463
    %v5467 = vmul.f32 %v4195, %v5463
    %5472 = vrot.lane.b32.xlu0 %v5464, 126
    %v5473 = vpop.permute.xlu0 %5472
    %5474 = vrot.lane.b32.xlu0 %v5465, 126
    %v5475 = vpop.permute.xlu0 %5474
    %5476 = vrot.lane.b32.xlu0 %v5466, 126
    %v5477 = vpop.permute.xlu0 %5476
    %5478 = vrot.lane.b32.xlu0 %v5467, 126
    %v5479 = vpop.permute.xlu0 %5478
    %v5484 = vadd.f32 %v5380, %v5473
    %v5485 = vadd.f32 %v5381, %v5475
    %v5486 = vadd.f32 %v5382, %v5477
    %v5487 = vadd.f32 %v5383, %v5479
    %s5488 = sld [smem:[#allocation13 + $0x46]]
    %v5489 = vstv %s5488
    %v5490 = vmul.f32 %v4192, %v5489
    %v5491 = vmul.f32 %v4193, %v5489
    %v5492 = vmul.f32 %v4194, %v5489
    %v5493 = vmul.f32 %v4195, %v5489
    %5498 = vrot.lane.b32.xlu0 %v5490, 126
    %v5499 = vpop.permute.xlu0 %5498
    %5500 = vrot.lane.b32.xlu0 %v5491, 126
    %v5501 = vpop.permute.xlu0 %5500
    %5502 = vrot.lane.b32.xlu0 %v5492, 126
    %v5503 = vpop.permute.xlu0 %5502
    %5504 = vrot.lane.b32.xlu0 %v5493, 126
    %v5505 = vpop.permute.xlu0 %5504
    %v5510 = vadd.f32 %v5406, %v5499
    %v5511 = vadd.f32 %v5407, %v5501
    %v5512 = vadd.f32 %v5408, %v5503
    %v5513 = vadd.f32 %v5409, %v5505
    %s5514 = sld [smem:[#allocation13 + $0x47]]
    %v5515 = vstv %s5514
    %v5516 = vmul.f32 %v4192, %v5515
    %v5517 = vmul.f32 %v4193, %v5515
    %v5518 = vmul.f32 %v4194, %v5515
    %v5519 = vmul.f32 %v4195, %v5515
    %5524 = vrot.lane.b32.xlu0 %v5516, 126
    %v5525 = vpop.permute.xlu0 %5524
    %5526 = vrot.lane.b32.xlu0 %v5517, 126
    %v5527 = vpop.permute.xlu0 %5526
    %5528 = vrot.lane.b32.xlu0 %v5518, 126
    %v5529 = vpop.permute.xlu0 %5528
    %5530 = vrot.lane.b32.xlu0 %v5519, 126
    %v5531 = vpop.permute.xlu0 %5530
    %v5536 = vadd.f32 %v5432, %v5525
    %v5537 = vadd.f32 %v5433, %v5527
    %v5538 = vadd.f32 %v5434, %v5529
    %v5539 = vadd.f32 %v5435, %v5531
    %s5540 = sld [smem:[#allocation13 + $0x48]]
    %v5541 = vstv %s5540
    %v5542 = vmul.f32 %v4236, %v5541
    %v5543 = vmul.f32 %v4237, %v5541
    %v5544 = vmul.f32 %v4238, %v5541
    %v5545 = vmul.f32 %v4239, %v5541
    %5550 = vrot.lane.b32.xlu0 %v5542, 126
    %v5551 = vpop.permute.xlu0 %5550
    %5552 = vrot.lane.b32.xlu0 %v5543, 126
    %v5553 = vpop.permute.xlu0 %5552
    %5554 = vrot.lane.b32.xlu0 %v5544, 126
    %v5555 = vpop.permute.xlu0 %5554
    %5556 = vrot.lane.b32.xlu0 %v5545, 126
    %v5557 = vpop.permute.xlu0 %5556
    %v5562 = vadd.f32 %v5458, %v5551
    %v5563 = vadd.f32 %v5459, %v5553
    %v5564 = vadd.f32 %v5460, %v5555
    %v5565 = vadd.f32 %v5461, %v5557
    %s5566 = sld [smem:[#allocation13 + $0x49]]
    %v5567 = vstv %s5566
    %v5568 = vmul.f32 %v4236, %v5567
    %v5569 = vmul.f32 %v4237, %v5567
    %v5570 = vmul.f32 %v4238, %v5567
    %v5571 = vmul.f32 %v4239, %v5567
    %5576 = vrot.lane.b32.xlu0 %v5568, 126
    %v5577 = vpop.permute.xlu0 %5576
    %5578 = vrot.lane.b32.xlu0 %v5569, 126
    %v5579 = vpop.permute.xlu0 %5578
    %5580 = vrot.lane.b32.xlu0 %v5570, 126
    %v5581 = vpop.permute.xlu0 %5580
    %5582 = vrot.lane.b32.xlu0 %v5571, 126
    %v5583 = vpop.permute.xlu0 %5582
    %v5588 = vadd.f32 %v5484, %v5577
    %v5589 = vadd.f32 %v5485, %v5579
    %v5590 = vadd.f32 %v5486, %v5581
    %v5591 = vadd.f32 %v5487, %v5583
    %s5592 = sld [smem:[#allocation13 + $0x4a]]
    %v5593 = vstv %s5592
    %v5594 = vmul.f32 %v4236, %v5593
    %v5595 = vmul.f32 %v4237, %v5593
    %v5596 = vmul.f32 %v4238, %v5593
    %v5597 = vmul.f32 %v4239, %v5593
    %5602 = vrot.lane.b32.xlu0 %v5594, 126
    %v5603 = vpop.permute.xlu0 %5602
    %5604 = vrot.lane.b32.xlu0 %v5595, 126
    %v5605 = vpop.permute.xlu0 %5604
    %5606 = vrot.lane.b32.xlu0 %v5596, 126
    %v5607 = vpop.permute.xlu0 %5606
    %5608 = vrot.lane.b32.xlu0 %v5597, 126
    %v5609 = vpop.permute.xlu0 %5608
    %v5614 = vadd.f32 %v5510, %v5603
    %v5615 = vadd.f32 %v5511, %v5605
    %v5616 = vadd.f32 %v5512, %v5607
    %v5617 = vadd.f32 %v5513, %v5609
    %s5618 = sld [smem:[#allocation13 + $0x4b]]
    %v5619 = vstv %s5618
    %v5620 = vmul.f32 %v4236, %v5619
    %v5621 = vmul.f32 %v4237, %v5619
    %v5622 = vmul.f32 %v4238, %v5619
    %v5623 = vmul.f32 %v4239, %v5619
    %5628 = vrot.lane.b32.xlu0 %v5620, 126
    %v5629 = vpop.permute.xlu0 %5628
    %5630 = vrot.lane.b32.xlu0 %v5621, 126
    %v5631 = vpop.permute.xlu0 %5630
    %5632 = vrot.lane.b32.xlu0 %v5622, 126
    %v5633 = vpop.permute.xlu0 %5632
    %5634 = vrot.lane.b32.xlu0 %v5623, 126
    %v5635 = vpop.permute.xlu0 %5634
    %v5640 = vadd.f32 %v5536, %v5629
    %v5641 = vadd.f32 %v5537, %v5631
    %v5642 = vadd.f32 %v5538, %v5633
    %v5643 = vadd.f32 %v5539, %v5635
    %s5644 = sld [smem:[#allocation13 + $0x4c]]
    %v5645 = vstv %s5644
    %v5646 = vmul.f32 %v4280, %v5645
    %v5647 = vmul.f32 %v4281, %v5645
    %v5648 = vmul.f32 %v4282, %v5645
    %v5649 = vmul.f32 %v4283, %v5645
    %5654 = vrot.lane.b32.xlu0 %v5646, 126
    %v5655 = vpop.permute.xlu0 %5654
    %5656 = vrot.lane.b32.xlu0 %v5647, 126
    %v5657 = vpop.permute.xlu0 %5656
    %5658 = vrot.lane.b32.xlu0 %v5648, 126
    %v5659 = vpop.permute.xlu0 %5658
    %5660 = vrot.lane.b32.xlu0 %v5649, 126
    %v5661 = vpop.permute.xlu0 %5660
    %v5666 = vadd.f32 %v5562, %v5655
    %v5667 = vadd.f32 %v5563, %v5657
    %v5668 = vadd.f32 %v5564, %v5659
    %v5669 = vadd.f32 %v5565, %v5661
    %s5670 = sld [smem:[#allocation13 + $0x4d]]
    %v5671 = vstv %s5670
    %v5672 = vmul.f32 %v4280, %v5671
    %v5673 = vmul.f32 %v4281, %v5671
    %v5674 = vmul.f32 %v4282, %v5671
    %v5675 = vmul.f32 %v4283, %v5671
    %5680 = vrot.lane.b32.xlu0 %v5672, 126
    %v5681 = vpop.permute.xlu0 %5680
    %5682 = vrot.lane.b32.xlu0 %v5673, 126
    %v5683 = vpop.permute.xlu0 %5682
    %5684 = vrot.lane.b32.xlu0 %v5674, 126
    %v5685 = vpop.permute.xlu0 %5684
    %5686 = vrot.lane.b32.xlu0 %v5675, 126
    %v5687 = vpop.permute.xlu0 %5686
    %v5692 = vadd.f32 %v5588, %v5681
    %v5693 = vadd.f32 %v5589, %v5683
    %v5694 = vadd.f32 %v5590, %v5685
    %v5695 = vadd.f32 %v5591, %v5687
    %s5696 = sld [smem:[#allocation13 + $0x4e]]
    %v5697 = vstv %s5696
    %v5698 = vmul.f32 %v4280, %v5697
    %v5699 = vmul.f32 %v4281, %v5697
    %v5700 = vmul.f32 %v4282, %v5697
    %v5701 = vmul.f32 %v4283, %v5697
    %5706 = vrot.lane.b32.xlu0 %v5698, 126
    %v5707 = vpop.permute.xlu0 %5706
    %5708 = vrot.lane.b32.xlu0 %v5699, 126
    %v5709 = vpop.permute.xlu0 %5708
    %5710 = vrot.lane.b32.xlu0 %v5700, 126
    %v5711 = vpop.permute.xlu0 %5710
    %5712 = vrot.lane.b32.xlu0 %v5701, 126
    %v5713 = vpop.permute.xlu0 %5712
    %v5718 = vadd.f32 %v5614, %v5707
    %v5719 = vadd.f32 %v5615, %v5709
    %v5720 = vadd.f32 %v5616, %v5711
    %v5721 = vadd.f32 %v5617, %v5713
    %s5722 = sld [smem:[#allocation13 + $0x4f]]
    %v5723 = vstv %s5722
    %v5724 = vmul.f32 %v4280, %v5723
    %v5725 = vmul.f32 %v4281, %v5723
    %v5726 = vmul.f32 %v4282, %v5723
    %v5727 = vmul.f32 %v4283, %v5723
    %5732 = vrot.lane.b32.xlu0 %v5724, 126
    %v5733 = vpop.permute.xlu0 %5732
    %5734 = vrot.lane.b32.xlu0 %v5725, 126
    %v5735 = vpop.permute.xlu0 %5734
    %5736 = vrot.lane.b32.xlu0 %v5726, 126
    %v5737 = vpop.permute.xlu0 %5736
    %5738 = vrot.lane.b32.xlu0 %v5727, 126
    %v5739 = vpop.permute.xlu0 %5738
    %v5744 = vadd.f32 %v5640, %v5733
    %v5745 = vadd.f32 %v5641, %v5735
    %v5746 = vadd.f32 %v5642, %v5737
    %v5747 = vadd.f32 %v5643, %v5739
    %s5748 = sld [smem:[#allocation13 + $0x50]]
    %v5749 = vstv %s5748
    %v5750 = vmul.f32 %v4324, %v5749
    %v5751 = vmul.f32 %v4325, %v5749
    %v5752 = vmul.f32 %v4326, %v5749
    %v5753 = vmul.f32 %v4327, %v5749
    %5758 = vrot.lane.b32.xlu0 %v5750, 126
    %v5759 = vpop.permute.xlu0 %5758
    %5760 = vrot.lane.b32.xlu0 %v5751, 126
    %v5761 = vpop.permute.xlu0 %5760
    %5762 = vrot.lane.b32.xlu0 %v5752, 126
    %v5763 = vpop.permute.xlu0 %5762
    %5764 = vrot.lane.b32.xlu0 %v5753, 126
    %v5765 = vpop.permute.xlu0 %5764
    %v5770 = vadd.f32 %v5666, %v5759
    %v5771 = vadd.f32 %v5667, %v5761
    %v5772 = vadd.f32 %v5668, %v5763
    %v5773 = vadd.f32 %v5669, %v5765
    %s5774 = sld [smem:[#allocation13 + $0x51]]
    %v5775 = vstv %s5774
    %v5776 = vmul.f32 %v4324, %v5775
    %v5777 = vmul.f32 %v4325, %v5775
    %v5778 = vmul.f32 %v4326, %v5775
    %v5779 = vmul.f32 %v4327, %v5775
    %5784 = vrot.lane.b32.xlu0 %v5776, 126
    %v5785 = vpop.permute.xlu0 %5784
    %5786 = vrot.lane.b32.xlu0 %v5777, 126
    %v5787 = vpop.permute.xlu0 %5786
    %5788 = vrot.lane.b32.xlu0 %v5778, 126
    %v5789 = vpop.permute.xlu0 %5788
    %5790 = vrot.lane.b32.xlu0 %v5779, 126
    %v5791 = vpop.permute.xlu0 %5790
    %v5796 = vadd.f32 %v5692, %v5785
    %v5797 = vadd.f32 %v5693, %v5787
    %v5798 = vadd.f32 %v5694, %v5789
    %v5799 = vadd.f32 %v5695, %v5791
    %s5800 = sld [smem:[#allocation13 + $0x52]]
    %v5801 = vstv %s5800
    %v5802 = vmul.f32 %v4324, %v5801
    %v5803 = vmul.f32 %v4325, %v5801
    %v5804 = vmul.f32 %v4326, %v5801
    %v5805 = vmul.f32 %v4327, %v5801
    %5810 = vrot.lane.b32.xlu0 %v5802, 126
    %v5811 = vpop.permute.xlu0 %5810
    %5812 = vrot.lane.b32.xlu0 %v5803, 126
    %v5813 = vpop.permute.xlu0 %5812
    %5814 = vrot.lane.b32.xlu0 %v5804, 126
    %v5815 = vpop.permute.xlu0 %5814
    %5816 = vrot.lane.b32.xlu0 %v5805, 126
    %v5817 = vpop.permute.xlu0 %5816
    %v5822 = vadd.f32 %v5718, %v5811
    %v5823 = vadd.f32 %v5719, %v5813
    %v5824 = vadd.f32 %v5720, %v5815
    %v5825 = vadd.f32 %v5721, %v5817
    %s5826 = sld [smem:[#allocation13 + $0x53]]
    %v5827 = vstv %s5826
    %v5828 = vmul.f32 %v4324, %v5827
    %v5829 = vmul.f32 %v4325, %v5827
    %v5830 = vmul.f32 %v4326, %v5827
    %v5831 = vmul.f32 %v4327, %v5827
    %5836 = vrot.lane.b32.xlu0 %v5828, 126
    %v5837 = vpop.permute.xlu0 %5836
    %5838 = vrot.lane.b32.xlu0 %v5829, 126
    %v5839 = vpop.permute.xlu0 %5838
    %5840 = vrot.lane.b32.xlu0 %v5830, 126
    %v5841 = vpop.permute.xlu0 %5840
    %5842 = vrot.lane.b32.xlu0 %v5831, 126
    %v5843 = vpop.permute.xlu0 %5842
    %v5848 = vadd.f32 %v5744, %v5837
    %v5849 = vadd.f32 %v5745, %v5839
    %v5850 = vadd.f32 %v5746, %v5841
    %v5851 = vadd.f32 %v5747, %v5843
    %s5852 = sld [smem:[#allocation13 + $0x54]]
    %v5853 = vstv %s5852
    %v5854 = vmul.f32 %v4368, %v5853
    %v5855 = vmul.f32 %v4369, %v5853
    %v5856 = vmul.f32 %v4370, %v5853
    %v5857 = vmul.f32 %v4371, %v5853
    %5862 = vrot.lane.b32.xlu0 %v5854, 126
    %v5863 = vpop.permute.xlu0 %5862
    %5864 = vrot.lane.b32.xlu0 %v5855, 126
    %v5865 = vpop.permute.xlu0 %5864
    %5866 = vrot.lane.b32.xlu0 %v5856, 126
    %v5867 = vpop.permute.xlu0 %5866
    %5868 = vrot.lane.b32.xlu0 %v5857, 126
    %v5869 = vpop.permute.xlu0 %5868
    %v5874 = vadd.f32 %v5770, %v5863
    %v5875 = vadd.f32 %v5771, %v5865
    %v5876 = vadd.f32 %v5772, %v5867
    %v5877 = vadd.f32 %v5773, %v5869
    %s5878 = sld [smem:[#allocation13 + $0x55]]
    %v5879 = vstv %s5878
    %v5880 = vmul.f32 %v4368, %v5879
    %v5881 = vmul.f32 %v4369, %v5879
    %v5882 = vmul.f32 %v4370, %v5879
    %v5883 = vmul.f32 %v4371, %v5879
    %5888 = vrot.lane.b32.xlu0 %v5880, 126
    %v5889 = vpop.permute.xlu0 %5888
    %5890 = vrot.lane.b32.xlu0 %v5881, 126
    %v5891 = vpop.permute.xlu0 %5890
    %5892 = vrot.lane.b32.xlu0 %v5882, 126
    %v5893 = vpop.permute.xlu0 %5892
    %5894 = vrot.lane.b32.xlu0 %v5883, 126
    %v5895 = vpop.permute.xlu0 %5894
    %v5900 = vadd.f32 %v5796, %v5889
    %v5901 = vadd.f32 %v5797, %v5891
    %v5902 = vadd.f32 %v5798, %v5893
    %v5903 = vadd.f32 %v5799, %v5895
    %s5904 = sld [smem:[#allocation13 + $0x56]]
    %v5905 = vstv %s5904
    %v5906 = vmul.f32 %v4368, %v5905
    %v5907 = vmul.f32 %v4369, %v5905
    %v5908 = vmul.f32 %v4370, %v5905
    %v5909 = vmul.f32 %v4371, %v5905
    %5914 = vrot.lane.b32.xlu0 %v5906, 126
    %v5915 = vpop.permute.xlu0 %5914
    %5916 = vrot.lane.b32.xlu0 %v5907, 126
    %v5917 = vpop.permute.xlu0 %5916
    %5918 = vrot.lane.b32.xlu0 %v5908, 126
    %v5919 = vpop.permute.xlu0 %5918
    %5920 = vrot.lane.b32.xlu0 %v5909, 126
    %v5921 = vpop.permute.xlu0 %5920
    %v5926 = vadd.f32 %v5822, %v5915
    %v5927 = vadd.f32 %v5823, %v5917
    %v5928 = vadd.f32 %v5824, %v5919
    %v5929 = vadd.f32 %v5825, %v5921
    %s5930 = sld [smem:[#allocation13 + $0x57]]
    %v5931 = vstv %s5930
    %v5932 = vmul.f32 %v4368, %v5931
    %v5933 = vmul.f32 %v4369, %v5931
    %v5934 = vmul.f32 %v4370, %v5931
    %v5935 = vmul.f32 %v4371, %v5931
    %5940 = vrot.lane.b32.xlu0 %v5932, 126
    %v5941 = vpop.permute.xlu0 %5940
    %5942 = vrot.lane.b32.xlu0 %v5933, 126
    %v5943 = vpop.permute.xlu0 %5942
    %5944 = vrot.lane.b32.xlu0 %v5934, 126
    %v5945 = vpop.permute.xlu0 %5944
    %5946 = vrot.lane.b32.xlu0 %v5935, 126
    %v5947 = vpop.permute.xlu0 %5946
    %v5952 = vadd.f32 %v5848, %v5941
    %v5953 = vadd.f32 %v5849, %v5943
    %v5954 = vadd.f32 %v5850, %v5945
    %v5955 = vadd.f32 %v5851, %v5947
    %s5956 = sld [smem:[#allocation13 + $0x58]]
    %v5957 = vstv %s5956
    %v5958 = vmul.f32 %v4412, %v5957
    %v5959 = vmul.f32 %v4413, %v5957
    %v5960 = vmul.f32 %v4414, %v5957
    %v5961 = vmul.f32 %v4415, %v5957
    %5966 = vrot.lane.b32.xlu0 %v5958, 126
    %v5967 = vpop.permute.xlu0 %5966
    %5968 = vrot.lane.b32.xlu0 %v5959, 126
    %v5969 = vpop.permute.xlu0 %5968
    %5970 = vrot.lane.b32.xlu0 %v5960, 126
    %v5971 = vpop.permute.xlu0 %5970
    %5972 = vrot.lane.b32.xlu0 %v5961, 126
    %v5973 = vpop.permute.xlu0 %5972
    %v5978 = vadd.f32 %v5874, %v5967
    %v5979 = vadd.f32 %v5875, %v5969
    %v5980 = vadd.f32 %v5876, %v5971
    %v5981 = vadd.f32 %v5877, %v5973
    %s5982 = sld [smem:[#allocation13 + $0x59]]
    %v5983 = vstv %s5982
    %v5984 = vmul.f32 %v4412, %v5983
    %v5985 = vmul.f32 %v4413, %v5983
    %v5986 = vmul.f32 %v4414, %v5983
    %v5987 = vmul.f32 %v4415, %v5983
    %5992 = vrot.lane.b32.xlu0 %v5984, 126
    %v5993 = vpop.permute.xlu0 %5992
    %5994 = vrot.lane.b32.xlu0 %v5985, 126
    %v5995 = vpop.permute.xlu0 %5994
    %5996 = vrot.lane.b32.xlu0 %v5986, 126
    %v5997 = vpop.permute.xlu0 %5996
    %5998 = vrot.lane.b32.xlu0 %v5987, 126
    %v5999 = vpop.permute.xlu0 %5998
    %v6004 = vadd.f32 %v5900, %v5993
    %v6005 = vadd.f32 %v5901, %v5995
    %v6006 = vadd.f32 %v5902, %v5997
    %v6007 = vadd.f32 %v5903, %v5999
    %s6008 = sld [smem:[#allocation13 + $0x5a]]
    %v6009 = vstv %s6008
    %v6010 = vmul.f32 %v4412, %v6009
    %v6011 = vmul.f32 %v4413, %v6009
    %v6012 = vmul.f32 %v4414, %v6009
    %v6013 = vmul.f32 %v4415, %v6009
    %6018 = vrot.lane.b32.xlu0 %v6010, 126
    %v6019 = vpop.permute.xlu0 %6018
    %6020 = vrot.lane.b32.xlu0 %v6011, 126
    %v6021 = vpop.permute.xlu0 %6020
    %6022 = vrot.lane.b32.xlu0 %v6012, 126
    %v6023 = vpop.permute.xlu0 %6022
    %6024 = vrot.lane.b32.xlu0 %v6013, 126
    %v6025 = vpop.permute.xlu0 %6024
    %v6030 = vadd.f32 %v5926, %v6019
    %v6031 = vadd.f32 %v5927, %v6021
    %v6032 = vadd.f32 %v5928, %v6023
    %v6033 = vadd.f32 %v5929, %v6025
    %s6034 = sld [smem:[#allocation13 + $0x5b]]
    %v6035 = vstv %s6034
    %v6036 = vmul.f32 %v4412, %v6035
    %v6037 = vmul.f32 %v4413, %v6035
    %v6038 = vmul.f32 %v4414, %v6035
    %v6039 = vmul.f32 %v4415, %v6035
    %6044 = vrot.lane.b32.xlu0 %v6036, 126
    %v6045 = vpop.permute.xlu0 %6044
    %6046 = vrot.lane.b32.xlu0 %v6037, 126
    %v6047 = vpop.permute.xlu0 %6046
    %6048 = vrot.lane.b32.xlu0 %v6038, 126
    %v6049 = vpop.permute.xlu0 %6048
    %6050 = vrot.lane.b32.xlu0 %v6039, 126
    %v6051 = vpop.permute.xlu0 %6050
    %v6056 = vadd.f32 %v5952, %v6045
    %v6057 = vadd.f32 %v5953, %v6047
    %v6058 = vadd.f32 %v5954, %v6049
    %v6059 = vadd.f32 %v5955, %v6051
    %s6060 = sld [smem:[#allocation13 + $0x5c]]
    %v6061 = vstv %s6060
    %v6062 = vmul.f32 %v4456, %v6061
    %v6063 = vmul.f32 %v4457, %v6061
    %v6064 = vmul.f32 %v4458, %v6061
    %v6065 = vmul.f32 %v4459, %v6061
    %6070 = vrot.lane.b32.xlu0 %v6062, 126
    %v6071 = vpop.permute.xlu0 %6070
    %6072 = vrot.lane.b32.xlu0 %v6063, 126
    %v6073 = vpop.permute.xlu0 %6072
    %6074 = vrot.lane.b32.xlu0 %v6064, 126
    %v6075 = vpop.permute.xlu0 %6074
    %6076 = vrot.lane.b32.xlu0 %v6065, 126
    %v6077 = vpop.permute.xlu0 %6076
    %v6082 = vadd.f32 %v5978, %v6071
    %v6083 = vadd.f32 %v5979, %v6073
    %v6084 = vadd.f32 %v5980, %v6075
    %v6085 = vadd.f32 %v5981, %v6077
    %s6086 = sld [smem:[#allocation13 + $0x5d]]
    %v6087 = vstv %s6086
    %v6088 = vmul.f32 %v4456, %v6087
    %v6089 = vmul.f32 %v4457, %v6087
    %v6090 = vmul.f32 %v4458, %v6087
    %v6091 = vmul.f32 %v4459, %v6087
    %6096 = vrot.lane.b32.xlu0 %v6088, 126
    %v6097 = vpop.permute.xlu0 %6096
    %6098 = vrot.lane.b32.xlu0 %v6089, 126
    %v6099 = vpop.permute.xlu0 %6098
    %6100 = vrot.lane.b32.xlu0 %v6090, 126
    %v6101 = vpop.permute.xlu0 %6100
    %6102 = vrot.lane.b32.xlu0 %v6091, 126
    %v6103 = vpop.permute.xlu0 %6102
    %v6108 = vadd.f32 %v6004, %v6097
    %v6109 = vadd.f32 %v6005, %v6099
    %v6110 = vadd.f32 %v6006, %v6101
    %v6111 = vadd.f32 %v6007, %v6103
    %s6112 = sld [smem:[#allocation13 + $0x5e]]
    %v6113 = vstv %s6112
    %v6114 = vmul.f32 %v4456, %v6113
    %v6115 = vmul.f32 %v4457, %v6113
    %v6116 = vmul.f32 %v4458, %v6113
    %v6117 = vmul.f32 %v4459, %v6113
    %6122 = vrot.lane.b32.xlu0 %v6114, 126
    %v6123 = vpop.permute.xlu0 %6122
    %6124 = vrot.lane.b32.xlu0 %v6115, 126
    %v6125 = vpop.permute.xlu0 %6124
    %6126 = vrot.lane.b32.xlu0 %v6116, 126
    %v6127 = vpop.permute.xlu0 %6126
    %6128 = vrot.lane.b32.xlu0 %v6117, 126
    %v6129 = vpop.permute.xlu0 %6128
    %v6134 = vadd.f32 %v6030, %v6123
    %v6135 = vadd.f32 %v6031, %v6125
    %v6136 = vadd.f32 %v6032, %v6127
    %v6137 = vadd.f32 %v6033, %v6129
    %s6138 = sld [smem:[#allocation13 + $0x5f]]
    %v6139 = vstv %s6138
    %v6140 = vmul.f32 %v4456, %v6139
    %v6141 = vmul.f32 %v4457, %v6139
    %v6142 = vmul.f32 %v4458, %v6139
    %v6143 = vmul.f32 %v4459, %v6139
    %6148 = vrot.lane.b32.xlu0 %v6140, 126
    %v6149 = vpop.permute.xlu0 %6148
    %6150 = vrot.lane.b32.xlu0 %v6141, 126
    %v6151 = vpop.permute.xlu0 %6150
    %6152 = vrot.lane.b32.xlu0 %v6142, 126
    %v6153 = vpop.permute.xlu0 %6152
    %6154 = vrot.lane.b32.xlu0 %v6143, 126
    %v6155 = vpop.permute.xlu0 %6154
    %v6160 = vadd.f32 %v6056, %v6149
    %v6161 = vadd.f32 %v6057, %v6151
    %v6162 = vadd.f32 %v6058, %v6153
    %v6163 = vadd.f32 %v6059, %v6155
    %v6164 = vld [vmem:[#allocation3 + $0x1] sm:$0xff]
    %v6165 = vld [vmem:[#allocation3 + $0x9] sm:$0xff]
    %v6166 = vld [vmem:[#allocation3 + $0xc1] sm:$0xff]
    %v6167 = vld [vmem:[#allocation3 + $0xc9] sm:$0xff]
    %s6168 = sld [smem:[#allocation13 + $0x60]]
    %v6169 = vstv %s6168
    %v6170 = vmul.f32 %v6164, %v6169
    %v6171 = vmul.f32 %v6165, %v6169
    %v6172 = vmul.f32 %v6166, %v6169
    %v6173 = vmul.f32 %v6167, %v6169
    %v6174 = vadd.f32 %v6082, %v6170
    %v6175 = vadd.f32 %v6083, %v6171
    %v6176 = vadd.f32 %v6084, %v6172
    %v6177 = vadd.f32 %v6085, %v6173
    %s6178 = sld [smem:[#allocation13 + $0x61]]
    %v6179 = vstv %s6178
    %v6180 = vmul.f32 %v6164, %v6179
    %v6181 = vmul.f32 %v6165, %v6179
    %v6182 = vmul.f32 %v6166, %v6179
    %v6183 = vmul.f32 %v6167, %v6179
    %v6184 = vadd.f32 %v6108, %v6180
    %v6185 = vadd.f32 %v6109, %v6181
    %v6186 = vadd.f32 %v6110, %v6182
    %v6187 = vadd.f32 %v6111, %v6183
    %s6188 = sld [smem:[#allocation13 + $0x62]]
    %v6189 = vstv %s6188
    %v6190 = vmul.f32 %v6164, %v6189
    %v6191 = vmul.f32 %v6165, %v6189
    %v6192 = vmul.f32 %v6166, %v6189
    %v6193 = vmul.f32 %v6167, %v6189
    %v6194 = vadd.f32 %v6134, %v6190
    %v6195 = vadd.f32 %v6135, %v6191
    %v6196 = vadd.f32 %v6136, %v6192
    %v6197 = vadd.f32 %v6137, %v6193
    %s6198 = sld [smem:[#allocation13 + $0x63]]
    %v6199 = vstv %s6198
    %v6200 = vmul.f32 %v6164, %v6199
    %v6201 = vmul.f32 %v6165, %v6199
    %v6202 = vmul.f32 %v6166, %v6199
    %v6203 = vmul.f32 %v6167, %v6199
    %v6204 = vadd.f32 %v6160, %v6200
    %v6205 = vadd.f32 %v6161, %v6201
    %v6206 = vadd.f32 %v6162, %v6202
    %v6207 = vadd.f32 %v6163, %v6203
    %v6208 = vld [vmem:[%s3601 + $0x1] sm:$0xff]
    %v6209 = vld [vmem:[%s3601 + $0x9] sm:$0xff]
    %v6210 = vld [vmem:[%s3601 + $0xc1] sm:$0xff]
    %v6211 = vld [vmem:[%s3601 + $0xc9] sm:$0xff]
    %s6212 = sld [smem:[#allocation13 + $0x64]]
    %v6213 = vstv %s6212
    %v6214 = vmul.f32 %v6208, %v6213
    %v6215 = vmul.f32 %v6209, %v6213
    %v6216 = vmul.f32 %v6210, %v6213
    %v6217 = vmul.f32 %v6211, %v6213
    %v6218 = vadd.f32 %v6174, %v6214
    %v6219 = vadd.f32 %v6175, %v6215
    %v6220 = vadd.f32 %v6176, %v6216
    %v6221 = vadd.f32 %v6177, %v6217
    %s6222 = sld [smem:[#allocation13 + $0x65]]
    %v6223 = vstv %s6222
    %v6224 = vmul.f32 %v6208, %v6223
    %v6225 = vmul.f32 %v6209, %v6223
    %v6226 = vmul.f32 %v6210, %v6223
    %v6227 = vmul.f32 %v6211, %v6223
    %v6228 = vadd.f32 %v6184, %v6224
    %v6229 = vadd.f32 %v6185, %v6225
    %v6230 = vadd.f32 %v6186, %v6226
    %v6231 = vadd.f32 %v6187, %v6227
    %s6232 = sld [smem:[#allocation13 + $0x66]]
    %v6233 = vstv %s6232
    %v6234 = vmul.f32 %v6208, %v6233
    %v6235 = vmul.f32 %v6209, %v6233
    %v6236 = vmul.f32 %v6210, %v6233
    %v6237 = vmul.f32 %v6211, %v6233
    %v6238 = vadd.f32 %v6194, %v6234
    %v6239 = vadd.f32 %v6195, %v6235
    %v6240 = vadd.f32 %v6196, %v6236
    %v6241 = vadd.f32 %v6197, %v6237
    %s6242 = sld [smem:[#allocation13 + $0x67]]
    %v6243 = vstv %s6242
    %v6244 = vmul.f32 %v6208, %v6243
    %v6245 = vmul.f32 %v6209, %v6243
    %v6246 = vmul.f32 %v6210, %v6243
    %v6247 = vmul.f32 %v6211, %v6243
    %v6248 = vadd.f32 %v6204, %v6244
    %v6249 = vadd.f32 %v6205, %v6245
    %v6250 = vadd.f32 %v6206, %v6246
    %v6251 = vadd.f32 %v6207, %v6247
    %v6252 = vld [vmem:[%s3694 + $0x1] sm:$0xff]
    %v6253 = vld [vmem:[%s3694 + $0x9] sm:$0xff]
    %v6254 = vld [vmem:[%s3694 + $0xc1] sm:$0xff]
    %v6255 = vld [vmem:[%s3694 + $0xc9] sm:$0xff]
    %s6256 = sld [smem:[#allocation13 + $0x68]]
    %v6257 = vstv %s6256
    %v6258 = vmul.f32 %v6252, %v6257
    %v6259 = vmul.f32 %v6253, %v6257
    %v6260 = vmul.f32 %v6254, %v6257
    %v6261 = vmul.f32 %v6255, %v6257
    %v6262 = vadd.f32 %v6218, %v6258
    %v6263 = vadd.f32 %v6219, %v6259
    %v6264 = vadd.f32 %v6220, %v6260
    %v6265 = vadd.f32 %v6221, %v6261
    %s6266 = sld [smem:[#allocation13 + $0x69]]
    %v6267 = vstv %s6266
    %v6268 = vmul.f32 %v6252, %v6267
    %v6269 = vmul.f32 %v6253, %v6267
    %v6270 = vmul.f32 %v6254, %v6267
    %v6271 = vmul.f32 %v6255, %v6267
    %v6272 = vadd.f32 %v6228, %v6268
    %v6273 = vadd.f32 %v6229, %v6269
    %v6274 = vadd.f32 %v6230, %v6270
    %v6275 = vadd.f32 %v6231, %v6271
    %s6276 = sld [smem:[#allocation13 + $0x6a]]
    %v6277 = vstv %s6276
    %v6278 = vmul.f32 %v6252, %v6277
    %v6279 = vmul.f32 %v6253, %v6277
    %v6280 = vmul.f32 %v6254, %v6277
    %v6281 = vmul.f32 %v6255, %v6277
    %v6282 = vadd.f32 %v6238, %v6278
    %v6283 = vadd.f32 %v6239, %v6279
    %v6284 = vadd.f32 %v6240, %v6280
    %v6285 = vadd.f32 %v6241, %v6281
    %s6286 = sld [smem:[#allocation13 + $0x6b]]
    %v6287 = vstv %s6286
    %v6288 = vmul.f32 %v6252, %v6287
    %v6289 = vmul.f32 %v6253, %v6287
    %v6290 = vmul.f32 %v6254, %v6287
    %v6291 = vmul.f32 %v6255, %v6287
    %v6292 = vadd.f32 %v6248, %v6288
    %v6293 = vadd.f32 %v6249, %v6289
    %v6294 = vadd.f32 %v6250, %v6290
    %v6295 = vadd.f32 %v6251, %v6291
    %v6296 = vld [vmem:[%s3787 + $0x1] sm:$0xff]
    %v6297 = vld [vmem:[%s3787 + $0x9] sm:$0xff]
    %v6298 = vld [vmem:[%s3787 + $0xc1] sm:$0xff]
    %v6299 = vld [vmem:[%s3787 + $0xc9] sm:$0xff]
    %s6300 = sld [smem:[#allocation13 + $0x6c]]
    %v6301 = vstv %s6300
    %v6302 = vmul.f32 %v6296, %v6301
    %v6303 = vmul.f32 %v6297, %v6301
    %v6304 = vmul.f32 %v6298, %v6301
    %v6305 = vmul.f32 %v6299, %v6301
    %v6306 = vadd.f32 %v6262, %v6302
    %v6307 = vadd.f32 %v6263, %v6303
    %v6308 = vadd.f32 %v6264, %v6304
    %v6309 = vadd.f32 %v6265, %v6305
    %s6310 = sld [smem:[#allocation13 + $0x6d]]
    %v6311 = vstv %s6310
    %v6312 = vmul.f32 %v6296, %v6311
    %v6313 = vmul.f32 %v6297, %v6311
    %v6314 = vmul.f32 %v6298, %v6311
    %v6315 = vmul.f32 %v6299, %v6311
    %v6316 = vadd.f32 %v6272, %v6312
    %v6317 = vadd.f32 %v6273, %v6313
    %v6318 = vadd.f32 %v6274, %v6314
    %v6319 = vadd.f32 %v6275, %v6315
    %s6320 = sld [smem:[#allocation13 + $0x6e]]
    %v6321 = vstv %s6320
    %v6322 = vmul.f32 %v6296, %v6321
    %v6323 = vmul.f32 %v6297, %v6321
    %v6324 = vmul.f32 %v6298, %v6321
    %v6325 = vmul.f32 %v6299, %v6321
    %v6326 = vadd.f32 %v6282, %v6322
    %v6327 = vadd.f32 %v6283, %v6323
    %v6328 = vadd.f32 %v6284, %v6324
    %v6329 = vadd.f32 %v6285, %v6325
    %s6330 = sld [smem:[#allocation13 + $0x6f]]
    %v6331 = vstv %s6330
    %v6332 = vmul.f32 %v6296, %v6331
    %v6333 = vmul.f32 %v6297, %v6331
    %v6334 = vmul.f32 %v6298, %v6331
    %v6335 = vmul.f32 %v6299, %v6331
    %v6336 = vadd.f32 %v6292, %v6332
    %v6337 = vadd.f32 %v6293, %v6333
    %v6338 = vadd.f32 %v6294, %v6334
    %v6339 = vadd.f32 %v6295, %v6335
    %v6340 = vld [vmem:[%s3880 + $0x1] sm:$0xff]
    %v6341 = vld [vmem:[%s3880 + $0x9] sm:$0xff]
    %v6342 = vld [vmem:[%s3880 + $0xc1] sm:$0xff]
    %v6343 = vld [vmem:[%s3880 + $0xc9] sm:$0xff]
    %s6344 = sld [smem:[#allocation13 + $0x70]]
    %v6345 = vstv %s6344
    %v6346 = vmul.f32 %v6340, %v6345
    %v6347 = vmul.f32 %v6341, %v6345
    %v6348 = vmul.f32 %v6342, %v6345
    %v6349 = vmul.f32 %v6343, %v6345
    %v6350 = vadd.f32 %v6306, %v6346
    %v6351 = vadd.f32 %v6307, %v6347
    %v6352 = vadd.f32 %v6308, %v6348
    %v6353 = vadd.f32 %v6309, %v6349
    %s6354 = sld [smem:[#allocation13 + $0x71]]
    %v6355 = vstv %s6354
    %v6356 = vmul.f32 %v6340, %v6355
    %v6357 = vmul.f32 %v6341, %v6355
    %v6358 = vmul.f32 %v6342, %v6355
    %v6359 = vmul.f32 %v6343, %v6355
    %v6360 = vadd.f32 %v6316, %v6356
    %v6361 = vadd.f32 %v6317, %v6357
    %v6362 = vadd.f32 %v6318, %v6358
    %v6363 = vadd.f32 %v6319, %v6359
    %s6364 = sld [smem:[#allocation13 + $0x72]]
    %v6365 = vstv %s6364
    %v6366 = vmul.f32 %v6340, %v6365
    %v6367 = vmul.f32 %v6341, %v6365
    %v6368 = vmul.f32 %v6342, %v6365
    %v6369 = vmul.f32 %v6343, %v6365
    %v6370 = vadd.f32 %v6326, %v6366
    %v6371 = vadd.f32 %v6327, %v6367
    %v6372 = vadd.f32 %v6328, %v6368
    %v6373 = vadd.f32 %v6329, %v6369
    %s6374 = sld [smem:[#allocation13 + $0x73]]
    %v6375 = vstv %s6374
    %v6376 = vmul.f32 %v6340, %v6375
    %v6377 = vmul.f32 %v6341, %v6375
    %v6378 = vmul.f32 %v6342, %v6375
    %v6379 = vmul.f32 %v6343, %v6375
    %v6380 = vadd.f32 %v6336, %v6376
    %v6381 = vadd.f32 %v6337, %v6377
    %v6382 = vadd.f32 %v6338, %v6378
    %v6383 = vadd.f32 %v6339, %v6379
    %v6384 = vld [vmem:[%s3973 + $0x1] sm:$0xff]
    %v6385 = vld [vmem:[%s3973 + $0x9] sm:$0xff]
    %v6386 = vld [vmem:[%s3973 + $0xc1] sm:$0xff]
    %v6387 = vld [vmem:[%s3973 + $0xc9] sm:$0xff]
    %s6388 = sld [smem:[#allocation13 + $0x74]]
    %v6389 = vstv %s6388
    %v6390 = vmul.f32 %v6384, %v6389
    %v6391 = vmul.f32 %v6385, %v6389
    %v6392 = vmul.f32 %v6386, %v6389
    %v6393 = vmul.f32 %v6387, %v6389
    %v6394 = vadd.f32 %v6350, %v6390
    %v6395 = vadd.f32 %v6351, %v6391
    %v6396 = vadd.f32 %v6352, %v6392
    %v6397 = vadd.f32 %v6353, %v6393
    %s6398 = sld [smem:[#allocation13 + $0x75]]
    %v6399 = vstv %s6398
    %v6400 = vmul.f32 %v6384, %v6399
    %v6401 = vmul.f32 %v6385, %v6399
    %v6402 = vmul.f32 %v6386, %v6399
    %v6403 = vmul.f32 %v6387, %v6399
    %v6404 = vadd.f32 %v6360, %v6400
    %v6405 = vadd.f32 %v6361, %v6401
    %v6406 = vadd.f32 %v6362, %v6402
    %v6407 = vadd.f32 %v6363, %v6403
    %s6408 = sld [smem:[#allocation13 + $0x76]]
    %v6409 = vstv %s6408
    %v6410 = vmul.f32 %v6384, %v6409
    %v6411 = vmul.f32 %v6385, %v6409
    %v6412 = vmul.f32 %v6386, %v6409
    %v6413 = vmul.f32 %v6387, %v6409
    %v6414 = vadd.f32 %v6370, %v6410
    %v6415 = vadd.f32 %v6371, %v6411
    %v6416 = vadd.f32 %v6372, %v6412
    %v6417 = vadd.f32 %v6373, %v6413
    %s6418 = sld [smem:[#allocation13 + $0x77]]
    %v6419 = vstv %s6418
    %v6420 = vmul.f32 %v6384, %v6419
    %v6421 = vmul.f32 %v6385, %v6419
    %v6422 = vmul.f32 %v6386, %v6419
    %v6423 = vmul.f32 %v6387, %v6419
    %v6424 = vadd.f32 %v6380, %v6420
    %v6425 = vadd.f32 %v6381, %v6421
    %v6426 = vadd.f32 %v6382, %v6422
    %v6427 = vadd.f32 %v6383, %v6423
    %v6428 = vld [vmem:[%s4066 + $0x1] sm:$0xff]
    %v6429 = vld [vmem:[%s4066 + $0x9] sm:$0xff]
    %v6430 = vld [vmem:[%s4066 + $0xc1] sm:$0xff]
    %v6431 = vld [vmem:[%s4066 + $0xc9] sm:$0xff]
    %s6432 = sld [smem:[#allocation13 + $0x78]]
    %v6433 = vstv %s6432
    %v6434 = vmul.f32 %v6428, %v6433
    %v6435 = vmul.f32 %v6429, %v6433
    %v6436 = vmul.f32 %v6430, %v6433
    %v6437 = vmul.f32 %v6431, %v6433
    %v6438 = vadd.f32 %v6394, %v6434
    %v6439 = vadd.f32 %v6395, %v6435
    %v6440 = vadd.f32 %v6396, %v6436
    %v6441 = vadd.f32 %v6397, %v6437
    %s6442 = sld [smem:[#allocation13 + $0x79]]
    %v6443 = vstv %s6442
    %v6444 = vmul.f32 %v6428, %v6443
    %v6445 = vmul.f32 %v6429, %v6443
    %v6446 = vmul.f32 %v6430, %v6443
    %v6447 = vmul.f32 %v6431, %v6443
    %v6448 = vadd.f32 %v6404, %v6444
    %v6449 = vadd.f32 %v6405, %v6445
    %v6450 = vadd.f32 %v6406, %v6446
    %v6451 = vadd.f32 %v6407, %v6447
    %s6452 = sld [smem:[#allocation13 + $0x7a]]
    %v6453 = vstv %s6452
    %v6454 = vmul.f32 %v6428, %v6453
    %v6455 = vmul.f32 %v6429, %v6453
    %v6456 = vmul.f32 %v6430, %v6453
    %v6457 = vmul.f32 %v6431, %v6453
    %v6458 = vadd.f32 %v6414, %v6454
    %v6459 = vadd.f32 %v6415, %v6455
    %v6460 = vadd.f32 %v6416, %v6456
    %v6461 = vadd.f32 %v6417, %v6457
    %s6462 = sld [smem:[#allocation13 + $0x7b]]
    %v6463 = vstv %s6462
    %v6464 = vmul.f32 %v6428, %v6463
    %v6465 = vmul.f32 %v6429, %v6463
    %v6466 = vmul.f32 %v6430, %v6463
    %v6467 = vmul.f32 %v6431, %v6463
    %v6468 = vadd.f32 %v6424, %v6464
    %v6469 = vadd.f32 %v6425, %v6465
    %v6470 = vadd.f32 %v6426, %v6466
    %v6471 = vadd.f32 %v6427, %v6467
    %v6472 = vld [vmem:[%s4159 + $0x1] sm:$0xff]
    %v6473 = vld [vmem:[%s4159 + $0x9] sm:$0xff]
    %v6474 = vld [vmem:[%s4159 + $0xc1] sm:$0xff]
    %v6475 = vld [vmem:[%s4159 + $0xc9] sm:$0xff]
    %s6476 = sld [smem:[#allocation13 + $0x7c]]
    %v6477 = vstv %s6476
    %v6478 = vmul.f32 %v6472, %v6477
    %v6479 = vmul.f32 %v6473, %v6477
    %v6480 = vmul.f32 %v6474, %v6477
    %v6481 = vmul.f32 %v6475, %v6477
    %v6482 = vadd.f32 %v6438, %v6478
    %v6483 = vadd.f32 %v6439, %v6479
    %v6484 = vadd.f32 %v6440, %v6480
    %v6485 = vadd.f32 %v6441, %v6481
    %s6486 = sld [smem:[#allocation13 + $0x7d]]
    %v6487 = vstv %s6486
    %v6488 = vmul.f32 %v6472, %v6487
    %v6489 = vmul.f32 %v6473, %v6487
    %v6490 = vmul.f32 %v6474, %v6487
    %v6491 = vmul.f32 %v6475, %v6487
    %v6492 = vadd.f32 %v6448, %v6488
    %v6493 = vadd.f32 %v6449, %v6489
    %v6494 = vadd.f32 %v6450, %v6490
    %v6495 = vadd.f32 %v6451, %v6491
    %s6496 = sld [smem:[#allocation13 + $0x7e]]
    %v6497 = vstv %s6496
    %v6498 = vmul.f32 %v6472, %v6497
    %v6499 = vmul.f32 %v6473, %v6497
    %v6500 = vmul.f32 %v6474, %v6497
    %v6501 = vmul.f32 %v6475, %v6497
    %v6502 = vadd.f32 %v6458, %v6498
    %v6503 = vadd.f32 %v6459, %v6499
    %v6504 = vadd.f32 %v6460, %v6500
    %v6505 = vadd.f32 %v6461, %v6501
    %s6506 = sld [smem:[#allocation13 + $0x7f]]
    %v6507 = vstv %s6506
    %v6508 = vmul.f32 %v6472, %v6507
    %v6509 = vmul.f32 %v6473, %v6507
    %v6510 = vmul.f32 %v6474, %v6507
    %v6511 = vmul.f32 %v6475, %v6507
    %v6512 = vadd.f32 %v6468, %v6508
    %v6513 = vadd.f32 %v6469, %v6509
    %v6514 = vadd.f32 %v6470, %v6510
    %v6515 = vadd.f32 %v6471, %v6511
    %s6516 = sld [smem:[#allocation13 + $0x80]]
    %v6517 = vstv %s6516
    %v6518 = vmul.f32 %v6164, %v6517
    %v6519 = vmul.f32 %v6165, %v6517
    %v6520 = vmul.f32 %v6166, %v6517
    %v6521 = vmul.f32 %v6167, %v6517
    %6526 = vrot.lane.b32.xlu0 %v6518, 127
    %v6527 = vpop.permute.xlu0 %6526
    %6528 = vrot.lane.b32.xlu0 %v6519, 127
    %v6529 = vpop.permute.xlu0 %6528
    %6530 = vrot.lane.b32.xlu0 %v6520, 127
    %v6531 = vpop.permute.xlu0 %6530
    %6532 = vrot.lane.b32.xlu0 %v6521, 127
    %v6533 = vpop.permute.xlu0 %6532
    %v6538 = vadd.f32 %v6482, %v6527
    %v6539 = vadd.f32 %v6483, %v6529
    %v6540 = vadd.f32 %v6484, %v6531
    %v6541 = vadd.f32 %v6485, %v6533
    %s6542 = sld [smem:[#allocation13 + $0x81]]
    %v6543 = vstv %s6542
    %v6544 = vmul.f32 %v6164, %v6543
    %v6545 = vmul.f32 %v6165, %v6543
    %v6546 = vmul.f32 %v6166, %v6543
    %v6547 = vmul.f32 %v6167, %v6543
    %6552 = vrot.lane.b32.xlu0 %v6544, 127
    %v6553 = vpop.permute.xlu0 %6552
    %6554 = vrot.lane.b32.xlu0 %v6545, 127
    %v6555 = vpop.permute.xlu0 %6554
    %6556 = vrot.lane.b32.xlu0 %v6546, 127
    %v6557 = vpop.permute.xlu0 %6556
    %6558 = vrot.lane.b32.xlu0 %v6547, 127
    %v6559 = vpop.permute.xlu0 %6558
    %v6564 = vadd.f32 %v6492, %v6553
    %v6565 = vadd.f32 %v6493, %v6555
    %v6566 = vadd.f32 %v6494, %v6557
    %v6567 = vadd.f32 %v6495, %v6559
    %s6568 = sld [smem:[#allocation13 + $0x82]]
    %v6569 = vstv %s6568
    %v6570 = vmul.f32 %v6164, %v6569
    %v6571 = vmul.f32 %v6165, %v6569
    %v6572 = vmul.f32 %v6166, %v6569
    %v6573 = vmul.f32 %v6167, %v6569
    %6578 = vrot.lane.b32.xlu0 %v6570, 127
    %v6579 = vpop.permute.xlu0 %6578
    %6580 = vrot.lane.b32.xlu0 %v6571, 127
    %v6581 = vpop.permute.xlu0 %6580
    %6582 = vrot.lane.b32.xlu0 %v6572, 127
    %v6583 = vpop.permute.xlu0 %6582
    %6584 = vrot.lane.b32.xlu0 %v6573, 127
    %v6585 = vpop.permute.xlu0 %6584
    %v6590 = vadd.f32 %v6502, %v6579
    %v6591 = vadd.f32 %v6503, %v6581
    %v6592 = vadd.f32 %v6504, %v6583
    %v6593 = vadd.f32 %v6505, %v6585
    %s6594 = sld [smem:[#allocation13 + $0x83]]
    %v6595 = vstv %s6594
    %v6596 = vmul.f32 %v6164, %v6595
    %v6597 = vmul.f32 %v6165, %v6595
    %v6598 = vmul.f32 %v6166, %v6595
    %v6599 = vmul.f32 %v6167, %v6595
    %6604 = vrot.lane.b32.xlu0 %v6596, 127
    %v6605 = vpop.permute.xlu0 %6604
    %6606 = vrot.lane.b32.xlu0 %v6597, 127
    %v6607 = vpop.permute.xlu0 %6606
    %6608 = vrot.lane.b32.xlu0 %v6598, 127
    %v6609 = vpop.permute.xlu0 %6608
    %6610 = vrot.lane.b32.xlu0 %v6599, 127
    %v6611 = vpop.permute.xlu0 %6610
    %v6616 = vadd.f32 %v6512, %v6605
    %v6617 = vadd.f32 %v6513, %v6607
    %v6618 = vadd.f32 %v6514, %v6609
    %v6619 = vadd.f32 %v6515, %v6611
    %s6620 = sld [smem:[#allocation13 + $0x84]]
    %v6621 = vstv %s6620
    %v6622 = vmul.f32 %v6208, %v6621
    %v6623 = vmul.f32 %v6209, %v6621
    %v6624 = vmul.f32 %v6210, %v6621
    %v6625 = vmul.f32 %v6211, %v6621
    %6630 = vrot.lane.b32.xlu0 %v6622, 127
    %v6631 = vpop.permute.xlu0 %6630
    %6632 = vrot.lane.b32.xlu0 %v6623, 127
    %v6633 = vpop.permute.xlu0 %6632
    %6634 = vrot.lane.b32.xlu0 %v6624, 127
    %v6635 = vpop.permute.xlu0 %6634
    %6636 = vrot.lane.b32.xlu0 %v6625, 127
    %v6637 = vpop.permute.xlu0 %6636
    %v6642 = vadd.f32 %v6538, %v6631
    %v6643 = vadd.f32 %v6539, %v6633
    %v6644 = vadd.f32 %v6540, %v6635
    %v6645 = vadd.f32 %v6541, %v6637
    %s6646 = sld [smem:[#allocation13 + $0x85]]
    %v6647 = vstv %s6646
    %v6648 = vmul.f32 %v6208, %v6647
    %v6649 = vmul.f32 %v6209, %v6647
    %v6650 = vmul.f32 %v6210, %v6647
    %v6651 = vmul.f32 %v6211, %v6647
    %6656 = vrot.lane.b32.xlu0 %v6648, 127
    %v6657 = vpop.permute.xlu0 %6656
    %6658 = vrot.lane.b32.xlu0 %v6649, 127
    %v6659 = vpop.permute.xlu0 %6658
    %6660 = vrot.lane.b32.xlu0 %v6650, 127
    %v6661 = vpop.permute.xlu0 %6660
    %6662 = vrot.lane.b32.xlu0 %v6651, 127
    %v6663 = vpop.permute.xlu0 %6662
    %v6668 = vadd.f32 %v6564, %v6657
    %v6669 = vadd.f32 %v6565, %v6659
    %v6670 = vadd.f32 %v6566, %v6661
    %v6671 = vadd.f32 %v6567, %v6663
    %s6672 = sld [smem:[#allocation13 + $0x86]]
    %v6673 = vstv %s6672
    %v6674 = vmul.f32 %v6208, %v6673
    %v6675 = vmul.f32 %v6209, %v6673
    %v6676 = vmul.f32 %v6210, %v6673
    %v6677 = vmul.f32 %v6211, %v6673
    %6682 = vrot.lane.b32.xlu0 %v6674, 127
    %v6683 = vpop.permute.xlu0 %6682
    %6684 = vrot.lane.b32.xlu0 %v6675, 127
    %v6685 = vpop.permute.xlu0 %6684
    %6686 = vrot.lane.b32.xlu0 %v6676, 127
    %v6687 = vpop.permute.xlu0 %6686
    %6688 = vrot.lane.b32.xlu0 %v6677, 127
    %v6689 = vpop.permute.xlu0 %6688
    %v6694 = vadd.f32 %v6590, %v6683
    %v6695 = vadd.f32 %v6591, %v6685
    %v6696 = vadd.f32 %v6592, %v6687
    %v6697 = vadd.f32 %v6593, %v6689
    %s6698 = sld [smem:[#allocation13 + $0x87]]
    %v6699 = vstv %s6698
    %v6700 = vmul.f32 %v6208, %v6699
    %v6701 = vmul.f32 %v6209, %v6699
    %v6702 = vmul.f32 %v6210, %v6699
    %v6703 = vmul.f32 %v6211, %v6699
    %6708 = vrot.lane.b32.xlu0 %v6700, 127
    %v6709 = vpop.permute.xlu0 %6708
    %6710 = vrot.lane.b32.xlu0 %v6701, 127
    %v6711 = vpop.permute.xlu0 %6710
    %6712 = vrot.lane.b32.xlu0 %v6702, 127
    %v6713 = vpop.permute.xlu0 %6712
    %6714 = vrot.lane.b32.xlu0 %v6703, 127
    %v6715 = vpop.permute.xlu0 %6714
    %v6720 = vadd.f32 %v6616, %v6709
    %v6721 = vadd.f32 %v6617, %v6711
    %v6722 = vadd.f32 %v6618, %v6713
    %v6723 = vadd.f32 %v6619, %v6715
    %s6724 = sld [smem:[#allocation13 + $0x88]]
    %v6725 = vstv %s6724
    %v6726 = vmul.f32 %v6252, %v6725
    %v6727 = vmul.f32 %v6253, %v6725
    %v6728 = vmul.f32 %v6254, %v6725
    %v6729 = vmul.f32 %v6255, %v6725
    %6734 = vrot.lane.b32.xlu0 %v6726, 127
    %v6735 = vpop.permute.xlu0 %6734
    %6736 = vrot.lane.b32.xlu0 %v6727, 127
    %v6737 = vpop.permute.xlu0 %6736
    %6738 = vrot.lane.b32.xlu0 %v6728, 127
    %v6739 = vpop.permute.xlu0 %6738
    %6740 = vrot.lane.b32.xlu0 %v6729, 127
    %v6741 = vpop.permute.xlu0 %6740
    %v6746 = vadd.f32 %v6642, %v6735
    %v6747 = vadd.f32 %v6643, %v6737
    %v6748 = vadd.f32 %v6644, %v6739
    %v6749 = vadd.f32 %v6645, %v6741
    %s6750 = sld [smem:[#allocation13 + $0x89]]
    %v6751 = vstv %s6750
    %v6752 = vmul.f32 %v6252, %v6751
    %v6753 = vmul.f32 %v6253, %v6751
    %v6754 = vmul.f32 %v6254, %v6751
    %v6755 = vmul.f32 %v6255, %v6751
    %6760 = vrot.lane.b32.xlu0 %v6752, 127
    %v6761 = vpop.permute.xlu0 %6760
    %6762 = vrot.lane.b32.xlu0 %v6753, 127
    %v6763 = vpop.permute.xlu0 %6762
    %6764 = vrot.lane.b32.xlu0 %v6754, 127
    %v6765 = vpop.permute.xlu0 %6764
    %6766 = vrot.lane.b32.xlu0 %v6755, 127
    %v6767 = vpop.permute.xlu0 %6766
    %v6772 = vadd.f32 %v6668, %v6761
    %v6773 = vadd.f32 %v6669, %v6763
    %v6774 = vadd.f32 %v6670, %v6765
    %v6775 = vadd.f32 %v6671, %v6767
    %s6776 = sld [smem:[#allocation13 + $0x8a]]
    %v6777 = vstv %s6776
    %v6778 = vmul.f32 %v6252, %v6777
    %v6779 = vmul.f32 %v6253, %v6777
    %v6780 = vmul.f32 %v6254, %v6777
    %v6781 = vmul.f32 %v6255, %v6777
    %6786 = vrot.lane.b32.xlu0 %v6778, 127
    %v6787 = vpop.permute.xlu0 %6786
    %6788 = vrot.lane.b32.xlu0 %v6779, 127
    %v6789 = vpop.permute.xlu0 %6788
    %6790 = vrot.lane.b32.xlu0 %v6780, 127
    %v6791 = vpop.permute.xlu0 %6790
    %6792 = vrot.lane.b32.xlu0 %v6781, 127
    %v6793 = vpop.permute.xlu0 %6792
    %v6798 = vadd.f32 %v6694, %v6787
    %v6799 = vadd.f32 %v6695, %v6789
    %v6800 = vadd.f32 %v6696, %v6791
    %v6801 = vadd.f32 %v6697, %v6793
    %s6802 = sld [smem:[#allocation13 + $0x8b]]
    %v6803 = vstv %s6802
    %v6804 = vmul.f32 %v6252, %v6803
    %v6805 = vmul.f32 %v6253, %v6803
    %v6806 = vmul.f32 %v6254, %v6803
    %v6807 = vmul.f32 %v6255, %v6803
    %6812 = vrot.lane.b32.xlu0 %v6804, 127
    %v6813 = vpop.permute.xlu0 %6812
    %6814 = vrot.lane.b32.xlu0 %v6805, 127
    %v6815 = vpop.permute.xlu0 %6814
    %6816 = vrot.lane.b32.xlu0 %v6806, 127
    %v6817 = vpop.permute.xlu0 %6816
    %6818 = vrot.lane.b32.xlu0 %v6807, 127
    %v6819 = vpop.permute.xlu0 %6818
    %v6824 = vadd.f32 %v6720, %v6813
    %v6825 = vadd.f32 %v6721, %v6815
    %v6826 = vadd.f32 %v6722, %v6817
    %v6827 = vadd.f32 %v6723, %v6819
    %s6828 = sld [smem:[#allocation13 + $0x8c]]
    %v6829 = vstv %s6828
    %v6830 = vmul.f32 %v6296, %v6829
    %v6831 = vmul.f32 %v6297, %v6829
    %v6832 = vmul.f32 %v6298, %v6829
    %v6833 = vmul.f32 %v6299, %v6829
    %6838 = vrot.lane.b32.xlu0 %v6830, 127
    %v6839 = vpop.permute.xlu0 %6838
    %6840 = vrot.lane.b32.xlu0 %v6831, 127
    %v6841 = vpop.permute.xlu0 %6840
    %6842 = vrot.lane.b32.xlu0 %v6832, 127
    %v6843 = vpop.permute.xlu0 %6842
    %6844 = vrot.lane.b32.xlu0 %v6833, 127
    %v6845 = vpop.permute.xlu0 %6844
    %v6850 = vadd.f32 %v6746, %v6839
    %v6851 = vadd.f32 %v6747, %v6841
    %v6852 = vadd.f32 %v6748, %v6843
    %v6853 = vadd.f32 %v6749, %v6845
    %s6854 = sld [smem:[#allocation13 + $0x8d]]
    %v6855 = vstv %s6854
    %v6856 = vmul.f32 %v6296, %v6855
    %v6857 = vmul.f32 %v6297, %v6855
    %v6858 = vmul.f32 %v6298, %v6855
    %v6859 = vmul.f32 %v6299, %v6855
    %6864 = vrot.lane.b32.xlu0 %v6856, 127
    %v6865 = vpop.permute.xlu0 %6864
    %6866 = vrot.lane.b32.xlu0 %v6857, 127
    %v6867 = vpop.permute.xlu0 %6866
    %6868 = vrot.lane.b32.xlu0 %v6858, 127
    %v6869 = vpop.permute.xlu0 %6868
    %6870 = vrot.lane.b32.xlu0 %v6859, 127
    %v6871 = vpop.permute.xlu0 %6870
    %v6876 = vadd.f32 %v6772, %v6865
    %v6877 = vadd.f32 %v6773, %v6867
    %v6878 = vadd.f32 %v6774, %v6869
    %v6879 = vadd.f32 %v6775, %v6871
    %s6880 = sld [smem:[#allocation13 + $0x8e]]
    %v6881 = vstv %s6880
    %v6882 = vmul.f32 %v6296, %v6881
    %v6883 = vmul.f32 %v6297, %v6881
    %v6884 = vmul.f32 %v6298, %v6881
    %v6885 = vmul.f32 %v6299, %v6881
    %6890 = vrot.lane.b32.xlu0 %v6882, 127
    %v6891 = vpop.permute.xlu0 %6890
    %6892 = vrot.lane.b32.xlu0 %v6883, 127
    %v6893 = vpop.permute.xlu0 %6892
    %6894 = vrot.lane.b32.xlu0 %v6884, 127
    %v6895 = vpop.permute.xlu0 %6894
    %6896 = vrot.lane.b32.xlu0 %v6885, 127
    %v6897 = vpop.permute.xlu0 %6896
    %v6902 = vadd.f32 %v6798, %v6891
    %v6903 = vadd.f32 %v6799, %v6893
    %v6904 = vadd.f32 %v6800, %v6895
    %v6905 = vadd.f32 %v6801, %v6897
    %s6906 = sld [smem:[#allocation13 + $0x8f]]
    %v6907 = vstv %s6906
    %v6908 = vmul.f32 %v6296, %v6907
    %v6909 = vmul.f32 %v6297, %v6907
    %v6910 = vmul.f32 %v6298, %v6907
    %v6911 = vmul.f32 %v6299, %v6907
    %6916 = vrot.lane.b32.xlu0 %v6908, 127
    %v6917 = vpop.permute.xlu0 %6916
    %6918 = vrot.lane.b32.xlu0 %v6909, 127
    %v6919 = vpop.permute.xlu0 %6918
    %6920 = vrot.lane.b32.xlu0 %v6910, 127
    %v6921 = vpop.permute.xlu0 %6920
    %6922 = vrot.lane.b32.xlu0 %v6911, 127
    %v6923 = vpop.permute.xlu0 %6922
    %v6928 = vadd.f32 %v6824, %v6917
    %v6929 = vadd.f32 %v6825, %v6919
    %v6930 = vadd.f32 %v6826, %v6921
    %v6931 = vadd.f32 %v6827, %v6923
    %s6932 = sld [smem:[#allocation13 + $0x90]]
    %v6933 = vstv %s6932
    %v6934 = vmul.f32 %v6340, %v6933
    %v6935 = vmul.f32 %v6341, %v6933
    %v6936 = vmul.f32 %v6342, %v6933
    %v6937 = vmul.f32 %v6343, %v6933
    %6942 = vrot.lane.b32.xlu0 %v6934, 127
    %v6943 = vpop.permute.xlu0 %6942
    %6944 = vrot.lane.b32.xlu0 %v6935, 127
    %v6945 = vpop.permute.xlu0 %6944
    %6946 = vrot.lane.b32.xlu0 %v6936, 127
    %v6947 = vpop.permute.xlu0 %6946
    %6948 = vrot.lane.b32.xlu0 %v6937, 127
    %v6949 = vpop.permute.xlu0 %6948
    %v6954 = vadd.f32 %v6850, %v6943
    %v6955 = vadd.f32 %v6851, %v6945
    %v6956 = vadd.f32 %v6852, %v6947
    %v6957 = vadd.f32 %v6853, %v6949
    %s6958 = sld [smem:[#allocation13 + $0x91]]
    %v6959 = vstv %s6958
    %v6960 = vmul.f32 %v6340, %v6959
    %v6961 = vmul.f32 %v6341, %v6959
    %v6962 = vmul.f32 %v6342, %v6959
    %v6963 = vmul.f32 %v6343, %v6959
    %6968 = vrot.lane.b32.xlu0 %v6960, 127
    %v6969 = vpop.permute.xlu0 %6968
    %6970 = vrot.lane.b32.xlu0 %v6961, 127
    %v6971 = vpop.permute.xlu0 %6970
    %6972 = vrot.lane.b32.xlu0 %v6962, 127
    %v6973 = vpop.permute.xlu0 %6972
    %6974 = vrot.lane.b32.xlu0 %v6963, 127
    %v6975 = vpop.permute.xlu0 %6974
    %v6980 = vadd.f32 %v6876, %v6969
    %v6981 = vadd.f32 %v6877, %v6971
    %v6982 = vadd.f32 %v6878, %v6973
    %v6983 = vadd.f32 %v6879, %v6975
    %s6984 = sld [smem:[#allocation13 + $0x92]]
    %v6985 = vstv %s6984
    %v6986 = vmul.f32 %v6340, %v6985
    %v6987 = vmul.f32 %v6341, %v6985
    %v6988 = vmul.f32 %v6342, %v6985
    %v6989 = vmul.f32 %v6343, %v6985
    %6994 = vrot.lane.b32.xlu0 %v6986, 127
    %v6995 = vpop.permute.xlu0 %6994
    %6996 = vrot.lane.b32.xlu0 %v6987, 127
    %v6997 = vpop.permute.xlu0 %6996
    %6998 = vrot.lane.b32.xlu0 %v6988, 127
    %v6999 = vpop.permute.xlu0 %6998
    %7000 = vrot.lane.b32.xlu0 %v6989, 127
    %v7001 = vpop.permute.xlu0 %7000
    %v7006 = vadd.f32 %v6902, %v6995
    %v7007 = vadd.f32 %v6903, %v6997
    %v7008 = vadd.f32 %v6904, %v6999
    %v7009 = vadd.f32 %v6905, %v7001
    %s7010 = sld [smem:[#allocation13 + $0x93]]
    %v7011 = vstv %s7010
    %v7012 = vmul.f32 %v6340, %v7011
    %v7013 = vmul.f32 %v6341, %v7011
    %v7014 = vmul.f32 %v6342, %v7011
    %v7015 = vmul.f32 %v6343, %v7011
    %7020 = vrot.lane.b32.xlu0 %v7012, 127
    %v7021 = vpop.permute.xlu0 %7020
    %7022 = vrot.lane.b32.xlu0 %v7013, 127
    %v7023 = vpop.permute.xlu0 %7022
    %7024 = vrot.lane.b32.xlu0 %v7014, 127
    %v7025 = vpop.permute.xlu0 %7024
    %7026 = vrot.lane.b32.xlu0 %v7015, 127
    %v7027 = vpop.permute.xlu0 %7026
    %v7032 = vadd.f32 %v6928, %v7021
    %v7033 = vadd.f32 %v6929, %v7023
    %v7034 = vadd.f32 %v6930, %v7025
    %v7035 = vadd.f32 %v6931, %v7027
    %s7036 = sld [smem:[#allocation13 + $0x94]]
    %v7037 = vstv %s7036
    %v7038 = vmul.f32 %v6384, %v7037
    %v7039 = vmul.f32 %v6385, %v7037
    %v7040 = vmul.f32 %v6386, %v7037
    %v7041 = vmul.f32 %v6387, %v7037
    %7046 = vrot.lane.b32.xlu0 %v7038, 127
    %v7047 = vpop.permute.xlu0 %7046
    %7048 = vrot.lane.b32.xlu0 %v7039, 127
    %v7049 = vpop.permute.xlu0 %7048
    %7050 = vrot.lane.b32.xlu0 %v7040, 127
    %v7051 = vpop.permute.xlu0 %7050
    %7052 = vrot.lane.b32.xlu0 %v7041, 127
    %v7053 = vpop.permute.xlu0 %7052
    %v7058 = vadd.f32 %v6954, %v7047
    %v7059 = vadd.f32 %v6955, %v7049
    %v7060 = vadd.f32 %v6956, %v7051
    %v7061 = vadd.f32 %v6957, %v7053
    %s7062 = sld [smem:[#allocation13 + $0x95]]
    %v7063 = vstv %s7062
    %v7064 = vmul.f32 %v6384, %v7063
    %v7065 = vmul.f32 %v6385, %v7063
    %v7066 = vmul.f32 %v6386, %v7063
    %v7067 = vmul.f32 %v6387, %v7063
    %7072 = vrot.lane.b32.xlu0 %v7064, 127
    %v7073 = vpop.permute.xlu0 %7072
    %7074 = vrot.lane.b32.xlu0 %v7065, 127
    %v7075 = vpop.permute.xlu0 %7074
    %7076 = vrot.lane.b32.xlu0 %v7066, 127
    %v7077 = vpop.permute.xlu0 %7076
    %7078 = vrot.lane.b32.xlu0 %v7067, 127
    %v7079 = vpop.permute.xlu0 %7078
    %v7084 = vadd.f32 %v6980, %v7073
    %v7085 = vadd.f32 %v6981, %v7075
    %v7086 = vadd.f32 %v6982, %v7077
    %v7087 = vadd.f32 %v6983, %v7079
    %s7088 = sld [smem:[#allocation13 + $0x96]]
    %v7089 = vstv %s7088
    %v7090 = vmul.f32 %v6384, %v7089
    %v7091 = vmul.f32 %v6385, %v7089
    %v7092 = vmul.f32 %v6386, %v7089
    %v7093 = vmul.f32 %v6387, %v7089
    %7098 = vrot.lane.b32.xlu0 %v7090, 127
    %v7099 = vpop.permute.xlu0 %7098
    %7100 = vrot.lane.b32.xlu0 %v7091, 127
    %v7101 = vpop.permute.xlu0 %7100
    %7102 = vrot.lane.b32.xlu0 %v7092, 127
    %v7103 = vpop.permute.xlu0 %7102
    %7104 = vrot.lane.b32.xlu0 %v7093, 127
    %v7105 = vpop.permute.xlu0 %7104
    %v7110 = vadd.f32 %v7006, %v7099
    %v7111 = vadd.f32 %v7007, %v7101
    %v7112 = vadd.f32 %v7008, %v7103
    %v7113 = vadd.f32 %v7009, %v7105
    %s7114 = sld [smem:[#allocation13 + $0x97]]
    %v7115 = vstv %s7114
    %v7116 = vmul.f32 %v6384, %v7115
    %v7117 = vmul.f32 %v6385, %v7115
    %v7118 = vmul.f32 %v6386, %v7115
    %v7119 = vmul.f32 %v6387, %v7115
    %7124 = vrot.lane.b32.xlu0 %v7116, 127
    %v7125 = vpop.permute.xlu0 %7124
    %7126 = vrot.lane.b32.xlu0 %v7117, 127
    %v7127 = vpop.permute.xlu0 %7126
    %7128 = vrot.lane.b32.xlu0 %v7118, 127
    %v7129 = vpop.permute.xlu0 %7128
    %7130 = vrot.lane.b32.xlu0 %v7119, 127
    %v7131 = vpop.permute.xlu0 %7130
    %v7136 = vadd.f32 %v7032, %v7125
    %v7137 = vadd.f32 %v7033, %v7127
    %v7138 = vadd.f32 %v7034, %v7129
    %v7139 = vadd.f32 %v7035, %v7131
    %s7140 = sld [smem:[#allocation13 + $0x98]]
    %v7141 = vstv %s7140
    %v7142 = vmul.f32 %v6428, %v7141
    %v7143 = vmul.f32 %v6429, %v7141
    %v7144 = vmul.f32 %v6430, %v7141
    %v7145 = vmul.f32 %v6431, %v7141
    %7150 = vrot.lane.b32.xlu0 %v7142, 127
    %v7151 = vpop.permute.xlu0 %7150
    %7152 = vrot.lane.b32.xlu0 %v7143, 127
    %v7153 = vpop.permute.xlu0 %7152
    %7154 = vrot.lane.b32.xlu0 %v7144, 127
    %v7155 = vpop.permute.xlu0 %7154
    %7156 = vrot.lane.b32.xlu0 %v7145, 127
    %v7157 = vpop.permute.xlu0 %7156
    %v7162 = vadd.f32 %v7058, %v7151
    %v7163 = vadd.f32 %v7059, %v7153
    %v7164 = vadd.f32 %v7060, %v7155
    %v7165 = vadd.f32 %v7061, %v7157
    %s7166 = sld [smem:[#allocation13 + $0x99]]
    %v7167 = vstv %s7166
    %v7168 = vmul.f32 %v6428, %v7167
    %v7169 = vmul.f32 %v6429, %v7167
    %v7170 = vmul.f32 %v6430, %v7167
    %v7171 = vmul.f32 %v6431, %v7167
    %7176 = vrot.lane.b32.xlu0 %v7168, 127
    %v7177 = vpop.permute.xlu0 %7176
    %7178 = vrot.lane.b32.xlu0 %v7169, 127
    %v7179 = vpop.permute.xlu0 %7178
    %7180 = vrot.lane.b32.xlu0 %v7170, 127
    %v7181 = vpop.permute.xlu0 %7180
    %7182 = vrot.lane.b32.xlu0 %v7171, 127
    %v7183 = vpop.permute.xlu0 %7182
    %v7188 = vadd.f32 %v7084, %v7177
    %v7189 = vadd.f32 %v7085, %v7179
    %v7190 = vadd.f32 %v7086, %v7181
    %v7191 = vadd.f32 %v7087, %v7183
    %s7192 = sld [smem:[#allocation13 + $0x9a]]
    %v7193 = vstv %s7192
    %v7194 = vmul.f32 %v6428, %v7193
    %v7195 = vmul.f32 %v6429, %v7193
    %v7196 = vmul.f32 %v6430, %v7193
    %v7197 = vmul.f32 %v6431, %v7193
    %7202 = vrot.lane.b32.xlu0 %v7194, 127
    %v7203 = vpop.permute.xlu0 %7202
    %7204 = vrot.lane.b32.xlu0 %v7195, 127
    %v7205 = vpop.permute.xlu0 %7204
    %7206 = vrot.lane.b32.xlu0 %v7196, 127
    %v7207 = vpop.permute.xlu0 %7206
    %7208 = vrot.lane.b32.xlu0 %v7197, 127
    %v7209 = vpop.permute.xlu0 %7208
    %v7214 = vadd.f32 %v7110, %v7203
    %v7215 = vadd.f32 %v7111, %v7205
    %v7216 = vadd.f32 %v7112, %v7207
    %v7217 = vadd.f32 %v7113, %v7209
    %s7218 = sld [smem:[#allocation13 + $0x9b]]
    %v7219 = vstv %s7218
    %v7220 = vmul.f32 %v6428, %v7219
    %v7221 = vmul.f32 %v6429, %v7219
    %v7222 = vmul.f32 %v6430, %v7219
    %v7223 = vmul.f32 %v6431, %v7219
    %7228 = vrot.lane.b32.xlu0 %v7220, 127
    %v7229 = vpop.permute.xlu0 %7228
    %7230 = vrot.lane.b32.xlu0 %v7221, 127
    %v7231 = vpop.permute.xlu0 %7230
    %7232 = vrot.lane.b32.xlu0 %v7222, 127
    %v7233 = vpop.permute.xlu0 %7232
    %7234 = vrot.lane.b32.xlu0 %v7223, 127
    %v7235 = vpop.permute.xlu0 %7234
    %v7240 = vadd.f32 %v7136, %v7229
    %v7241 = vadd.f32 %v7137, %v7231
    %v7242 = vadd.f32 %v7138, %v7233
    %v7243 = vadd.f32 %v7139, %v7235
    %s7244 = sld [smem:[#allocation13 + $0x9c]]
    %v7245 = vstv %s7244
    %v7246 = vmul.f32 %v6472, %v7245
    %v7247 = vmul.f32 %v6473, %v7245
    %v7248 = vmul.f32 %v6474, %v7245
    %v7249 = vmul.f32 %v6475, %v7245
    %7254 = vrot.lane.b32.xlu0 %v7246, 127
    %v7255 = vpop.permute.xlu0 %7254
    %7256 = vrot.lane.b32.xlu0 %v7247, 127
    %v7257 = vpop.permute.xlu0 %7256
    %7258 = vrot.lane.b32.xlu0 %v7248, 127
    %v7259 = vpop.permute.xlu0 %7258
    %7260 = vrot.lane.b32.xlu0 %v7249, 127
    %v7261 = vpop.permute.xlu0 %7260
    %v7266 = vadd.f32 %v7162, %v7255
    %v7267 = vadd.f32 %v7163, %v7257
    %v7268 = vadd.f32 %v7164, %v7259
    %v7269 = vadd.f32 %v7165, %v7261
    %s7270 = sld [smem:[#allocation13 + $0x9d]]
    %v7271 = vstv %s7270
    %v7272 = vmul.f32 %v6472, %v7271
    %v7273 = vmul.f32 %v6473, %v7271
    %v7274 = vmul.f32 %v6474, %v7271
    %v7275 = vmul.f32 %v6475, %v7271
    %7280 = vrot.lane.b32.xlu0 %v7272, 127
    %v7281 = vpop.permute.xlu0 %7280
    %7282 = vrot.lane.b32.xlu0 %v7273, 127
    %v7283 = vpop.permute.xlu0 %7282
    %7284 = vrot.lane.b32.xlu0 %v7274, 127
    %v7285 = vpop.permute.xlu0 %7284
    %7286 = vrot.lane.b32.xlu0 %v7275, 127
    %v7287 = vpop.permute.xlu0 %7286
    %v7292 = vadd.f32 %v7188, %v7281
    %v7293 = vadd.f32 %v7189, %v7283
    %v7294 = vadd.f32 %v7190, %v7285
    %v7295 = vadd.f32 %v7191, %v7287
    %s7296 = sld [smem:[#allocation13 + $0x9e]]
    %v7297 = vstv %s7296
    %v7298 = vmul.f32 %v6472, %v7297
    %v7299 = vmul.f32 %v6473, %v7297
    %v7300 = vmul.f32 %v6474, %v7297
    %v7301 = vmul.f32 %v6475, %v7297
    %7306 = vrot.lane.b32.xlu0 %v7298, 127
    %v7307 = vpop.permute.xlu0 %7306
    %7308 = vrot.lane.b32.xlu0 %v7299, 127
    %v7309 = vpop.permute.xlu0 %7308
    %7310 = vrot.lane.b32.xlu0 %v7300, 127
    %v7311 = vpop.permute.xlu0 %7310
    %7312 = vrot.lane.b32.xlu0 %v7301, 127
    %v7313 = vpop.permute.xlu0 %7312
    %v7318 = vadd.f32 %v7214, %v7307
    %v7319 = vadd.f32 %v7215, %v7309
    %v7320 = vadd.f32 %v7216, %v7311
    %v7321 = vadd.f32 %v7217, %v7313
    %s7322 = sld [smem:[#allocation13 + $0x9f]]
    %v7323 = vstv %s7322
    %v7324 = vmul.f32 %v6472, %v7323
    %v7325 = vmul.f32 %v6473, %v7323
    %v7326 = vmul.f32 %v6474, %v7323
    %v7327 = vmul.f32 %v6475, %v7323
    %7332 = vrot.lane.b32.xlu0 %v7324, 127
    %v7333 = vpop.permute.xlu0 %7332
    %7334 = vrot.lane.b32.xlu0 %v7325, 127
    %v7335 = vpop.permute.xlu0 %7334
    %7336 = vrot.lane.b32.xlu0 %v7326, 127
    %v7337 = vpop.permute.xlu0 %7336
    %7338 = vrot.lane.b32.xlu0 %v7327, 127
    %v7339 = vpop.permute.xlu0 %7338
    %v7344 = vadd.f32 %v7240, %v7333
    %v7345 = vadd.f32 %v7241, %v7335
    %v7346 = vadd.f32 %v7242, %v7337
    %v7347 = vadd.f32 %v7243, %v7339
    %s7348 = sld [smem:[#allocation14]]
    %s7349 = sld [smem:[#allocation16]]
    %v7350 = vsel %vm3422, %v7266, 0.0
    %7351 = vadd.xlane.f32.xlu0 %v7350
    %v7352 = vpop.xlane.xlu0 %7351
    %v7353 = vsel %vm3422, %v7267, 0.0
    %7354 = vadd.xlane.f32.xlu0 %v7353
    %v7355 = vpop.xlane.xlu0 %7354
    %v7356 = vsel %vm3422, %v7268, 0.0
    %7357 = vadd.xlane.f32.xlu0 %v7356
    %v7358 = vpop.xlane.xlu0 %7357
    %v7359 = vsel %vm3422, %v7269, 0.0
    %7360 = vadd.xlane.f32.xlu0 %v7359
    %v7361 = vpop.xlane.xlu0 %7360
    %v7362 = vadd.f32 %v7352, %v7355
    %v7363 = vadd.f32 %v7362, %v7358
    %v7364 = vadd.f32 %v7363, %v7361
    %v7365 = vrot.slane %v7364, 4
    %v7366 = vadd.f32 %v7364, %v7365
    %v7367 = vrot.slane %v7366, 2
    %v7368 = vadd.f32 %v7366, %v7367
    %v7369 = vrot.slane %v7368, 1
    %v7370 = vadd.f32 %v7368, %v7369
    %v7371 = vmul.f32 %v7370, 0.001953125
    %v7372 = vmul.f32 %v7266, %v7266
    %v7373 = vmul.f32 %v7267, %v7267
    %v7374 = vmul.f32 %v7268, %v7268
    %v7375 = vmul.f32 %v7269, %v7269
    %v7376 = vsel %vm3422, %v7372, 0.0
    %7377 = vadd.xlane.f32.xlu0 %v7376
    %v7378 = vpop.xlane.xlu0 %7377
    %v7379 = vsel %vm3422, %v7373, 0.0
    %7380 = vadd.xlane.f32.xlu0 %v7379
    %v7381 = vpop.xlane.xlu0 %7380
    %v7382 = vsel %vm3422, %v7374, 0.0
    %7383 = vadd.xlane.f32.xlu0 %v7382
    %v7384 = vpop.xlane.xlu0 %7383
    %v7385 = vsel %vm3422, %v7375, 0.0
    %7386 = vadd.xlane.f32.xlu0 %v7385
    %v7387 = vpop.xlane.xlu0 %7386
    %v7388 = vadd.f32 %v7378, %v7381
    %v7389 = vadd.f32 %v7388, %v7384
    %v7390 = vadd.f32 %v7389, %v7387
    %v7391 = vrot.slane %v7390, 4
    %v7392 = vadd.f32 %v7390, %v7391
    %v7393 = vrot.slane %v7392, 2
    %v7394 = vadd.f32 %v7392, %v7393
    %v7395 = vrot.slane %v7394, 1
    %v7396 = vadd.f32 %v7394, %v7395
    %v7397 = vmul.f32 %v7396, 0.001953125
    %v7398 = vmul.f32 %v7371, %v7371
    %v7399 = vsub.f32 %v7397, %v7398
    %v7400 = vmax.f32 %v7399, 0.0
    %v7401 = vadd.f32 %v7400, 1e-05
    %v7402 = vrsqrt.pop %v7401
    %v7403 = vstv %s7348
    %v7404 = vmul.f32 %v7403, %v7402
    %v7405 = vmul.f32 %v7371, %v7404
    %v7406 = vstv %s7349
    %v7407 = vsub.f32 %v7406, %v7405
    %v7408 = vmul.f32 %v7266, %v7404
    %v7409 = vmul.f32 %v7267, %v7404
    %v7410 = vmul.f32 %v7268, %v7404
    %v7411 = vmul.f32 %v7269, %v7404
    %v7412 = vadd.f32 %v7408, %v7407
    %v7413 = vadd.f32 %v7409, %v7407
    %v7414 = vadd.f32 %v7410, %v7407
    %v7415 = vadd.f32 %v7411, %v7407
    %v7416 = vmax.f32 %v7412, 0.0
    %v7417 = vmax.f32 %v7413, 0.0
    %v7418 = vmax.f32 %v7414, 0.0
    %v7419 = vmax.f32 %v7415, 0.0
    %v7420 = vadd.f32 %v7416, %v110
    %v7421 = vadd.f32 %v7417, %v111
    %v7422 = vadd.f32 %v7418, %v118
    %v7423 = vadd.f32 %v7419, %v119
    %7424 = vst.msk [vmem:[#allocation17] sm:$0xff] %vm3422, %v7420
    %7425 = vst.msk [vmem:[#allocation17 + $0x8] sm:$0xff] %vm3422, %v7421
    %7426 = vst.msk [vmem:[#allocation17 + $0x40] sm:$0xff] %vm3422, %v7422
    %7427 = vst.msk [vmem:[#allocation17 + $0x48] sm:$0xff] %vm3422, %v7423
    %s7428 = sld [smem:[#allocation14 + $0x1]]
    %s7429 = sld [smem:[#allocation16 + $0x1]]
    %v7430 = vsel %vm3422, %v7292, 0.0
    %7431 = vadd.xlane.f32.xlu0 %v7430
    %v7432 = vpop.xlane.xlu0 %7431
    %v7433 = vsel %vm3422, %v7293, 0.0
    %7434 = vadd.xlane.f32.xlu0 %v7433
    %v7435 = vpop.xlane.xlu0 %7434
    %v7436 = vsel %vm3422, %v7294, 0.0
    %7437 = vadd.xlane.f32.xlu0 %v7436
    %v7438 = vpop.xlane.xlu0 %7437
    %v7439 = vsel %vm3422, %v7295, 0.0
    %7440 = vadd.xlane.f32.xlu0 %v7439
    %v7441 = vpop.xlane.xlu0 %7440
    %v7442 = vadd.f32 %v7432, %v7435
    %v7443 = vadd.f32 %v7442, %v7438
    %v7444 = vadd.f32 %v7443, %v7441
    %v7445 = vrot.slane %v7444, 4
    %v7446 = vadd.f32 %v7444, %v7445
    %v7447 = vrot.slane %v7446, 2
    %v7448 = vadd.f32 %v7446, %v7447
    %v7449 = vrot.slane %v7448, 1
    %v7450 = vadd.f32 %v7448, %v7449
    %v7451 = vmul.f32 %v7450, 0.001953125
    %v7452 = vmul.f32 %v7292, %v7292
    %v7453 = vmul.f32 %v7293, %v7293
    %v7454 = vmul.f32 %v7294, %v7294
    %v7455 = vmul.f32 %v7295, %v7295
    %v7456 = vsel %vm3422, %v7452, 0.0
    %7457 = vadd.xlane.f32.xlu0 %v7456
    %v7458 = vpop.xlane.xlu0 %7457
    %v7459 = vsel %vm3422, %v7453, 0.0
    %7460 = vadd.xlane.f32.xlu0 %v7459
    %v7461 = vpop.xlane.xlu0 %7460
    %v7462 = vsel %vm3422, %v7454, 0.0
    %7463 = vadd.xlane.f32.xlu0 %v7462
    %v7464 = vpop.xlane.xlu0 %7463
    %v7465 = vsel %vm3422, %v7455, 0.0
    %7466 = vadd.xlane.f32.xlu0 %v7465
    %v7467 = vpop.xlane.xlu0 %7466
    %v7468 = vadd.f32 %v7458, %v7461
    %v7469 = vadd.f32 %v7468, %v7464
    %v7470 = vadd.f32 %v7469, %v7467
    %v7471 = vrot.slane %v7470, 4
    %v7472 = vadd.f32 %v7470, %v7471
    %v7473 = vrot.slane %v7472, 2
    %v7474 = vadd.f32 %v7472, %v7473
    %v7475 = vrot.slane %v7474, 1
    %v7476 = vadd.f32 %v7474, %v7475
    %v7477 = vmul.f32 %v7476, 0.001953125
    %v7478 = vmul.f32 %v7451, %v7451
    %v7479 = vsub.f32 %v7477, %v7478
    %v7480 = vmax.f32 %v7479, 0.0
    %v7481 = vadd.f32 %v7480, 1e-05
    %v7482 = vrsqrt.pop %v7481
    %v7483 = vstv %s7428
    %v7484 = vmul.f32 %v7483, %v7482
    %v7485 = vmul.f32 %v7451, %v7484
    %v7486 = vstv %s7429
    %v7487 = vsub.f32 %v7486, %v7485
    %v7488 = vmul.f32 %v7292, %v7484
    %v7489 = vmul.f32 %v7293, %v7484
    %v7490 = vmul.f32 %v7294, %v7484
    %v7491 = vmul.f32 %v7295, %v7484
    %v7492 = vadd.f32 %v7488, %v7487
    %v7493 = vadd.f32 %v7489, %v7487
    %v7494 = vadd.f32 %v7490, %v7487
    %v7495 = vadd.f32 %v7491, %v7487
    %v7496 = vmax.f32 %v7492, 0.0
    %v7497 = vmax.f32 %v7493, 0.0
    %v7498 = vmax.f32 %v7494, 0.0
    %v7499 = vmax.f32 %v7495, 0.0
    %v7500 = vadd.f32 %v7496, %v112
    %v7501 = vadd.f32 %v7497, %v113
    %v7502 = vadd.f32 %v7498, %v120
    %v7503 = vadd.f32 %v7499, %v121
    %s7504 = scalar_lea.vmem [#allocation17], 16
    %7505 = vst.msk [vmem:[%s7504] sm:$0xff] %vm3422, %v7500
    %7506 = vst.msk [vmem:[%s7504 + $0x8] sm:$0xff] %vm3422, %v7501
    %7507 = vst.msk [vmem:[%s7504 + $0x40] sm:$0xff] %vm3422, %v7502
    %7508 = vst.msk [vmem:[%s7504 + $0x48] sm:$0xff] %vm3422, %v7503
    %s7509 = sld [smem:[#allocation14 + $0x2]]
    %s7510 = sld [smem:[#allocation16 + $0x2]]
    %v7511 = vsel %vm3422, %v7318, 0.0
    %7512 = vadd.xlane.f32.xlu0 %v7511
    %v7513 = vpop.xlane.xlu0 %7512
    %v7514 = vsel %vm3422, %v7319, 0.0
    %7515 = vadd.xlane.f32.xlu0 %v7514
    %v7516 = vpop.xlane.xlu0 %7515
    %v7517 = vsel %vm3422, %v7320, 0.0
    %7518 = vadd.xlane.f32.xlu0 %v7517
    %v7519 = vpop.xlane.xlu0 %7518
    %v7520 = vsel %vm3422, %v7321, 0.0
    %7521 = vadd.xlane.f32.xlu0 %v7520
    %v7522 = vpop.xlane.xlu0 %7521
    %v7523 = vadd.f32 %v7513, %v7516
    %v7524 = vadd.f32 %v7523, %v7519
    %v7525 = vadd.f32 %v7524, %v7522
    %v7526 = vrot.slane %v7525, 4
    %v7527 = vadd.f32 %v7525, %v7526
    %v7528 = vrot.slane %v7527, 2
    %v7529 = vadd.f32 %v7527, %v7528
    %v7530 = vrot.slane %v7529, 1
    %v7531 = vadd.f32 %v7529, %v7530
    %v7532 = vmul.f32 %v7531, 0.001953125
    %v7533 = vmul.f32 %v7318, %v7318
    %v7534 = vmul.f32 %v7319, %v7319
    %v7535 = vmul.f32 %v7320, %v7320
    %v7536 = vmul.f32 %v7321, %v7321
    %v7537 = vsel %vm3422, %v7533, 0.0
    %7538 = vadd.xlane.f32.xlu0 %v7537
    %v7539 = vpop.xlane.xlu0 %7538
    %v7540 = vsel %vm3422, %v7534, 0.0
    %7541 = vadd.xlane.f32.xlu0 %v7540
    %v7542 = vpop.xlane.xlu0 %7541
    %v7543 = vsel %vm3422, %v7535, 0.0
    %7544 = vadd.xlane.f32.xlu0 %v7543
    %v7545 = vpop.xlane.xlu0 %7544
    %v7546 = vsel %vm3422, %v7536, 0.0
    %7547 = vadd.xlane.f32.xlu0 %v7546
    %v7548 = vpop.xlane.xlu0 %7547
    %v7549 = vadd.f32 %v7539, %v7542
    %v7550 = vadd.f32 %v7549, %v7545
    %v7551 = vadd.f32 %v7550, %v7548
    %v7552 = vrot.slane %v7551, 4
    %v7553 = vadd.f32 %v7551, %v7552
    %v7554 = vrot.slane %v7553, 2
    %v7555 = vadd.f32 %v7553, %v7554
    %v7556 = vrot.slane %v7555, 1
    %v7557 = vadd.f32 %v7555, %v7556
    %v7558 = vmul.f32 %v7557, 0.001953125
    %v7559 = vmul.f32 %v7532, %v7532
    %v7560 = vsub.f32 %v7558, %v7559
    %v7561 = vmax.f32 %v7560, 0.0
    %v7562 = vadd.f32 %v7561, 1e-05
    %v7563 = vrsqrt.pop %v7562
    %v7564 = vstv %s7509
    %v7565 = vmul.f32 %v7564, %v7563
    %v7566 = vmul.f32 %v7532, %v7565
    %v7567 = vstv %s7510
    %v7568 = vsub.f32 %v7567, %v7566
    %v7569 = vmul.f32 %v7318, %v7565
    %v7570 = vmul.f32 %v7319, %v7565
    %v7571 = vmul.f32 %v7320, %v7565
    %v7572 = vmul.f32 %v7321, %v7565
    %v7573 = vadd.f32 %v7569, %v7568
    %v7574 = vadd.f32 %v7570, %v7568
    %v7575 = vadd.f32 %v7571, %v7568
    %v7576 = vadd.f32 %v7572, %v7568
    %v7577 = vmax.f32 %v7573, 0.0
    %v7578 = vmax.f32 %v7574, 0.0
    %v7579 = vmax.f32 %v7575, 0.0
    %v7580 = vmax.f32 %v7576, 0.0
    %v7581 = vadd.f32 %v7577, %v114
    %v7582 = vadd.f32 %v7578, %v115
    %v7583 = vadd.f32 %v7579, %v122
    %v7584 = vadd.f32 %v7580, %v123
    %s7585 = scalar_lea.vmem [#allocation17], 32
    %7586 = vst.msk [vmem:[%s7585] sm:$0xff] %vm3422, %v7581
    %7587 = vst.msk [vmem:[%s7585 + $0x8] sm:$0xff] %vm3422, %v7582
    %7588 = vst.msk [vmem:[%s7585 + $0x40] sm:$0xff] %vm3422, %v7583
    %7589 = vst.msk [vmem:[%s7585 + $0x48] sm:$0xff] %vm3422, %v7584
    %s7590 = sld [smem:[#allocation14 + $0x3]]
    %s7591 = sld [smem:[#allocation16 + $0x3]]
    %v7592 = vsel %vm3422, %v7344, 0.0
    %7593 = vadd.xlane.f32.xlu0 %v7592
    %v7594 = vpop.xlane.xlu0 %7593
    %v7595 = vsel %vm3422, %v7345, 0.0
    %7596 = vadd.xlane.f32.xlu0 %v7595
    %v7597 = vpop.xlane.xlu0 %7596
    %v7598 = vsel %vm3422, %v7346, 0.0
    %7599 = vadd.xlane.f32.xlu0 %v7598
    %v7600 = vpop.xlane.xlu0 %7599
    %v7601 = vsel %vm3422, %v7347, 0.0
    %7602 = vadd.xlane.f32.xlu0 %v7601
    %v7603 = vpop.xlane.xlu0 %7602
    %v7604 = vadd.f32 %v7594, %v7597
    %v7605 = vadd.f32 %v7604, %v7600
    %v7606 = vadd.f32 %v7605, %v7603
    %v7607 = vrot.slane %v7606, 4
    %v7608 = vadd.f32 %v7606, %v7607
    %v7609 = vrot.slane %v7608, 2
    %v7610 = vadd.f32 %v7608, %v7609
    %v7611 = vrot.slane %v7610, 1
    %v7612 = vadd.f32 %v7610, %v7611
    %v7613 = vmul.f32 %v7612, 0.001953125
    %v7614 = vmul.f32 %v7344, %v7344
    %v7615 = vmul.f32 %v7345, %v7345
    %v7616 = vmul.f32 %v7346, %v7346
    %v7617 = vmul.f32 %v7347, %v7347
    %v7618 = vsel %vm3422, %v7614, 0.0
    %7619 = vadd.xlane.f32.xlu0 %v7618
    %v7620 = vpop.xlane.xlu0 %7619
    %v7621 = vsel %vm3422, %v7615, 0.0
    %7622 = vadd.xlane.f32.xlu0 %v7621
    %v7623 = vpop.xlane.xlu0 %7622
    %v7624 = vsel %vm3422, %v7616, 0.0
    %7625 = vadd.xlane.f32.xlu0 %v7624
    %v7626 = vpop.xlane.xlu0 %7625
    %v7627 = vsel %vm3422, %v7617, 0.0
    %7628 = vadd.xlane.f32.xlu0 %v7627
    %v7629 = vpop.xlane.xlu0 %7628
    %v7630 = vadd.f32 %v7620, %v7623
    %v7631 = vadd.f32 %v7630, %v7626
    %v7632 = vadd.f32 %v7631, %v7629
    %v7633 = vrot.slane %v7632, 4
    %v7634 = vadd.f32 %v7632, %v7633
    %v7635 = vrot.slane %v7634, 2
    %v7636 = vadd.f32 %v7634, %v7635
    %v7637 = vrot.slane %v7636, 1
    %v7638 = vadd.f32 %v7636, %v7637
    %v7639 = vmul.f32 %v7638, 0.001953125
    %v7640 = vmul.f32 %v7613, %v7613
    %v7641 = vsub.f32 %v7639, %v7640
    %v7642 = vmax.f32 %v7641, 0.0
    %v7643 = vadd.f32 %v7642, 1e-05
    %v7644 = vrsqrt.pop %v7643
    %v7645 = vstv %s7590
    %v7646 = vmul.f32 %v7645, %v7644
    %v7647 = vmul.f32 %v7613, %v7646
    %v7648 = vstv %s7591
    %v7649 = vsub.f32 %v7648, %v7647
    %v7650 = vmul.f32 %v7344, %v7646
    %v7651 = vmul.f32 %v7345, %v7646
    %v7652 = vmul.f32 %v7346, %v7646
    %v7653 = vmul.f32 %v7347, %v7646
    %v7654 = vadd.f32 %v7650, %v7649
    %v7655 = vadd.f32 %v7651, %v7649
    %v7656 = vadd.f32 %v7652, %v7649
    %v7657 = vadd.f32 %v7653, %v7649
    %v7658 = vmax.f32 %v7654, 0.0
    %v7659 = vmax.f32 %v7655, 0.0
    %v7660 = vmax.f32 %v7656, 0.0
    %v7661 = vmax.f32 %v7657, 0.0
    %v7662 = vadd.f32 %v7658, %v116
    %v7663 = vadd.f32 %v7659, %v117
    %v7664 = vadd.f32 %v7660, %v124
    %v7665 = vadd.f32 %v7661, %v125
    %s7666 = scalar_lea.vmem [#allocation17], 48
    %7667 = vst.msk [vmem:[%s7666] sm:$0xff] %vm3422, %v7662
    %7668 = vst.msk [vmem:[%s7666 + $0x8] sm:$0xff] %vm3422, %v7663
    %7669 = vst.msk [vmem:[%s7666 + $0x40] sm:$0xff] %vm3422, %v7664
    %7670 = vst.msk [vmem:[%s7666 + $0x48] sm:$0xff] %vm3422, %v7665
    // Predicated region
    $region58: #{tpu_custom_call.1} parent=1 // pred_check
      _
    $region59: #{tpu_custom_call.1} parent=1 // pred_check_branch
      %7672 = sbr.rel (0) target = $region61
    $region60: #{tpu_custom_call.1} parent=1 // pred_region
      %s7674 = ssub.s32 2048, 2048
      %7675 = vsyncadd [#allocation6], %s7674
      %s7676 = sshll.u32 [#allocation17], 4
      %s7677 = int_to_ptr.vmem [resolvable:$true] %s7676
      %7682 = dma.vmem_to_hbm [thread:$0]  %s7677, 2048, %s7, [#allocation6], 128, 128, 8
    $region61: #{tpu_custom_call.1} parent=1 // pred_fallthru
      _
    // Predicated region
    $region62: #{tpu_custom_call.1} parent=1 // pred_check
      _
    $region63: #{tpu_custom_call.1} parent=1 // pred_check_branch
      %7684 = sbr.rel (0) target = $region65
    $region64: #{tpu_custom_call.1} parent=1 // pred_region
      %7685 = dma.done [#allocation6], 2048
    $region65: #{tpu_custom_call.1} parent=1 // pred_fallthru
      _
    %7686 = vsyncpa [#allocation5], 1
    %7687 = vsyncpa [#allocation6], 1
    %7688 = vsyncpa [#allocation7], 1
    %7689 = vsyncpa [#allocation8], 1
    %7690 = vsyncpa [#allocation12], 1
    %7691 = vsyncpa [#allocation15], 1

</llo_original>
